<compile_context>
chip_gen: v5e
topology: v5e:2x2
jax: 0.10.0
libtpu: 0.0.40
codegen_flags: <defaults>
</compile_context>

<pallas_src>
import numpy as np
import jax
import jax.numpy as jnp
from jax.experimental import pallas as pl
from jax.experimental.pallas import tpu as pltpu

NUM_CLASS = 8          # stand-in for 80
HIDDEN_DIM = 16        # stand-in for 128
FEAT_DIM = 32          # stand-in for VGG's 512
IMG_SIZE = 32          # -> 2x2 feature map after 4 maxpools
# VGG16 feature config (channels scaled), final MaxPool dropped (== features[:-1])
VGG_CFG = [8, 8, "M", 16, 16, "M", 16, 16, 16, "M", 32, 32, 32, "M", 32, 32, 32]

BASE = 128                       # lane offset of the interior of every activation buffer
WPACK_W = 9 * 32 + 1             # 289: widest packed-weight row (288 taps + 1 bias column)
NMAX = IMG_SIZE * (IMG_SIZE + 2)  # 1088: widest flat spatial extent

_VMEM = pl.BlockSpec(memory_space=pltpu.MemorySpace.VMEM)


def _rup(x, m):
    return (x + m - 1) // m * m


# ---------------- static schedule: conv/pool stages, ping-pong buffers, packing offsets -----
#
# Activation layout at resolution H: a bf16 (C, N + 2*BASE) buffer with N = H*(H+2).
# Pixel x[i, j] lives at lane BASE + i*(H+2) + (j+1); the 128-lane rings on both sides and the
# per-row pad columns read back as zero, so a 3x3 'same' conv is 9 shifted contiguous slices.

def _make_plan():
    stages, buf_ch, buf_len = [], [], []
    mask_row = {}                     # H -> row index in the f32 aux slab
    h, cin, cur, other = IMG_SIZE, 3, -1, None   # cur == -1 means "the input ref"
    wrow = 0                          # running sublane offset inside wpack (conv region)

    def alloc_pair(hh):
        n = hh * (hh + 2)
        buf_ch.extend([0, 0])
        buf_len.extend([n + 2 * BASE] * 2)
        return len(buf_ch) - 2, len(buf_ch) - 1

    for cfg in VGG_CFG:
        if cfg == "M":
            a, b = alloc_pair(h // 2)
            buf_ch[a] = max(buf_ch[a], cin)
            stages.append(dict(kind="pool", H=h, C=cin, src=cur, dst=a, prow=None))
            h //= 2
            cur, other = a, b
        else:
            if cur == -1:
                dst, nxt = alloc_pair(h)
            else:
                dst, nxt = other, cur
            buf_ch[dst] = max(buf_ch[dst], cfg)
            if h not in mask_row:
                mask_row[h] = len(mask_row)
            cinp = 16 if cin <= 16 else 32           # pad Cin so tap rows are 16-aligned (bf16)
            stages.append(dict(kind="conv", H=h, Cin=cin, Cinp=cinp, Cout=cfg,
                               K=9 * cinp, src=cur, dst=dst, wrow=wrow, mrow=mask_row[h]))
            wrow += _rup(cfg, 16)
            cur, other = dst, nxt
            cin = cfg

    # remaining rows of the packed bf16 slab: pooling selections, feature gather, head weights
    r = wrow
    for st in stages:
        if st["kind"] == "pool":
            st["prow"] = r
            r += _rup(st["H"] * (st["H"] + 2), 16)
    r_pfeat = r; r += 16
    r_label = r; r += 16
    r_feat = r;  r += 16
    r_w1 = r;    r += _rup(FEAT_DIM, 16)
    r_w2 = r;    r += _rup(FEAT_DIM, 16)
    return dict(stages=stages, buf_ch=buf_ch, buf_len=buf_len, mask_row=mask_row,
                wpack_rows=r, r_pfeat=r_pfeat, r_label=r_label, r_feat=r_feat,
                r_w1=r_w1, r_w2=r_w2, final_buf=cur)


_P = _make_plan()
_N_MASK = len(_P["mask_row"])
_AUX_B1 = _N_MASK          # classifier bias 1 row in aux
_AUX_B2 = _N_MASK + 1      # classifier bias 2 row in aux
_AUX_OH = _N_MASK + 2      # one-hot label rows start here


# ---------------- the fused Pallas kernel ----------------

def _fused_kernel(x_ref, w_ref, aux_ref, out_ref, stk_ref, *bufs):
    stages = _P["stages"]

    # -- prologue: zero only what must read back as zero ------------------------------------
    stk_ref[...] = jnp.zeros(stk_ref.shape, stk_ref.dtype)
    # all-ones "bias lanes": the bias column folded into the packed weights multiplies these
    # rows (pad columns are re-zeroed by the mask multiply afterwards anyway)
    for k_bias in (9 * 16, 9 * 32):
        stk_ref[k_bias:k_bias + 1, :] = jnp.ones((1, stk_ref.shape[1]), stk_ref.dtype)
    for buf in bufs:                              # zero only the 128-lane pad rings
        c, l = buf.shape
        z = jnp.zeros((c, BASE), buf.dtype)
        buf[:, 0:BASE] = z
        buf[:, l - BASE:l] = z

    def src_ref(i):
        return x_ref if i < 0 else bufs[i]

    # -- backbone: 13 convs (one K-stacked MXU matmul each) + 4 maxpools ----------------------
    for st in stages:
        H = st["H"]; Wp = H + 2; N = H * Wp
        src = src_ref(st["src"])
        if st["kind"] == "conv":
            cin, cinp, cout, K = st["Cin"], st["Cinp"], st["Cout"], st["K"]
            # build the stacked bf16 RHS: 9 shifted (Cin, N) slabs at 16/32-row tap blocks
            for k in range(9):
                dh, dw = k // 3 - 1, k % 3 - 1
                lo = BASE + dh * Wp + dw
                stk_ref[k * cinp:k * cinp + cin, 0:N] = src[0:cin, lo:lo + N]
            w = w_ref[st["wrow"]:st["wrow"] + cout, 0:K + 1]          # taps + bias column
            acc = jnp.dot(w, stk_ref[0:K + 1, 0:N],
                          preferred_element_type=jnp.float32)          # (Cout, N), one matmul
            mask = aux_ref[st["mrow"]:st["mrow"] + 1, 0:N]             # re-zero pad columns
            out = jnp.maximum(acc, 0.0) * mask
            bufs[st["dst"]][0:cout, BASE:BASE + N] = out.astype(jnp.bfloat16)
        else:
            c = st["C"]
            v00 = src[0:c, BASE:BASE + N]
            v01 = src[0:c, BASE + 1:BASE + 1 + N]
            v10 = src[0:c, BASE + Wp:BASE + Wp + N]
            v11 = src[0:c, BASE + Wp + 1:BASE + Wp + 1 + N]
            vm = jnp.maximum(jnp.maximum(v00, v01), jnp.maximum(v10, v11))
            Ho = H // 2; No = Ho * (Ho + 2)
            # exact 0/1 selection matmul compacts the stride-2 anchors into the next layout.
            # (bf16 rounding here equals the bf16 cast the next conv applies anyway.)
            psel = w_ref[st["prow"]:st["prow"] + N, 0:No]
            pooled = jnp.dot(vm, psel, preferred_element_type=jnp.float32)
            bufs[st["dst"]][0:c, BASE:BASE + No] = pooled.astype(jnp.bfloat16)

    # -- head: conv_feat gather + cosine attention + classifier + cross-entropy ---------------
    Hf = IMG_SIZE // 16; Wpf = Hf + 2; Nf = Hf * Wpf; M = Hf * Hf
    L = aux_ref.shape[0] - _AUX_OH

    slab = bufs[_P["final_buf"]][0:FEAT_DIM, BASE:BASE + Nf]                  # (C, Nf) bf16
    pfeat = w_ref[_P["r_pfeat"]:_P["r_pfeat"] + Nf, 0:M]
    feat = jnp.dot(slab, pfeat, preferred_element_type=jnp.float32)           # conv_feat.view(C, M)
    feat_b = feat.astype(jnp.bfloat16)

    oh = aux_ref[_AUX_OH:_AUX_OH + L, 0:NUM_CLASS]                            # (L, NC) f32
    lw = w_ref[_P["r_label"]:_P["r_label"] + NUM_CLASS, 0:HIDDEN_DIM]
    fw = w_ref[_P["r_feat"]:_P["r_feat"] + HIDDEN_DIM, 0:FEAT_DIM]
    emb_label = jnp.dot(oh.astype(jnp.bfloat16), lw,
                        preferred_element_type=jnp.float32)                   # (L, D)
    emb_feat = jnp.dot(fw, feat_b, preferred_element_type=jnp.float32)        # (D, M)
    att = jnp.dot(emb_label.astype(jnp.bfloat16), emb_feat.astype(jnp.bfloat16),
                  preferred_element_type=jnp.float32)                         # (L, M)
    # cosine normalization (clamp 1e-4) + softmax over spatial axis, exact f32 divides
    label_norm = jnp.sqrt(jnp.sum(emb_label * emb_label, axis=1, keepdims=True))
    feat_norm = jnp.sqrt(jnp.sum(emb_feat * emb_feat, axis=0, keepdims=True))
    att = att / jnp.maximum(label_norm * feat_norm, 1e-4)
    att = att - jnp.max(att, axis=1, keepdims=True)
    att = jnp.exp(att)
    att = att / jnp.sum(att, axis=1, keepdims=True)

    attended = jax.lax.dot_general(att.astype(jnp.bfloat16), feat_b,
                                   (((1,), (1,)), ((), ())),
                                   preferred_element_type=jnp.float32)        # (L, C)
    w1 = w_ref[_P["r_w1"]:_P["r_w1"] + FEAT_DIM, 0:FEAT_DIM]
    w2 = w_ref[_P["r_w2"]:_P["r_w2"] + FEAT_DIM, 0:NUM_CLASS]
    b1 = aux_ref[_AUX_B1:_AUX_B1 + 1, 0:FEAT_DIM]
    b2 = aux_ref[_AUX_B2:_AUX_B2 + 1, 0:NUM_CLASS]
    h1 = jnp.maximum(jnp.dot(attended.astype(jnp.bfloat16), w1,
                             preferred_element_type=jnp.float32) + b1, 0.0)
    score = jnp.dot(h1.astype(jnp.bfloat16), w2,
                    preferred_element_type=jnp.float32) + b2
    smax = jnp.max(score, axis=1, keepdims=True)
    es = jnp.exp(score - smax)
    se = jnp.sum(es, axis=1, keepdims=True)
    probs = es / se
    log_z = jnp.log(se) + smax
    tgt = jnp.sum(score * oh, axis=1, keepdims=True)
    loss = jnp.mean(log_z - tgt, keepdims=True)                               # (1, 1)

    # single lane-dense (8,128) f32 output block: [probs | attention | ... loss]
    out_ref[...] = jnp.zeros(out_ref.shape, out_ref.dtype)
    out_ref[0:L, 0:NUM_CLASS] = probs
    out_ref[0:L, NUM_CLASS:NUM_CLASS + M] = att
    out_ref[7:8, 127:128] = loss


# ---------------- parameters ----------------

def init_params(key):
    params = {"conv_ws": [], "conv_bs": []}
    cin = 3
    for cfg in VGG_CFG:
        if cfg == "M":
            continue
        key, k1 = jax.random.split(key)
        std = (2.0 / (9 * cin)) ** 0.5
        params["conv_ws"].append(jax.random.normal(k1, (cfg, cin, 3, 3), jnp.float32) * std)
        params["conv_bs"].append(jnp.zeros((cfg,), jnp.float32))
        cin = cfg
    key, k1, k2, k3, k4 = jax.random.split(key, 5)
    # AttentionLayer params (randn * 0.01)
    params["label_weights"] = jax.random.normal(k1, (NUM_CLASS, HIDDEN_DIM), jnp.float32) * 0.01
    params["feat_weights"] = jax.random.normal(k2, (HIDDEN_DIM, FEAT_DIM), jnp.float32) * 0.01
    # classifier: normal_init(mean=0, std=0.01), zero bias (as in _init_weights)
    params["cls_w1"] = jax.random.normal(k3, (FEAT_DIM, FEAT_DIM), jnp.float32) * 0.01
    params["cls_b1"] = jnp.zeros((FEAT_DIM,), jnp.float32)
    params["cls_w2"] = jax.random.normal(k4, (FEAT_DIM, NUM_CLASS), jnp.float32) * 0.01
    params["cls_b2"] = jnp.zeros((NUM_CLASS,), jnp.float32)
    return params


# ---------------- host-side constant packing (one bf16 slab + one f32 slab) ----------------

def pack_constants(params):
    W = np.zeros((_P["wpack_rows"], WPACK_W), np.float32)
    convs = [s for s in _P["stages"] if s["kind"] == "conv"]
    for st, w, b in zip(convs, params["conv_ws"], params["conv_bs"]):
        cout, cin, cinp, K = st["Cout"], st["Cin"], st["Cinp"], st["K"]
        wk = np.asarray(w, np.float32).transpose(0, 2, 3, 1)       # (Cout, 3, 3, Cin)
        blk = np.zeros((cout, 9, cinp), np.float32)
        blk[:, :, :cin] = wk.reshape(cout, 9, cin)
        W[st["wrow"]:st["wrow"] + cout, 0:K] = blk.reshape(cout, K)
        W[st["wrow"]:st["wrow"] + cout, K] = np.asarray(b, np.float32)   # folded bias column
    # 0/1 pooling selections: compact the stride-2 anchors into the next resolution's layout
    for st in _P["stages"]:
        if st["kind"] != "pool":
            continue
        H = st["H"]; Wp = H + 2; Ho = H // 2; Wpo = Ho + 2
        P = np.zeros((H * Wp, Ho * Wpo), np.float32)
        for i in range(Ho):
            for j in range(Ho):
                P[(2 * i) * Wp + (2 * j + 1), i * Wpo + (j + 1)] = 1.0
        W[st["prow"]:st["prow"] + H * Wp, 0:Ho * Wpo] = P
    # 0/1 final-feature gather (== conv_feat.view(C, M), row-major)
    Hf = IMG_SIZE // 16; Wpf = Hf + 2
    Pf = np.zeros((Hf * Wpf, Hf * Hf), np.float32)
    for i in range(Hf):
        for j in range(Hf):
            Pf[i * Wpf + (j + 1), i * Hf + j] = 1.0
    W[_P["r_pfeat"]:_P["r_pfeat"] + Hf * Wpf, 0:Hf * Hf] = Pf
    W[_P["r_label"]:_P["r_label"] + NUM_CLASS, 0:HIDDEN_DIM] = np.asarray(params["label_weights"])
    W[_P["r_feat"]:_P["r_feat"] + HIDDEN_DIM, 0:FEAT_DIM] = np.asarray(params["feat_weights"])
    W[_P["r_w1"]:_P["r_w1"] + FEAT_DIM, 0:FEAT_DIM] = np.asarray(params["cls_w1"])
    W[_P["r_w2"]:_P["r_w2"] + FEAT_DIM, 0:NUM_CLASS] = np.asarray(params["cls_w2"])
    wpack = jnp.asarray(W, dtype=jnp.bfloat16)

    # f32 aux slab rows: [pad-column masks (one per resolution) | cls_b1 | cls_b2]
    A = np.zeros((_N_MASK + 2, NMAX), np.float32)
    for Hh, row in _P["mask_row"].items():
        Wp = Hh + 2
        m = np.zeros((Wp,), np.float32)
        m[1:Hh + 1] = 1.0
        A[row, 0:Hh * Wp] = np.tile(m, Hh)
    A[_AUX_B1, 0:FEAT_DIM] = np.asarray(params["cls_b1"])
    A[_AUX_B2, 0:NUM_CLASS] = np.asarray(params["cls_b2"])
    return {"wpack": wpack, "aux_base": jnp.asarray(A)}


# ---------------- forward ----------------

@jax.jit
def attentive_det_forward(packed, im_data, target_cls):
    # im_data: NCHW with batch 1 (the PyTorch AttentionLayer assumes batch = 1)
    H = IMG_SIZE; Wp = H + 2; N = H * Wp
    x = im_data[0].astype(jnp.float32)                               # (3, H, W)
    xp = jnp.pad(x, ((0, 0), (1, 1), (1, 1))).reshape(3, Wp * Wp)
    lead = BASE - Wp
    x0 = jnp.pad(xp, ((0, 0), (lead, N + 2 * BASE - Wp * Wp - lead))).astype(jnp.bfloat16)

    L = target_cls.shape[0]
    if L > 8:
        raise ValueError("this toy kernel packs outputs into an (8,128) block; need L <= 8")
    Hf = IMG_SIZE // 16; M = Hf * Hf
    oh = jax.nn.one_hot(target_cls, NUM_CLASS, dtype=jnp.float32)    # (L, NC)
    oh_rows = jnp.zeros((L, NMAX), jnp.float32).at[:, 0:NUM_CLASS].set(oh)
    aux = jnp.concatenate([packed["aux_base"], oh_rows], axis=0)     # (_AUX_OH + L, NMAX)

    scratch = [pltpu.VMEM((WPACK_W, NMAX), jnp.bfloat16)]            # stacked conv RHS (289,1088)
    scratch += [pltpu.VMEM((c, l), jnp.bfloat16)
                for c, l in zip(_P["buf_ch"], _P["buf_len"])]        # ping-pong activations

    out = pl.pallas_call(
        _fused_kernel,
        out_shape=jax.ShapeDtypeStruct((8, 128), jnp.float32),       # lane-dense merged output
        in_specs=[_VMEM, _VMEM, _VMEM],
        out_specs=_VMEM,
        scratch_shapes=scratch,
    )(x0, packed["wpack"], aux)

    probs = out[0:L, 0:NUM_CLASS]
    attention = out[0:L, NUM_CLASS:NUM_CLASS + M].reshape(L, Hf, Hf)
    loss = out[7, 127]
    return probs, loss, attention


if __name__ == "__main__":
    key = jax.random.PRNGKey(0)
    pkey, dkey = jax.random.split(key)
    params = init_params(pkey)
    packed = pack_constants(params)

    im_data = jax.random.normal(dkey, (1, 3, IMG_SIZE, IMG_SIZE), jnp.float32)
    target_cls = jnp.array([0, 3, 5, 2], dtype=jnp.int32)   # L = 4 positive classes

    probs, loss, attention = attentive_det_forward(packed, im_data, target_cls)
    jax.block_until_ready((probs, loss, attention))

    assert probs.shape == (4, NUM_CLASS)
    assert attention.shape == (4, IMG_SIZE // 16, IMG_SIZE // 16)
    assert bool(jnp.isfinite(loss))
    assert bool(jnp.allclose(jnp.sum(probs, axis=1), 1.0, atol=1e-5))
    print("KERNEL_OK")
</pallas_src>

<mosaic_0001>
module attributes {stable_mosaic.version = 11 : i64} {
  func.func @_fused_kernel(%arg0: memref<3x1344xbf16, #tpu.memory_space<vmem>>, %arg1: memref<1904x289xbf16, #tpu.memory_space<vmem>>, %arg2: memref<11x1088xf32, #tpu.memory_space<vmem>>, %arg3: memref<8x128xf32, #tpu.memory_space<vmem>>, %arg4: memref<289x1088xbf16, #tpu.memory_space<vmem>>, %arg5: memref<8x1344xbf16, #tpu.memory_space<vmem>>, %arg6: memref<8x1344xbf16, #tpu.memory_space<vmem>>, %arg7: memref<16x544xbf16, #tpu.memory_space<vmem>>, %arg8: memref<16x544xbf16, #tpu.memory_space<vmem>>, %arg9: memref<16x336xbf16, #tpu.memory_space<vmem>>, %arg10: memref<16x336xbf16, #tpu.memory_space<vmem>>, %arg11: memref<32x280xbf16, #tpu.memory_space<vmem>>, %arg12: memref<32x280xbf16, #tpu.memory_space<vmem>>, %arg13: memref<32x264xbf16, #tpu.memory_space<vmem>>, %arg14: memref<32x264xbf16, #tpu.memory_space<vmem>>) attributes {dimension_semantics = [], scalar_prefetch = 0 : i64, scratch_operands = 11 : i64, tpu.core_type = #tpu.core_type<tc>} {
    %cst = arith.constant 0.000000e+00 : bf16
    %0 = vector.broadcast %cst : bf16 to vector<289x1088xbf16>
    %c0 = arith.constant 0 : index
    %c0_0 = arith.constant 0 : index
    %1 = vector.load %arg4[%c0, %c0_0] : memref<289x1088xbf16, #tpu.memory_space<vmem>>, vector<289x1088xbf16>
    tpu.vector_store %arg4[%c0, %c0_0], %0 {strides = array<i32>} : memref<289x1088xbf16, #tpu.memory_space<vmem>>, vector<289x1088xbf16>,
    %cst_1 = arith.constant 1.000000e+00 : bf16
    %2 = vector.broadcast %cst_1 : bf16 to vector<1x1088xbf16>
    %c144 = arith.constant 144 : index
    %c0_2 = arith.constant 0 : index
    %3 = vector.load %arg4[%c144, %c0_2] : memref<289x1088xbf16, #tpu.memory_space<vmem>>, vector<1x1088xbf16>
    tpu.vector_store %arg4[%c144, %c0_2], %2 {strides = array<i32>} : memref<289x1088xbf16, #tpu.memory_space<vmem>>, vector<1x1088xbf16>,
    %cst_3 = arith.constant 1.000000e+00 : bf16
    %4 = vector.broadcast %cst_3 : bf16 to vector<1x1088xbf16>
    %c288 = arith.constant 288 : index
    %c0_4 = arith.constant 0 : index
    %5 = vector.load %arg4[%c288, %c0_4] : memref<289x1088xbf16, #tpu.memory_space<vmem>>, vector<1x1088xbf16>
    tpu.vector_store %arg4[%c288, %c0_4], %4 {strides = array<i32>} : memref<289x1088xbf16, #tpu.memory_space<vmem>>, vector<1x1088xbf16>,
    %cst_5 = arith.constant 0.000000e+00 : bf16
    %6 = vector.broadcast %cst_5 : bf16 to vector<8x128xbf16>
    %c0_6 = arith.constant 0 : index
    %c0_7 = arith.constant 0 : index
    %7 = vector.load %arg5[%c0_6, %c0_7] : memref<8x1344xbf16, #tpu.memory_space<vmem>>, vector<8x128xbf16>
    tpu.vector_store %arg5[%c0_6, %c0_7], %6 {strides = array<i32>} : memref<8x1344xbf16, #tpu.memory_space<vmem>>, vector<8x128xbf16>,
    %c0_8 = arith.constant 0 : index
    %c1216 = arith.constant 1216 : index
    %8 = vector.load %arg5[%c0_8, %c1216] : memref<8x1344xbf16, #tpu.memory_space<vmem>>, vector<8x128xbf16>
    tpu.vector_store %arg5[%c0_8, %c1216], %6 {strides = array<i32>} : memref<8x1344xbf16, #tpu.memory_space<vmem>>, vector<8x128xbf16>,
    %cst_9 = arith.constant 0.000000e+00 : bf16
    %9 = vector.broadcast %cst_9 : bf16 to vector<8x128xbf16>
    %c0_10 = arith.constant 0 : index
    %c0_11 = arith.constant 0 : index
    %10 = vector.load %arg6[%c0_10, %c0_11] : memref<8x1344xbf16, #tpu.memory_space<vmem>>, vector<8x128xbf16>
    tpu.vector_store %arg6[%c0_10, %c0_11], %9 {strides = array<i32>} : memref<8x1344xbf16, #tpu.memory_space<vmem>>, vector<8x128xbf16>,
    %c0_12 = arith.constant 0 : index
    %c1216_13 = arith.constant 1216 : index
    %11 = vector.load %arg6[%c0_12, %c1216_13] : memref<8x1344xbf16, #tpu.memory_space<vmem>>, vector<8x128xbf16>
    tpu.vector_store %arg6[%c0_12, %c1216_13], %9 {strides = array<i32>} : memref<8x1344xbf16, #tpu.memory_space<vmem>>, vector<8x128xbf16>,
    %cst_14 = arith.constant 0.000000e+00 : bf16
    %12 = vector.broadcast %cst_14 : bf16 to vector<16x128xbf16>
    %c0_15 = arith.constant 0 : index
    %c0_16 = arith.constant 0 : index
    %13 = vector.load %arg7[%c0_15, %c0_16] : memref<16x544xbf16, #tpu.memory_space<vmem>>, vector<16x128xbf16>
    tpu.vector_store %arg7[%c0_15, %c0_16], %12 {strides = array<i32>} : memref<16x544xbf16, #tpu.memory_space<vmem>>, vector<16x128xbf16>,
    %c0_17 = arith.constant 0 : index
    %c416 = arith.constant 416 : index
    %14 = vector.load %arg7[%c0_17, %c416] : memref<16x544xbf16, #tpu.memory_space<vmem>>, vector<16x128xbf16>
    tpu.vector_store %arg7[%c0_17, %c416], %12 {strides = array<i32>} : memref<16x544xbf16, #tpu.memory_space<vmem>>, vector<16x128xbf16>,
    %cst_18 = arith.constant 0.000000e+00 : bf16
    %15 = vector.broadcast %cst_18 : bf16 to vector<16x128xbf16>
    %c0_19 = arith.constant 0 : index
    %c0_20 = arith.constant 0 : index
    %16 = vector.load %arg8[%c0_19, %c0_20] : memref<16x544xbf16, #tpu.memory_space<vmem>>, vector<16x128xbf16>
    tpu.vector_store %arg8[%c0_19, %c0_20], %15 {strides = array<i32>} : memref<16x544xbf16, #tpu.memory_space<vmem>>, vector<16x128xbf16>,
    %c0_21 = arith.constant 0 : index
    %c416_22 = arith.constant 416 : index
    %17 = vector.load %arg8[%c0_21, %c416_22] : memref<16x544xbf16, #tpu.memory_space<vmem>>, vector<16x128xbf16>
    tpu.vector_store %arg8[%c0_21, %c416_22], %15 {strides = array<i32>} : memref<16x544xbf16, #tpu.memory_space<vmem>>, vector<16x128xbf16>,
    %cst_23 = arith.constant 0.000000e+00 : bf16
    %18 = vector.broadcast %cst_23 : bf16 to vector<16x128xbf16>
    %c0_24 = arith.constant 0 : index
    %c0_25 = arith.constant 0 : index
    %19 = vector.load %arg9[%c0_24, %c0_25] : memref<16x336xbf16, #tpu.memory_space<vmem>>, vector<16x128xbf16>
    tpu.vector_store %arg9[%c0_24, %c0_25], %18 {strides = array<i32>} : memref<16x336xbf16, #tpu.memory_space<vmem>>, vector<16x128xbf16>,
    %c0_26 = arith.constant 0 : index
    %c208 = arith.constant 208 : index
    %20 = vector.load %arg9[%c0_26, %c208] : memref<16x336xbf16, #tpu.memory_space<vmem>>, vector<16x128xbf16>
    tpu.vector_store %arg9[%c0_26, %c208], %18 {strides = array<i32>} : memref<16x336xbf16, #tpu.memory_space<vmem>>, vector<16x128xbf16>,
    %cst_27 = arith.constant 0.000000e+00 : bf16
    %21 = vector.broadcast %cst_27 : bf16 to vector<16x128xbf16>
    %c0_28 = arith.constant 0 : index
    %c0_29 = arith.constant 0 : index
    %22 = vector.load %arg10[%c0_28, %c0_29] : memref<16x336xbf16, #tpu.memory_space<vmem>>, vector<16x128xbf16>
    tpu.vector_store %arg10[%c0_28, %c0_29], %21 {strides = array<i32>} : memref<16x336xbf16, #tpu.memory_space<vmem>>, vector<16x128xbf16>,
    %c0_30 = arith.constant 0 : index
    %c208_31 = arith.constant 208 : index
    %23 = vector.load %arg10[%c0_30, %c208_31] : memref<16x336xbf16, #tpu.memory_space<vmem>>, vector<16x128xbf16>
    tpu.vector_store %arg10[%c0_30, %c208_31], %21 {strides = array<i32>} : memref<16x336xbf16, #tpu.memory_space<vmem>>, vector<16x128xbf16>,
    %cst_32 = arith.constant 0.000000e+00 : bf16
    %24 = vector.broadcast %cst_32 : bf16 to vector<32x128xbf16>
    %c0_33 = arith.constant 0 : index
    %c0_34 = arith.constant 0 : index
    %25 = vector.load %arg11[%c0_33, %c0_34] : memref<32x280xbf16, #tpu.memory_space<vmem>>, vector<32x128xbf16>
    tpu.vector_store %arg11[%c0_33, %c0_34], %24 {strides = array<i32>} : memref<32x280xbf16, #tpu.memory_space<vmem>>, vector<32x128xbf16>,
    %c0_35 = arith.constant 0 : index
    %c152 = arith.constant 152 : index
    %26 = vector.load %arg11[%c0_35, %c152] : memref<32x280xbf16, #tpu.memory_space<vmem>>, vector<32x128xbf16>
    tpu.vector_store %arg11[%c0_35, %c152], %24 {strides = array<i32>} : memref<32x280xbf16, #tpu.memory_space<vmem>>, vector<32x128xbf16>,
    %cst_36 = arith.constant 0.000000e+00 : bf16
    %27 = vector.broadcast %cst_36 : bf16 to vector<32x128xbf16>
    %c0_37 = arith.constant 0 : index
    %c0_38 = arith.constant 0 : index
    %28 = vector.load %arg12[%c0_37, %c0_38] : memref<32x280xbf16, #tpu.memory_space<vmem>>, vector<32x128xbf16>
    tpu.vector_store %arg12[%c0_37, %c0_38], %27 {strides = array<i32>} : memref<32x280xbf16, #tpu.memory_space<vmem>>, vector<32x128xbf16>,
    %c0_39 = arith.constant 0 : index
    %c152_40 = arith.constant 152 : index
    %29 = vector.load %arg12[%c0_39, %c152_40] : memref<32x280xbf16, #tpu.memory_space<vmem>>, vector<32x128xbf16>
    tpu.vector_store %arg12[%c0_39, %c152_40], %27 {strides = array<i32>} : memref<32x280xbf16, #tpu.memory_space<vmem>>, vector<32x128xbf16>,
    %cst_41 = arith.constant 0.000000e+00 : bf16
    %30 = vector.broadcast %cst_41 : bf16 to vector<32x128xbf16>
    %c0_42 = arith.constant 0 : index
    %c0_43 = arith.constant 0 : index
    %31 = vector.load %arg13[%c0_42, %c0_43] : memref<32x264xbf16, #tpu.memory_space<vmem>>, vector<32x128xbf16>
    tpu.vector_store %arg13[%c0_42, %c0_43], %30 {strides = array<i32>} : memref<32x264xbf16, #tpu.memory_space<vmem>>, vector<32x128xbf16>,
    %c0_44 = arith.constant 0 : index
    %c136 = arith.constant 136 : index
    %32 = vector.load %arg13[%c0_44, %c136] : memref<32x264xbf16, #tpu.memory_space<vmem>>, vector<32x128xbf16>
    tpu.vector_store %arg13[%c0_44, %c136], %30 {strides = array<i32>} : memref<32x264xbf16, #tpu.memory_space<vmem>>, vector<32x128xbf16>,
    %cst_45 = arith.constant 0.000000e+00 : bf16
    %33 = vector.broadcast %cst_45 : bf16 to vector<32x128xbf16>
    %c0_46 = arith.constant 0 : index
    %c0_47 = arith.constant 0 : index
    %34 = vector.load %arg14[%c0_46, %c0_47] : memref<32x264xbf16, #tpu.memory_space<vmem>>, vector<32x128xbf16>
    tpu.vector_store %arg14[%c0_46, %c0_47], %33 {strides = array<i32>} : memref<32x264xbf16, #tpu.memory_space<vmem>>, vector<32x128xbf16>,
    %c0_48 = arith.constant 0 : index
    %c136_49 = arith.constant 136 : index
    %35 = vector.load %arg14[%c0_48, %c136_49] : memref<32x264xbf16, #tpu.memory_space<vmem>>, vector<32x128xbf16>
    tpu.vector_store %arg14[%c0_48, %c136_49], %33 {strides = array<i32>} : memref<32x264xbf16, #tpu.memory_space<vmem>>, vector<32x128xbf16>,
    %c0_50 = arith.constant 0 : index
    %c93 = arith.constant 93 : index
    %36 = vector.load %arg0[%c0_50, %c93] : memref<3x1344xbf16, #tpu.memory_space<vmem>>, vector<3x1088xbf16>
    %c0_51 = arith.constant 0 : index
    %c0_52 = arith.constant 0 : index
    %37 = vector.load %arg4[%c0_51, %c0_52] : memref<289x1088xbf16, #tpu.memory_space<vmem>>, vector<3x1088xbf16>
    tpu.vector_store %arg4[%c0_51, %c0_52], %36 {strides = array<i32>} : memref<289x1088xbf16, #tpu.memory_space<vmem>>, vector<3x1088xbf16>,
    %c0_53 = arith.constant 0 : index
    %c94 = arith.constant 94 : index
    %38 = vector.load %arg0[%c0_53, %c94] : memref<3x1344xbf16, #tpu.memory_space<vmem>>, vector<3x1088xbf16>
    %c16 = arith.constant 16 : index
    %c0_54 = arith.constant 0 : index
    %39 = vector.load %arg4[%c16, %c0_54] : memref<289x1088xbf16, #tpu.memory_space<vmem>>, vector<3x1088xbf16>
    tpu.vector_store %arg4[%c16, %c0_54], %38 {strides = array<i32>} : memref<289x1088xbf16, #tpu.memory_space<vmem>>, vector<3x1088xbf16>,
    %c0_55 = arith.constant 0 : index
    %c95 = arith.constant 95 : index
    %40 = vector.load %arg0[%c0_55, %c95] : memref<3x1344xbf16, #tpu.memory_space<vmem>>, vector<3x1088xbf16>
    %c32 = arith.constant 32 : index
    %c0_56 = arith.constant 0 : index
    %41 = vector.load %arg4[%c32, %c0_56] : memref<289x1088xbf16, #tpu.memory_space<vmem>>, vector<3x1088xbf16>
    tpu.vector_store %arg4[%c32, %c0_56], %40 {strides = array<i32>} : memref<289x1088xbf16, #tpu.memory_space<vmem>>, vector<3x1088xbf16>,
    %c0_57 = arith.constant 0 : index
    %c127 = arith.constant 127 : index
    %42 = vector.load %arg0[%c0_57, %c127] : memref<3x1344xbf16, #tpu.memory_space<vmem>>, vector<3x1088xbf16>
    %c48 = arith.constant 48 : index
    %c0_58 = arith.constant 0 : index
    %43 = vector.load %arg4[%c48, %c0_58] : memref<289x1088xbf16, #tpu.memory_space<vmem>>, vector<3x1088xbf16>
    tpu.vector_store %arg4[%c48, %c0_58], %42 {strides = array<i32>} : memref<289x1088xbf16, #tpu.memory_space<vmem>>, vector<3x1088xbf16>,
    %c0_59 = arith.constant 0 : index
    %c128 = arith.constant 128 : index
    %44 = vector.load %arg0[%c0_59, %c128] : memref<3x1344xbf16, #tpu.memory_space<vmem>>, vector<3x1088xbf16>
    %c64 = arith.constant 64 : index
    %c0_60 = arith.constant 0 : index
    %45 = vector.load %arg4[%c64, %c0_60] : memref<289x1088xbf16, #tpu.memory_space<vmem>>, vector<3x1088xbf16>
    tpu.vector_store %arg4[%c64, %c0_60], %44 {strides = array<i32>} : memref<289x1088xbf16, #tpu.memory_space<vmem>>, vector<3x1088xbf16>,
    %c0_61 = arith.constant 0 : index
    %c129 = arith.constant 129 : index
    %46 = vector.load %arg0[%c0_61, %c129] : memref<3x1344xbf16, #tpu.memory_space<vmem>>, vector<3x1088xbf16>
    %c80 = arith.constant 80 : index
    %c0_62 = arith.constant 0 : index
    %47 = vector.load %arg4[%c80, %c0_62] : memref<289x1088xbf16, #tpu.memory_space<vmem>>, vector<3x1088xbf16>
    tpu.vector_store %arg4[%c80, %c0_62], %46 {strides = array<i32>} : memref<289x1088xbf16, #tpu.memory_space<vmem>>, vector<3x1088xbf16>,
    %c0_63 = arith.constant 0 : index
    %c161 = arith.constant 161 : index
    %48 = vector.load %arg0[%c0_63, %c161] : memref<3x1344xbf16, #tpu.memory_space<vmem>>, vector<3x1088xbf16>
    %c96 = arith.constant 96 : index
    %c0_64 = arith.constant 0 : index
    %49 = vector.load %arg4[%c96, %c0_64] : memref<289x1088xbf16, #tpu.memory_space<vmem>>, vector<3x1088xbf16>
    tpu.vector_store %arg4[%c96, %c0_64], %48 {strides = array<i32>} : memref<289x1088xbf16, #tpu.memory_space<vmem>>, vector<3x1088xbf16>,
    %c0_65 = arith.constant 0 : index
    %c162 = arith.constant 162 : index
    %50 = vector.load %arg0[%c0_65, %c162] : memref<3x1344xbf16, #tpu.memory_space<vmem>>, vector<3x1088xbf16>
    %c112 = arith.constant 112 : index
    %c0_66 = arith.constant 0 : index
    %51 = vector.load %arg4[%c112, %c0_66] : memref<289x1088xbf16, #tpu.memory_space<vmem>>, vector<3x1088xbf16>
    tpu.vector_store %arg4[%c112, %c0_66], %50 {strides = array<i32>} : memref<289x1088xbf16, #tpu.memory_space<vmem>>, vector<3x1088xbf16>,
    %c0_67 = arith.constant 0 : index
    %c163 = arith.constant 163 : index
    %52 = vector.load %arg0[%c0_67, %c163] : memref<3x1344xbf16, #tpu.memory_space<vmem>>, vector<3x1088xbf16>
    %c128_68 = arith.constant 128 : index
    %c0_69 = arith.constant 0 : index
    %53 = vector.load %arg4[%c128_68, %c0_69] : memref<289x1088xbf16, #tpu.memory_space<vmem>>, vector<3x1088xbf16>
    tpu.vector_store %arg4[%c128_68, %c0_69], %52 {strides = array<i32>} : memref<289x1088xbf16, #tpu.memory_space<vmem>>, vector<3x1088xbf16>,
    %c0_70 = arith.constant 0 : index
    %c0_71 = arith.constant 0 : index
    %54 = vector.load %arg1[%c0_70, %c0_71] : memref<1904x289xbf16, #tpu.memory_space<vmem>>, vector<8x145xbf16>
    %c0_72 = arith.constant 0 : index
    %c0_73 = arith.constant 0 : index
    %55 = vector.load %arg4[%c0_72, %c0_73] : memref<289x1088xbf16, #tpu.memory_space<vmem>>, vector<145x1088xbf16>
    %cst_74 = arith.constant dense<0.000000e+00> : vector<8x1088xf32>
    %56 = tpu.matmul %54, %55, %cst_74 {dimension_numbers = #tpu.dot_dimension_numbers<[1], [0], [0], [1], [0, 0, 1, 1], [], []>} : vector<8x145xbf16>, vector<145x1088xbf16>, vector<8x1088xf32> -> vector<8x1088xf32>
    %c0_75 = arith.constant 0 : index
    %c0_76 = arith.constant 0 : index
    %57 = vector.load %arg2[%c0_75, %c0_76] : memref<11x1088xf32, #tpu.memory_space<vmem>>, vector<1x1088xf32>
    %cst_77 = arith.constant 0.000000e+00 : f32
    %58 = vector.broadcast %cst_77 : f32 to vector<8x1088xf32>
    %59 = arith.maximumf %56, %58 : vector<8x1088xf32>
    %60 = vector.broadcast %57 : vector<1x1088xf32> to vector<8x1088xf32>
    %61 = arith.mulf %59, %60 : vector<8x1088xf32>
    %62 = arith.truncf %61 : vector<8x1088xf32> to vector<8x1088xbf16>
    %c0_78 = arith.constant 0 : index
    %c128_79 = arith.constant 128 : index
    %63 = vector.load %arg5[%c0_78, %c128_79] : memref<8x1344xbf16, #tpu.memory_space<vmem>>, vector<8x1088xbf16>
    tpu.vector_store %arg5[%c0_78, %c128_79], %62 {strides = array<i32>} : memref<8x1344xbf16, #tpu.memory_space<vmem>>, vector<8x1088xbf16>,
    %c0_80 = arith.constant 0 : index
    %c93_81 = arith.constant 93 : index
    %64 = vector.load %arg5[%c0_80, %c93_81] : memref<8x1344xbf16, #tpu.memory_space<vmem>>, vector<8x1088xbf16>
    %c0_82 = arith.constant 0 : index
    %c0_83 = arith.constant 0 : index
    %65 = vector.load %arg4[%c0_82, %c0_83] : memref<289x1088xbf16, #tpu.memory_space<vmem>>, vector<8x1088xbf16>
    tpu.vector_store %arg4[%c0_82, %c0_83], %64 {strides = array<i32>} : memref<289x1088xbf16, #tpu.memory_space<vmem>>, vector<8x1088xbf16>,
    %c0_84 = arith.constant 0 : index
    %c94_85 = arith.constant 94 : index
    %66 = vector.load %arg5[%c0_84, %c94_85] : memref<8x1344xbf16, #tpu.memory_space<vmem>>, vector<8x1088xbf16>
    %c16_86 = arith.constant 16 : index
    %c0_87 = arith.constant 0 : index
    %67 = vector.load %arg4[%c16_86, %c0_87] : memref<289x1088xbf16, #tpu.memory_space<vmem>>, vector<8x1088xbf16>
    tpu.vector_store %arg4[%c16_86, %c0_87], %66 {strides = array<i32>} : memref<289x1088xbf16, #tpu.memory_space<vmem>>, vector<8x1088xbf16>,
    %c0_88 = arith.constant 0 : index
    %c95_89 = arith.constant 95 : index
    %68 = vector.load %arg5[%c0_88, %c95_89] : memref<8x1344xbf16, #tpu.memory_space<vmem>>, vector<8x1088xbf16>
    %c32_90 = arith.constant 32 : index
    %c0_91 = arith.constant 0 : index
    %69 = vector.load %arg4[%c32_90, %c0_91] : memref<289x1088xbf16, #tpu.memory_space<vmem>>, vector<8x1088xbf16>
    tpu.vector_store %arg4[%c32_90, %c0_91], %68 {strides = array<i32>} : memref<289x1088xbf16, #tpu.memory_space<vmem>>, vector<8x1088xbf16>,
    %c0_92 = arith.constant 0 : index
    %c127_93 = arith.constant 127 : index
    %70 = vector.load %arg5[%c0_92, %c127_93] : memref<8x1344xbf16, #tpu.memory_space<vmem>>, vector<8x1088xbf16>
    %c48_94 = arith.constant 48 : index
    %c0_95 = arith.constant 0 : index
    %71 = vector.load %arg4[%c48_94, %c0_95] : memref<289x1088xbf16, #tpu.memory_space<vmem>>, vector<8x1088xbf16>
    tpu.vector_store %arg4[%c48_94, %c0_95], %70 {strides = array<i32>} : memref<289x1088xbf16, #tpu.memory_space<vmem>>, vector<8x1088xbf16>,
    %c0_96 = arith.constant 0 : index
    %c128_97 = arith.constant 128 : index
    %72 = vector.load %arg5[%c0_96, %c128_97] : memref<8x1344xbf16, #tpu.memory_space<vmem>>, vector<8x1088xbf16>
    %c64_98 = arith.constant 64 : index
    %c0_99 = arith.constant 0 : index
    %73 = vector.load %arg4[%c64_98, %c0_99] : memref<289x1088xbf16, #tpu.memory_space<vmem>>, vector<8x1088xbf16>
    tpu.vector_store %arg4[%c64_98, %c0_99], %72 {strides = array<i32>} : memref<289x1088xbf16, #tpu.memory_space<vmem>>, vector<8x1088xbf16>,
    %c0_100 = arith.constant 0 : index
    %c129_101 = arith.constant 129 : index
    %74 = vector.load %arg5[%c0_100, %c129_101] : memref<8x1344xbf16, #tpu.memory_space<vmem>>, vector<8x1088xbf16>
    %c80_102 = arith.constant 80 : index
    %c0_103 = arith.constant 0 : index
    %75 = vector.load %arg4[%c80_102, %c0_103] : memref<289x1088xbf16, #tpu.memory_space<vmem>>, vector<8x1088xbf16>
    tpu.vector_store %arg4[%c80_102, %c0_103], %74 {strides = array<i32>} : memref<289x1088xbf16, #tpu.memory_space<vmem>>, vector<8x1088xbf16>,
    %c0_104 = arith.constant 0 : index
    %c161_105 = arith.constant 161 : index
    %76 = vector.load %arg5[%c0_104, %c161_105] : memref<8x1344xbf16, #tpu.memory_space<vmem>>, vector<8x1088xbf16>
    %c96_106 = arith.constant 96 : index
    %c0_107 = arith.constant 0 : index
    %77 = vector.load %arg4[%c96_106, %c0_107] : memref<289x1088xbf16, #tpu.memory_space<vmem>>, vector<8x1088xbf16>
    tpu.vector_store %arg4[%c96_106, %c0_107], %76 {strides = array<i32>} : memref<289x1088xbf16, #tpu.memory_space<vmem>>, vector<8x1088xbf16>,
    %c0_108 = arith.constant 0 : index
    %c162_109 = arith.constant 162 : index
    %78 = vector.load %arg5[%c0_108, %c162_109] : memref<8x1344xbf16, #tpu.memory_space<vmem>>, vector<8x1088xbf16>
    %c112_110 = arith.constant 112 : index
    %c0_111 = arith.constant 0 : index
    %79 = vector.load %arg4[%c112_110, %c0_111] : memref<289x1088xbf16, #tpu.memory_space<vmem>>, vector<8x1088xbf16>
    tpu.vector_store %arg4[%c112_110, %c0_111], %78 {strides = array<i32>} : memref<289x1088xbf16, #tpu.memory_space<vmem>>, vector<8x1088xbf16>,
    %c0_112 = arith.constant 0 : index
    %c163_113 = arith.constant 163 : index
    %80 = vector.load %arg5[%c0_112, %c163_113] : memref<8x1344xbf16, #tpu.memory_space<vmem>>, vector<8x1088xbf16>
    %c128_114 = arith.constant 128 : index
    %c0_115 = arith.constant 0 : index
    %81 = vector.load %arg4[%c128_114, %c0_115] : memref<289x1088xbf16, #tpu.memory_space<vmem>>, vector<8x1088xbf16>
    tpu.vector_store %arg4[%c128_114, %c0_115], %80 {strides = array<i32>} : memref<289x1088xbf16, #tpu.memory_space<vmem>>, vector<8x1088xbf16>,
    %c16_116 = arith.constant 16 : index
    %c0_117 = arith.constant 0 : index
    %82 = vector.load %arg1[%c16_116, %c0_117] : memref<1904x289xbf16, #tpu.memory_space<vmem>>, vector<8x145xbf16>
    %c0_118 = arith.constant 0 : index
    %c0_119 = arith.constant 0 : index
    %83 = vector.load %arg4[%c0_118, %c0_119] : memref<289x1088xbf16, #tpu.memory_space<vmem>>, vector<145x1088xbf16>
    %cst_120 = arith.constant dense<0.000000e+00> : vector<8x1088xf32>
    %84 = tpu.matmul %82, %83, %cst_120 {dimension_numbers = #tpu.dot_dimension_numbers<[1], [0], [0], [1], [0, 0, 1, 1], [], []>} : vector<8x145xbf16>, vector<145x1088xbf16>, vector<8x1088xf32> -> vector<8x1088xf32>
    %c0_121 = arith.constant 0 : index
    %c0_122 = arith.constant 0 : index
    %85 = vector.load %arg2[%c0_121, %c0_122] : memref<11x1088xf32, #tpu.memory_space<vmem>>, vector<1x1088xf32>
    %cst_123 = arith.constant 0.000000e+00 : f32
    %86 = vector.broadcast %cst_123 : f32 to vector<8x1088xf32>
    %87 = arith.maximumf %84, %86 : vector<8x1088xf32>
    %88 = vector.broadcast %85 : vector<1x1088xf32> to vector<8x1088xf32>
    %89 = arith.mulf %87, %88 : vector<8x1088xf32>
    %90 = arith.truncf %89 : vector<8x1088xf32> to vector<8x1088xbf16>
    %c0_124 = arith.constant 0 : index
    %c128_125 = arith.constant 128 : index
    %91 = vector.load %arg6[%c0_124, %c128_125] : memref<8x1344xbf16, #tpu.memory_space<vmem>>, vector<8x1088xbf16>
    tpu.vector_store %arg6[%c0_124, %c128_125], %90 {strides = array<i32>} : memref<8x1344xbf16, #tpu.memory_space<vmem>>, vector<8x1088xbf16>,
    %c0_126 = arith.constant 0 : index
    %c128_127 = arith.constant 128 : index
    %92 = vector.load %arg6[%c0_126, %c128_127] : memref<8x1344xbf16, #tpu.memory_space<vmem>>, vector<8x1088xbf16>
    %c0_128 = arith.constant 0 : index
    %c129_129 = arith.constant 129 : index
    %93 = vector.load %arg6[%c0_128, %c129_129] : memref<8x1344xbf16, #tpu.memory_space<vmem>>, vector<8x1088xbf16>
    %c0_130 = arith.constant 0 : index
    %c162_131 = arith.constant 162 : index
    %94 = vector.load %arg6[%c0_130, %c162_131] : memref<8x1344xbf16, #tpu.memory_space<vmem>>, vector<8x1088xbf16>
    %c0_132 = arith.constant 0 : index
    %c163_133 = arith.constant 163 : index
    %95 = vector.load %arg6[%c0_132, %c163_133] : memref<8x1344xbf16, #tpu.memory_space<vmem>>, vector<8x1088xbf16>
    %96 = arith.maximumf %92, %93 : vector<8x1088xbf16>
    %97 = arith.maximumf %94, %95 : vector<8x1088xbf16>
    %98 = arith.maximumf %96, %97 : vector<8x1088xbf16>
    %c304 = arith.constant 304 : index
    %c0_134 = arith.constant 0 : index
    %99 = vector.load %arg1[%c304, %c0_134] : memref<1904x289xbf16, #tpu.memory_space<vmem>>, vector<1088x288xbf16>
    %cst_135 = arith.constant dense<0.000000e+00> : vector<8x288xf32>
    %100 = tpu.matmul %98, %99, %cst_135 {dimension_numbers = #tpu.dot_dimension_numbers<[1], [0], [0], [1], [0, 0, 1, 1], [], []>} : vector<8x1088xbf16>, vector<1088x288xbf16>, vector<8x288xf32> -> vector<8x288xf32>
    %101 = arith.truncf %100 : vector<8x288xf32> to vector<8x288xbf16>
    %c0_136 = arith.constant 0 : index
    %c128_137 = arith.constant 128 : index
    %102 = vector.load %arg7[%c0_136, %c128_137] : memref<16x544xbf16, #tpu.memory_space<vmem>>, vector<8x288xbf16>
    tpu.vector_store %arg7[%c0_136, %c128_137], %101 {strides = array<i32>} : memref<16x544xbf16, #tpu.memory_space<vmem>>, vector<8x288xbf16>,
    %c0_138 = arith.constant 0 : index
    %c109 = arith.constant 109 : index
    %103 = vector.load %arg7[%c0_138, %c109] : memref<16x544xbf16, #tpu.memory_space<vmem>>, vector<8x288xbf16>
    %c0_139 = arith.constant 0 : index
    %c0_140 = arith.constant 0 : index
    %104 = vector.load %arg4[%c0_139, %c0_140] : memref<289x1088xbf16, #tpu.memory_space<vmem>>, vector<8x288xbf16>
    tpu.vector_store %arg4[%c0_139, %c0_140], %103 {strides = array<i32>} : memref<289x1088xbf16, #tpu.memory_space<vmem>>, vector<8x288xbf16>,
    %c0_141 = arith.constant 0 : index
    %c110 = arith.constant 110 : index
    %105 = vector.load %arg7[%c0_141, %c110] : memref<16x544xbf16, #tpu.memory_space<vmem>>, vector<8x288xbf16>
    %c16_142 = arith.constant 16 : index
    %c0_143 = arith.constant 0 : index
    %106 = vector.load %arg4[%c16_142, %c0_143] : memref<289x1088xbf16, #tpu.memory_space<vmem>>, vector<8x288xbf16>
    tpu.vector_store %arg4[%c16_142, %c0_143], %105 {strides = array<i32>} : memref<289x1088xbf16, #tpu.memory_space<vmem>>, vector<8x288xbf16>,
    %c0_144 = arith.constant 0 : index
    %c111 = arith.constant 111 : index
    %107 = vector.load %arg7[%c0_144, %c111] : memref<16x544xbf16, #tpu.memory_space<vmem>>, vector<8x288xbf16>
    %c32_145 = arith.constant 32 : index
    %c0_146 = arith.constant 0 : index
    %108 = vector.load %arg4[%c32_145, %c0_146] : memref<289x1088xbf16, #tpu.memory_space<vmem>>, vector<8x288xbf16>
    tpu.vector_store %arg4[%c32_145, %c0_146], %107 {strides = array<i32>} : memref<289x1088xbf16, #tpu.memory_space<vmem>>, vector<8x288xbf16>,
    %c0_147 = arith.constant 0 : index
    %c127_148 = arith.constant 127 : index
    %109 = vector.load %arg7[%c0_147, %c127_148] : memref<16x544xbf16, #tpu.memory_space<vmem>>, vector<8x288xbf16>
    %c48_149 = arith.constant 48 : index
    %c0_150 = arith.constant 0 : index
    %110 = vector.load %arg4[%c48_149, %c0_150] : memref<289x1088xbf16, #tpu.memory_space<vmem>>, vector<8x288xbf16>
    tpu.vector_store %arg4[%c48_149, %c0_150], %109 {strides = array<i32>} : memref<289x1088xbf16, #tpu.memory_space<vmem>>, vector<8x288xbf16>,
    %c0_151 = arith.constant 0 : index
    %c128_152 = arith.constant 128 : index
    %111 = vector.load %arg7[%c0_151, %c128_152] : memref<16x544xbf16, #tpu.memory_space<vmem>>, vector<8x288xbf16>
    %c64_153 = arith.constant 64 : index
    %c0_154 = arith.constant 0 : index
    %112 = vector.load %arg4[%c64_153, %c0_154] : memref<289x1088xbf16, #tpu.memory_space<vmem>>, vector<8x288xbf16>
    tpu.vector_store %arg4[%c64_153, %c0_154], %111 {strides = array<i32>} : memref<289x1088xbf16, #tpu.memory_space<vmem>>, vector<8x288xbf16>,
    %c0_155 = arith.constant 0 : index
    %c129_156 = arith.constant 129 : index
    %113 = vector.load %arg7[%c0_155, %c129_156] : memref<16x544xbf16, #tpu.memory_space<vmem>>, vector<8x288xbf16>
    %c80_157 = arith.constant 80 : index
    %c0_158 = arith.constant 0 : index
    %114 = vector.load %arg4[%c80_157, %c0_158] : memref<289x1088xbf16, #tpu.memory_space<vmem>>, vector<8x288xbf16>
    tpu.vector_store %arg4[%c80_157, %c0_158], %113 {strides = array<i32>} : memref<289x1088xbf16, #tpu.memory_space<vmem>>, vector<8x288xbf16>,
    %c0_159 = arith.constant 0 : index
    %c145 = arith.constant 145 : index
    %115 = vector.load %arg7[%c0_159, %c145] : memref<16x544xbf16, #tpu.memory_space<vmem>>, vector<8x288xbf16>
    %c96_160 = arith.constant 96 : index
    %c0_161 = arith.constant 0 : index
    %116 = vector.load %arg4[%c96_160, %c0_161] : memref<289x1088xbf16, #tpu.memory_space<vmem>>, vector<8x288xbf16>
    tpu.vector_store %arg4[%c96_160, %c0_161], %115 {strides = array<i32>} : memref<289x1088xbf16, #tpu.memory_space<vmem>>, vector<8x288xbf16>,
    %c0_162 = arith.constant 0 : index
    %c146 = arith.constant 146 : index
    %117 = vector.load %arg7[%c0_162, %c146] : memref<16x544xbf16, #tpu.memory_space<vmem>>, vector<8x288xbf16>
    %c112_163 = arith.constant 112 : index
    %c0_164 = arith.constant 0 : index
    %118 = vector.load %arg4[%c112_163, %c0_164] : memref<289x1088xbf16, #tpu.memory_space<vmem>>, vector<8x288xbf16>
    tpu.vector_store %arg4[%c112_163, %c0_164], %117 {strides = array<i32>} : memref<289x1088xbf16, #tpu.memory_space<vmem>>, vector<8x288xbf16>,
    %c0_165 = arith.constant 0 : index
    %c147 = arith.constant 147 : index
    %119 = vector.load %arg7[%c0_165, %c147] : memref<16x544xbf16, #tpu.memory_space<vmem>>, vector<8x288xbf16>
    %c128_166 = arith.constant 128 : index
    %c0_167 = arith.constant 0 : index
    %120 = vector.load %arg4[%c128_166, %c0_167] : memref<289x1088xbf16, #tpu.memory_space<vmem>>, vector<8x288xbf16>
    tpu.vector_store %arg4[%c128_166, %c0_167], %119 {strides = array<i32>} : memref<289x1088xbf16, #tpu.memory_space<vmem>>, vector<8x288xbf16>,
    %c32_168 = arith.constant 32 : index
    %c0_169 = arith.constant 0 : index
    %121 = vector.load %arg1[%c32_168, %c0_169] : memref<1904x289xbf16, #tpu.memory_space<vmem>>, vector<16x145xbf16>
    %c0_170 = arith.constant 0 : index
    %c0_171 = arith.constant 0 : index
    %122 = vector.load %arg4[%c0_170, %c0_171] : memref<289x1088xbf16, #tpu.memory_space<vmem>>, vector<145x288xbf16>
    %cst_172 = arith.constant dense<0.000000e+00> : vector<16x288xf32>
    %123 = tpu.matmul %121, %122, %cst_172 {dimension_numbers = #tpu.dot_dimension_numbers<[1], [0], [0], [1], [0, 0, 1, 1], [], []>} : vector<16x145xbf16>, vector<145x288xbf16>, vector<16x288xf32> -> vector<16x288xf32>
    %c1 = arith.constant 1 : index
    %c0_173 = arith.constant 0 : index
    %124 = vector.load %arg2[%c1, %c0_173] : memref<11x1088xf32, #tpu.memory_space<vmem>>, vector<1x288xf32>
    %cst_174 = arith.constant 0.000000e+00 : f32
    %125 = vector.broadcast %cst_174 : f32 to vector<16x288xf32>
    %126 = arith.maximumf %123, %125 : vector<16x288xf32>
    %127 = vector.broadcast %124 : vector<1x288xf32> to vector<16x288xf32>
    %128 = arith.mulf %126, %127 : vector<16x288xf32>
    %129 = arith.truncf %128 : vector<16x288xf32> to vector<16x288xbf16>
    %c0_175 = arith.constant 0 : index
    %c128_176 = arith.constant 128 : index
    %130 = vector.load %arg8[%c0_175, %c128_176] : memref<16x544xbf16, #tpu.memory_space<vmem>>, vector<16x288xbf16>
    tpu.vector_store %arg8[%c0_175, %c128_176], %129 {strides = array<i32>} : memref<16x544xbf16, #tpu.memory_space<vmem>>, vector<16x288xbf16>,
    %c0_177 = arith.constant 0 : index
    %c109_178 = arith.constant 109 : index
    %131 = vector.load %arg8[%c0_177, %c109_178] : memref<16x544xbf16, #tpu.memory_space<vmem>>, vector<16x288xbf16>
    %c0_179 = arith.constant 0 : index
    %c0_180 = arith.constant 0 : index
    %132 = vector.load %arg4[%c0_179, %c0_180] : memref<289x1088xbf16, #tpu.memory_space<vmem>>, vector<16x288xbf16>
    tpu.vector_store %arg4[%c0_179, %c0_180], %131 {strides = array<i32>} : memref<289x1088xbf16, #tpu.memory_space<vmem>>, vector<16x288xbf16>,
    %c0_181 = arith.constant 0 : index
    %c110_182 = arith.constant 110 : index
    %133 = vector.load %arg8[%c0_181, %c110_182] : memref<16x544xbf16, #tpu.memory_space<vmem>>, vector<16x288xbf16>
    %c16_183 = arith.constant 16 : index
    %c0_184 = arith.constant 0 : index
    %134 = vector.load %arg4[%c16_183, %c0_184] : memref<289x1088xbf16, #tpu.memory_space<vmem>>, vector<16x288xbf16>
    tpu.vector_store %arg4[%c16_183, %c0_184], %133 {strides = array<i32>} : memref<289x1088xbf16, #tpu.memory_space<vmem>>, vector<16x288xbf16>,
    %c0_185 = arith.constant 0 : index
    %c111_186 = arith.constant 111 : index
    %135 = vector.load %arg8[%c0_185, %c111_186] : memref<16x544xbf16, #tpu.memory_space<vmem>>, vector<16x288xbf16>
    %c32_187 = arith.constant 32 : index
    %c0_188 = arith.constant 0 : index
    %136 = vector.load %arg4[%c32_187, %c0_188] : memref<289x1088xbf16, #tpu.memory_space<vmem>>, vector<16x288xbf16>
    tpu.vector_store %arg4[%c32_187, %c0_188], %135 {strides = array<i32>} : memref<289x1088xbf16, #tpu.memory_space<vmem>>, vector<16x288xbf16>,
    %c0_189 = arith.constant 0 : index
    %c127_190 = arith.constant 127 : index
    %137 = vector.load %arg8[%c0_189, %c127_190] : memref<16x544xbf16, #tpu.memory_space<vmem>>, vector<16x288xbf16>
    %c48_191 = arith.constant 48 : index
    %c0_192 = arith.constant 0 : index
    %138 = vector.load %arg4[%c48_191, %c0_192] : memref<289x1088xbf16, #tpu.memory_space<vmem>>, vector<16x288xbf16>
    tpu.vector_store %arg4[%c48_191, %c0_192], %137 {strides = array<i32>} : memref<289x1088xbf16, #tpu.memory_space<vmem>>, vector<16x288xbf16>,
    %c0_193 = arith.constant 0 : index
    %c128_194 = arith.constant 128 : index
    %139 = vector.load %arg8[%c0_193, %c128_194] : memref<16x544xbf16, #tpu.memory_space<vmem>>, vector<16x288xbf16>
    %c64_195 = arith.constant 64 : index
    %c0_196 = arith.constant 0 : index
    %140 = vector.load %arg4[%c64_195, %c0_196] : memref<289x1088xbf16, #tpu.memory_space<vmem>>, vector<16x288xbf16>
    tpu.vector_store %arg4[%c64_195, %c0_196], %139 {strides = array<i32>} : memref<289x1088xbf16, #tpu.memory_space<vmem>>, vector<16x288xbf16>,
    %c0_197 = arith.constant 0 : index
    %c129_198 = arith.constant 129 : index
    %141 = vector.load %arg8[%c0_197, %c129_198] : memref<16x544xbf16, #tpu.memory_space<vmem>>, vector<16x288xbf16>
    %c80_199 = arith.constant 80 : index
    %c0_200 = arith.constant 0 : index
    %142 = vector.load %arg4[%c80_199, %c0_200] : memref<289x1088xbf16, #tpu.memory_space<vmem>>, vector<16x288xbf16>
    tpu.vector_store %arg4[%c80_199, %c0_200], %141 {strides = array<i32>} : memref<289x1088xbf16, #tpu.memory_space<vmem>>, vector<16x288xbf16>,
    %c0_201 = arith.constant 0 : index
    %c145_202 = arith.constant 145 : index
    %143 = vector.load %arg8[%c0_201, %c145_202] : memref<16x544xbf16, #tpu.memory_space<vmem>>, vector<16x288xbf16>
    %c96_203 = arith.constant 96 : index
    %c0_204 = arith.constant 0 : index
    %144 = vector.load %arg4[%c96_203, %c0_204] : memref<289x1088xbf16, #tpu.memory_space<vmem>>, vector<16x288xbf16>
    tpu.vector_store %arg4[%c96_203, %c0_204], %143 {strides = array<i32>} : memref<289x1088xbf16, #tpu.memory_space<vmem>>, vector<16x288xbf16>,
    %c0_205 = arith.constant 0 : index
    %c146_206 = arith.constant 146 : index
    %145 = vector.load %arg8[%c0_205, %c146_206] : memref<16x544xbf16, #tpu.memory_space<vmem>>, vector<16x288xbf16>
    %c112_207 = arith.constant 112 : index
    %c0_208 = arith.constant 0 : index
    %146 = vector.load %arg4[%c112_207, %c0_208] : memref<289x1088xbf16, #tpu.memory_space<vmem>>, vector<16x288xbf16>
    tpu.vector_store %arg4[%c112_207, %c0_208], %145 {strides = array<i32>} : memref<289x1088xbf16, #tpu.memory_space<vmem>>, vector<16x288xbf16>,
    %c0_209 = arith.constant 0 : index
    %c147_210 = arith.constant 147 : index
    %147 = vector.load %arg8[%c0_209, %c147_210] : memref<16x544xbf16, #tpu.memory_space<vmem>>, vector<16x288xbf16>
    %c128_211 = arith.constant 128 : index
    %c0_212 = arith.constant 0 : index
    %148 = vector.load %arg4[%c128_211, %c0_212] : memref<289x1088xbf16, #tpu.memory_space<vmem>>, vector<16x288xbf16>
    tpu.vector_store %arg4[%c128_211, %c0_212], %147 {strides = array<i32>} : memref<289x1088xbf16, #tpu.memory_space<vmem>>, vector<16x288xbf16>,
    %c48_213 = arith.constant 48 : index
    %c0_214 = arith.constant 0 : index
    %149 = vector.load %arg1[%c48_213, %c0_214] : memref<1904x289xbf16, #tpu.memory_space<vmem>>, vector<16x145xbf16>
    %c0_215 = arith.constant 0 : index
    %c0_216 = arith.constant 0 : index
    %150 = vector.load %arg4[%c0_215, %c0_216] : memref<289x1088xbf16, #tpu.memory_space<vmem>>, vector<145x288xbf16>
    %cst_217 = arith.constant dense<0.000000e+00> : vector<16x288xf32>
    %151 = tpu.matmul %149, %150, %cst_217 {dimension_numbers = #tpu.dot_dimension_numbers<[1], [0], [0], [1], [0, 0, 1, 1], [], []>} : vector<16x145xbf16>, vector<145x288xbf16>, vector<16x288xf32> -> vector<16x288xf32>
    %c1_218 = arith.constant 1 : index
    %c0_219 = arith.constant 0 : index
    %152 = vector.load %arg2[%c1_218, %c0_219] : memref<11x1088xf32, #tpu.memory_space<vmem>>, vector<1x288xf32>
    %cst_220 = arith.constant 0.000000e+00 : f32
    %153 = vector.broadcast %cst_220 : f32 to vector<16x288xf32>
    %154 = arith.maximumf %151, %153 : vector<16x288xf32>
    %155 = vector.broadcast %152 : vector<1x288xf32> to vector<16x288xf32>
    %156 = arith.mulf %154, %155 : vector<16x288xf32>
    %157 = arith.truncf %156 : vector<16x288xf32> to vector<16x288xbf16>
    %c0_221 = arith.constant 0 : index
    %c128_222 = arith.constant 128 : index
    %158 = vector.load %arg7[%c0_221, %c128_222] : memref<16x544xbf16, #tpu.memory_space<vmem>>, vector<16x288xbf16>
    tpu.vector_store %arg7[%c0_221, %c128_222], %157 {strides = array<i32>} : memref<16x544xbf16, #tpu.memory_space<vmem>>, vector<16x288xbf16>,
    %c0_223 = arith.constant 0 : index
    %c128_224 = arith.constant 128 : index
    %159 = vector.load %arg7[%c0_223, %c128_224] : memref<16x544xbf16, #tpu.memory_space<vmem>>, vector<16x288xbf16>
    %c0_225 = arith.constant 0 : index
    %c129_226 = arith.constant 129 : index
    %160 = vector.load %arg7[%c0_225, %c129_226] : memref<16x544xbf16, #tpu.memory_space<vmem>>, vector<16x288xbf16>
    %c0_227 = arith.constant 0 : index
    %c146_228 = arith.constant 146 : index
    %161 = vector.load %arg7[%c0_227, %c146_228] : memref<16x544xbf16, #tpu.memory_space<vmem>>, vector<16x288xbf16>
    %c0_229 = arith.constant 0 : index
    %c147_230 = arith.constant 147 : index
    %162 = vector.load %arg7[%c0_229, %c147_230] : memref<16x544xbf16, #tpu.memory_space<vmem>>, vector<16x288xbf16>
    %163 = arith.maximumf %159, %160 : vector<16x288xbf16>
    %164 = arith.maximumf %161, %162 : vector<16x288xbf16>
    %165 = arith.maximumf %163, %164 : vector<16x288xbf16>
    %c1392 = arith.constant 1392 : index
    %c0_231 = arith.constant 0 : index
    %166 = vector.load %arg1[%c1392, %c0_231] : memref<1904x289xbf16, #tpu.memory_space<vmem>>, vector<288x80xbf16>
    %cst_232 = arith.constant dense<0.000000e+00> : vector<16x80xf32>
    %167 = tpu.matmul %165, %166, %cst_232 {dimension_numbers = #tpu.dot_dimension_numbers<[1], [0], [0], [1], [0, 0, 1, 1], [], []>} : vector<16x288xbf16>, vector<288x80xbf16>, vector<16x80xf32> -> vector<16x80xf32>
    %168 = arith.truncf %167 : vector<16x80xf32> to vector<16x80xbf16>
    %c0_233 = arith.constant 0 : index
    %c128_234 = arith.constant 128 : index
    %169 = vector.load %arg9[%c0_233, %c128_234] : memref<16x336xbf16, #tpu.memory_space<vmem>>, vector<16x80xbf16>
    tpu.vector_store %arg9[%c0_233, %c128_234], %168 {strides = array<i32>} : memref<16x336xbf16, #tpu.memory_space<vmem>>, vector<16x80xbf16>,
    %c0_235 = arith.constant 0 : index
    %c117 = arith.constant 117 : index
    %170 = vector.load %arg9[%c0_235, %c117] : memref<16x336xbf16, #tpu.memory_space<vmem>>, vector<16x80xbf16>
    %c0_236 = arith.constant 0 : index
    %c0_237 = arith.constant 0 : index
    %171 = vector.load %arg4[%c0_236, %c0_237] : memref<289x1088xbf16, #tpu.memory_space<vmem>>, vector<16x80xbf16>
    tpu.vector_store %arg4[%c0_236, %c0_237], %170 {strides = array<i32>} : memref<289x1088xbf16, #tpu.memory_space<vmem>>, vector<16x80xbf16>,
    %c0_238 = arith.constant 0 : index
    %c118 = arith.constant 118 : index
    %172 = vector.load %arg9[%c0_238, %c118] : memref<16x336xbf16, #tpu.memory_space<vmem>>, vector<16x80xbf16>
    %c16_239 = arith.constant 16 : index
    %c0_240 = arith.constant 0 : index
    %173 = vector.load %arg4[%c16_239, %c0_240] : memref<289x1088xbf16, #tpu.memory_space<vmem>>, vector<16x80xbf16>
    tpu.vector_store %arg4[%c16_239, %c0_240], %172 {strides = array<i32>} : memref<289x1088xbf16, #tpu.memory_space<vmem>>, vector<16x80xbf16>,
    %c0_241 = arith.constant 0 : index
    %c119 = arith.constant 119 : index
    %174 = vector.load %arg9[%c0_241, %c119] : memref<16x336xbf16, #tpu.memory_space<vmem>>, vector<16x80xbf16>
    %c32_242 = arith.constant 32 : index
    %c0_243 = arith.constant 0 : index
    %175 = vector.load %arg4[%c32_242, %c0_243] : memref<289x1088xbf16, #tpu.memory_space<vmem>>, vector<16x80xbf16>
    tpu.vector_store %arg4[%c32_242, %c0_243], %174 {strides = array<i32>} : memref<289x1088xbf16, #tpu.memory_space<vmem>>, vector<16x80xbf16>,
    %c0_244 = arith.constant 0 : index
    %c127_245 = arith.constant 127 : index
    %176 = vector.load %arg9[%c0_244, %c127_245] : memref<16x336xbf16, #tpu.memory_space<vmem>>, vector<16x80xbf16>
    %c48_246 = arith.constant 48 : index
    %c0_247 = arith.constant 0 : index
    %177 = vector.load %arg4[%c48_246, %c0_247] : memref<289x1088xbf16, #tpu.memory_space<vmem>>, vector<16x80xbf16>
    tpu.vector_store %arg4[%c48_246, %c0_247], %176 {strides = array<i32>} : memref<289x1088xbf16, #tpu.memory_space<vmem>>, vector<16x80xbf16>,
    %c0_248 = arith.constant 0 : index
    %c128_249 = arith.constant 128 : index
    %178 = vector.load %arg9[%c0_248, %c128_249] : memref<16x336xbf16, #tpu.memory_space<vmem>>, vector<16x80xbf16>
    %c64_250 = arith.constant 64 : index
    %c0_251 = arith.constant 0 : index
    %179 = vector.load %arg4[%c64_250, %c0_251] : memref<289x1088xbf16, #tpu.memory_space<vmem>>, vector<16x80xbf16>
    tpu.vector_store %arg4[%c64_250, %c0_251], %178 {strides = array<i32>} : memref<289x1088xbf16, #tpu.memory_space<vmem>>, vector<16x80xbf16>,
    %c0_252 = arith.constant 0 : index
    %c129_253 = arith.constant 129 : index
    %180 = vector.load %arg9[%c0_252, %c129_253] : memref<16x336xbf16, #tpu.memory_space<vmem>>, vector<16x80xbf16>
    %c80_254 = arith.constant 80 : index
    %c0_255 = arith.constant 0 : index
    %181 = vector.load %arg4[%c80_254, %c0_255] : memref<289x1088xbf16, #tpu.memory_space<vmem>>, vector<16x80xbf16>
    tpu.vector_store %arg4[%c80_254, %c0_255], %180 {strides = array<i32>} : memref<289x1088xbf16, #tpu.memory_space<vmem>>, vector<16x80xbf16>,
    %c0_256 = arith.constant 0 : index
    %c137 = arith.constant 137 : index
    %182 = vector.load %arg9[%c0_256, %c137] : memref<16x336xbf16, #tpu.memory_space<vmem>>, vector<16x80xbf16>
    %c96_257 = arith.constant 96 : index
    %c0_258 = arith.constant 0 : index
    %183 = vector.load %arg4[%c96_257, %c0_258] : memref<289x1088xbf16, #tpu.memory_space<vmem>>, vector<16x80xbf16>
    tpu.vector_store %arg4[%c96_257, %c0_258], %182 {strides = array<i32>} : memref<289x1088xbf16, #tpu.memory_space<vmem>>, vector<16x80xbf16>,
    %c0_259 = arith.constant 0 : index
    %c138 = arith.constant 138 : index
    %184 = vector.load %arg9[%c0_259, %c138] : memref<16x336xbf16, #tpu.memory_space<vmem>>, vector<16x80xbf16>
    %c112_260 = arith.constant 112 : index
    %c0_261 = arith.constant 0 : index
    %185 = vector.load %arg4[%c112_260, %c0_261] : memref<289x1088xbf16, #tpu.memory_space<vmem>>, vector<16x80xbf16>
    tpu.vector_store %arg4[%c112_260, %c0_261], %184 {strides = array<i32>} : memref<289x1088xbf16, #tpu.memory_space<vmem>>, vector<16x80xbf16>,
    %c0_262 = arith.constant 0 : index
    %c139 = arith.constant 139 : index
    %186 = vector.load %arg9[%c0_262, %c139] : memref<16x336xbf16, #tpu.memory_space<vmem>>, vector<16x80xbf16>
    %c128_263 = arith.constant 128 : index
    %c0_264 = arith.constant 0 : index
    %187 = vector.load %arg4[%c128_263, %c0_264] : memref<289x1088xbf16, #tpu.memory_space<vmem>>, vector<16x80xbf16>
    tpu.vector_store %arg4[%c128_263, %c0_264], %186 {strides = array<i32>} : memref<289x1088xbf16, #tpu.memory_space<vmem>>, vector<16x80xbf16>,
    %c64_265 = arith.constant 64 : index
    %c0_266 = arith.constant 0 : index
    %188 = vector.load %arg1[%c64_265, %c0_266] : memref<1904x289xbf16, #tpu.memory_space<vmem>>, vector<16x145xbf16>
    %c0_267 = arith.constant 0 : index
    %c0_268 = arith.constant 0 : index
    %189 = vector.load %arg4[%c0_267, %c0_268] : memref<289x1088xbf16, #tpu.memory_space<vmem>>, vector<145x80xbf16>
    %cst_269 = arith.constant dense<0.000000e+00> : vector<16x80xf32>
    %190 = tpu.matmul %188, %189, %cst_269 {dimension_numbers = #tpu.dot_dimension_numbers<[1], [0], [0], [1], [0, 0, 1, 1], [], []>} : vector<16x145xbf16>, vector<145x80xbf16>, vector<16x80xf32> -> vector<16x80xf32>
    %c2 = arith.constant 2 : index
    %c0_270 = arith.constant 0 : index
    %191 = vector.load %arg2[%c2, %c0_270] : memref<11x1088xf32, #tpu.memory_space<vmem>>, vector<1x80xf32>
    %cst_271 = arith.constant 0.000000e+00 : f32
    %192 = vector.broadcast %cst_271 : f32 to vector<16x80xf32>
    %193 = arith.maximumf %190, %192 : vector<16x80xf32>
    %194 = vector.broadcast %191 : vector<1x80xf32> to vector<16x80xf32>
    %195 = arith.mulf %193, %194 : vector<16x80xf32>
    %196 = arith.truncf %195 : vector<16x80xf32> to vector<16x80xbf16>
    %c0_272 = arith.constant 0 : index
    %c128_273 = arith.constant 128 : index
    %197 = vector.load %arg10[%c0_272, %c128_273] : memref<16x336xbf16, #tpu.memory_space<vmem>>, vector<16x80xbf16>
    tpu.vector_store %arg10[%c0_272, %c128_273], %196 {strides = array<i32>} : memref<16x336xbf16, #tpu.memory_space<vmem>>, vector<16x80xbf16>,
    %c0_274 = arith.constant 0 : index
    %c117_275 = arith.constant 117 : index
    %198 = vector.load %arg10[%c0_274, %c117_275] : memref<16x336xbf16, #tpu.memory_space<vmem>>, vector<16x80xbf16>
    %c0_276 = arith.constant 0 : index
    %c0_277 = arith.constant 0 : index
    %199 = vector.load %arg4[%c0_276, %c0_277] : memref<289x1088xbf16, #tpu.memory_space<vmem>>, vector<16x80xbf16>
    tpu.vector_store %arg4[%c0_276, %c0_277], %198 {strides = array<i32>} : memref<289x1088xbf16, #tpu.memory_space<vmem>>, vector<16x80xbf16>,
    %c0_278 = arith.constant 0 : index
    %c118_279 = arith.constant 118 : index
    %200 = vector.load %arg10[%c0_278, %c118_279] : memref<16x336xbf16, #tpu.memory_space<vmem>>, vector<16x80xbf16>
    %c16_280 = arith.constant 16 : index
    %c0_281 = arith.constant 0 : index
    %201 = vector.load %arg4[%c16_280, %c0_281] : memref<289x1088xbf16, #tpu.memory_space<vmem>>, vector<16x80xbf16>
    tpu.vector_store %arg4[%c16_280, %c0_281], %200 {strides = array<i32>} : memref<289x1088xbf16, #tpu.memory_space<vmem>>, vector<16x80xbf16>,
    %c0_282 = arith.constant 0 : index
    %c119_283 = arith.constant 119 : index
    %202 = vector.load %arg10[%c0_282, %c119_283] : memref<16x336xbf16, #tpu.memory_space<vmem>>, vector<16x80xbf16>
    %c32_284 = arith.constant 32 : index
    %c0_285 = arith.constant 0 : index
    %203 = vector.load %arg4[%c32_284, %c0_285] : memref<289x1088xbf16, #tpu.memory_space<vmem>>, vector<16x80xbf16>
    tpu.vector_store %arg4[%c32_284, %c0_285], %202 {strides = array<i32>} : memref<289x1088xbf16, #tpu.memory_space<vmem>>, vector<16x80xbf16>,
    %c0_286 = arith.constant 0 : index
    %c127_287 = arith.constant 127 : index
    %204 = vector.load %arg10[%c0_286, %c127_287] : memref<16x336xbf16, #tpu.memory_space<vmem>>, vector<16x80xbf16>
    %c48_288 = arith.constant 48 : index
    %c0_289 = arith.constant 0 : index
    %205 = vector.load %arg4[%c48_288, %c0_289] : memref<289x1088xbf16, #tpu.memory_space<vmem>>, vector<16x80xbf16>
    tpu.vector_store %arg4[%c48_288, %c0_289], %204 {strides = array<i32>} : memref<289x1088xbf16, #tpu.memory_space<vmem>>, vector<16x80xbf16>,
    %c0_290 = arith.constant 0 : index
    %c128_291 = arith.constant 128 : index
    %206 = vector.load %arg10[%c0_290, %c128_291] : memref<16x336xbf16, #tpu.memory_space<vmem>>, vector<16x80xbf16>
    %c64_292 = arith.constant 64 : index
    %c0_293 = arith.constant 0 : index
    %207 = vector.load %arg4[%c64_292, %c0_293] : memref<289x1088xbf16, #tpu.memory_space<vmem>>, vector<16x80xbf16>
    tpu.vector_store %arg4[%c64_292, %c0_293], %206 {strides = array<i32>} : memref<289x1088xbf16, #tpu.memory_space<vmem>>, vector<16x80xbf16>,
    %c0_294 = arith.constant 0 : index
    %c129_295 = arith.constant 129 : index
    %208 = vector.load %arg10[%c0_294, %c129_295] : memref<16x336xbf16, #tpu.memory_space<vmem>>, vector<16x80xbf16>
    %c80_296 = arith.constant 80 : index
    %c0_297 = arith.constant 0 : index
    %209 = vector.load %arg4[%c80_296, %c0_297] : memref<289x1088xbf16, #tpu.memory_space<vmem>>, vector<16x80xbf16>
    tpu.vector_store %arg4[%c80_296, %c0_297], %208 {strides = array<i32>} : memref<289x1088xbf16, #tpu.memory_space<vmem>>, vector<16x80xbf16>,
    %c0_298 = arith.constant 0 : index
    %c137_299 = arith.constant 137 : index
    %210 = vector.load %arg10[%c0_298, %c137_299] : memref<16x336xbf16, #tpu.memory_space<vmem>>, vector<16x80xbf16>
    %c96_300 = arith.constant 96 : index
    %c0_301 = arith.constant 0 : index
    %211 = vector.load %arg4[%c96_300, %c0_301] : memref<289x1088xbf16, #tpu.memory_space<vmem>>, vector<16x80xbf16>
    tpu.vector_store %arg4[%c96_300, %c0_301], %210 {strides = array<i32>} : memref<289x1088xbf16, #tpu.memory_space<vmem>>, vector<16x80xbf16>,
    %c0_302 = arith.constant 0 : index
    %c138_303 = arith.constant 138 : index
    %212 = vector.load %arg10[%c0_302, %c138_303] : memref<16x336xbf16, #tpu.memory_space<vmem>>, vector<16x80xbf16>
    %c112_304 = arith.constant 112 : index
    %c0_305 = arith.constant 0 : index
    %213 = vector.load %arg4[%c112_304, %c0_305] : memref<289x1088xbf16, #tpu.memory_space<vmem>>, vector<16x80xbf16>
    tpu.vector_store %arg4[%c112_304, %c0_305], %212 {strides = array<i32>} : memref<289x1088xbf16, #tpu.memory_space<vmem>>, vector<16x80xbf16>,
    %c0_306 = arith.constant 0 : index
    %c139_307 = arith.constant 139 : index
    %214 = vector.load %arg10[%c0_306, %c139_307] : memref<16x336xbf16, #tpu.memory_space<vmem>>, vector<16x80xbf16>
    %c128_308 = arith.constant 128 : index
    %c0_309 = arith.constant 0 : index
    %215 = vector.load %arg4[%c128_308, %c0_309] : memref<289x1088xbf16, #tpu.memory_space<vmem>>, vector<16x80xbf16>
    tpu.vector_store %arg4[%c128_308, %c0_309], %214 {strides = array<i32>} : memref<289x1088xbf16, #tpu.memory_space<vmem>>, vector<16x80xbf16>,
    %c80_310 = arith.constant 80 : index
    %c0_311 = arith.constant 0 : index
    %216 = vector.load %arg1[%c80_310, %c0_311] : memref<1904x289xbf16, #tpu.memory_space<vmem>>, vector<16x145xbf16>
    %c0_312 = arith.constant 0 : index
    %c0_313 = arith.constant 0 : index
    %217 = vector.load %arg4[%c0_312, %c0_313] : memref<289x1088xbf16, #tpu.memory_space<vmem>>, vector<145x80xbf16>
    %cst_314 = arith.constant dense<0.000000e+00> : vector<16x80xf32>
    %218 = tpu.matmul %216, %217, %cst_314 {dimension_numbers = #tpu.dot_dimension_numbers<[1], [0], [0], [1], [0, 0, 1, 1], [], []>} : vector<16x145xbf16>, vector<145x80xbf16>, vector<16x80xf32> -> vector<16x80xf32>
    %c2_315 = arith.constant 2 : index
    %c0_316 = arith.constant 0 : index
    %219 = vector.load %arg2[%c2_315, %c0_316] : memref<11x1088xf32, #tpu.memory_space<vmem>>, vector<1x80xf32>
    %cst_317 = arith.constant 0.000000e+00 : f32
    %220 = vector.broadcast %cst_317 : f32 to vector<16x80xf32>
    %221 = arith.maximumf %218, %220 : vector<16x80xf32>
    %222 = vector.broadcast %219 : vector<1x80xf32> to vector<16x80xf32>
    %223 = arith.mulf %221, %222 : vector<16x80xf32>
    %224 = arith.truncf %223 : vector<16x80xf32> to vector<16x80xbf16>
    %c0_318 = arith.constant 0 : index
    %c128_319 = arith.constant 128 : index
    %225 = vector.load %arg9[%c0_318, %c128_319] : memref<16x336xbf16, #tpu.memory_space<vmem>>, vector<16x80xbf16>
    tpu.vector_store %arg9[%c0_318, %c128_319], %224 {strides = array<i32>} : memref<16x336xbf16, #tpu.memory_space<vmem>>, vector<16x80xbf16>,
    %c0_320 = arith.constant 0 : index
    %c117_321 = arith.constant 117 : index
    %226 = vector.load %arg9[%c0_320, %c117_321] : memref<16x336xbf16, #tpu.memory_space<vmem>>, vector<16x80xbf16>
    %c0_322 = arith.constant 0 : index
    %c0_323 = arith.constant 0 : index
    %227 = vector.load %arg4[%c0_322, %c0_323] : memref<289x1088xbf16, #tpu.memory_space<vmem>>, vector<16x80xbf16>
    tpu.vector_store %arg4[%c0_322, %c0_323], %226 {strides = array<i32>} : memref<289x1088xbf16, #tpu.memory_space<vmem>>, vector<16x80xbf16>,
    %c0_324 = arith.constant 0 : index
    %c118_325 = arith.constant 118 : index
    %228 = vector.load %arg9[%c0_324, %c118_325] : memref<16x336xbf16, #tpu.memory_space<vmem>>, vector<16x80xbf16>
    %c16_326 = arith.constant 16 : index
    %c0_327 = arith.constant 0 : index
    %229 = vector.load %arg4[%c16_326, %c0_327] : memref<289x1088xbf16, #tpu.memory_space<vmem>>, vector<16x80xbf16>
    tpu.vector_store %arg4[%c16_326, %c0_327], %228 {strides = array<i32>} : memref<289x1088xbf16, #tpu.memory_space<vmem>>, vector<16x80xbf16>,
    %c0_328 = arith.constant 0 : index
    %c119_329 = arith.constant 119 : index
    %230 = vector.load %arg9[%c0_328, %c119_329] : memref<16x336xbf16, #tpu.memory_space<vmem>>, vector<16x80xbf16>
    %c32_330 = arith.constant 32 : index
    %c0_331 = arith.constant 0 : index
    %231 = vector.load %arg4[%c32_330, %c0_331] : memref<289x1088xbf16, #tpu.memory_space<vmem>>, vector<16x80xbf16>
    tpu.vector_store %arg4[%c32_330, %c0_331], %230 {strides = array<i32>} : memref<289x1088xbf16, #tpu.memory_space<vmem>>, vector<16x80xbf16>,
    %c0_332 = arith.constant 0 : index
    %c127_333 = arith.constant 127 : index
    %232 = vector.load %arg9[%c0_332, %c127_333] : memref<16x336xbf16, #tpu.memory_space<vmem>>, vector<16x80xbf16>
    %c48_334 = arith.constant 48 : index
    %c0_335 = arith.constant 0 : index
    %233 = vector.load %arg4[%c48_334, %c0_335] : memref<289x1088xbf16, #tpu.memory_space<vmem>>, vector<16x80xbf16>
    tpu.vector_store %arg4[%c48_334, %c0_335], %232 {strides = array<i32>} : memref<289x1088xbf16, #tpu.memory_space<vmem>>, vector<16x80xbf16>,
    %c0_336 = arith.constant 0 : index
    %c128_337 = arith.constant 128 : index
    %234 = vector.load %arg9[%c0_336, %c128_337] : memref<16x336xbf16, #tpu.memory_space<vmem>>, vector<16x80xbf16>
    %c64_338 = arith.constant 64 : index
    %c0_339 = arith.constant 0 : index
    %235 = vector.load %arg4[%c64_338, %c0_339] : memref<289x1088xbf16, #tpu.memory_space<vmem>>, vector<16x80xbf16>
    tpu.vector_store %arg4[%c64_338, %c0_339], %234 {strides = array<i32>} : memref<289x1088xbf16, #tpu.memory_space<vmem>>, vector<16x80xbf16>,
    %c0_340 = arith.constant 0 : index
    %c129_341 = arith.constant 129 : index
    %236 = vector.load %arg9[%c0_340, %c129_341] : memref<16x336xbf16, #tpu.memory_space<vmem>>, vector<16x80xbf16>
    %c80_342 = arith.constant 80 : index
    %c0_343 = arith.constant 0 : index
    %237 = vector.load %arg4[%c80_342, %c0_343] : memref<289x1088xbf16, #tpu.memory_space<vmem>>, vector<16x80xbf16>
    tpu.vector_store %arg4[%c80_342, %c0_343], %236 {strides = array<i32>} : memref<289x1088xbf16, #tpu.memory_space<vmem>>, vector<16x80xbf16>,
    %c0_344 = arith.constant 0 : index
    %c137_345 = arith.constant 137 : index
    %238 = vector.load %arg9[%c0_344, %c137_345] : memref<16x336xbf16, #tpu.memory_space<vmem>>, vector<16x80xbf16>
    %c96_346 = arith.constant 96 : index
    %c0_347 = arith.constant 0 : index
    %239 = vector.load %arg4[%c96_346, %c0_347] : memref<289x1088xbf16, #tpu.memory_space<vmem>>, vector<16x80xbf16>
    tpu.vector_store %arg4[%c96_346, %c0_347], %238 {strides = array<i32>} : memref<289x1088xbf16, #tpu.memory_space<vmem>>, vector<16x80xbf16>,
    %c0_348 = arith.constant 0 : index
    %c138_349 = arith.constant 138 : index
    %240 = vector.load %arg9[%c0_348, %c138_349] : memref<16x336xbf16, #tpu.memory_space<vmem>>, vector<16x80xbf16>
    %c112_350 = arith.constant 112 : index
    %c0_351 = arith.constant 0 : index
    %241 = vector.load %arg4[%c112_350, %c0_351] : memref<289x1088xbf16, #tpu.memory_space<vmem>>, vector<16x80xbf16>
    tpu.vector_store %arg4[%c112_350, %c0_351], %240 {strides = array<i32>} : memref<289x1088xbf16, #tpu.memory_space<vmem>>, vector<16x80xbf16>,
    %c0_352 = arith.constant 0 : index
    %c139_353 = arith.constant 139 : index
    %242 = vector.load %arg9[%c0_352, %c139_353] : memref<16x336xbf16, #tpu.memory_space<vmem>>, vector<16x80xbf16>
    %c128_354 = arith.constant 128 : index
    %c0_355 = arith.constant 0 : index
    %243 = vector.load %arg4[%c128_354, %c0_355] : memref<289x1088xbf16, #tpu.memory_space<vmem>>, vector<16x80xbf16>
    tpu.vector_store %arg4[%c128_354, %c0_355], %242 {strides = array<i32>} : memref<289x1088xbf16, #tpu.memory_space<vmem>>, vector<16x80xbf16>,
    %c96_356 = arith.constant 96 : index
    %c0_357 = arith.constant 0 : index
    %244 = vector.load %arg1[%c96_356, %c0_357] : memref<1904x289xbf16, #tpu.memory_space<vmem>>, vector<16x145xbf16>
    %c0_358 = arith.constant 0 : index
    %c0_359 = arith.constant 0 : index
    %245 = vector.load %arg4[%c0_358, %c0_359] : memref<289x1088xbf16, #tpu.memory_space<vmem>>, vector<145x80xbf16>
    %cst_360 = arith.constant dense<0.000000e+00> : vector<16x80xf32>
    %246 = tpu.matmul %244, %245, %cst_360 {dimension_numbers = #tpu.dot_dimension_numbers<[1], [0], [0], [1], [0, 0, 1, 1], [], []>} : vector<16x145xbf16>, vector<145x80xbf16>, vector<16x80xf32> -> vector<16x80xf32>
    %c2_361 = arith.constant 2 : index
    %c0_362 = arith.constant 0 : index
    %247 = vector.load %arg2[%c2_361, %c0_362] : memref<11x1088xf32, #tpu.memory_space<vmem>>, vector<1x80xf32>
    %cst_363 = arith.constant 0.000000e+00 : f32
    %248 = vector.broadcast %cst_363 : f32 to vector<16x80xf32>
    %249 = arith.maximumf %246, %248 : vector<16x80xf32>
    %250 = vector.broadcast %247 : vector<1x80xf32> to vector<16x80xf32>
    %251 = arith.mulf %249, %250 : vector<16x80xf32>
    %252 = arith.truncf %251 : vector<16x80xf32> to vector<16x80xbf16>
    %c0_364 = arith.constant 0 : index
    %c128_365 = arith.constant 128 : index
    %253 = vector.load %arg10[%c0_364, %c128_365] : memref<16x336xbf16, #tpu.memory_space<vmem>>, vector<16x80xbf16>
    tpu.vector_store %arg10[%c0_364, %c128_365], %252 {strides = array<i32>} : memref<16x336xbf16, #tpu.memory_space<vmem>>, vector<16x80xbf16>,
    %c0_366 = arith.constant 0 : index
    %c128_367 = arith.constant 128 : index
    %254 = vector.load %arg10[%c0_366, %c128_367] : memref<16x336xbf16, #tpu.memory_space<vmem>>, vector<16x80xbf16>
    %c0_368 = arith.constant 0 : index
    %c129_369 = arith.constant 129 : index
    %255 = vector.load %arg10[%c0_368, %c129_369] : memref<16x336xbf16, #tpu.memory_space<vmem>>, vector<16x80xbf16>
    %c0_370 = arith.constant 0 : index
    %c138_371 = arith.constant 138 : index
    %256 = vector.load %arg10[%c0_370, %c138_371] : memref<16x336xbf16, #tpu.memory_space<vmem>>, vector<16x80xbf16>
    %c0_372 = arith.constant 0 : index
    %c139_373 = arith.constant 139 : index
    %257 = vector.load %arg10[%c0_372, %c139_373] : memref<16x336xbf16, #tpu.memory_space<vmem>>, vector<16x80xbf16>
    %258 = arith.maximumf %254, %255 : vector<16x80xbf16>
    %259 = arith.maximumf %256, %257 : vector<16x80xbf16>
    %260 = arith.maximumf %258, %259 : vector<16x80xbf16>
    %c1680 = arith.constant 1680 : index
    %c0_374 = arith.constant 0 : index
    %261 = vector.load %arg1[%c1680, %c0_374] : memref<1904x289xbf16, #tpu.memory_space<vmem>>, vector<80x24xbf16>
    %cst_375 = arith.constant dense<0.000000e+00> : vector<16x24xf32>
    %262 = tpu.matmul %260, %261, %cst_375 {dimension_numbers = #tpu.dot_dimension_numbers<[1], [0], [0], [1], [0, 0, 1, 1], [], []>} : vector<16x80xbf16>, vector<80x24xbf16>, vector<16x24xf32> -> vector<16x24xf32>
    %263 = arith.truncf %262 : vector<16x24xf32> to vector<16x24xbf16>
    %c0_376 = arith.constant 0 : index
    %c128_377 = arith.constant 128 : index
    %264 = vector.load %arg11[%c0_376, %c128_377] : memref<32x280xbf16, #tpu.memory_space<vmem>>, vector<16x24xbf16>
    tpu.vector_store %arg11[%c0_376, %c128_377], %263 {strides = array<i32>} : memref<32x280xbf16, #tpu.memory_space<vmem>>, vector<16x24xbf16>,
    %c0_378 = arith.constant 0 : index
    %c121 = arith.constant 121 : index
    %265 = vector.load %arg11[%c0_378, %c121] : memref<32x280xbf16, #tpu.memory_space<vmem>>, vector<16x24xbf16>
    %c0_379 = arith.constant 0 : index
    %c0_380 = arith.constant 0 : index
    %266 = vector.load %arg4[%c0_379, %c0_380] : memref<289x1088xbf16, #tpu.memory_space<vmem>>, vector<16x24xbf16>
    tpu.vector_store %arg4[%c0_379, %c0_380], %265 {strides = array<i32>} : memref<289x1088xbf16, #tpu.memory_space<vmem>>, vector<16x24xbf16>,
    %c0_381 = arith.constant 0 : index
    %c122 = arith.constant 122 : index
    %267 = vector.load %arg11[%c0_381, %c122] : memref<32x280xbf16, #tpu.memory_space<vmem>>, vector<16x24xbf16>
    %c16_382 = arith.constant 16 : index
    %c0_383 = arith.constant 0 : index
    %268 = vector.load %arg4[%c16_382, %c0_383] : memref<289x1088xbf16, #tpu.memory_space<vmem>>, vector<16x24xbf16>
    tpu.vector_store %arg4[%c16_382, %c0_383], %267 {strides = array<i32>} : memref<289x1088xbf16, #tpu.memory_space<vmem>>, vector<16x24xbf16>,
    %c0_384 = arith.constant 0 : index
    %c123 = arith.constant 123 : index
    %269 = vector.load %arg11[%c0_384, %c123] : memref<32x280xbf16, #tpu.memory_space<vmem>>, vector<16x24xbf16>
    %c32_385 = arith.constant 32 : index
    %c0_386 = arith.constant 0 : index
    %270 = vector.load %arg4[%c32_385, %c0_386] : memref<289x1088xbf16, #tpu.memory_space<vmem>>, vector<16x24xbf16>
    tpu.vector_store %arg4[%c32_385, %c0_386], %269 {strides = array<i32>} : memref<289x1088xbf16, #tpu.memory_space<vmem>>, vector<16x24xbf16>,
    %c0_387 = arith.constant 0 : index
    %c127_388 = arith.constant 127 : index
    %271 = vector.load %arg11[%c0_387, %c127_388] : memref<32x280xbf16, #tpu.memory_space<vmem>>, vector<16x24xbf16>
    %c48_389 = arith.constant 48 : index
    %c0_390 = arith.constant 0 : index
    %272 = vector.load %arg4[%c48_389, %c0_390] : memref<289x1088xbf16, #tpu.memory_space<vmem>>, vector<16x24xbf16>
    tpu.vector_store %arg4[%c48_389, %c0_390], %271 {strides = array<i32>} : memref<289x1088xbf16, #tpu.memory_space<vmem>>, vector<16x24xbf16>,
    %c0_391 = arith.constant 0 : index
    %c128_392 = arith.constant 128 : index
    %273 = vector.load %arg11[%c0_391, %c128_392] : memref<32x280xbf16, #tpu.memory_space<vmem>>, vector<16x24xbf16>
    %c64_393 = arith.constant 64 : index
    %c0_394 = arith.constant 0 : index
    %274 = vector.load %arg4[%c64_393, %c0_394] : memref<289x1088xbf16, #tpu.memory_space<vmem>>, vector<16x24xbf16>
    tpu.vector_store %arg4[%c64_393, %c0_394], %273 {strides = array<i32>} : memref<289x1088xbf16, #tpu.memory_space<vmem>>, vector<16x24xbf16>,
    %c0_395 = arith.constant 0 : index
    %c129_396 = arith.constant 129 : index
    %275 = vector.load %arg11[%c0_395, %c129_396] : memref<32x280xbf16, #tpu.memory_space<vmem>>, vector<16x24xbf16>
    %c80_397 = arith.constant 80 : index
    %c0_398 = arith.constant 0 : index
    %276 = vector.load %arg4[%c80_397, %c0_398] : memref<289x1088xbf16, #tpu.memory_space<vmem>>, vector<16x24xbf16>
    tpu.vector_store %arg4[%c80_397, %c0_398], %275 {strides = array<i32>} : memref<289x1088xbf16, #tpu.memory_space<vmem>>, vector<16x24xbf16>,
    %c0_399 = arith.constant 0 : index
    %c133 = arith.constant 133 : index
    %277 = vector.load %arg11[%c0_399, %c133] : memref<32x280xbf16, #tpu.memory_space<vmem>>, vector<16x24xbf16>
    %c96_400 = arith.constant 96 : index
    %c0_401 = arith.constant 0 : index
    %278 = vector.load %arg4[%c96_400, %c0_401] : memref<289x1088xbf16, #tpu.memory_space<vmem>>, vector<16x24xbf16>
    tpu.vector_store %arg4[%c96_400, %c0_401], %277 {strides = array<i32>} : memref<289x1088xbf16, #tpu.memory_space<vmem>>, vector<16x24xbf16>,
    %c0_402 = arith.constant 0 : index
    %c134 = arith.constant 134 : index
    %279 = vector.load %arg11[%c0_402, %c134] : memref<32x280xbf16, #tpu.memory_space<vmem>>, vector<16x24xbf16>
    %c112_403 = arith.constant 112 : index
    %c0_404 = arith.constant 0 : index
    %280 = vector.load %arg4[%c112_403, %c0_404] : memref<289x1088xbf16, #tpu.memory_space<vmem>>, vector<16x24xbf16>
    tpu.vector_store %arg4[%c112_403, %c0_404], %279 {strides = array<i32>} : memref<289x1088xbf16, #tpu.memory_space<vmem>>, vector<16x24xbf16>,
    %c0_405 = arith.constant 0 : index
    %c135 = arith.constant 135 : index
    %281 = vector.load %arg11[%c0_405, %c135] : memref<32x280xbf16, #tpu.memory_space<vmem>>, vector<16x24xbf16>
    %c128_406 = arith.constant 128 : index
    %c0_407 = arith.constant 0 : index
    %282 = vector.load %arg4[%c128_406, %c0_407] : memref<289x1088xbf16, #tpu.memory_space<vmem>>, vector<16x24xbf16>
    tpu.vector_store %arg4[%c128_406, %c0_407], %281 {strides = array<i32>} : memref<289x1088xbf16, #tpu.memory_space<vmem>>, vector<16x24xbf16>,
    %c112_408 = arith.constant 112 : index
    %c0_409 = arith.constant 0 : index
    %283 = vector.load %arg1[%c112_408, %c0_409] : memref<1904x289xbf16, #tpu.memory_space<vmem>>, vector<32x145xbf16>
    %c0_410 = arith.constant 0 : index
    %c0_411 = arith.constant 0 : index
    %284 = vector.load %arg4[%c0_410, %c0_411] : memref<289x1088xbf16, #tpu.memory_space<vmem>>, vector<145x24xbf16>
    %cst_412 = arith.constant dense<0.000000e+00> : vector<32x24xf32>
    %285 = tpu.matmul %283, %284, %cst_412 {dimension_numbers = #tpu.dot_dimension_numbers<[1], [0], [0], [1], [0, 0, 1, 1], [], []>} : vector<32x145xbf16>, vector<145x24xbf16>, vector<32x24xf32> -> vector<32x24xf32>
    %c3 = arith.constant 3 : index
    %c0_413 = arith.constant 0 : index
    %286 = vector.load %arg2[%c3, %c0_413] : memref<11x1088xf32, #tpu.memory_space<vmem>>, vector<1x24xf32>
    %cst_414 = arith.constant 0.000000e+00 : f32
    %287 = vector.broadcast %cst_414 : f32 to vector<32x24xf32>
    %288 = arith.maximumf %285, %287 : vector<32x24xf32>
    %289 = vector.broadcast %286 : vector<1x24xf32> to vector<32x24xf32>
    %290 = arith.mulf %288, %289 : vector<32x24xf32>
    %291 = arith.truncf %290 : vector<32x24xf32> to vector<32x24xbf16>
    %c0_415 = arith.constant 0 : index
    %c128_416 = arith.constant 128 : index
    %292 = vector.load %arg12[%c0_415, %c128_416] : memref<32x280xbf16, #tpu.memory_space<vmem>>, vector<32x24xbf16>
    tpu.vector_store %arg12[%c0_415, %c128_416], %291 {strides = array<i32>} : memref<32x280xbf16, #tpu.memory_space<vmem>>, vector<32x24xbf16>,
    %c0_417 = arith.constant 0 : index
    %c121_418 = arith.constant 121 : index
    %293 = vector.load %arg12[%c0_417, %c121_418] : memref<32x280xbf16, #tpu.memory_space<vmem>>, vector<32x24xbf16>
    %c0_419 = arith.constant 0 : index
    %c0_420 = arith.constant 0 : index
    %294 = vector.load %arg4[%c0_419, %c0_420] : memref<289x1088xbf16, #tpu.memory_space<vmem>>, vector<32x24xbf16>
    tpu.vector_store %arg4[%c0_419, %c0_420], %293 {strides = array<i32>} : memref<289x1088xbf16, #tpu.memory_space<vmem>>, vector<32x24xbf16>,
    %c0_421 = arith.constant 0 : index
    %c122_422 = arith.constant 122 : index
    %295 = vector.load %arg12[%c0_421, %c122_422] : memref<32x280xbf16, #tpu.memory_space<vmem>>, vector<32x24xbf16>
    %c32_423 = arith.constant 32 : index
    %c0_424 = arith.constant 0 : index
    %296 = vector.load %arg4[%c32_423, %c0_424] : memref<289x1088xbf16, #tpu.memory_space<vmem>>, vector<32x24xbf16>
    tpu.vector_store %arg4[%c32_423, %c0_424], %295 {strides = array<i32>} : memref<289x1088xbf16, #tpu.memory_space<vmem>>, vector<32x24xbf16>,
    %c0_425 = arith.constant 0 : index
    %c123_426 = arith.constant 123 : index
    %297 = vector.load %arg12[%c0_425, %c123_426] : memref<32x280xbf16, #tpu.memory_space<vmem>>, vector<32x24xbf16>
    %c64_427 = arith.constant 64 : index
    %c0_428 = arith.constant 0 : index
    %298 = vector.load %arg4[%c64_427, %c0_428] : memref<289x1088xbf16, #tpu.memory_space<vmem>>, vector<32x24xbf16>
    tpu.vector_store %arg4[%c64_427, %c0_428], %297 {strides = array<i32>} : memref<289x1088xbf16, #tpu.memory_space<vmem>>, vector<32x24xbf16>,
    %c0_429 = arith.constant 0 : index
    %c127_430 = arith.constant 127 : index
    %299 = vector.load %arg12[%c0_429, %c127_430] : memref<32x280xbf16, #tpu.memory_space<vmem>>, vector<32x24xbf16>
    %c96_431 = arith.constant 96 : index
    %c0_432 = arith.constant 0 : index
    %300 = vector.load %arg4[%c96_431, %c0_432] : memref<289x1088xbf16, #tpu.memory_space<vmem>>, vector<32x24xbf16>
    tpu.vector_store %arg4[%c96_431, %c0_432], %299 {strides = array<i32>} : memref<289x1088xbf16, #tpu.memory_space<vmem>>, vector<32x24xbf16>,
    %c0_433 = arith.constant 0 : index
    %c128_434 = arith.constant 128 : index
    %301 = vector.load %arg12[%c0_433, %c128_434] : memref<32x280xbf16, #tpu.memory_space<vmem>>, vector<32x24xbf16>
    %c128_435 = arith.constant 128 : index
    %c0_436 = arith.constant 0 : index
    %302 = vector.load %arg4[%c128_435, %c0_436] : memref<289x1088xbf16, #tpu.memory_space<vmem>>, vector<32x24xbf16>
    tpu.vector_store %arg4[%c128_435, %c0_436], %301 {strides = array<i32>} : memref<289x1088xbf16, #tpu.memory_space<vmem>>, vector<32x24xbf16>,
    %c0_437 = arith.constant 0 : index
    %c129_438 = arith.constant 129 : index
    %303 = vector.load %arg12[%c0_437, %c129_438] : memref<32x280xbf16, #tpu.memory_space<vmem>>, vector<32x24xbf16>
    %c160 = arith.constant 160 : index
    %c0_439 = arith.constant 0 : index
    %304 = vector.load %arg4[%c160, %c0_439] : memref<289x1088xbf16, #tpu.memory_space<vmem>>, vector<32x24xbf16>
    tpu.vector_store %arg4[%c160, %c0_439], %303 {strides = array<i32>} : memref<289x1088xbf16, #tpu.memory_space<vmem>>, vector<32x24xbf16>,
    %c0_440 = arith.constant 0 : index
    %c133_441 = arith.constant 133 : index
    %305 = vector.load %arg12[%c0_440, %c133_441] : memref<32x280xbf16, #tpu.memory_space<vmem>>, vector<32x24xbf16>
    %c192 = arith.constant 192 : index
    %c0_442 = arith.constant 0 : index
    %306 = vector.load %arg4[%c192, %c0_442] : memref<289x1088xbf16, #tpu.memory_space<vmem>>, vector<32x24xbf16>
    tpu.vector_store %arg4[%c192, %c0_442], %305 {strides = array<i32>} : memref<289x1088xbf16, #tpu.memory_space<vmem>>, vector<32x24xbf16>,
    %c0_443 = arith.constant 0 : index
    %c134_444 = arith.constant 134 : index
    %307 = vector.load %arg12[%c0_443, %c134_444] : memref<32x280xbf16, #tpu.memory_space<vmem>>, vector<32x24xbf16>
    %c224 = arith.constant 224 : index
    %c0_445 = arith.constant 0 : index
    %308 = vector.load %arg4[%c224, %c0_445] : memref<289x1088xbf16, #tpu.memory_space<vmem>>, vector<32x24xbf16>
    tpu.vector_store %arg4[%c224, %c0_445], %307 {strides = array<i32>} : memref<289x1088xbf16, #tpu.memory_space<vmem>>, vector<32x24xbf16>,
    %c0_446 = arith.constant 0 : index
    %c135_447 = arith.constant 135 : index
    %309 = vector.load %arg12[%c0_446, %c135_447] : memref<32x280xbf16, #tpu.memory_space<vmem>>, vector<32x24xbf16>
    %c256 = arith.constant 256 : index
    %c0_448 = arith.constant 0 : index
    %310 = vector.load %arg4[%c256, %c0_448] : memref<289x1088xbf16, #tpu.memory_space<vmem>>, vector<32x24xbf16>
    tpu.vector_store %arg4[%c256, %c0_448], %309 {strides = array<i32>} : memref<289x1088xbf16, #tpu.memory_space<vmem>>, vector<32x24xbf16>,
    %c144_449 = arith.constant 144 : index
    %c0_450 = arith.constant 0 : index
    %311 = vector.load %arg1[%c144_449, %c0_450] : memref<1904x289xbf16, #tpu.memory_space<vmem>>, vector<32x289xbf16>
    %c0_451 = arith.constant 0 : index
    %c0_452 = arith.constant 0 : index
    %312 = vector.load %arg4[%c0_451, %c0_452] : memref<289x1088xbf16, #tpu.memory_space<vmem>>, vector<289x24xbf16>
    %cst_453 = arith.constant dense<0.000000e+00> : vector<32x24xf32>
    %313 = tpu.matmul %311, %312, %cst_453 {dimension_numbers = #tpu.dot_dimension_numbers<[1], [0], [0], [1], [0, 0, 1, 1], [], []>} : vector<32x289xbf16>, vector<289x24xbf16>, vector<32x24xf32> -> vector<32x24xf32>
    %c3_454 = arith.constant 3 : index
    %c0_455 = arith.constant 0 : index
    %314 = vector.load %arg2[%c3_454, %c0_455] : memref<11x1088xf32, #tpu.memory_space<vmem>>, vector<1x24xf32>
    %cst_456 = arith.constant 0.000000e+00 : f32
    %315 = vector.broadcast %cst_456 : f32 to vector<32x24xf32>
    %316 = arith.maximumf %313, %315 : vector<32x24xf32>
    %317 = vector.broadcast %314 : vector<1x24xf32> to vector<32x24xf32>
    %318 = arith.mulf %316, %317 : vector<32x24xf32>
    %319 = arith.truncf %318 : vector<32x24xf32> to vector<32x24xbf16>
    %c0_457 = arith.constant 0 : index
    %c128_458 = arith.constant 128 : index
    %320 = vector.load %arg11[%c0_457, %c128_458] : memref<32x280xbf16, #tpu.memory_space<vmem>>, vector<32x24xbf16>
    tpu.vector_store %arg11[%c0_457, %c128_458], %319 {strides = array<i32>} : memref<32x280xbf16, #tpu.memory_space<vmem>>, vector<32x24xbf16>,
    %c0_459 = arith.constant 0 : index
    %c121_460 = arith.constant 121 : index
    %321 = vector.load %arg11[%c0_459, %c121_460] : memref<32x280xbf16, #tpu.memory_space<vmem>>, vector<32x24xbf16>
    %c0_461 = arith.constant 0 : index
    %c0_462 = arith.constant 0 : index
    %322 = vector.load %arg4[%c0_461, %c0_462] : memref<289x1088xbf16, #tpu.memory_space<vmem>>, vector<32x24xbf16>
    tpu.vector_store %arg4[%c0_461, %c0_462], %321 {strides = array<i32>} : memref<289x1088xbf16, #tpu.memory_space<vmem>>, vector<32x24xbf16>,
    %c0_463 = arith.constant 0 : index
    %c122_464 = arith.constant 122 : index
    %323 = vector.load %arg11[%c0_463, %c122_464] : memref<32x280xbf16, #tpu.memory_space<vmem>>, vector<32x24xbf16>
    %c32_465 = arith.constant 32 : index
    %c0_466 = arith.constant 0 : index
    %324 = vector.load %arg4[%c32_465, %c0_466] : memref<289x1088xbf16, #tpu.memory_space<vmem>>, vector<32x24xbf16>
    tpu.vector_store %arg4[%c32_465, %c0_466], %323 {strides = array<i32>} : memref<289x1088xbf16, #tpu.memory_space<vmem>>, vector<32x24xbf16>,
    %c0_467 = arith.constant 0 : index
    %c123_468 = arith.constant 123 : index
    %325 = vector.load %arg11[%c0_467, %c123_468] : memref<32x280xbf16, #tpu.memory_space<vmem>>, vector<32x24xbf16>
    %c64_469 = arith.constant 64 : index
    %c0_470 = arith.constant 0 : index
    %326 = vector.load %arg4[%c64_469, %c0_470] : memref<289x1088xbf16, #tpu.memory_space<vmem>>, vector<32x24xbf16>
    tpu.vector_store %arg4[%c64_469, %c0_470], %325 {strides = array<i32>} : memref<289x1088xbf16, #tpu.memory_space<vmem>>, vector<32x24xbf16>,
    %c0_471 = arith.constant 0 : index
    %c127_472 = arith.constant 127 : index
    %327 = vector.load %arg11[%c0_471, %c127_472] : memref<32x280xbf16, #tpu.memory_space<vmem>>, vector<32x24xbf16>
    %c96_473 = arith.constant 96 : index
    %c0_474 = arith.constant 0 : index
    %328 = vector.load %arg4[%c96_473, %c0_474] : memref<289x1088xbf16, #tpu.memory_space<vmem>>, vector<32x24xbf16>
    tpu.vector_store %arg4[%c96_473, %c0_474], %327 {strides = array<i32>} : memref<289x1088xbf16, #tpu.memory_space<vmem>>, vector<32x24xbf16>,
    %c0_475 = arith.constant 0 : index
    %c128_476 = arith.constant 128 : index
    %329 = vector.load %arg11[%c0_475, %c128_476] : memref<32x280xbf16, #tpu.memory_space<vmem>>, vector<32x24xbf16>
    %c128_477 = arith.constant 128 : index
    %c0_478 = arith.constant 0 : index
    %330 = vector.load %arg4[%c128_477, %c0_478] : memref<289x1088xbf16, #tpu.memory_space<vmem>>, vector<32x24xbf16>
    tpu.vector_store %arg4[%c128_477, %c0_478], %329 {strides = array<i32>} : memref<289x1088xbf16, #tpu.memory_space<vmem>>, vector<32x24xbf16>,
    %c0_479 = arith.constant 0 : index
    %c129_480 = arith.constant 129 : index
    %331 = vector.load %arg11[%c0_479, %c129_480] : memref<32x280xbf16, #tpu.memory_space<vmem>>, vector<32x24xbf16>
    %c160_481 = arith.constant 160 : index
    %c0_482 = arith.constant 0 : index
    %332 = vector.load %arg4[%c160_481, %c0_482] : memref<289x1088xbf16, #tpu.memory_space<vmem>>, vector<32x24xbf16>
    tpu.vector_store %arg4[%c160_481, %c0_482], %331 {strides = array<i32>} : memref<289x1088xbf16, #tpu.memory_space<vmem>>, vector<32x24xbf16>,
    %c0_483 = arith.constant 0 : index
    %c133_484 = arith.constant 133 : index
    %333 = vector.load %arg11[%c0_483, %c133_484] : memref<32x280xbf16, #tpu.memory_space<vmem>>, vector<32x24xbf16>
    %c192_485 = arith.constant 192 : index
    %c0_486 = arith.constant 0 : index
    %334 = vector.load %arg4[%c192_485, %c0_486] : memref<289x1088xbf16, #tpu.memory_space<vmem>>, vector<32x24xbf16>
    tpu.vector_store %arg4[%c192_485, %c0_486], %333 {strides = array<i32>} : memref<289x1088xbf16, #tpu.memory_space<vmem>>, vector<32x24xbf16>,
    %c0_487 = arith.constant 0 : index
    %c134_488 = arith.constant 134 : index
    %335 = vector.load %arg11[%c0_487, %c134_488] : memref<32x280xbf16, #tpu.memory_space<vmem>>, vector<32x24xbf16>
    %c224_489 = arith.constant 224 : index
    %c0_490 = arith.constant 0 : index
    %336 = vector.load %arg4[%c224_489, %c0_490] : memref<289x1088xbf16, #tpu.memory_space<vmem>>, vector<32x24xbf16>
    tpu.vector_store %arg4[%c224_489, %c0_490], %335 {strides = array<i32>} : memref<289x1088xbf16, #tpu.memory_space<vmem>>, vector<32x24xbf16>,
    %c0_491 = arith.constant 0 : index
    %c135_492 = arith.constant 135 : index
    %337 = vector.load %arg11[%c0_491, %c135_492] : memref<32x280xbf16, #tpu.memory_space<vmem>>, vector<32x24xbf16>
    %c256_493 = arith.constant 256 : index
    %c0_494 = arith.constant 0 : index
    %338 = vector.load %arg4[%c256_493, %c0_494] : memref<289x1088xbf16, #tpu.memory_space<vmem>>, vector<32x24xbf16>
    tpu.vector_store %arg4[%c256_493, %c0_494], %337 {strides = array<i32>} : memref<289x1088xbf16, #tpu.memory_space<vmem>>, vector<32x24xbf16>,
    %c176 = arith.constant 176 : index
    %c0_495 = arith.constant 0 : index
    %339 = vector.load %arg1[%c176, %c0_495] : memref<1904x289xbf16, #tpu.memory_space<vmem>>, vector<32x289xbf16>
    %c0_496 = arith.constant 0 : index
    %c0_497 = arith.constant 0 : index
    %340 = vector.load %arg4[%c0_496, %c0_497] : memref<289x1088xbf16, #tpu.memory_space<vmem>>, vector<289x24xbf16>
    %cst_498 = arith.constant dense<0.000000e+00> : vector<32x24xf32>
    %341 = tpu.matmul %339, %340, %cst_498 {dimension_numbers = #tpu.dot_dimension_numbers<[1], [0], [0], [1], [0, 0, 1, 1], [], []>} : vector<32x289xbf16>, vector<289x24xbf16>, vector<32x24xf32> -> vector<32x24xf32>
    %c3_499 = arith.constant 3 : index
    %c0_500 = arith.constant 0 : index
    %342 = vector.load %arg2[%c3_499, %c0_500] : memref<11x1088xf32, #tpu.memory_space<vmem>>, vector<1x24xf32>
    %cst_501 = arith.constant 0.000000e+00 : f32
    %343 = vector.broadcast %cst_501 : f32 to vector<32x24xf32>
    %344 = arith.maximumf %341, %343 : vector<32x24xf32>
    %345 = vector.broadcast %342 : vector<1x24xf32> to vector<32x24xf32>
    %346 = arith.mulf %344, %345 : vector<32x24xf32>
    %347 = arith.truncf %346 : vector<32x24xf32> to vector<32x24xbf16>
    %c0_502 = arith.constant 0 : index
    %c128_503 = arith.constant 128 : index
    %348 = vector.load %arg12[%c0_502, %c128_503] : memref<32x280xbf16, #tpu.memory_space<vmem>>, vector<32x24xbf16>
    tpu.vector_store %arg12[%c0_502, %c128_503], %347 {strides = array<i32>} : memref<32x280xbf16, #tpu.memory_space<vmem>>, vector<32x24xbf16>,
    %c0_504 = arith.constant 0 : index
    %c128_505 = arith.constant 128 : index
    %349 = vector.load %arg12[%c0_504, %c128_505] : memref<32x280xbf16, #tpu.memory_space<vmem>>, vector<32x24xbf16>
    %c0_506 = arith.constant 0 : index
    %c129_507 = arith.constant 129 : index
    %350 = vector.load %arg12[%c0_506, %c129_507] : memref<32x280xbf16, #tpu.memory_space<vmem>>, vector<32x24xbf16>
    %c0_508 = arith.constant 0 : index
    %c134_509 = arith.constant 134 : index
    %351 = vector.load %arg12[%c0_508, %c134_509] : memref<32x280xbf16, #tpu.memory_space<vmem>>, vector<32x24xbf16>
    %c0_510 = arith.constant 0 : index
    %c135_511 = arith.constant 135 : index
    %352 = vector.load %arg12[%c0_510, %c135_511] : memref<32x280xbf16, #tpu.memory_space<vmem>>, vector<32x24xbf16>
    %353 = arith.maximumf %349, %350 : vector<32x24xbf16>
    %354 = arith.maximumf %351, %352 : vector<32x24xbf16>
    %355 = arith.maximumf %353, %354 : vector<32x24xbf16>
    %c1760 = arith.constant 1760 : index
    %c0_512 = arith.constant 0 : index
    %356 = vector.load %arg1[%c1760, %c0_512] : memref<1904x289xbf16, #tpu.memory_space<vmem>>, vector<24x8xbf16>
    %cst_513 = arith.constant dense<0.000000e+00> : vector<32x8xf32>
    %357 = tpu.matmul %355, %356, %cst_513 {dimension_numbers = #tpu.dot_dimension_numbers<[1], [0], [0], [1], [0, 0, 1, 1], [], []>} : vector<32x24xbf16>, vector<24x8xbf16>, vector<32x8xf32> -> vector<32x8xf32>
    %358 = arith.truncf %357 : vector<32x8xf32> to vector<32x8xbf16>
    %c0_514 = arith.constant 0 : index
    %c128_515 = arith.constant 128 : index
    %359 = vector.load %arg13[%c0_514, %c128_515] : memref<32x264xbf16, #tpu.memory_space<vmem>>, vector<32x8xbf16>
    tpu.vector_store %arg13[%c0_514, %c128_515], %358 {strides = array<i32>} : memref<32x264xbf16, #tpu.memory_space<vmem>>, vector<32x8xbf16>,
    %c0_516 = arith.constant 0 : index
    %c123_517 = arith.constant 123 : index
    %360 = vector.load %arg13[%c0_516, %c123_517] : memref<32x264xbf16, #tpu.memory_space<vmem>>, vector<32x8xbf16>
    %c0_518 = arith.constant 0 : index
    %c0_519 = arith.constant 0 : index
    %361 = vector.load %arg4[%c0_518, %c0_519] : memref<289x1088xbf16, #tpu.memory_space<vmem>>, vector<32x8xbf16>
    tpu.vector_store %arg4[%c0_518, %c0_519], %360 {strides = array<i32>} : memref<289x1088xbf16, #tpu.memory_space<vmem>>, vector<32x8xbf16>,
    %c0_520 = arith.constant 0 : index
    %c124 = arith.constant 124 : index
    %362 = vector.load %arg13[%c0_520, %c124] : memref<32x264xbf16, #tpu.memory_space<vmem>>, vector<32x8xbf16>
    %c32_521 = arith.constant 32 : index
    %c0_522 = arith.constant 0 : index
    %363 = vector.load %arg4[%c32_521, %c0_522] : memref<289x1088xbf16, #tpu.memory_space<vmem>>, vector<32x8xbf16>
    tpu.vector_store %arg4[%c32_521, %c0_522], %362 {strides = array<i32>} : memref<289x1088xbf16, #tpu.memory_space<vmem>>, vector<32x8xbf16>,
    %c0_523 = arith.constant 0 : index
    %c125 = arith.constant 125 : index
    %364 = vector.load %arg13[%c0_523, %c125] : memref<32x264xbf16, #tpu.memory_space<vmem>>, vector<32x8xbf16>
    %c64_524 = arith.constant 64 : index
    %c0_525 = arith.constant 0 : index
    %365 = vector.load %arg4[%c64_524, %c0_525] : memref<289x1088xbf16, #tpu.memory_space<vmem>>, vector<32x8xbf16>
    tpu.vector_store %arg4[%c64_524, %c0_525], %364 {strides = array<i32>} : memref<289x1088xbf16, #tpu.memory_space<vmem>>, vector<32x8xbf16>,
    %c0_526 = arith.constant 0 : index
    %c127_527 = arith.constant 127 : index
    %366 = vector.load %arg13[%c0_526, %c127_527] : memref<32x264xbf16, #tpu.memory_space<vmem>>, vector<32x8xbf16>
    %c96_528 = arith.constant 96 : index
    %c0_529 = arith.constant 0 : index
    %367 = vector.load %arg4[%c96_528, %c0_529] : memref<289x1088xbf16, #tpu.memory_space<vmem>>, vector<32x8xbf16>
    tpu.vector_store %arg4[%c96_528, %c0_529], %366 {strides = array<i32>} : memref<289x1088xbf16, #tpu.memory_space<vmem>>, vector<32x8xbf16>,
    %c0_530 = arith.constant 0 : index
    %c128_531 = arith.constant 128 : index
    %368 = vector.load %arg13[%c0_530, %c128_531] : memref<32x264xbf16, #tpu.memory_space<vmem>>, vector<32x8xbf16>
    %c128_532 = arith.constant 128 : index
    %c0_533 = arith.constant 0 : index
    %369 = vector.load %arg4[%c128_532, %c0_533] : memref<289x1088xbf16, #tpu.memory_space<vmem>>, vector<32x8xbf16>
    tpu.vector_store %arg4[%c128_532, %c0_533], %368 {strides = array<i32>} : memref<289x1088xbf16, #tpu.memory_space<vmem>>, vector<32x8xbf16>,
    %c0_534 = arith.constant 0 : index
    %c129_535 = arith.constant 129 : index
    %370 = vector.load %arg13[%c0_534, %c129_535] : memref<32x264xbf16, #tpu.memory_space<vmem>>, vector<32x8xbf16>
    %c160_536 = arith.constant 160 : index
    %c0_537 = arith.constant 0 : index
    %371 = vector.load %arg4[%c160_536, %c0_537] : memref<289x1088xbf16, #tpu.memory_space<vmem>>, vector<32x8xbf16>
    tpu.vector_store %arg4[%c160_536, %c0_537], %370 {strides = array<i32>} : memref<289x1088xbf16, #tpu.memory_space<vmem>>, vector<32x8xbf16>,
    %c0_538 = arith.constant 0 : index
    %c131 = arith.constant 131 : index
    %372 = vector.load %arg13[%c0_538, %c131] : memref<32x264xbf16, #tpu.memory_space<vmem>>, vector<32x8xbf16>
    %c192_539 = arith.constant 192 : index
    %c0_540 = arith.constant 0 : index
    %373 = vector.load %arg4[%c192_539, %c0_540] : memref<289x1088xbf16, #tpu.memory_space<vmem>>, vector<32x8xbf16>
    tpu.vector_store %arg4[%c192_539, %c0_540], %372 {strides = array<i32>} : memref<289x1088xbf16, #tpu.memory_space<vmem>>, vector<32x8xbf16>,
    %c0_541 = arith.constant 0 : index
    %c132 = arith.constant 132 : index
    %374 = vector.load %arg13[%c0_541, %c132] : memref<32x264xbf16, #tpu.memory_space<vmem>>, vector<32x8xbf16>
    %c224_542 = arith.constant 224 : index
    %c0_543 = arith.constant 0 : index
    %375 = vector.load %arg4[%c224_542, %c0_543] : memref<289x1088xbf16, #tpu.memory_space<vmem>>, vector<32x8xbf16>
    tpu.vector_store %arg4[%c224_542, %c0_543], %374 {strides = array<i32>} : memref<289x1088xbf16, #tpu.memory_space<vmem>>, vector<32x8xbf16>,
    %c0_544 = arith.constant 0 : index
    %c133_545 = arith.constant 133 : index
    %376 = vector.load %arg13[%c0_544, %c133_545] : memref<32x264xbf16, #tpu.memory_space<vmem>>, vector<32x8xbf16>
    %c256_546 = arith.constant 256 : index
    %c0_547 = arith.constant 0 : index
    %377 = vector.load %arg4[%c256_546, %c0_547] : memref<289x1088xbf16, #tpu.memory_space<vmem>>, vector<32x8xbf16>
    tpu.vector_store %arg4[%c256_546, %c0_547], %376 {strides = array<i32>} : memref<289x1088xbf16, #tpu.memory_space<vmem>>, vector<32x8xbf16>,
    %c208_548 = arith.constant 208 : index
    %c0_549 = arith.constant 0 : index
    %378 = vector.load %arg1[%c208_548, %c0_549] : memref<1904x289xbf16, #tpu.memory_space<vmem>>, vector<32x289xbf16>
    %c0_550 = arith.constant 0 : index
    %c0_551 = arith.constant 0 : index
    %379 = vector.load %arg4[%c0_550, %c0_551] : memref<289x1088xbf16, #tpu.memory_space<vmem>>, vector<289x8xbf16>
    %cst_552 = arith.constant dense<0.000000e+00> : vector<32x8xf32>
    %380 = tpu.matmul %378, %379, %cst_552 {dimension_numbers = #tpu.dot_dimension_numbers<[1], [0], [0], [1], [0, 0, 1, 1], [], []>} : vector<32x289xbf16>, vector<289x8xbf16>, vector<32x8xf32> -> vector<32x8xf32>
    %c4 = arith.constant 4 : index
    %c0_553 = arith.constant 0 : index
    %381 = vector.load %arg2[%c4, %c0_553] : memref<11x1088xf32, #tpu.memory_space<vmem>>, vector<1x8xf32>
    %cst_554 = arith.constant 0.000000e+00 : f32
    %382 = vector.broadcast %cst_554 : f32 to vector<32x8xf32>
    %383 = arith.maximumf %380, %382 : vector<32x8xf32>
    %384 = vector.broadcast %381 : vector<1x8xf32> to vector<32x8xf32>
    %385 = arith.mulf %383, %384 : vector<32x8xf32>
    %386 = arith.truncf %385 : vector<32x8xf32> to vector<32x8xbf16>
    %c0_555 = arith.constant 0 : index
    %c128_556 = arith.constant 128 : index
    %387 = vector.load %arg14[%c0_555, %c128_556] : memref<32x264xbf16, #tpu.memory_space<vmem>>, vector<32x8xbf16>
    tpu.vector_store %arg14[%c0_555, %c128_556], %386 {strides = array<i32>} : memref<32x264xbf16, #tpu.memory_space<vmem>>, vector<32x8xbf16>,
    %c0_557 = arith.constant 0 : index
    %c123_558 = arith.constant 123 : index
    %388 = vector.load %arg14[%c0_557, %c123_558] : memref<32x264xbf16, #tpu.memory_space<vmem>>, vector<32x8xbf16>
    %c0_559 = arith.constant 0 : index
    %c0_560 = arith.constant 0 : index
    %389 = vector.load %arg4[%c0_559, %c0_560] : memref<289x1088xbf16, #tpu.memory_space<vmem>>, vector<32x8xbf16>
    tpu.vector_store %arg4[%c0_559, %c0_560], %388 {strides = array<i32>} : memref<289x1088xbf16, #tpu.memory_space<vmem>>, vector<32x8xbf16>,
    %c0_561 = arith.constant 0 : index
    %c124_562 = arith.constant 124 : index
    %390 = vector.load %arg14[%c0_561, %c124_562] : memref<32x264xbf16, #tpu.memory_space<vmem>>, vector<32x8xbf16>
    %c32_563 = arith.constant 32 : index
    %c0_564 = arith.constant 0 : index
    %391 = vector.load %arg4[%c32_563, %c0_564] : memref<289x1088xbf16, #tpu.memory_space<vmem>>, vector<32x8xbf16>
    tpu.vector_store %arg4[%c32_563, %c0_564], %390 {strides = array<i32>} : memref<289x1088xbf16, #tpu.memory_space<vmem>>, vector<32x8xbf16>,
    %c0_565 = arith.constant 0 : index
    %c125_566 = arith.constant 125 : index
    %392 = vector.load %arg14[%c0_565, %c125_566] : memref<32x264xbf16, #tpu.memory_space<vmem>>, vector<32x8xbf16>
    %c64_567 = arith.constant 64 : index
    %c0_568 = arith.constant 0 : index
    %393 = vector.load %arg4[%c64_567, %c0_568] : memref<289x1088xbf16, #tpu.memory_space<vmem>>, vector<32x8xbf16>
    tpu.vector_store %arg4[%c64_567, %c0_568], %392 {strides = array<i32>} : memref<289x1088xbf16, #tpu.memory_space<vmem>>, vector<32x8xbf16>,
    %c0_569 = arith.constant 0 : index
    %c127_570 = arith.constant 127 : index
    %394 = vector.load %arg14[%c0_569, %c127_570] : memref<32x264xbf16, #tpu.memory_space<vmem>>, vector<32x8xbf16>
    %c96_571 = arith.constant 96 : index
    %c0_572 = arith.constant 0 : index
    %395 = vector.load %arg4[%c96_571, %c0_572] : memref<289x1088xbf16, #tpu.memory_space<vmem>>, vector<32x8xbf16>
    tpu.vector_store %arg4[%c96_571, %c0_572], %394 {strides = array<i32>} : memref<289x1088xbf16, #tpu.memory_space<vmem>>, vector<32x8xbf16>,
    %c0_573 = arith.constant 0 : index
    %c128_574 = arith.constant 128 : index
    %396 = vector.load %arg14[%c0_573, %c128_574] : memref<32x264xbf16, #tpu.memory_space<vmem>>, vector<32x8xbf16>
    %c128_575 = arith.constant 128 : index
    %c0_576 = arith.constant 0 : index
    %397 = vector.load %arg4[%c128_575, %c0_576] : memref<289x1088xbf16, #tpu.memory_space<vmem>>, vector<32x8xbf16>
    tpu.vector_store %arg4[%c128_575, %c0_576], %396 {strides = array<i32>} : memref<289x1088xbf16, #tpu.memory_space<vmem>>, vector<32x8xbf16>,
    %c0_577 = arith.constant 0 : index
    %c129_578 = arith.constant 129 : index
    %398 = vector.load %arg14[%c0_577, %c129_578] : memref<32x264xbf16, #tpu.memory_space<vmem>>, vector<32x8xbf16>
    %c160_579 = arith.constant 160 : index
    %c0_580 = arith.constant 0 : index
    %399 = vector.load %arg4[%c160_579, %c0_580] : memref<289x1088xbf16, #tpu.memory_space<vmem>>, vector<32x8xbf16>
    tpu.vector_store %arg4[%c160_579, %c0_580], %398 {strides = array<i32>} : memref<289x1088xbf16, #tpu.memory_space<vmem>>, vector<32x8xbf16>,
    %c0_581 = arith.constant 0 : index
    %c131_582 = arith.constant 131 : index
    %400 = vector.load %arg14[%c0_581, %c131_582] : memref<32x264xbf16, #tpu.memory_space<vmem>>, vector<32x8xbf16>
    %c192_583 = arith.constant 192 : index
    %c0_584 = arith.constant 0 : index
    %401 = vector.load %arg4[%c192_583, %c0_584] : memref<289x1088xbf16, #tpu.memory_space<vmem>>, vector<32x8xbf16>
    tpu.vector_store %arg4[%c192_583, %c0_584], %400 {strides = array<i32>} : memref<289x1088xbf16, #tpu.memory_space<vmem>>, vector<32x8xbf16>,
    %c0_585 = arith.constant 0 : index
    %c132_586 = arith.constant 132 : index
    %402 = vector.load %arg14[%c0_585, %c132_586] : memref<32x264xbf16, #tpu.memory_space<vmem>>, vector<32x8xbf16>
    %c224_587 = arith.constant 224 : index
    %c0_588 = arith.constant 0 : index
    %403 = vector.load %arg4[%c224_587, %c0_588] : memref<289x1088xbf16, #tpu.memory_space<vmem>>, vector<32x8xbf16>
    tpu.vector_store %arg4[%c224_587, %c0_588], %402 {strides = array<i32>} : memref<289x1088xbf16, #tpu.memory_space<vmem>>, vector<32x8xbf16>,
    %c0_589 = arith.constant 0 : index
    %c133_590 = arith.constant 133 : index
    %404 = vector.load %arg14[%c0_589, %c133_590] : memref<32x264xbf16, #tpu.memory_space<vmem>>, vector<32x8xbf16>
    %c256_591 = arith.constant 256 : index
    %c0_592 = arith.constant 0 : index
    %405 = vector.load %arg4[%c256_591, %c0_592] : memref<289x1088xbf16, #tpu.memory_space<vmem>>, vector<32x8xbf16>
    tpu.vector_store %arg4[%c256_591, %c0_592], %404 {strides = array<i32>} : memref<289x1088xbf16, #tpu.memory_space<vmem>>, vector<32x8xbf16>,
    %c240 = arith.constant 240 : index
    %c0_593 = arith.constant 0 : index
    %406 = vector.load %arg1[%c240, %c0_593] : memref<1904x289xbf16, #tpu.memory_space<vmem>>, vector<32x289xbf16>
    %c0_594 = arith.constant 0 : index
    %c0_595 = arith.constant 0 : index
    %407 = vector.load %arg4[%c0_594, %c0_595] : memref<289x1088xbf16, #tpu.memory_space<vmem>>, vector<289x8xbf16>
    %cst_596 = arith.constant dense<0.000000e+00> : vector<32x8xf32>
    %408 = tpu.matmul %406, %407, %cst_596 {dimension_numbers = #tpu.dot_dimension_numbers<[1], [0], [0], [1], [0, 0, 1, 1], [], []>} : vector<32x289xbf16>, vector<289x8xbf16>, vector<32x8xf32> -> vector<32x8xf32>
    %c4_597 = arith.constant 4 : index
    %c0_598 = arith.constant 0 : index
    %409 = vector.load %arg2[%c4_597, %c0_598] : memref<11x1088xf32, #tpu.memory_space<vmem>>, vector<1x8xf32>
    %cst_599 = arith.constant 0.000000e+00 : f32
    %410 = vector.broadcast %cst_599 : f32 to vector<32x8xf32>
    %411 = arith.maximumf %408, %410 : vector<32x8xf32>
    %412 = vector.broadcast %409 : vector<1x8xf32> to vector<32x8xf32>
    %413 = arith.mulf %411, %412 : vector<32x8xf32>
    %414 = arith.truncf %413 : vector<32x8xf32> to vector<32x8xbf16>
    %c0_600 = arith.constant 0 : index
    %c128_601 = arith.constant 128 : index
    %415 = vector.load %arg13[%c0_600, %c128_601] : memref<32x264xbf16, #tpu.memory_space<vmem>>, vector<32x8xbf16>
    tpu.vector_store %arg13[%c0_600, %c128_601], %414 {strides = array<i32>} : memref<32x264xbf16, #tpu.memory_space<vmem>>, vector<32x8xbf16>,
    %c0_602 = arith.constant 0 : index
    %c123_603 = arith.constant 123 : index
    %416 = vector.load %arg13[%c0_602, %c123_603] : memref<32x264xbf16, #tpu.memory_space<vmem>>, vector<32x8xbf16>
    %c0_604 = arith.constant 0 : index
    %c0_605 = arith.constant 0 : index
    %417 = vector.load %arg4[%c0_604, %c0_605] : memref<289x1088xbf16, #tpu.memory_space<vmem>>, vector<32x8xbf16>
    tpu.vector_store %arg4[%c0_604, %c0_605], %416 {strides = array<i32>} : memref<289x1088xbf16, #tpu.memory_space<vmem>>, vector<32x8xbf16>,
    %c0_606 = arith.constant 0 : index
    %c124_607 = arith.constant 124 : index
    %418 = vector.load %arg13[%c0_606, %c124_607] : memref<32x264xbf16, #tpu.memory_space<vmem>>, vector<32x8xbf16>
    %c32_608 = arith.constant 32 : index
    %c0_609 = arith.constant 0 : index
    %419 = vector.load %arg4[%c32_608, %c0_609] : memref<289x1088xbf16, #tpu.memory_space<vmem>>, vector<32x8xbf16>
    tpu.vector_store %arg4[%c32_608, %c0_609], %418 {strides = array<i32>} : memref<289x1088xbf16, #tpu.memory_space<vmem>>, vector<32x8xbf16>,
    %c0_610 = arith.constant 0 : index
    %c125_611 = arith.constant 125 : index
    %420 = vector.load %arg13[%c0_610, %c125_611] : memref<32x264xbf16, #tpu.memory_space<vmem>>, vector<32x8xbf16>
    %c64_612 = arith.constant 64 : index
    %c0_613 = arith.constant 0 : index
    %421 = vector.load %arg4[%c64_612, %c0_613] : memref<289x1088xbf16, #tpu.memory_space<vmem>>, vector<32x8xbf16>
    tpu.vector_store %arg4[%c64_612, %c0_613], %420 {strides = array<i32>} : memref<289x1088xbf16, #tpu.memory_space<vmem>>, vector<32x8xbf16>,
    %c0_614 = arith.constant 0 : index
    %c127_615 = arith.constant 127 : index
    %422 = vector.load %arg13[%c0_614, %c127_615] : memref<32x264xbf16, #tpu.memory_space<vmem>>, vector<32x8xbf16>
    %c96_616 = arith.constant 96 : index
    %c0_617 = arith.constant 0 : index
    %423 = vector.load %arg4[%c96_616, %c0_617] : memref<289x1088xbf16, #tpu.memory_space<vmem>>, vector<32x8xbf16>
    tpu.vector_store %arg4[%c96_616, %c0_617], %422 {strides = array<i32>} : memref<289x1088xbf16, #tpu.memory_space<vmem>>, vector<32x8xbf16>,
    %c0_618 = arith.constant 0 : index
    %c128_619 = arith.constant 128 : index
    %424 = vector.load %arg13[%c0_618, %c128_619] : memref<32x264xbf16, #tpu.memory_space<vmem>>, vector<32x8xbf16>
    %c128_620 = arith.constant 128 : index
    %c0_621 = arith.constant 0 : index
    %425 = vector.load %arg4[%c128_620, %c0_621] : memref<289x1088xbf16, #tpu.memory_space<vmem>>, vector<32x8xbf16>
    tpu.vector_store %arg4[%c128_620, %c0_621], %424 {strides = array<i32>} : memref<289x1088xbf16, #tpu.memory_space<vmem>>, vector<32x8xbf16>,
    %c0_622 = arith.constant 0 : index
    %c129_623 = arith.constant 129 : index
    %426 = vector.load %arg13[%c0_622, %c129_623] : memref<32x264xbf16, #tpu.memory_space<vmem>>, vector<32x8xbf16>
    %c160_624 = arith.constant 160 : index
    %c0_625 = arith.constant 0 : index
    %427 = vector.load %arg4[%c160_624, %c0_625] : memref<289x1088xbf16, #tpu.memory_space<vmem>>, vector<32x8xbf16>
    tpu.vector_store %arg4[%c160_624, %c0_625], %426 {strides = array<i32>} : memref<289x1088xbf16, #tpu.memory_space<vmem>>, vector<32x8xbf16>,
    %c0_626 = arith.constant 0 : index
    %c131_627 = arith.constant 131 : index
    %428 = vector.load %arg13[%c0_626, %c131_627] : memref<32x264xbf16, #tpu.memory_space<vmem>>, vector<32x8xbf16>
    %c192_628 = arith.constant 192 : index
    %c0_629 = arith.constant 0 : index
    %429 = vector.load %arg4[%c192_628, %c0_629] : memref<289x1088xbf16, #tpu.memory_space<vmem>>, vector<32x8xbf16>
    tpu.vector_store %arg4[%c192_628, %c0_629], %428 {strides = array<i32>} : memref<289x1088xbf16, #tpu.memory_space<vmem>>, vector<32x8xbf16>,
    %c0_630 = arith.constant 0 : index
    %c132_631 = arith.constant 132 : index
    %430 = vector.load %arg13[%c0_630, %c132_631] : memref<32x264xbf16, #tpu.memory_space<vmem>>, vector<32x8xbf16>
    %c224_632 = arith.constant 224 : index
    %c0_633 = arith.constant 0 : index
    %431 = vector.load %arg4[%c224_632, %c0_633] : memref<289x1088xbf16, #tpu.memory_space<vmem>>, vector<32x8xbf16>
    tpu.vector_store %arg4[%c224_632, %c0_633], %430 {strides = array<i32>} : memref<289x1088xbf16, #tpu.memory_space<vmem>>, vector<32x8xbf16>,
    %c0_634 = arith.constant 0 : index
    %c133_635 = arith.constant 133 : index
    %432 = vector.load %arg13[%c0_634, %c133_635] : memref<32x264xbf16, #tpu.memory_space<vmem>>, vector<32x8xbf16>
    %c256_636 = arith.constant 256 : index
    %c0_637 = arith.constant 0 : index
    %433 = vector.load %arg4[%c256_636, %c0_637] : memref<289x1088xbf16, #tpu.memory_space<vmem>>, vector<32x8xbf16>
    tpu.vector_store %arg4[%c256_636, %c0_637], %432 {strides = array<i32>} : memref<289x1088xbf16, #tpu.memory_space<vmem>>, vector<32x8xbf16>,
    %c272 = arith.constant 272 : index
    %c0_638 = arith.constant 0 : index
    %434 = vector.load %arg1[%c272, %c0_638] : memref<1904x289xbf16, #tpu.memory_space<vmem>>, vector<32x289xbf16>
    %c0_639 = arith.constant 0 : index
    %c0_640 = arith.constant 0 : index
    %435 = vector.load %arg4[%c0_639, %c0_640] : memref<289x1088xbf16, #tpu.memory_space<vmem>>, vector<289x8xbf16>
    %cst_641 = arith.constant dense<0.000000e+00> : vector<32x8xf32>
    %436 = tpu.matmul %434, %435, %cst_641 {dimension_numbers = #tpu.dot_dimension_numbers<[1], [0], [0], [1], [0, 0, 1, 1], [], []>} : vector<32x289xbf16>, vector<289x8xbf16>, vector<32x8xf32> -> vector<32x8xf32>
    %c4_642 = arith.constant 4 : index
    %c0_643 = arith.constant 0 : index
    %437 = vector.load %arg2[%c4_642, %c0_643] : memref<11x1088xf32, #tpu.memory_space<vmem>>, vector<1x8xf32>
    %cst_644 = arith.constant 0.000000e+00 : f32
    %438 = vector.broadcast %cst_644 : f32 to vector<32x8xf32>
    %439 = arith.maximumf %436, %438 : vector<32x8xf32>
    %440 = vector.broadcast %437 : vector<1x8xf32> to vector<32x8xf32>
    %441 = arith.mulf %439, %440 : vector<32x8xf32>
    %442 = arith.truncf %441 : vector<32x8xf32> to vector<32x8xbf16>
    %c0_645 = arith.constant 0 : index
    %c128_646 = arith.constant 128 : index
    %443 = vector.load %arg14[%c0_645, %c128_646] : memref<32x264xbf16, #tpu.memory_space<vmem>>, vector<32x8xbf16>
    tpu.vector_store %arg14[%c0_645, %c128_646], %442 {strides = array<i32>} : memref<32x264xbf16, #tpu.memory_space<vmem>>, vector<32x8xbf16>,
    %c0_647 = arith.constant 0 : index
    %c128_648 = arith.constant 128 : index
    %444 = vector.load %arg14[%c0_647, %c128_648] : memref<32x264xbf16, #tpu.memory_space<vmem>>, vector<32x8xbf16>
    %c1792 = arith.constant 1792 : index
    %c0_649 = arith.constant 0 : index
    %445 = vector.load %arg1[%c1792, %c0_649] : memref<1904x289xbf16, #tpu.memory_space<vmem>>, vector<8x4xbf16>
    %cst_650 = arith.constant dense<0.000000e+00> : vector<32x4xf32>
    %446 = tpu.matmul %444, %445, %cst_650 {dimension_numbers = #tpu.dot_dimension_numbers<[1], [0], [0], [1], [0, 0, 1, 1], [], []>} : vector<32x8xbf16>, vector<8x4xbf16>, vector<32x4xf32> -> vector<32x4xf32>
    %447 = arith.truncf %446 : vector<32x4xf32> to vector<32x4xbf16>
    %c7 = arith.constant 7 : index
    %c0_651 = arith.constant 0 : index
    %448 = vector.load %arg2[%c7, %c0_651] : memref<11x1088xf32, #tpu.memory_space<vmem>>, vector<4x8xf32>
    %c1808 = arith.constant 1808 : index
    %c0_652 = arith.constant 0 : index
    %449 = vector.load %arg1[%c1808, %c0_652] : memref<1904x289xbf16, #tpu.memory_space<vmem>>, vector<8x16xbf16>
    %c1824 = arith.constant 1824 : index
    %c0_653 = arith.constant 0 : index
    %450 = vector.load %arg1[%c1824, %c0_653] : memref<1904x289xbf16, #tpu.memory_space<vmem>>, vector<16x32xbf16>
    %451 = arith.truncf %448 : vector<4x8xf32> to vector<4x8xbf16>
    %cst_654 = arith.constant dense<0.000000e+00> : vector<4x16xf32>
    %452 = tpu.matmul %451, %449, %cst_654 {dimension_numbers = #tpu.dot_dimension_numbers<[1], [0], [0], [1], [0, 0, 1, 1], [], []>} : vector<4x8xbf16>, vector<8x16xbf16>, vector<4x16xf32> -> vector<4x16xf32>
    %cst_655 = arith.constant dense<0.000000e+00> : vector<16x4xf32>
    %453 = tpu.matmul %450, %447, %cst_655 {dimension_numbers = #tpu.dot_dimension_numbers<[1], [0], [0], [1], [0, 0, 1, 1], [], []>} : vector<16x32xbf16>, vector<32x4xbf16>, vector<16x4xf32> -> vector<16x4xf32>
    %454 = arith.truncf %452 : vector<4x16xf32> to vector<4x16xbf16>
    %455 = arith.truncf %453 : vector<16x4xf32> to vector<16x4xbf16>
    %cst_656 = arith.constant dense<0.000000e+00> : vector<4x4xf32>
    %456 = tpu.matmul %454, %455, %cst_656 {dimension_numbers = #tpu.dot_dimension_numbers<[1], [0], [0], [1], [0, 0, 1, 1], [], []>} : vector<4x16xbf16>, vector<16x4xbf16>, vector<4x4xf32> -> vector<4x4xf32>
    %457 = arith.mulf %452, %452 : vector<4x16xf32>
    %cst_657 = arith.constant dense<0.000000e+00> : vector<4xf32>
    %458 = vector.multi_reduction <add>, %457, %cst_657 [1] : vector<4x16xf32> to vector<4xf32>
    %459 = vector.shape_cast %458 : vector<4xf32> to vector<4x1xf32>
    %460 = math.sqrt %459 : vector<4x1xf32>
    %461 = arith.mulf %453, %453 : vector<16x4xf32>
    %cst_658 = arith.constant dense<0.000000e+00> : vector<4xf32>
    %462 = vector.multi_reduction <add>, %461, %cst_658 [0] : vector<16x4xf32> to vector<4xf32>
    %463 = vector.shape_cast %462 : vector<4xf32> to vector<1x4xf32>
    %464 = math.sqrt %463 : vector<1x4xf32>
    %465 = vector.broadcast %460 : vector<4x1xf32> to vector<4x4xf32>
    %466 = vector.broadcast %464 : vector<1x4xf32> to vector<4x4xf32>
    %467 = arith.mulf %465, %466 : vector<4x4xf32>
    %cst_659 = arith.constant 9.99999974E-5 : f32
    %468 = vector.broadcast %cst_659 : f32 to vector<4x4xf32>
    %469 = arith.maximumf %467, %468 : vector<4x4xf32>
    %470 = arith.divf %456, %469 : vector<4x4xf32>
    %cst_660 = arith.constant dense<0xFF800000> : vector<4xf32>
    %471 = vector.multi_reduction <maximumf>, %470, %cst_660 [1] : vector<4x4xf32> to vector<4xf32>
    %472 = vector.shape_cast %471 : vector<4xf32> to vector<4x1xf32>
    %473 = vector.broadcast %472 : vector<4x1xf32> to vector<4x4xf32>
    %474 = arith.subf %470, %473 : vector<4x4xf32>
    %475 = math.exp %474 : vector<4x4xf32>
    %cst_661 = arith.constant dense<0.000000e+00> : vector<4xf32>
    %476 = vector.multi_reduction <add>, %475, %cst_661 [1] : vector<4x4xf32> to vector<4xf32>
    %477 = vector.shape_cast %476 : vector<4xf32> to vector<4x1xf32>
    %478 = vector.broadcast %477 : vector<4x1xf32> to vector<4x4xf32>
    %479 = arith.divf %475, %478 : vector<4x4xf32>
    %480 = arith.truncf %479 : vector<4x4xf32> to vector<4x4xbf16>
    %cst_662 = arith.constant dense<0.000000e+00> : vector<4x32xf32>
    %481 = tpu.matmul %480, %447, %cst_662 {dimension_numbers = #tpu.dot_dimension_numbers<[1], [1], [0], [0], [0, 0, 1, 0], [], []>} : vector<4x4xbf16>, vector<32x4xbf16>, vector<4x32xf32> -> vector<4x32xf32>
    %c1840 = arith.constant 1840 : index
    %c0_663 = arith.constant 0 : index
    %482 = vector.load %arg1[%c1840, %c0_663] : memref<1904x289xbf16, #tpu.memory_space<vmem>>, vector<32x32xbf16>
    %c1872 = arith.constant 1872 : index
    %c0_664 = arith.constant 0 : index
    %483 = vector.load %arg1[%c1872, %c0_664] : memref<1904x289xbf16, #tpu.memory_space<vmem>>, vector<32x8xbf16>
    %c5 = arith.constant 5 : index
    %c0_665 = arith.constant 0 : index
    %484 = vector.load %arg2[%c5, %c0_665] : memref<11x1088xf32, #tpu.memory_space<vmem>>, vector<1x32xf32>
    %c6 = arith.constant 6 : index
    %c0_666 = arith.constant 0 : index
    %485 = vector.load %arg2[%c6, %c0_666] : memref<11x1088xf32, #tpu.memory_space<vmem>>, vector<1x8xf32>
    %486 = arith.truncf %481 : vector<4x32xf32> to vector<4x32xbf16>
    %cst_667 = arith.constant dense<0.000000e+00> : vector<4x32xf32>
    %487 = tpu.matmul %486, %482, %cst_667 {dimension_numbers = #tpu.dot_dimension_numbers<[1], [0], [0], [1], [0, 0, 1, 1], [], []>} : vector<4x32xbf16>, vector<32x32xbf16>, vector<4x32xf32> -> vector<4x32xf32>
    %488 = vector.broadcast %484 : vector<1x32xf32> to vector<4x32xf32>
    %489 = arith.addf %487, %488 : vector<4x32xf32>
    %cst_668 = arith.constant 0.000000e+00 : f32
    %490 = vector.broadcast %cst_668 : f32 to vector<4x32xf32>
    %491 = arith.maximumf %489, %490 : vector<4x32xf32>
    %492 = arith.truncf %491 : vector<4x32xf32> to vector<4x32xbf16>
    %cst_669 = arith.constant dense<0.000000e+00> : vector<4x8xf32>
    %493 = tpu.matmul %492, %483, %cst_669 {dimension_numbers = #tpu.dot_dimension_numbers<[1], [0], [0], [1], [0, 0, 1, 1], [], []>} : vector<4x32xbf16>, vector<32x8xbf16>, vector<4x8xf32> -> vector<4x8xf32>
    %494 = vector.broadcast %485 : vector<1x8xf32> to vector<4x8xf32>
    %495 = arith.addf %493, %494 : vector<4x8xf32>
    %cst_670 = arith.constant dense<0xFF800000> : vector<4xf32>
    %496 = vector.multi_reduction <maximumf>, %495, %cst_670 [1] : vector<4x8xf32> to vector<4xf32>
    %497 = vector.shape_cast %496 : vector<4xf32> to vector<4x1xf32>
    %498 = vector.broadcast %497 : vector<4x1xf32> to vector<4x8xf32>
    %499 = arith.subf %495, %498 : vector<4x8xf32>
    %500 = math.exp %499 : vector<4x8xf32>
    %cst_671 = arith.constant dense<0.000000e+00> : vector<4xf32>
    %501 = vector.multi_reduction <add>, %500, %cst_671 [1] : vector<4x8xf32> to vector<4xf32>
    %502 = vector.shape_cast %501 : vector<4xf32> to vector<4x1xf32>
    %503 = vector.broadcast %502 : vector<4x1xf32> to vector<4x8xf32>
    %504 = arith.divf %500, %503 : vector<4x8xf32>
    %505 = math.log %502 : vector<4x1xf32>
    %506 = arith.addf %505, %497 : vector<4x1xf32>
    %507 = arith.mulf %495, %448 : vector<4x8xf32>
    %cst_672 = arith.constant dense<0.000000e+00> : vector<4xf32>
    %508 = vector.multi_reduction <add>, %507, %cst_672 [1] : vector<4x8xf32> to vector<4xf32>
    %509 = vector.shape_cast %508 : vector<4xf32> to vector<4x1xf32>
    %510 = arith.subf %506, %509 : vector<4x1xf32>
    %511 = vector.shape_cast %510 : vector<4x1xf32> to vector<1x4x1xf32>
    %cst_673 = arith.constant dense<0.000000e+00> : vector<1xf32>
    %512 = vector.multi_reduction <add>, %511, %cst_673 [1, 2] : vector<1x4x1xf32> to vector<1xf32>
    %513 = vector.shape_cast %512 : vector<1xf32> to vector<1x1x1xf32>
    %514 = vector.extract %513[0, 0, 0] : f32 from vector<1x1x1xf32>
    %515 = vector.broadcast %514 : f32 to vector<1x1xf32>
    %cst_674 = arith.constant 4.000000e+00 : f32
    %516 = vector.broadcast %cst_674 : f32 to vector<1x1xf32>
    %517 = arith.divf %515, %516 : vector<1x1xf32>
    %cst_675 = arith.constant 0.000000e+00 : f32
    %518 = vector.broadcast %cst_675 : f32 to vector<8x128xf32>
    %c0_676 = arith.constant 0 : index
    %c0_677 = arith.constant 0 : index
    %519 = vector.load %arg3[%c0_676, %c0_677] : memref<8x128xf32, #tpu.memory_space<vmem>>, vector<8x128xf32>
    tpu.vector_store %arg3[%c0_676, %c0_677], %518 {strides = array<i32>} : memref<8x128xf32, #tpu.memory_space<vmem>>, vector<8x128xf32>,
    %c0_678 = arith.constant 0 : index
    %c0_679 = arith.constant 0 : index
    %520 = vector.load %arg3[%c0_678, %c0_679] : memref<8x128xf32, #tpu.memory_space<vmem>>, vector<4x8xf32>
    tpu.vector_store %arg3[%c0_678, %c0_679], %504 {strides = array<i32>} : memref<8x128xf32, #tpu.memory_space<vmem>>, vector<4x8xf32>,
    %c0_680 = arith.constant 0 : index
    %c8 = arith.constant 8 : index
    %521 = vector.load %arg3[%c0_680, %c8] : memref<8x128xf32, #tpu.memory_space<vmem>>, vector<4x4xf32>
    tpu.vector_store %arg3[%c0_680, %c8], %479 {strides = array<i32>} : memref<8x128xf32, #tpu.memory_space<vmem>>, vector<4x4xf32>,
    %c7_681 = arith.constant 7 : index
    %c127_682 = arith.constant 127 : index
    %522 = vector.load %arg3[%c7_681, %c127_682] : memref<8x128xf32, #tpu.memory_space<vmem>>, vector<1x1xf32>
    tpu.vector_store %arg3[%c7_681, %c127_682], %517 {strides = array<i32>} : memref<8x128xf32, #tpu.memory_space<vmem>>, vector<1x1xf32>,
    return
  }
}

</mosaic_0001>

<llo_original>
// kernel: attentive_det_forward.1
$region0: #{attentive_det_forward.1}
  #allocation0 [shape = 'u32[]', space=smem, size = 0x4, offset = 0x4, fixed_abs, tag = 'smem constant byte address 0x4 - core index']
  #allocation1 [shape = 'u32[72,128]{1,0:T(1,128)}', space=vmem, size = 0x9000, scoped, tag = 'internal scratch']
  #allocation2 [shape = 'bf16[289,1088]{1,0:T(8,128)(2,1)}', space=vmem, size = 0xa6800, scoped, tag = 'scratch operand']
  #allocation3 [shape = 'bf16[8,1344]{1,0:T(8,128)(2,1)}', space=vmem, size = 0x5800, scoped, tag = 'scratch operand']
  #allocation4 [shape = 'bf16[8,1344]{1,0:T(8,128)(2,1)}', space=vmem, size = 0x5800, scoped, tag = 'scratch operand']
  #allocation5 [shape = 'bf16[16,544]{1,0:T(8,128)(2,1)}', space=vmem, size = 0x5000, scoped, tag = 'scratch operand']
  #allocation6 [shape = 'bf16[16,544]{1,0:T(8,128)(2,1)}', space=vmem, size = 0x5000, scoped, tag = 'scratch operand']
  #allocation7 [shape = 'bf16[16,336]{1,0:T(8,128)(2,1)}', space=vmem, size = 0x3000, scoped, tag = 'scratch operand']
  #allocation8 [shape = 'bf16[16,336]{1,0:T(8,128)(2,1)}', space=vmem, size = 0x3000, scoped, tag = 'scratch operand']
  #allocation9 [shape = 'bf16[32,280]{1,0:T(8,128)(2,1)}', space=vmem, size = 0x6000, scoped, tag = 'scratch operand']
  #allocation10 [shape = 'bf16[32,280]{1,0:T(8,128)(2,1)}', space=vmem, size = 0x6000, scoped, tag = 'scratch operand']
  #allocation11 [shape = 'bf16[32,264]{1,0:T(8,128)(2,1)}', space=vmem, size = 0x6000, scoped, tag = 'scratch operand']
  #allocation12 [shape = 'bf16[32,264]{1,0:T(8,128)(2,1)}', space=vmem, size = 0x6000, scoped, tag = 'scratch operand']
  %s0 = inlined_call_operand.vmem [shape: bf16[3,1344], index: 0, kind: input, shape index: {}]
  %s1 = inlined_call_operand.vmem [shape: bf16[1904,289], index: 1, kind: input, shape index: {}]
  %s2 = inlined_call_operand.vmem [shape: f32[11,1088], index: 2, kind: input, shape index: {}]
  %s3 = inlined_call_operand.vmem [shape: f32[8,128], index: 3, kind: output, shape index: {}]
  %s4 = sld [smem:[#allocation0]]
  $region22: #{attentive_det_forward.1} parent=0
    _
  %s6 = ssub.s32 1, %s4
  %s7 = scalar_select 0, %s6, %s4
  // Predicated region
  $region2: #{attentive_det_forward.1} parent=0 // pred_check
    _
  $region3: #{attentive_det_forward.1} parent=0 // pred_check_branch
    %9 = sbr.rel (0) target = $region5
  $region4: #{attentive_det_forward.1} parent=0 // pred_region
    _
  $region5: #{attentive_det_forward.1} parent=0 // pred_fallthru
    _
  // Predicated region
  $region6: #{attentive_det_forward.1} parent=0 // pred_check
    _
  $region7: #{attentive_det_forward.1} parent=0 // pred_check_branch
    %11 = sbr.rel (0) target = $region9
  $region8: #{attentive_det_forward.1} parent=0 // pred_region
    _
  $region9: #{attentive_det_forward.1} parent=0 // pred_fallthru
    _
  // Predicated region
  $region10: #{attentive_det_forward.1} parent=0 // pred_check
    _
  $region11: #{attentive_det_forward.1} parent=0 // pred_check_branch
    %13 = sbr.rel (0) target = $region13
  $region12: #{attentive_det_forward.1} parent=0 // pred_region
    _
  $region13: #{attentive_det_forward.1} parent=0 // pred_fallthru
    _
  %16 = vst [vmem:[#allocation2] sm:$0xff] 0
  %17 = vst [vmem:[#allocation2 + $0x8] sm:$0xff] 0
  %18 = vst [vmem:[#allocation2 + $0x10] sm:$0xff] 0
  %19 = vst [vmem:[#allocation2 + $0x18] sm:$0xff] 0
  %vm20 = vcmask 519168
  %21 = vst.msk [vmem:[#allocation2 + $0x20] sm:$0xf] %vm20, 0
  %22 = vst [vmem:[#allocation2 + $0x24] sm:$0xff] 0
  %23 = vst [vmem:[#allocation2 + $0x2c] sm:$0xff] 0
  %24 = vst [vmem:[#allocation2 + $0x34] sm:$0xff] 0
  %25 = vst [vmem:[#allocation2 + $0x3c] sm:$0xff] 0
  %26 = vst.msk [vmem:[#allocation2 + $0x44] sm:$0xf] %vm20, 0
  %27 = vst [vmem:[#allocation2 + $0x48] sm:$0xff] 0
  %28 = vst [vmem:[#allocation2 + $0x50] sm:$0xff] 0
  %29 = vst [vmem:[#allocation2 + $0x58] sm:$0xff] 0
  %30 = vst [vmem:[#allocation2 + $0x60] sm:$0xff] 0
  %31 = vst.msk [vmem:[#allocation2 + $0x68] sm:$0xf] %vm20, 0
  %32 = vst [vmem:[#allocation2 + $0x6c] sm:$0xff] 0
  %33 = vst [vmem:[#allocation2 + $0x74] sm:$0xff] 0
  %34 = vst [vmem:[#allocation2 + $0x7c] sm:$0xff] 0
  %35 = vst [vmem:[#allocation2 + $0x84] sm:$0xff] 0
  %36 = vst.msk [vmem:[#allocation2 + $0x8c] sm:$0xf] %vm20, 0
  %37 = vst [vmem:[#allocation2 + $0x90] sm:$0xff] 0
  %38 = vst [vmem:[#allocation2 + $0x98] sm:$0xff] 0
  %39 = vst [vmem:[#allocation2 + $0xa0] sm:$0xff] 0
  %40 = vst [vmem:[#allocation2 + $0xa8] sm:$0xff] 0
  %41 = vst.msk [vmem:[#allocation2 + $0xb0] sm:$0xf] %vm20, 0
  %42 = vst [vmem:[#allocation2 + $0xb4] sm:$0xff] 0
  %43 = vst [vmem:[#allocation2 + $0xbc] sm:$0xff] 0
  %44 = vst [vmem:[#allocation2 + $0xc4] sm:$0xff] 0
  %45 = vst [vmem:[#allocation2 + $0xcc] sm:$0xff] 0
  %46 = vst.msk [vmem:[#allocation2 + $0xd4] sm:$0xf] %vm20, 0
  %47 = vst [vmem:[#allocation2 + $0xd8] sm:$0xff] 0
  %48 = vst [vmem:[#allocation2 + $0xe0] sm:$0xff] 0
  %49 = vst [vmem:[#allocation2 + $0xe8] sm:$0xff] 0
  %50 = vst [vmem:[#allocation2 + $0xf0] sm:$0xff] 0
  %51 = vst.msk [vmem:[#allocation2 + $0xf8] sm:$0xf] %vm20, 0
  %52 = vst [vmem:[#allocation2 + $0xfc] sm:$0xff] 0
  %53 = vst [vmem:[#allocation2 + $0x104] sm:$0xff] 0
  %54 = vst [vmem:[#allocation2 + $0x10c] sm:$0xff] 0
  %55 = vst [vmem:[#allocation2 + $0x114] sm:$0xff] 0
  %56 = vst.msk [vmem:[#allocation2 + $0x11c] sm:$0xf] %vm20, 0
  %57 = vst [vmem:[#allocation2 + $0x120] sm:$0xff] 0
  %58 = vst [vmem:[#allocation2 + $0x128] sm:$0xff] 0
  %59 = vst [vmem:[#allocation2 + $0x130] sm:$0xff] 0
  %60 = vst [vmem:[#allocation2 + $0x138] sm:$0xff] 0
  %61 = vst.msk [vmem:[#allocation2 + $0x140] sm:$0xf] %vm20, 0
  %62 = vst [vmem:[#allocation2 + $0x144] sm:$0xff] 0
  %63 = vst [vmem:[#allocation2 + $0x14c] sm:$0xff] 0
  %64 = vst [vmem:[#allocation2 + $0x154] sm:$0xff] 0
  %65 = vst [vmem:[#allocation2 + $0x15c] sm:$0xff] 0
  %66 = vst.msk [vmem:[#allocation2 + $0x164] sm:$0xf] %vm20, 0
  %67 = vst [vmem:[#allocation2 + $0x168] sm:$0xff] 0
  %68 = vst [vmem:[#allocation2 + $0x170] sm:$0xff] 0
  %69 = vst [vmem:[#allocation2 + $0x178] sm:$0xff] 0
  %70 = vst [vmem:[#allocation2 + $0x180] sm:$0xff] 0
  %71 = vst.msk [vmem:[#allocation2 + $0x188] sm:$0xf] %vm20, 0
  %72 = vst [vmem:[#allocation2 + $0x18c] sm:$0xff] 0
  %73 = vst [vmem:[#allocation2 + $0x194] sm:$0xff] 0
  %74 = vst [vmem:[#allocation2 + $0x19c] sm:$0xff] 0
  %75 = vst [vmem:[#allocation2 + $0x1a4] sm:$0xff] 0
  %76 = vst.msk [vmem:[#allocation2 + $0x1ac] sm:$0xf] %vm20, 0
  %77 = vst [vmem:[#allocation2 + $0x1b0] sm:$0xff] 0
  %78 = vst [vmem:[#allocation2 + $0x1b8] sm:$0xff] 0
  %79 = vst [vmem:[#allocation2 + $0x1c0] sm:$0xff] 0
  %80 = vst [vmem:[#allocation2 + $0x1c8] sm:$0xff] 0
  %81 = vst.msk [vmem:[#allocation2 + $0x1d0] sm:$0xf] %vm20, 0
  %82 = vst [vmem:[#allocation2 + $0x1d4] sm:$0xff] 0
  %83 = vst [vmem:[#allocation2 + $0x1dc] sm:$0xff] 0
  %84 = vst [vmem:[#allocation2 + $0x1e4] sm:$0xff] 0
  %85 = vst [vmem:[#allocation2 + $0x1ec] sm:$0xff] 0
  %86 = vst.msk [vmem:[#allocation2 + $0x1f4] sm:$0xf] %vm20, 0
  %87 = vst [vmem:[#allocation2 + $0x1f8] sm:$0xff] 0
  %88 = vst [vmem:[#allocation2 + $0x200] sm:$0xff] 0
  %89 = vst [vmem:[#allocation2 + $0x208] sm:$0xff] 0
  %90 = vst [vmem:[#allocation2 + $0x210] sm:$0xff] 0
  %91 = vst.msk [vmem:[#allocation2 + $0x218] sm:$0xf] %vm20, 0
  %92 = vst [vmem:[#allocation2 + $0x21c] sm:$0xff] 0
  %93 = vst [vmem:[#allocation2 + $0x224] sm:$0xff] 0
  %94 = vst [vmem:[#allocation2 + $0x22c] sm:$0xff] 0
  %95 = vst [vmem:[#allocation2 + $0x234] sm:$0xff] 0
  %96 = vst.msk [vmem:[#allocation2 + $0x23c] sm:$0xf] %vm20, 0
  %97 = vst [vmem:[#allocation2 + $0x240] sm:$0xff] 0
  %98 = vst [vmem:[#allocation2 + $0x248] sm:$0xff] 0
  %99 = vst [vmem:[#allocation2 + $0x250] sm:$0xff] 0
  %100 = vst [vmem:[#allocation2 + $0x258] sm:$0xff] 0
  %101 = vst.msk [vmem:[#allocation2 + $0x260] sm:$0xf] %vm20, 0
  %102 = vst [vmem:[#allocation2 + $0x264] sm:$0xff] 0
  %103 = vst [vmem:[#allocation2 + $0x26c] sm:$0xff] 0
  %104 = vst [vmem:[#allocation2 + $0x274] sm:$0xff] 0
  %105 = vst [vmem:[#allocation2 + $0x27c] sm:$0xff] 0
  %106 = vst.msk [vmem:[#allocation2 + $0x284] sm:$0xf] %vm20, 0
  %107 = vst [vmem:[#allocation2 + $0x288] sm:$0xff] 0
  %108 = vst [vmem:[#allocation2 + $0x290] sm:$0xff] 0
  %109 = vst [vmem:[#allocation2 + $0x298] sm:$0xff] 0
  %110 = vst [vmem:[#allocation2 + $0x2a0] sm:$0xff] 0
  %111 = vst.msk [vmem:[#allocation2 + $0x2a8] sm:$0xf] %vm20, 0
  %112 = vst [vmem:[#allocation2 + $0x2ac] sm:$0xff] 0
  %113 = vst [vmem:[#allocation2 + $0x2b4] sm:$0xff] 0
  %114 = vst [vmem:[#allocation2 + $0x2bc] sm:$0xff] 0
  %115 = vst [vmem:[#allocation2 + $0x2c4] sm:$0xff] 0
  %116 = vst.msk [vmem:[#allocation2 + $0x2cc] sm:$0xf] %vm20, 0
  %117 = vst [vmem:[#allocation2 + $0x2d0] sm:$0xff] 0
  %118 = vst [vmem:[#allocation2 + $0x2d8] sm:$0xff] 0
  %119 = vst [vmem:[#allocation2 + $0x2e0] sm:$0xff] 0
  %120 = vst [vmem:[#allocation2 + $0x2e8] sm:$0xff] 0
  %121 = vst.msk [vmem:[#allocation2 + $0x2f0] sm:$0xf] %vm20, 0
  %122 = vst [vmem:[#allocation2 + $0x2f4] sm:$0xff] 0
  %123 = vst [vmem:[#allocation2 + $0x2fc] sm:$0xff] 0
  %124 = vst [vmem:[#allocation2 + $0x304] sm:$0xff] 0
  %125 = vst [vmem:[#allocation2 + $0x30c] sm:$0xff] 0
  %126 = vst.msk [vmem:[#allocation2 + $0x314] sm:$0xf] %vm20, 0
  %127 = vst [vmem:[#allocation2 + $0x318] sm:$0xff] 0
  %128 = vst [vmem:[#allocation2 + $0x320] sm:$0xff] 0
  %129 = vst [vmem:[#allocation2 + $0x328] sm:$0xff] 0
  %130 = vst [vmem:[#allocation2 + $0x330] sm:$0xff] 0
  %131 = vst.msk [vmem:[#allocation2 + $0x338] sm:$0xf] %vm20, 0
  %132 = vst [vmem:[#allocation2 + $0x33c] sm:$0xff] 0
  %133 = vst [vmem:[#allocation2 + $0x344] sm:$0xff] 0
  %134 = vst [vmem:[#allocation2 + $0x34c] sm:$0xff] 0
  %135 = vst [vmem:[#allocation2 + $0x354] sm:$0xff] 0
  %136 = vst.msk [vmem:[#allocation2 + $0x35c] sm:$0xf] %vm20, 0
  %137 = vst [vmem:[#allocation2 + $0x360] sm:$0xff] 0
  %138 = vst [vmem:[#allocation2 + $0x368] sm:$0xff] 0
  %139 = vst [vmem:[#allocation2 + $0x370] sm:$0xff] 0
  %140 = vst [vmem:[#allocation2 + $0x378] sm:$0xff] 0
  %141 = vst.msk [vmem:[#allocation2 + $0x380] sm:$0xf] %vm20, 0
  %142 = vst [vmem:[#allocation2 + $0x384] sm:$0xff] 0
  %143 = vst [vmem:[#allocation2 + $0x38c] sm:$0xff] 0
  %144 = vst [vmem:[#allocation2 + $0x394] sm:$0xff] 0
  %145 = vst [vmem:[#allocation2 + $0x39c] sm:$0xff] 0
  %146 = vst.msk [vmem:[#allocation2 + $0x3a4] sm:$0xf] %vm20, 0
  %147 = vst [vmem:[#allocation2 + $0x3a8] sm:$0xff] 0
  %148 = vst [vmem:[#allocation2 + $0x3b0] sm:$0xff] 0
  %149 = vst [vmem:[#allocation2 + $0x3b8] sm:$0xff] 0
  %150 = vst [vmem:[#allocation2 + $0x3c0] sm:$0xff] 0
  %151 = vst.msk [vmem:[#allocation2 + $0x3c8] sm:$0xf] %vm20, 0
  %152 = vst [vmem:[#allocation2 + $0x3cc] sm:$0xff] 0
  %153 = vst [vmem:[#allocation2 + $0x3d4] sm:$0xff] 0
  %154 = vst [vmem:[#allocation2 + $0x3dc] sm:$0xff] 0
  %155 = vst [vmem:[#allocation2 + $0x3e4] sm:$0xff] 0
  %156 = vst.msk [vmem:[#allocation2 + $0x3ec] sm:$0xf] %vm20, 0
  %157 = vst [vmem:[#allocation2 + $0x3f0] sm:$0xff] 0
  %158 = vst [vmem:[#allocation2 + $0x3f8] sm:$0xff] 0
  %159 = vst [vmem:[#allocation2 + $0x400] sm:$0xff] 0
  %160 = vst [vmem:[#allocation2 + $0x408] sm:$0xff] 0
  %161 = vst.msk [vmem:[#allocation2 + $0x410] sm:$0xf] %vm20, 0
  %162 = vst [vmem:[#allocation2 + $0x414] sm:$0xff] 0
  %163 = vst [vmem:[#allocation2 + $0x41c] sm:$0xff] 0
  %164 = vst [vmem:[#allocation2 + $0x424] sm:$0xff] 0
  %165 = vst [vmem:[#allocation2 + $0x42c] sm:$0xff] 0
  %166 = vst.msk [vmem:[#allocation2 + $0x434] sm:$0xf] %vm20, 0
  %167 = vst [vmem:[#allocation2 + $0x438] sm:$0xff] 0
  %168 = vst [vmem:[#allocation2 + $0x440] sm:$0xff] 0
  %169 = vst [vmem:[#allocation2 + $0x448] sm:$0xff] 0
  %170 = vst [vmem:[#allocation2 + $0x450] sm:$0xff] 0
  %171 = vst.msk [vmem:[#allocation2 + $0x458] sm:$0xf] %vm20, 0
  %172 = vst [vmem:[#allocation2 + $0x45c] sm:$0xff] 0
  %173 = vst [vmem:[#allocation2 + $0x464] sm:$0xff] 0
  %174 = vst [vmem:[#allocation2 + $0x46c] sm:$0xff] 0
  %175 = vst [vmem:[#allocation2 + $0x474] sm:$0xff] 0
  %176 = vst.msk [vmem:[#allocation2 + $0x47c] sm:$0xf] %vm20, 0
  %177 = vst [vmem:[#allocation2 + $0x480] sm:$0xff] 0
  %178 = vst [vmem:[#allocation2 + $0x488] sm:$0xff] 0
  %179 = vst [vmem:[#allocation2 + $0x490] sm:$0xff] 0
  %180 = vst [vmem:[#allocation2 + $0x498] sm:$0xff] 0
  %181 = vst.msk [vmem:[#allocation2 + $0x4a0] sm:$0xf] %vm20, 0
  %182 = vst [vmem:[#allocation2 + $0x4a4] sm:$0xff] 0
  %183 = vst [vmem:[#allocation2 + $0x4ac] sm:$0xff] 0
  %184 = vst [vmem:[#allocation2 + $0x4b4] sm:$0xff] 0
  %185 = vst [vmem:[#allocation2 + $0x4bc] sm:$0xff] 0
  %186 = vst.msk [vmem:[#allocation2 + $0x4c4] sm:$0xf] %vm20, 0
  %187 = vst [vmem:[#allocation2 + $0x4c8] sm:$0xff] 0
  %188 = vst [vmem:[#allocation2 + $0x4d0] sm:$0xff] 0
  %189 = vst [vmem:[#allocation2 + $0x4d8] sm:$0xff] 0
  %190 = vst [vmem:[#allocation2 + $0x4e0] sm:$0xff] 0
  %191 = vst.msk [vmem:[#allocation2 + $0x4e8] sm:$0xf] %vm20, 0
  %192 = vst [vmem:[#allocation2 + $0x4ec] sm:$0xff] 0
  %193 = vst [vmem:[#allocation2 + $0x4f4] sm:$0xff] 0
  %194 = vst [vmem:[#allocation2 + $0x4fc] sm:$0xff] 0
  %195 = vst [vmem:[#allocation2 + $0x504] sm:$0xff] 0
  %196 = vst.msk [vmem:[#allocation2 + $0x50c] sm:$0xf] %vm20, 0
  %vm197 = vcmask 1040384
  %vm198 = vsmask.f32 256
  %vm199 = vmand %vm197, %vm198
  %vm200 = vcmask 1044484
  %vm201 = vsmask.f32 4352
  %vm202 = vmand %vm200, %vm201
  %vm203 = vmor %vm202, %vm199
  %v204 = vld [vmem:[#allocation2 + $0x510] sm:$0x11]
  %v205 = vsel %vm203, 0, %v204
  %206 = vst [vmem:[#allocation2 + $0x510] sm:$0x11] %v205
  %v207 = vld [vmem:[#allocation2 + $0x518] sm:$0x11]
  %v208 = vsel %vm203, 0, %v207
  %209 = vst [vmem:[#allocation2 + $0x518] sm:$0x11] %v208
  %v210 = vld [vmem:[#allocation2 + $0x520] sm:$0x11]
  %v211 = vsel %vm203, 0, %v210
  %212 = vst [vmem:[#allocation2 + $0x520] sm:$0x11] %v211
  %v213 = vld [vmem:[#allocation2 + $0x528] sm:$0x11]
  %v214 = vsel %vm203, 0, %v213
  %215 = vst [vmem:[#allocation2 + $0x528] sm:$0x11] %v214
  %vm216 = vcmask 516096
  %vm217 = vmand %vm216, %vm198
  %v218 = vld [vmem:[#allocation2 + $0x530] sm:$0x1]
  %v219 = vsel %vm217, 0, %v218
  %220 = vst [vmem:[#allocation2 + $0x530] sm:$0x1] %v219
  %v221 = vld [vmem:[#allocation2 + $0x288] sm:$0x11]
  %v222 = vsel %vm203, 1065369472, %v221
  %223 = vst [vmem:[#allocation2 + $0x288] sm:$0x11] %v222
  %v224 = vld [vmem:[#allocation2 + $0x290] sm:$0x11]
  %v225 = vsel %vm203, 1065369472, %v224
  %226 = vst [vmem:[#allocation2 + $0x290] sm:$0x11] %v225
  %v227 = vld [vmem:[#allocation2 + $0x298] sm:$0x11]
  %v228 = vsel %vm203, 1065369472, %v227
  %229 = vst [vmem:[#allocation2 + $0x298] sm:$0x11] %v228
  %v230 = vld [vmem:[#allocation2 + $0x2a0] sm:$0x11]
  %v231 = vsel %vm203, 1065369472, %v230
  %232 = vst [vmem:[#allocation2 + $0x2a0] sm:$0x11] %v231
  %v233 = vld [vmem:[#allocation2 + $0x2a8] sm:$0x1]
  %v234 = vsel %vm217, 1065369472, %v233
  %235 = vst [vmem:[#allocation2 + $0x2a8] sm:$0x1] %v234
  %v236 = vld [vmem:[#allocation2 + $0x510] sm:$0x11]
  %v237 = vsel %vm203, 1065369472, %v236
  %238 = vst [vmem:[#allocation2 + $0x510] sm:$0x11] %v237
  %v239 = vld [vmem:[#allocation2 + $0x518] sm:$0x11]
  %v240 = vsel %vm203, 1065369472, %v239
  %241 = vst [vmem:[#allocation2 + $0x518] sm:$0x11] %v240
  %v242 = vld [vmem:[#allocation2 + $0x520] sm:$0x11]
  %v243 = vsel %vm203, 1065369472, %v242
  %244 = vst [vmem:[#allocation2 + $0x520] sm:$0x11] %v243
  %v245 = vld [vmem:[#allocation2 + $0x528] sm:$0x11]
  %v246 = vsel %vm203, 1065369472, %v245
  %247 = vst [vmem:[#allocation2 + $0x528] sm:$0x11] %v246
  %v248 = vld [vmem:[#allocation2 + $0x530] sm:$0x1]
  %v249 = vsel %vm217, 1065369472, %v248
  %250 = vst [vmem:[#allocation2 + $0x530] sm:$0x1] %v249
  %251 = vst [vmem:[#allocation3] sm:$0xf] 0
  %vm252 = vcmask 1043968
  %vm253 = vcmask 523268
  %vm254 = vmor %vm253, %vm252
  %255 = vst.msk [vmem:[#allocation3 + $0x24] sm:$0xff] %vm254, 0
  %256 = vst [vmem:[#allocation4] sm:$0xf] 0
  %257 = vst.msk [vmem:[#allocation4 + $0x24] sm:$0xff] %vm254, 0
  %258 = vst [vmem:[#allocation5] sm:$0xf] 0
  %259 = vst [vmem:[#allocation5 + $0x14] sm:$0xf] 0
  %vm260 = vcmask 1043712
  %vm261 = vcmask 261124
  %vm262 = vmor %vm261, %vm260
  %263 = vst.msk [vmem:[#allocation5 + $0xc] sm:$0xff] %vm262, 0
  %264 = vst.msk [vmem:[#allocation5 + $0x20] sm:$0xff] %vm262, 0
  %265 = vst [vmem:[#allocation6] sm:$0xf] 0
  %266 = vst [vmem:[#allocation6 + $0x14] sm:$0xf] 0
  %267 = vst.msk [vmem:[#allocation6 + $0xc] sm:$0xff] %vm262, 0
  %268 = vst.msk [vmem:[#allocation6 + $0x20] sm:$0xff] %vm262, 0
  %269 = vst [vmem:[#allocation7] sm:$0xf] 0
  %270 = vst [vmem:[#allocation7 + $0xc] sm:$0xf] 0
  %vm271 = vcmask 1044096
  %vm272 = vcmask 654340
  %vm273 = vmor %vm272, %vm271
  %274 = vst.msk [vmem:[#allocation7 + $0x4] sm:$0xff] %vm273, 0
  %275 = vst.msk [vmem:[#allocation7 + $0x10] sm:$0xff] %vm273, 0
  %276 = vst [vmem:[#allocation8] sm:$0xf] 0
  %277 = vst [vmem:[#allocation8 + $0xc] sm:$0xf] 0
  %278 = vst.msk [vmem:[#allocation8 + $0x4] sm:$0xff] %vm273, 0
  %279 = vst.msk [vmem:[#allocation8 + $0x10] sm:$0xff] %vm273, 0
  %280 = vst [vmem:[#allocation9] sm:$0xf] 0
  %281 = vst [vmem:[#allocation9 + $0xc] sm:$0xf] 0
  %282 = vst [vmem:[#allocation9 + $0x18] sm:$0xf] 0
  %283 = vst [vmem:[#allocation9 + $0x24] sm:$0xf] 0
  %vm284 = vcmask 1043648
  %vm285 = vcmask 195588
  %vm286 = vmor %vm285, %vm284
  %287 = vst.msk [vmem:[#allocation9 + $0x4] sm:$0xff] %vm286, 0
  %288 = vst.msk [vmem:[#allocation9 + $0x10] sm:$0xff] %vm286, 0
  %289 = vst.msk [vmem:[#allocation9 + $0x1c] sm:$0xff] %vm286, 0
  %290 = vst.msk [vmem:[#allocation9 + $0x28] sm:$0xff] %vm286, 0
  %291 = vst [vmem:[#allocation10] sm:$0xf] 0
  %292 = vst [vmem:[#allocation10 + $0xc] sm:$0xf] 0
  %293 = vst [vmem:[#allocation10 + $0x18] sm:$0xf] 0
  %294 = vst [vmem:[#allocation10 + $0x24] sm:$0xf] 0
  %295 = vst.msk [vmem:[#allocation10 + $0x4] sm:$0xff] %vm286, 0
  %296 = vst.msk [vmem:[#allocation10 + $0x10] sm:$0xff] %vm286, 0
  %297 = vst.msk [vmem:[#allocation10 + $0x1c] sm:$0xff] %vm286, 0
  %298 = vst.msk [vmem:[#allocation10 + $0x28] sm:$0xff] %vm286, 0
  %299 = vst [vmem:[#allocation11] sm:$0xf] 0
  %300 = vst [vmem:[#allocation11 + $0xc] sm:$0xf] 0
  %301 = vst [vmem:[#allocation11 + $0x18] sm:$0xf] 0
  %302 = vst [vmem:[#allocation11 + $0x24] sm:$0xf] 0
  %vm303 = vcmask 1043520
  %vm304 = vcmask 64516
  %vm305 = vmor %vm304, %vm303
  %306 = vst.msk [vmem:[#allocation11 + $0x4] sm:$0xff] %vm305, 0
  %307 = vst.msk [vmem:[#allocation11 + $0x10] sm:$0xff] %vm305, 0
  %308 = vst.msk [vmem:[#allocation11 + $0x1c] sm:$0xff] %vm305, 0
  %309 = vst.msk [vmem:[#allocation11 + $0x28] sm:$0xff] %vm305, 0
  %310 = vst [vmem:[#allocation12] sm:$0xf] 0
  %311 = vst [vmem:[#allocation12 + $0xc] sm:$0xf] 0
  %312 = vst [vmem:[#allocation12 + $0x18] sm:$0xf] 0
  %313 = vst [vmem:[#allocation12 + $0x24] sm:$0xf] 0
  %314 = vst.msk [vmem:[#allocation12 + $0x4] sm:$0xff] %vm305, 0
  %315 = vst.msk [vmem:[#allocation12 + $0x10] sm:$0xff] %vm305, 0
  %316 = vst.msk [vmem:[#allocation12 + $0x1c] sm:$0xff] %vm305, 0
  %317 = vst.msk [vmem:[#allocation12 + $0x28] sm:$0xff] %vm305, 0
  %v318 = vld [vmem:[%s0] sm:$0xff]
  %v319 = vld [vmem:[%s0 + $0x8] sm:$0xff]
  %v320 = vld [vmem:[%s0 + $0x10] sm:$0xf]
  %322 = vst [vmem:[#allocation1] ss:$2 sm:$0xff] %v318
  %s324 = scalar_lea.vmem [#allocation1], 16
  %325 = vst [vmem:[%s324] ss:$2 sm:$0xff] %v319
  %s327 = scalar_lea.vmem [#allocation1], 32
  %328 = vst [vmem:[%s327] ss:$2 sm:$0xff] %v320
  %v329 = vld.sshfl [vmem:[#allocation1] sm:$0xff pattern:$0x75643120]
  %v331 = vld.sshfl [vmem:[#allocation1 + $0x8] sm:$0xff pattern:$0x75643120]
  %v333 = vld.sshfl [vmem:[#allocation1 + $0x10] sm:$0xff pattern:$0x75643120]
  %v335 = vld.sshfl [vmem:[#allocation1 + $0x18] sm:$0xff pattern:$0x75643120]
  %v337 = vld.sshfl [vmem:[#allocation1 + $0x20] sm:$0xff pattern:$0x75643120]
  %339 = vrot.lane.b32.xlu0 %v329, 35
  %v340 = vpop.permute.xlu0 %339
  %341 = vrot.lane.b32.xlu0 %v331, 35
  %v342 = vpop.permute.xlu0 %341
  %343 = vrot.lane.b32.xlu0 %v333, 35
  %v344 = vpop.permute.xlu0 %343
  %345 = vrot.lane.b32.xlu0 %v335, 35
  %v346 = vpop.permute.xlu0 %345
  %347 = vrot.lane.b32.xlu0 %v337, 35
  %v348 = vpop.permute.xlu0 %347
  %v349 = vrot.slane %v340, 4
  %v350 = vrot.slane %v342, 4
  %v351 = vrot.slane %v344, 4
  %v352 = vrot.slane %v346, 4
  %v353 = vrot.slane %v348, 4
  %vm354 = vcmask 1043456
  %v355 = vsel %vm354, %v349, %v350
  %vm356 = vcmask 285696
  %v357 = vsel %vm356, %v340, %v355
  %v358 = vsel %vm354, %v350, %v351
  %v359 = vsel %vm356, %v342, %v358
  %v360 = vsel %vm354, %v351, %v352
  %v361 = vsel %vm356, %v344, %v360
  %v362 = vsel %vm354, %v352, %v353
  %v363 = vsel %vm356, %v346, %v362
  %v364 = vsel %vm356, %v348, %v353
  %vm370 = vcmask 1041408
  %vm371 = vsmask.f32 1280
  %vm372 = vmand %vm370, %vm371
  %vm373 = vcmask 1045508
  %vm374 = vsmask.f32 5376
  %vm375 = vmand %vm373, %vm374
  %vm376 = vmor %vm375, %vm372
  %v377 = vld [vmem:[#allocation2] sm:$0x33]
  %v378 = vsel %vm376, %v357, %v377
  %379 = vst [vmem:[#allocation2] sm:$0x33] %v378
  %v380 = vld [vmem:[#allocation2 + $0x8] sm:$0x33]
  %v381 = vsel %vm376, %v359, %v380
  %382 = vst [vmem:[#allocation2 + $0x8] sm:$0x33] %v381
  %v383 = vld [vmem:[#allocation2 + $0x10] sm:$0x33]
  %v384 = vsel %vm376, %v361, %v383
  %385 = vst [vmem:[#allocation2 + $0x10] sm:$0x33] %v384
  %v386 = vld [vmem:[#allocation2 + $0x18] sm:$0x33]
  %v387 = vsel %vm376, %v363, %v386
  %388 = vst [vmem:[#allocation2 + $0x18] sm:$0x33] %v387
  %vm389 = vcmask 517120
  %vm390 = vmand %vm389, %vm371
  %v391 = vld [vmem:[#allocation2 + $0x20] sm:$0x3]
  %v392 = vsel %vm390, %v364, %v391
  %393 = vst [vmem:[#allocation2 + $0x20] sm:$0x3] %v392
  %v394 = vld [vmem:[%s0] sm:$0xff]
  %v395 = vld [vmem:[%s0 + $0x8] sm:$0xff]
  %v396 = vld [vmem:[%s0 + $0x10] sm:$0xf]
  %398 = vst [vmem:[#allocation1] ss:$2 sm:$0xff] %v394
  %s400 = scalar_lea.vmem [#allocation1], 16
  %401 = vst [vmem:[%s400] ss:$2 sm:$0xff] %v395
  %s403 = scalar_lea.vmem [#allocation1], 32
  %404 = vst [vmem:[%s403] ss:$2 sm:$0xff] %v396
  %v405 = vld.sshfl [vmem:[#allocation1] sm:$0xff pattern:$0x75643120]
  %v407 = vld.sshfl [vmem:[#allocation1 + $0x8] sm:$0xff pattern:$0x75643120]
  %v409 = vld.sshfl [vmem:[#allocation1 + $0x10] sm:$0xff pattern:$0x75643120]
  %v411 = vld.sshfl [vmem:[#allocation1 + $0x18] sm:$0xff pattern:$0x75643120]
  %v413 = vld.sshfl [vmem:[#allocation1 + $0x20] sm:$0xff pattern:$0x75643120]
  %415 = vrot.lane.b32.xlu0 %v405, 34
  %v416 = vpop.permute.xlu0 %415
  %417 = vrot.lane.b32.xlu0 %v407, 34
  %v418 = vpop.permute.xlu0 %417
  %419 = vrot.lane.b32.xlu0 %v409, 34
  %v420 = vpop.permute.xlu0 %419
  %421 = vrot.lane.b32.xlu0 %v411, 34
  %v422 = vpop.permute.xlu0 %421
  %423 = vrot.lane.b32.xlu0 %v413, 34
  %v424 = vpop.permute.xlu0 %423
  %v425 = vrot.slane %v416, 4
  %v426 = vrot.slane %v418, 4
  %v427 = vrot.slane %v420, 4
  %v428 = vrot.slane %v422, 4
  %v429 = vrot.slane %v424, 4
  %v430 = vsel %vm354, %v425, %v426
  %vm431 = vcmask 277504
  %v432 = vsel %vm431, %v416, %v430
  %v433 = vsel %vm354, %v426, %v427
  %v434 = vsel %vm431, %v418, %v433
  %v435 = vsel %vm354, %v427, %v428
  %v436 = vsel %vm431, %v420, %v435
  %v437 = vsel %vm354, %v428, %v429
  %v438 = vsel %vm431, %v422, %v437
  %v439 = vsel %vm431, %v424, %v429
  %v445 = vld [vmem:[#allocation2 + $0x48] sm:$0x33]
  %v446 = vsel %vm376, %v432, %v445
  %447 = vst [vmem:[#allocation2 + $0x48] sm:$0x33] %v446
  %v448 = vld [vmem:[#allocation2 + $0x50] sm:$0x33]
  %v449 = vsel %vm376, %v434, %v448
  %450 = vst [vmem:[#allocation2 + $0x50] sm:$0x33] %v449
  %v451 = vld [vmem:[#allocation2 + $0x58] sm:$0x33]
  %v452 = vsel %vm376, %v436, %v451
  %453 = vst [vmem:[#allocation2 + $0x58] sm:$0x33] %v452
  %v454 = vld [vmem:[#allocation2 + $0x60] sm:$0x33]
  %v455 = vsel %vm376, %v438, %v454
  %456 = vst [vmem:[#allocation2 + $0x60] sm:$0x33] %v455
  %v457 = vld [vmem:[#allocation2 + $0x68] sm:$0x3]
  %v458 = vsel %vm390, %v439, %v457
  %459 = vst [vmem:[#allocation2 + $0x68] sm:$0x3] %v458
  %v460 = vld [vmem:[%s0] sm:$0xff]
  %v461 = vld [vmem:[%s0 + $0x8] sm:$0xff]
  %v462 = vld [vmem:[%s0 + $0x10] sm:$0xf]
  %464 = vst [vmem:[#allocation1] ss:$2 sm:$0xff] %v460
  %s466 = scalar_lea.vmem [#allocation1], 16
  %467 = vst [vmem:[%s466] ss:$2 sm:$0xff] %v461
  %s469 = scalar_lea.vmem [#allocation1], 32
  %470 = vst [vmem:[%s469] ss:$2 sm:$0xff] %v462
  %v471 = vld.sshfl [vmem:[#allocation1] sm:$0xff pattern:$0x75643120]
  %v473 = vld.sshfl [vmem:[#allocation1 + $0x8] sm:$0xff pattern:$0x75643120]
  %v475 = vld.sshfl [vmem:[#allocation1 + $0x10] sm:$0xff pattern:$0x75643120]
  %v477 = vld.sshfl [vmem:[#allocation1 + $0x18] sm:$0xff pattern:$0x75643120]
  %v479 = vld.sshfl [vmem:[#allocation1 + $0x20] sm:$0xff pattern:$0x75643120]
  %481 = vrot.lane.b32.xlu0 %v471, 33
  %v482 = vpop.permute.xlu0 %481
  %483 = vrot.lane.b32.xlu0 %v473, 33
  %v484 = vpop.permute.xlu0 %483
  %485 = vrot.lane.b32.xlu0 %v475, 33
  %v486 = vpop.permute.xlu0 %485
  %487 = vrot.lane.b32.xlu0 %v477, 33
  %v488 = vpop.permute.xlu0 %487
  %489 = vrot.lane.b32.xlu0 %v479, 33
  %v490 = vpop.permute.xlu0 %489
  %v491 = vrot.slane %v482, 4
  %v492 = vrot.slane %v484, 4
  %v493 = vrot.slane %v486, 4
  %v494 = vrot.slane %v488, 4
  %v495 = vrot.slane %v490, 4
  %v496 = vsel %vm354, %v491, %v492
  %vm497 = vcmask 269312
  %v498 = vsel %vm497, %v482, %v496
  %v499 = vsel %vm354, %v492, %v493
  %v500 = vsel %vm497, %v484, %v499
  %v501 = vsel %vm354, %v493, %v494
  %v502 = vsel %vm497, %v486, %v501
  %v503 = vsel %vm354, %v494, %v495
  %v504 = vsel %vm497, %v488, %v503
  %v505 = vsel %vm497, %v490, %v495
  %v511 = vld [vmem:[#allocation2 + $0x90] sm:$0x33]
  %v512 = vsel %vm376, %v498, %v511
  %513 = vst [vmem:[#allocation2 + $0x90] sm:$0x33] %v512
  %v514 = vld [vmem:[#allocation2 + $0x98] sm:$0x33]
  %v515 = vsel %vm376, %v500, %v514
  %516 = vst [vmem:[#allocation2 + $0x98] sm:$0x33] %v515
  %v517 = vld [vmem:[#allocation2 + $0xa0] sm:$0x33]
  %v518 = vsel %vm376, %v502, %v517
  %519 = vst [vmem:[#allocation2 + $0xa0] sm:$0x33] %v518
  %v520 = vld [vmem:[#allocation2 + $0xa8] sm:$0x33]
  %v521 = vsel %vm376, %v504, %v520
  %522 = vst [vmem:[#allocation2 + $0xa8] sm:$0x33] %v521
  %v523 = vld [vmem:[#allocation2 + $0xb0] sm:$0x3]
  %v524 = vsel %vm390, %v505, %v523
  %525 = vst [vmem:[#allocation2 + $0xb0] sm:$0x3] %v524
  %v526 = vld [vmem:[%s0] sm:$0xff]
  %v527 = vld [vmem:[%s0 + $0x8] sm:$0xff]
  %v528 = vld [vmem:[%s0 + $0x10] sm:$0xf]
  %530 = vst [vmem:[#allocation1] ss:$2 sm:$0xff] %v526
  %s532 = scalar_lea.vmem [#allocation1], 16
  %533 = vst [vmem:[%s532] ss:$2 sm:$0xff] %v527
  %s535 = scalar_lea.vmem [#allocation1], 32
  %536 = vst [vmem:[%s535] ss:$2 sm:$0xff] %v528
  %v537 = vld.sshfl [vmem:[#allocation1] sm:$0xff pattern:$0x75643120]
  %v539 = vld.sshfl [vmem:[#allocation1 + $0x8] sm:$0xff pattern:$0x75643120]
  %v541 = vld.sshfl [vmem:[#allocation1 + $0x10] sm:$0xff pattern:$0x75643120]
  %v543 = vld.sshfl [vmem:[#allocation1 + $0x18] sm:$0xff pattern:$0x75643120]
  %v545 = vld.sshfl [vmem:[#allocation1 + $0x20] sm:$0xff pattern:$0x75643120]
  %547 = vrot.lane.b32.xlu0 %v537, 1
  %v548 = vpop.permute.xlu0 %547
  %549 = vrot.lane.b32.xlu0 %v539, 1
  %v550 = vpop.permute.xlu0 %549
  %551 = vrot.lane.b32.xlu0 %v541, 1
  %v552 = vpop.permute.xlu0 %551
  %553 = vrot.lane.b32.xlu0 %v543, 1
  %v554 = vpop.permute.xlu0 %553
  %555 = vrot.lane.b32.xlu0 %v545, 1
  %v556 = vpop.permute.xlu0 %555
  %v557 = vrot.slane %v548, 4
  %v558 = vrot.slane %v550, 4
  %v559 = vrot.slane %v552, 4
  %v560 = vrot.slane %v554, 4
  %v561 = vrot.slane %v556, 4
  %v562 = vsel %vm354, %v557, %v558
  %vm563 = vcmask 7168
  %v564 = vsel %vm563, %v548, %v562
  %v565 = vsel %vm354, %v558, %v559
  %v566 = vsel %vm563, %v550, %v565
  %v567 = vsel %vm354, %v559, %v560
  %v568 = vsel %vm563, %v552, %v567
  %v569 = vsel %vm354, %v560, %v561
  %v570 = vsel %vm563, %v554, %v569
  %v571 = vsel %vm563, %v556, %v561
  %v577 = vld [vmem:[#allocation2 + $0xd8] sm:$0x33]
  %v578 = vsel %vm376, %v564, %v577
  %579 = vst [vmem:[#allocation2 + $0xd8] sm:$0x33] %v578
  %v580 = vld [vmem:[#allocation2 + $0xe0] sm:$0x33]
  %v581 = vsel %vm376, %v566, %v580
  %582 = vst [vmem:[#allocation2 + $0xe0] sm:$0x33] %v581
  %v583 = vld [vmem:[#allocation2 + $0xe8] sm:$0x33]
  %v584 = vsel %vm376, %v568, %v583
  %585 = vst [vmem:[#allocation2 + $0xe8] sm:$0x33] %v584
  %v586 = vld [vmem:[#allocation2 + $0xf0] sm:$0x33]
  %v587 = vsel %vm376, %v570, %v586
  %588 = vst [vmem:[#allocation2 + $0xf0] sm:$0x33] %v587
  %v589 = vld [vmem:[#allocation2 + $0xf8] sm:$0x3]
  %v590 = vsel %vm390, %v571, %v589
  %591 = vst [vmem:[#allocation2 + $0xf8] sm:$0x3] %v590
  %v592 = vld [vmem:[%s0 + $0x2] sm:$0xff]
  %v593 = vld [vmem:[%s0 + $0xa] sm:$0xff]
  %v594 = vld [vmem:[%s0 + $0x12] sm:$0x3]
  %596 = vst [vmem:[#allocation1] ss:$2 sm:$0xff] %v592
  %s598 = scalar_lea.vmem [#allocation1], 16
  %599 = vst [vmem:[%s598] ss:$2 sm:$0xff] %v593
  %s601 = scalar_lea.vmem [#allocation1], 32
  %602 = vst [vmem:[%s601] ss:$2 sm:$0xff] %v594
  %v603 = vld.sshfl [vmem:[#allocation1] sm:$0xff pattern:$0x75643120]
  %v604 = vld.sshfl [vmem:[#allocation1 + $0x8] sm:$0xff pattern:$0x75643120]
  %v605 = vld.sshfl [vmem:[#allocation1 + $0x10] sm:$0xff pattern:$0x75643120]
  %v606 = vld.sshfl [vmem:[#allocation1 + $0x18] sm:$0xff pattern:$0x75643120]
  %v607 = vld.sshfl [vmem:[#allocation1 + $0x20] sm:$0xff pattern:$0x75643120]
  %v613 = vld [vmem:[#allocation2 + $0x120] sm:$0x33]
  %v614 = vsel %vm376, %v603, %v613
  %615 = vst [vmem:[#allocation2 + $0x120] sm:$0x33] %v614
  %v616 = vld [vmem:[#allocation2 + $0x128] sm:$0x33]
  %v617 = vsel %vm376, %v604, %v616
  %618 = vst [vmem:[#allocation2 + $0x128] sm:$0x33] %v617
  %v619 = vld [vmem:[#allocation2 + $0x130] sm:$0x33]
  %v620 = vsel %vm376, %v605, %v619
  %621 = vst [vmem:[#allocation2 + $0x130] sm:$0x33] %v620
  %v622 = vld [vmem:[#allocation2 + $0x138] sm:$0x33]
  %v623 = vsel %vm376, %v606, %v622
  %624 = vst [vmem:[#allocation2 + $0x138] sm:$0x33] %v623
  %v625 = vld [vmem:[#allocation2 + $0x140] sm:$0x3]
  %v626 = vsel %vm390, %v607, %v625
  %627 = vst [vmem:[#allocation2 + $0x140] sm:$0x3] %v626
  %v628 = vld [vmem:[%s0 + $0x2] sm:$0xff]
  %v629 = vld [vmem:[%s0 + $0xa] sm:$0xff]
  %v630 = vld [vmem:[%s0 + $0x12] sm:$0x3]
  %632 = vst [vmem:[#allocation1] ss:$2 sm:$0xff] %v628
  %s634 = scalar_lea.vmem [#allocation1], 16
  %635 = vst [vmem:[%s634] ss:$2 sm:$0xff] %v629
  %s637 = scalar_lea.vmem [#allocation1], 32
  %638 = vst [vmem:[%s637] ss:$2 sm:$0xff] %v630
  %v639 = vld.sshfl [vmem:[#allocation1] sm:$0xff pattern:$0x75643120]
  %v641 = vld.sshfl [vmem:[#allocation1 + $0x8] sm:$0xff pattern:$0x75643120]
  %v643 = vld.sshfl [vmem:[#allocation1 + $0x10] sm:$0xff pattern:$0x75643120]
  %v645 = vld.sshfl [vmem:[#allocation1 + $0x18] sm:$0xff pattern:$0x75643120]
  %v647 = vld.sshfl [vmem:[#allocation1 + $0x20] sm:$0xff pattern:$0x75643120]
  %649 = vrot.lane.b32.xlu0 %v639, 127
  %v650 = vpop.permute.xlu0 %649
  %651 = vrot.lane.b32.xlu0 %v641, 127
  %v652 = vpop.permute.xlu0 %651
  %653 = vrot.lane.b32.xlu0 %v643, 127
  %v654 = vpop.permute.xlu0 %653
  %655 = vrot.lane.b32.xlu0 %v645, 127
  %v656 = vpop.permute.xlu0 %655
  %657 = vrot.lane.b32.xlu0 %v647, 127
  %v658 = vpop.permute.xlu0 %657
  %v659 = vrot.slane %v650, 4
  %v660 = vrot.slane %v652, 4
  %v661 = vrot.slane %v654, 4
  %v662 = vrot.slane %v656, 4
  %v663 = vrot.slane %v658, 4
  %v664 = vsel %vm354, %v659, %v660
  %vm665 = vcmask 1039360
  %v666 = vsel %vm665, %v650, %v664
  %v667 = vsel %vm354, %v660, %v661
  %v668 = vsel %vm665, %v652, %v667
  %v669 = vsel %vm354, %v661, %v662
  %v670 = vsel %vm665, %v654, %v669
  %v671 = vsel %vm354, %v662, %v663
  %v672 = vsel %vm665, %v656, %v671
  %v678 = vld [vmem:[#allocation2 + $0x168] sm:$0x33]
  %v679 = vsel %vm376, %v666, %v678
  %680 = vst [vmem:[#allocation2 + $0x168] sm:$0x33] %v679
  %v681 = vld [vmem:[#allocation2 + $0x170] sm:$0x33]
  %v682 = vsel %vm376, %v668, %v681
  %683 = vst [vmem:[#allocation2 + $0x170] sm:$0x33] %v682
  %v684 = vld [vmem:[#allocation2 + $0x178] sm:$0x33]
  %v685 = vsel %vm376, %v670, %v684
  %686 = vst [vmem:[#allocation2 + $0x178] sm:$0x33] %v685
  %v687 = vld [vmem:[#allocation2 + $0x180] sm:$0x33]
  %v688 = vsel %vm376, %v672, %v687
  %689 = vst [vmem:[#allocation2 + $0x180] sm:$0x33] %v688
  %v690 = vld [vmem:[#allocation2 + $0x188] sm:$0x3]
  %v691 = vsel %vm390, %v658, %v690
  %692 = vst [vmem:[#allocation2 + $0x188] sm:$0x3] %v691
  %v693 = vld [vmem:[%s0 + $0x2] sm:$0xff]
  %v694 = vld [vmem:[%s0 + $0xa] sm:$0xff]
  %v695 = vld [vmem:[%s0 + $0x12] sm:$0x3]
  %697 = vst [vmem:[#allocation1] ss:$2 sm:$0xff] %v693
  %s699 = scalar_lea.vmem [#allocation1], 16
  %700 = vst [vmem:[%s699] ss:$2 sm:$0xff] %v694
  %s702 = scalar_lea.vmem [#allocation1], 32
  %703 = vst [vmem:[%s702] ss:$2 sm:$0xff] %v695
  %v704 = vld.sshfl [vmem:[#allocation1] sm:$0xff pattern:$0x75643120]
  %v706 = vld.sshfl [vmem:[#allocation1 + $0x8] sm:$0xff pattern:$0x75643120]
  %v708 = vld.sshfl [vmem:[#allocation1 + $0x10] sm:$0xff pattern:$0x75643120]
  %v710 = vld.sshfl [vmem:[#allocation1 + $0x18] sm:$0xff pattern:$0x75643120]
  %v712 = vld.sshfl [vmem:[#allocation1 + $0x20] sm:$0xff pattern:$0x75643120]
  %714 = vrot.lane.b32.xlu0 %v704, 95
  %v715 = vpop.permute.xlu0 %714
  %716 = vrot.lane.b32.xlu0 %v706, 95
  %v717 = vpop.permute.xlu0 %716
  %718 = vrot.lane.b32.xlu0 %v708, 95
  %v719 = vpop.permute.xlu0 %718
  %720 = vrot.lane.b32.xlu0 %v710, 95
  %v721 = vpop.permute.xlu0 %720
  %722 = vrot.lane.b32.xlu0 %v712, 95
  %v723 = vpop.permute.xlu0 %722
  %v724 = vrot.slane %v715, 4
  %v725 = vrot.slane %v717, 4
  %v726 = vrot.slane %v719, 4
  %v727 = vrot.slane %v721, 4
  %v728 = vrot.slane %v723, 4
  %v729 = vsel %vm354, %v724, %v725
  %vm730 = vcmask 777216
  %v731 = vsel %vm730, %v715, %v729
  %v732 = vsel %vm354, %v725, %v726
  %v733 = vsel %vm730, %v717, %v732
  %v734 = vsel %vm354, %v726, %v727
  %v735 = vsel %vm730, %v719, %v734
  %v736 = vsel %vm354, %v727, %v728
  %v737 = vsel %vm730, %v721, %v736
  %v743 = vld [vmem:[#allocation2 + $0x1b0] sm:$0x33]
  %v744 = vsel %vm376, %v731, %v743
  %745 = vst [vmem:[#allocation2 + $0x1b0] sm:$0x33] %v744
  %v746 = vld [vmem:[#allocation2 + $0x1b8] sm:$0x33]
  %v747 = vsel %vm376, %v733, %v746
  %748 = vst [vmem:[#allocation2 + $0x1b8] sm:$0x33] %v747
  %v749 = vld [vmem:[#allocation2 + $0x1c0] sm:$0x33]
  %v750 = vsel %vm376, %v735, %v749
  %751 = vst [vmem:[#allocation2 + $0x1c0] sm:$0x33] %v750
  %v752 = vld [vmem:[#allocation2 + $0x1c8] sm:$0x33]
  %v753 = vsel %vm376, %v737, %v752
  %754 = vst [vmem:[#allocation2 + $0x1c8] sm:$0x33] %v753
  %v755 = vld [vmem:[#allocation2 + $0x1d0] sm:$0x3]
  %v756 = vsel %vm390, %v723, %v755
  %757 = vst [vmem:[#allocation2 + $0x1d0] sm:$0x3] %v756
  %v758 = vld [vmem:[%s0 + $0x2] sm:$0xff]
  %v759 = vld [vmem:[%s0 + $0xa] sm:$0xff]
  %v760 = vld [vmem:[%s0 + $0x12] sm:$0x3]
  %762 = vst [vmem:[#allocation1] ss:$2 sm:$0xff] %v758
  %s764 = scalar_lea.vmem [#allocation1], 16
  %765 = vst [vmem:[%s764] ss:$2 sm:$0xff] %v759
  %s767 = scalar_lea.vmem [#allocation1], 32
  %768 = vst [vmem:[%s767] ss:$2 sm:$0xff] %v760
  %v769 = vld.sshfl [vmem:[#allocation1] sm:$0xff pattern:$0x75643120]
  %v771 = vld.sshfl [vmem:[#allocation1 + $0x8] sm:$0xff pattern:$0x75643120]
  %v773 = vld.sshfl [vmem:[#allocation1 + $0x10] sm:$0xff pattern:$0x75643120]
  %v775 = vld.sshfl [vmem:[#allocation1 + $0x18] sm:$0xff pattern:$0x75643120]
  %v777 = vld.sshfl [vmem:[#allocation1 + $0x20] sm:$0xff pattern:$0x75643120]
  %779 = vrot.lane.b32.xlu0 %v769, 94
  %v780 = vpop.permute.xlu0 %779
  %781 = vrot.lane.b32.xlu0 %v771, 94
  %v782 = vpop.permute.xlu0 %781
  %783 = vrot.lane.b32.xlu0 %v773, 94
  %v784 = vpop.permute.xlu0 %783
  %785 = vrot.lane.b32.xlu0 %v775, 94
  %v786 = vpop.permute.xlu0 %785
  %787 = vrot.lane.b32.xlu0 %v777, 94
  %v788 = vpop.permute.xlu0 %787
  %v789 = vrot.slane %v780, 4
  %v790 = vrot.slane %v782, 4
  %v791 = vrot.slane %v784, 4
  %v792 = vrot.slane %v786, 4
  %v793 = vrot.slane %v788, 4
  %v794 = vsel %vm354, %v789, %v790
  %vm795 = vcmask 769024
  %v796 = vsel %vm795, %v780, %v794
  %v797 = vsel %vm354, %v790, %v791
  %v798 = vsel %vm795, %v782, %v797
  %v799 = vsel %vm354, %v791, %v792
  %v800 = vsel %vm795, %v784, %v799
  %v801 = vsel %vm354, %v792, %v793
  %v802 = vsel %vm795, %v786, %v801
  %v808 = vld [vmem:[#allocation2 + $0x1f8] sm:$0x33]
  %v809 = vsel %vm376, %v796, %v808
  %810 = vst [vmem:[#allocation2 + $0x1f8] sm:$0x33] %v809
  %v811 = vld [vmem:[#allocation2 + $0x200] sm:$0x33]
  %v812 = vsel %vm376, %v798, %v811
  %813 = vst [vmem:[#allocation2 + $0x200] sm:$0x33] %v812
  %v814 = vld [vmem:[#allocation2 + $0x208] sm:$0x33]
  %v815 = vsel %vm376, %v800, %v814
  %816 = vst [vmem:[#allocation2 + $0x208] sm:$0x33] %v815
  %v817 = vld [vmem:[#allocation2 + $0x210] sm:$0x33]
  %v818 = vsel %vm376, %v802, %v817
  %819 = vst [vmem:[#allocation2 + $0x210] sm:$0x33] %v818
  %v820 = vld [vmem:[#allocation2 + $0x218] sm:$0x3]
  %v821 = vsel %vm390, %v788, %v820
  %822 = vst [vmem:[#allocation2 + $0x218] sm:$0x3] %v821
  %v823 = vld [vmem:[%s0 + $0x2] sm:$0xff]
  %v824 = vld [vmem:[%s0 + $0xa] sm:$0xff]
  %v825 = vld [vmem:[%s0 + $0x12] sm:$0x3]
  %827 = vst [vmem:[#allocation1] ss:$2 sm:$0xff] %v823
  %s829 = scalar_lea.vmem [#allocation1], 16
  %830 = vst [vmem:[%s829] ss:$2 sm:$0xff] %v824
  %s832 = scalar_lea.vmem [#allocation1], 32
  %833 = vst [vmem:[%s832] ss:$2 sm:$0xff] %v825
  %v834 = vld.sshfl [vmem:[#allocation1] sm:$0xff pattern:$0x75643120]
  %v836 = vld.sshfl [vmem:[#allocation1 + $0x8] sm:$0xff pattern:$0x75643120]
  %v838 = vld.sshfl [vmem:[#allocation1 + $0x10] sm:$0xff pattern:$0x75643120]
  %v840 = vld.sshfl [vmem:[#allocation1 + $0x18] sm:$0xff pattern:$0x75643120]
  %v842 = vld.sshfl [vmem:[#allocation1 + $0x20] sm:$0xff pattern:$0x75643120]
  %844 = vrot.lane.b32.xlu0 %v834, 93
  %v845 = vpop.permute.xlu0 %844
  %846 = vrot.lane.b32.xlu0 %v836, 93
  %v847 = vpop.permute.xlu0 %846
  %848 = vrot.lane.b32.xlu0 %v838, 93
  %v849 = vpop.permute.xlu0 %848
  %850 = vrot.lane.b32.xlu0 %v840, 93
  %v851 = vpop.permute.xlu0 %850
  %852 = vrot.lane.b32.xlu0 %v842, 93
  %v853 = vpop.permute.xlu0 %852
  %v854 = vrot.slane %v845, 4
  %v855 = vrot.slane %v847, 4
  %v856 = vrot.slane %v849, 4
  %v857 = vrot.slane %v851, 4
  %v858 = vrot.slane %v853, 4
  %v859 = vsel %vm354, %v854, %v855
  %vm860 = vcmask 760832
  %v861 = vsel %vm860, %v845, %v859
  %v862 = vsel %vm354, %v855, %v856
  %v863 = vsel %vm860, %v847, %v862
  %v864 = vsel %vm354, %v856, %v857
  %v865 = vsel %vm860, %v849, %v864
  %v866 = vsel %vm354, %v857, %v858
  %v867 = vsel %vm860, %v851, %v866
  %v873 = vld [vmem:[#allocation2 + $0x240] sm:$0x33]
  %v874 = vsel %vm376, %v861, %v873
  %875 = vst [vmem:[#allocation2 + $0x240] sm:$0x33] %v874
  %v876 = vld [vmem:[#allocation2 + $0x248] sm:$0x33]
  %v877 = vsel %vm376, %v863, %v876
  %878 = vst [vmem:[#allocation2 + $0x248] sm:$0x33] %v877
  %v879 = vld [vmem:[#allocation2 + $0x250] sm:$0x33]
  %v880 = vsel %vm376, %v865, %v879
  %881 = vst [vmem:[#allocation2 + $0x250] sm:$0x33] %v880
  %v882 = vld [vmem:[#allocation2 + $0x258] sm:$0x33]
  %v883 = vsel %vm376, %v867, %v882
  %884 = vst [vmem:[#allocation2 + $0x258] sm:$0x33] %v883
  %v885 = vld [vmem:[#allocation2 + $0x260] sm:$0x3]
  %v886 = vsel %vm390, %v853, %v885
  %887 = vst [vmem:[#allocation2 + $0x260] sm:$0x3] %v886
  %v888 = vld [vmem:[%s1] sm:$0xff]
  %v889 = vld [vmem:[#allocation2] sm:$0xff]
  %v890 = vld [vmem:[#allocation2 + $0x8] sm:$0xff]
  %v891 = vld [vmem:[#allocation2 + $0x10] sm:$0xff]
  %v892 = vld [vmem:[#allocation2 + $0x18] sm:$0xff]
  %v893 = vld [vmem:[#allocation2 + $0x20] sm:$0xf]
  %v894 = vld [vmem:[#allocation2 + $0x24] sm:$0xff]
  %v895 = vld [vmem:[#allocation2 + $0x2c] sm:$0xff]
  %v896 = vld [vmem:[#allocation2 + $0x34] sm:$0xff]
  %v897 = vld [vmem:[#allocation2 + $0x3c] sm:$0xff]
  %v898 = vld [vmem:[#allocation2 + $0x44] sm:$0xf]
  %v899 = vld [vmem:[#allocation2 + $0x48] sm:$0xff]
  %v900 = vld [vmem:[#allocation2 + $0x50] sm:$0xff]
  %v901 = vld [vmem:[#allocation2 + $0x58] sm:$0xff]
  %v902 = vld [vmem:[#allocation2 + $0x60] sm:$0xff]
  %v903 = vld [vmem:[#allocation2 + $0x68] sm:$0xf]
  %v904 = vld [vmem:[#allocation2 + $0x6c] sm:$0xff]
  %v905 = vld [vmem:[#allocation2 + $0x74] sm:$0xff]
  %v906 = vld [vmem:[#allocation2 + $0x7c] sm:$0xff]
  %v907 = vld [vmem:[#allocation2 + $0x84] sm:$0xff]
  %v908 = vld [vmem:[#allocation2 + $0x8c] sm:$0xf]
  %v909 = vld [vmem:[#allocation2 + $0x90] sm:$0xff]
  %v910 = vld [vmem:[#allocation2 + $0x98] sm:$0xff]
  %v911 = vld [vmem:[#allocation2 + $0xa0] sm:$0xff]
  %v912 = vld [vmem:[#allocation2 + $0xa8] sm:$0xff]
  %v913 = vld [vmem:[#allocation2 + $0xb0] sm:$0xf]
  %v914 = vld [vmem:[#allocation2 + $0xb4] sm:$0xff]
  %v915 = vld [vmem:[#allocation2 + $0xbc] sm:$0xff]
  %v916 = vld [vmem:[#allocation2 + $0xc4] sm:$0xff]
  %v917 = vld [vmem:[#allocation2 + $0xcc] sm:$0xff]
  %v918 = vld [vmem:[#allocation2 + $0xd4] sm:$0xf]
  %v919 = vld [vmem:[#allocation2 + $0xd8] sm:$0xff]
  %v920 = vld [vmem:[#allocation2 + $0xe0] sm:$0xff]
  %v921 = vld [vmem:[#allocation2 + $0xe8] sm:$0xff]
  %v922 = vld [vmem:[#allocation2 + $0xf0] sm:$0xff]
  %v923 = vld [vmem:[#allocation2 + $0xf8] sm:$0xf]
  %v924 = vld [vmem:[#allocation2 + $0xfc] sm:$0xff]
  %v925 = vld [vmem:[#allocation2 + $0x104] sm:$0xff]
  %v926 = vld [vmem:[#allocation2 + $0x10c] sm:$0xff]
  %v927 = vld [vmem:[#allocation2 + $0x114] sm:$0xff]
  %v928 = vld [vmem:[#allocation2 + $0x11c] sm:$0xf]
  %v929 = vld [vmem:[#allocation2 + $0x120] sm:$0xff]
  %v930 = vld [vmem:[#allocation2 + $0x128] sm:$0xff]
  %v931 = vld [vmem:[#allocation2 + $0x130] sm:$0xff]
  %v932 = vld [vmem:[#allocation2 + $0x138] sm:$0xff]
  %v933 = vld [vmem:[#allocation2 + $0x140] sm:$0xf]
  %v934 = vld [vmem:[#allocation2 + $0x144] sm:$0xff]
  %v935 = vld [vmem:[#allocation2 + $0x14c] sm:$0xff]
  %v936 = vld [vmem:[#allocation2 + $0x154] sm:$0xff]
  %v937 = vld [vmem:[#allocation2 + $0x15c] sm:$0xff]
  %v938 = vld [vmem:[#allocation2 + $0x164] sm:$0xf]
  %v939 = vld [vmem:[#allocation2 + $0x168] sm:$0xff]
  %v940 = vld [vmem:[#allocation2 + $0x170] sm:$0xff]
  %v941 = vld [vmem:[#allocation2 + $0x178] sm:$0xff]
  %v942 = vld [vmem:[#allocation2 + $0x180] sm:$0xff]
  %v943 = vld [vmem:[#allocation2 + $0x188] sm:$0xf]
  %v944 = vld [vmem:[#allocation2 + $0x18c] sm:$0xff]
  %v945 = vld [vmem:[#allocation2 + $0x194] sm:$0xff]
  %v946 = vld [vmem:[#allocation2 + $0x19c] sm:$0xff]
  %v947 = vld [vmem:[#allocation2 + $0x1a4] sm:$0xff]
  %v948 = vld [vmem:[#allocation2 + $0x1ac] sm:$0xf]
  %v949 = vld [vmem:[#allocation2 + $0x1b0] sm:$0xff]
  %v950 = vld [vmem:[#allocation2 + $0x1b8] sm:$0xff]
  %v951 = vld [vmem:[#allocation2 + $0x1c0] sm:$0xff]
  %v952 = vld [vmem:[#allocation2 + $0x1c8] sm:$0xff]
  %v953 = vld [vmem:[#allocation2 + $0x1d0] sm:$0xf]
  %v954 = vld [vmem:[#allocation2 + $0x1d4] sm:$0xff]
  %v955 = vld [vmem:[#allocation2 + $0x1dc] sm:$0xff]
  %v956 = vld [vmem:[#allocation2 + $0x1e4] sm:$0xff]
  %v957 = vld [vmem:[#allocation2 + $0x1ec] sm:$0xff]
  %v958 = vld [vmem:[#allocation2 + $0x1f4] sm:$0xf]
  %v959 = vld [vmem:[#allocation2 + $0x1f8] sm:$0xff]
  %v960 = vld [vmem:[#allocation2 + $0x200] sm:$0xff]
  %v961 = vld [vmem:[#allocation2 + $0x208] sm:$0xff]
  %v962 = vld [vmem:[#allocation2 + $0x210] sm:$0xff]
  %v963 = vld [vmem:[#allocation2 + $0x218] sm:$0xf]
  %v964 = vld [vmem:[#allocation2 + $0x21c] sm:$0xff]
  %v965 = vld [vmem:[#allocation2 + $0x224] sm:$0xff]
  %v966 = vld [vmem:[#allocation2 + $0x22c] sm:$0xff]
  %v967 = vld [vmem:[#allocation2 + $0x234] sm:$0xff]
  %v968 = vld [vmem:[#allocation2 + $0x23c] sm:$0xf]
  %v969 = vld [vmem:[#allocation2 + $0x240] sm:$0xff]
  %v970 = vld [vmem:[#allocation2 + $0x248] sm:$0xff]
  %v971 = vld [vmem:[#allocation2 + $0x250] sm:$0xff]
  %v972 = vld [vmem:[#allocation2 + $0x258] sm:$0xff]
  %v973 = vld [vmem:[#allocation2 + $0x260] sm:$0xf]
  %v974 = vld [vmem:[#allocation2 + $0x264] sm:$0xff]
  %v975 = vld [vmem:[#allocation2 + $0x26c] sm:$0xff]
  %v976 = vld [vmem:[#allocation2 + $0x274] sm:$0xff]
  %v977 = vld [vmem:[#allocation2 + $0x27c] sm:$0xff]
  %v978 = vld [vmem:[#allocation2 + $0x284] sm:$0xf]
  %v979 = vld [vmem:[#allocation2 + $0x288] sm:$0x11]
  %v980 = vld [vmem:[#allocation2 + $0x290] sm:$0x11]
  %v981 = vld [vmem:[#allocation2 + $0x298] sm:$0x11]
  %v982 = vld [vmem:[#allocation2 + $0x2a0] sm:$0x11]
  %v983 = vld [vmem:[#allocation2 + $0x2a8] sm:$0x1]
  %v985 = vunpack.c.l.b16 %v888
  %v986 = vunpack.c.h.b16 %v888
  %v987 = vpack.c.b16 %v985, %v985
  %v988 = vpack.c.b16 %v986, %v986
  %v1085 = vunpack.c.l.b16 %v889
  %v1086 = vunpack.c.h.b16 %v889
  %v1087 = vunpack.c.l.b16 %v890
  %v1088 = vunpack.c.h.b16 %v890
  %v1089 = vunpack.c.l.b16 %v891
  %v1090 = vunpack.c.h.b16 %v891
  %v1091 = vunpack.c.l.b16 %v892
  %v1092 = vunpack.c.h.b16 %v892
  %v1093 = vunpack.c.l.b16 %v893
  %v1094 = vunpack.c.l.b16 %v894
  %v1095 = vunpack.c.h.b16 %v894
  %v1096 = vunpack.c.l.b16 %v895
  %v1097 = vunpack.c.h.b16 %v895
  %v1098 = vunpack.c.l.b16 %v896
  %v1099 = vunpack.c.h.b16 %v896
  %v1100 = vunpack.c.l.b16 %v897
  %v1101 = vunpack.c.h.b16 %v897
  %v1102 = vunpack.c.l.b16 %v898
  %v1103 = vunpack.c.l.b16 %v899
  %v1104 = vunpack.c.h.b16 %v899
  %v1105 = vunpack.c.l.b16 %v900
  %v1106 = vunpack.c.h.b16 %v900
  %v1107 = vunpack.c.l.b16 %v901
  %v1108 = vunpack.c.h.b16 %v901
  %v1109 = vunpack.c.l.b16 %v902
  %v1110 = vunpack.c.h.b16 %v902
  %v1111 = vunpack.c.l.b16 %v903
  %v1112 = vunpack.c.l.b16 %v904
  %v1113 = vunpack.c.h.b16 %v904
  %v1114 = vunpack.c.l.b16 %v905
  %v1115 = vunpack.c.h.b16 %v905
  %v1116 = vunpack.c.l.b16 %v906
  %v1117 = vunpack.c.h.b16 %v906
  %v1118 = vunpack.c.l.b16 %v907
  %v1119 = vunpack.c.h.b16 %v907
  %v1120 = vunpack.c.l.b16 %v908
  %v1121 = vunpack.c.l.b16 %v909
  %v1122 = vunpack.c.h.b16 %v909
  %v1123 = vunpack.c.l.b16 %v910
  %v1124 = vunpack.c.h.b16 %v910
  %v1125 = vunpack.c.l.b16 %v911
  %v1126 = vunpack.c.h.b16 %v911
  %v1127 = vunpack.c.l.b16 %v912
  %v1128 = vunpack.c.h.b16 %v912
  %v1129 = vunpack.c.l.b16 %v913
  %v1130 = vunpack.c.l.b16 %v914
  %v1131 = vunpack.c.h.b16 %v914
  %v1132 = vunpack.c.l.b16 %v915
  %v1133 = vunpack.c.h.b16 %v915
  %v1134 = vunpack.c.l.b16 %v916
  %v1135 = vunpack.c.h.b16 %v916
  %v1136 = vunpack.c.l.b16 %v917
  %v1137 = vunpack.c.h.b16 %v917
  %v1138 = vunpack.c.l.b16 %v918
  %v1139 = vunpack.c.l.b16 %v919
  %v1140 = vunpack.c.h.b16 %v919
  %v1141 = vunpack.c.l.b16 %v920
  %v1142 = vunpack.c.h.b16 %v920
  %v1143 = vunpack.c.l.b16 %v921
  %v1144 = vunpack.c.h.b16 %v921
  %v1145 = vunpack.c.l.b16 %v922
  %v1146 = vunpack.c.h.b16 %v922
  %v1147 = vunpack.c.l.b16 %v923
  %v1148 = vunpack.c.l.b16 %v924
  %v1149 = vunpack.c.h.b16 %v924
  %v1150 = vunpack.c.l.b16 %v925
  %v1151 = vunpack.c.h.b16 %v925
  %v1152 = vunpack.c.l.b16 %v926
  %v1153 = vunpack.c.h.b16 %v926
  %v1154 = vunpack.c.l.b16 %v927
  %v1155 = vunpack.c.h.b16 %v927
  %v1156 = vunpack.c.l.b16 %v928
  %v1157 = vunpack.c.l.b16 %v929
  %v1158 = vunpack.c.h.b16 %v929
  %v1159 = vunpack.c.l.b16 %v930
  %v1160 = vunpack.c.h.b16 %v930
  %v1161 = vunpack.c.l.b16 %v931
  %v1162 = vunpack.c.h.b16 %v931
  %v1163 = vunpack.c.l.b16 %v932
  %v1164 = vunpack.c.h.b16 %v932
  %v1165 = vunpack.c.l.b16 %v933
  %v1166 = vunpack.c.l.b16 %v934
  %v1167 = vunpack.c.h.b16 %v934
  %v1168 = vunpack.c.l.b16 %v935
  %v1169 = vunpack.c.h.b16 %v935
  %v1170 = vunpack.c.l.b16 %v936
  %v1171 = vunpack.c.h.b16 %v936
  %v1172 = vunpack.c.l.b16 %v937
  %v1173 = vunpack.c.h.b16 %v937
  %v1174 = vunpack.c.l.b16 %v938
  %v1175 = vunpack.c.l.b16 %v939
  %v1176 = vunpack.c.h.b16 %v939
  %v1177 = vunpack.c.l.b16 %v940
  %v1178 = vunpack.c.h.b16 %v940
  %v1179 = vunpack.c.l.b16 %v941
  %v1180 = vunpack.c.h.b16 %v941
  %v1181 = vunpack.c.l.b16 %v942
  %v1182 = vunpack.c.h.b16 %v942
  %v1183 = vunpack.c.l.b16 %v943
  %v1184 = vunpack.c.l.b16 %v944
  %v1185 = vunpack.c.h.b16 %v944
  %v1186 = vunpack.c.l.b16 %v945
  %v1187 = vunpack.c.h.b16 %v945
  %v1188 = vunpack.c.l.b16 %v946
  %v1189 = vunpack.c.h.b16 %v946
  %v1190 = vunpack.c.l.b16 %v947
  %v1191 = vunpack.c.h.b16 %v947
  %v1192 = vunpack.c.l.b16 %v948
  %v1193 = vunpack.c.l.b16 %v949
  %v1194 = vunpack.c.h.b16 %v949
  %v1195 = vunpack.c.l.b16 %v950
  %v1196 = vunpack.c.h.b16 %v950
  %v1197 = vunpack.c.l.b16 %v951
  %v1198 = vunpack.c.h.b16 %v951
  %v1199 = vunpack.c.l.b16 %v952
  %v1200 = vunpack.c.h.b16 %v952
  %v1201 = vunpack.c.l.b16 %v953
  %v1202 = vunpack.c.l.b16 %v954
  %v1203 = vunpack.c.h.b16 %v954
  %v1204 = vunpack.c.l.b16 %v955
  %v1205 = vunpack.c.h.b16 %v955
  %v1206 = vunpack.c.l.b16 %v956
  %v1207 = vunpack.c.h.b16 %v956
  %v1208 = vunpack.c.l.b16 %v957
  %v1209 = vunpack.c.h.b16 %v957
  %v1210 = vunpack.c.l.b16 %v958
  %v1211 = vunpack.c.l.b16 %v959
  %v1212 = vunpack.c.h.b16 %v959
  %v1213 = vunpack.c.l.b16 %v960
  %v1214 = vunpack.c.h.b16 %v960
  %v1215 = vunpack.c.l.b16 %v961
  %v1216 = vunpack.c.h.b16 %v961
  %v1217 = vunpack.c.l.b16 %v962
  %v1218 = vunpack.c.h.b16 %v962
  %v1219 = vunpack.c.l.b16 %v963
  %v1220 = vunpack.c.l.b16 %v964
  %v1221 = vunpack.c.h.b16 %v964
  %v1222 = vunpack.c.l.b16 %v965
  %v1223 = vunpack.c.h.b16 %v965
  %v1224 = vunpack.c.l.b16 %v966
  %v1225 = vunpack.c.h.b16 %v966
  %v1226 = vunpack.c.l.b16 %v967
  %v1227 = vunpack.c.h.b16 %v967
  %v1228 = vunpack.c.l.b16 %v968
  %v1229 = vunpack.c.l.b16 %v969
  %v1230 = vunpack.c.h.b16 %v969
  %v1231 = vunpack.c.l.b16 %v970
  %v1232 = vunpack.c.h.b16 %v970
  %v1233 = vunpack.c.l.b16 %v971
  %v1234 = vunpack.c.h.b16 %v971
  %v1235 = vunpack.c.l.b16 %v972
  %v1236 = vunpack.c.h.b16 %v972
  %v1237 = vunpack.c.l.b16 %v973
  %v1238 = vunpack.c.l.b16 %v974
  %v1239 = vunpack.c.h.b16 %v974
  %v1240 = vunpack.c.l.b16 %v975
  %v1241 = vunpack.c.h.b16 %v975
  %v1242 = vunpack.c.l.b16 %v976
  %v1243 = vunpack.c.h.b16 %v976
  %v1244 = vunpack.c.l.b16 %v977
  %v1245 = vunpack.c.h.b16 %v977
  %v1246 = vunpack.c.l.b16 %v978
  %v1247 = vunpack.c.l.b16 %v979
  %v1248 = vunpack.c.h.b16 %v979
  %v1249 = vunpack.c.l.b16 %v980
  %v1250 = vunpack.c.h.b16 %v980
  %v1251 = vunpack.c.l.b16 %v981
  %v1252 = vunpack.c.h.b16 %v981
  %v1253 = vunpack.c.l.b16 %v982
  %v1254 = vunpack.c.h.b16 %v982
  %v1255 = vunpack.c.l.b16 %v983
  %v1256 = vpack.c.b16 %v1094, %v1085
  %v1257 = vpack.c.b16 %v1095, %v1086
  %v1258 = vpack.c.b16 %v1096, %v1087
  %v1259 = vpack.c.b16 %v1097, %v1088
  %v1260 = vpack.c.b16 %v1098, %v1089
  %v1261 = vpack.c.b16 %v1099, %v1090
  %v1262 = vpack.c.b16 %v1100, %v1091
  %v1263 = vpack.c.b16 %v1101, %v1092
  %v1264 = vpack.c.b16 %v1102, %v1093
  %v1265 = vpack.c.b16 %v1112, %v1103
  %v1266 = vpack.c.b16 %v1113, %v1104
  %v1267 = vpack.c.b16 %v1114, %v1105
  %v1268 = vpack.c.b16 %v1115, %v1106
  %v1269 = vpack.c.b16 %v1116, %v1107
  %v1270 = vpack.c.b16 %v1117, %v1108
  %v1271 = vpack.c.b16 %v1118, %v1109
  %v1272 = vpack.c.b16 %v1119, %v1110
  %v1273 = vpack.c.b16 %v1120, %v1111
  %v1274 = vpack.c.b16 %v1130, %v1121
  %v1275 = vpack.c.b16 %v1131, %v1122
  %v1276 = vpack.c.b16 %v1132, %v1123
  %v1277 = vpack.c.b16 %v1133, %v1124
  %v1278 = vpack.c.b16 %v1134, %v1125
  %v1279 = vpack.c.b16 %v1135, %v1126
  %v1280 = vpack.c.b16 %v1136, %v1127
  %v1281 = vpack.c.b16 %v1137, %v1128
  %v1282 = vpack.c.b16 %v1138, %v1129
  %v1283 = vpack.c.b16 %v1148, %v1139
  %v1284 = vpack.c.b16 %v1149, %v1140
  %v1285 = vpack.c.b16 %v1150, %v1141
  %v1286 = vpack.c.b16 %v1151, %v1142
  %v1287 = vpack.c.b16 %v1152, %v1143
  %v1288 = vpack.c.b16 %v1153, %v1144
  %v1289 = vpack.c.b16 %v1154, %v1145
  %v1290 = vpack.c.b16 %v1155, %v1146
  %v1291 = vpack.c.b16 %v1156, %v1147
  %v1292 = vpack.c.b16 %v1166, %v1157
  %v1293 = vpack.c.b16 %v1167, %v1158
  %v1294 = vpack.c.b16 %v1168, %v1159
  %v1295 = vpack.c.b16 %v1169, %v1160
  %v1296 = vpack.c.b16 %v1170, %v1161
  %v1297 = vpack.c.b16 %v1171, %v1162
  %v1298 = vpack.c.b16 %v1172, %v1163
  %v1299 = vpack.c.b16 %v1173, %v1164
  %v1300 = vpack.c.b16 %v1174, %v1165
  %v1301 = vpack.c.b16 %v1184, %v1175
  %v1302 = vpack.c.b16 %v1185, %v1176
  %v1303 = vpack.c.b16 %v1186, %v1177
  %v1304 = vpack.c.b16 %v1187, %v1178
  %v1305 = vpack.c.b16 %v1188, %v1179
  %v1306 = vpack.c.b16 %v1189, %v1180
  %v1307 = vpack.c.b16 %v1190, %v1181
  %v1308 = vpack.c.b16 %v1191, %v1182
  %v1309 = vpack.c.b16 %v1192, %v1183
  %v1310 = vpack.c.b16 %v1202, %v1193
  %v1311 = vpack.c.b16 %v1203, %v1194
  %v1312 = vpack.c.b16 %v1204, %v1195
  %v1313 = vpack.c.b16 %v1205, %v1196
  %v1314 = vpack.c.b16 %v1206, %v1197
  %v1315 = vpack.c.b16 %v1207, %v1198
  %v1316 = vpack.c.b16 %v1208, %v1199
  %v1317 = vpack.c.b16 %v1209, %v1200
  %v1318 = vpack.c.b16 %v1210, %v1201
  %v1319 = vpack.c.b16 %v1220, %v1211
  %v1320 = vpack.c.b16 %v1221, %v1212
  %v1321 = vpack.c.b16 %v1222, %v1213
  %v1322 = vpack.c.b16 %v1223, %v1214
  %v1323 = vpack.c.b16 %v1224, %v1215
  %v1324 = vpack.c.b16 %v1225, %v1216
  %v1325 = vpack.c.b16 %v1226, %v1217
  %v1326 = vpack.c.b16 %v1227, %v1218
  %v1327 = vpack.c.b16 %v1228, %v1219
  %v1328 = vpack.c.b16 %v1238, %v1229
  %v1329 = vpack.c.b16 %v1239, %v1230
  %v1330 = vpack.c.b16 %v1240, %v1231
  %v1331 = vpack.c.b16 %v1241, %v1232
  %v1332 = vpack.c.b16 %v1242, %v1233
  %v1333 = vpack.c.b16 %v1243, %v1234
  %v1334 = vpack.c.b16 %v1244, %v1235
  %v1335 = vpack.c.b16 %v1245, %v1236
  %v1336 = vpack.c.b16 %v1246, %v1237
  %v1337 = vpack.c.b16 %v1247, %v1247
  %v1338 = vpack.c.b16 %v1248, %v1248
  %v1339 = vpack.c.b16 %v1249, %v1249
  %v1340 = vpack.c.b16 %v1250, %v1250
  %v1341 = vpack.c.b16 %v1251, %v1251
  %v1342 = vpack.c.b16 %v1252, %v1252
  %v1343 = vpack.c.b16 %v1253, %v1253
  %v1344 = vpack.c.b16 %v1254, %v1254
  %v1345 = vpack.c.b16 %v1255, %v1255
  %vm1427 = vcmask 138240
  %v1429 = vsel %vm1427, %v988, 0
  %vm1431 = vcmask 1040384
  %v1432 = vsel 0, 4294967295, 65535
  %v1433 = vsel %vm1431, %v1432, 0
  %v1435 = vand.u32 %v1337, %v1433
  %v1438 = vand.u32 %v1338, %v1433
  %v1441 = vand.u32 %v1339, %v1433
  %v1444 = vand.u32 %v1340, %v1433
  %v1447 = vand.u32 %v1341, %v1433
  %v1450 = vand.u32 %v1342, %v1433
  %v1453 = vand.u32 %v1343, %v1433
  %v1456 = vand.u32 %v1344, %v1433
  %v1459 = vand.u32 %v1345, %v1433
  %1461 = vmatpush.bf16.msra.mxu0 %v1319
  %1462 = vmatpush.bf16.msra.mxu0 %v1310
  %1463 = vmatpush.bf16.msra.mxu0 %v1301
  %1464 = vmatpush.bf16.msra.mxu0 %v1292
  %1465 = vmatpush.bf16.msra.mxu0 %v1283
  %1466 = vmatpush.bf16.msra.mxu0 %v1274
  %1467 = vmatpush.bf16.msra.mxu0 %v1265
  %1468 = vmatpush.bf16.msra.mxu0 %v1256
  %1469 = vmatmul.bf16.gmra.mxu0 %v987
  %v1470 = vpop.f32.mrf.mxu0
  %v1471 = vadd.f32 0.0, %v1470
  %v1472 = vpop.f32.mrf.mxu0
  %1473 = vdwg.mxu0
  %1474 = vmatpush.bf16.msra.mxu0 0
  %1475 = vmatpush.bf16.msra.mxu0 0
  %1476 = vmatpush.bf16.msra.mxu0 0
  %1477 = vmatpush.bf16.msra.mxu0 0
  %1478 = vmatpush.bf16.msra.mxu0 0
  %1479 = vmatpush.bf16.msra.mxu0 0
  %1480 = vmatpush.bf16.msra.mxu0 %v1435
  %1481 = vmatpush.bf16.msra.mxu0 %v1328
  %1482 = vmatmul.bf16.gmra.mxu0 %v1429
  %v1483 = vpop.f32.mrf.mxu0
  %v1484 = vadd.f32 %v1471, %v1483
  %v1485 = vpop.f32.mrf.mxu0
  %1486 = vdwg.mxu0
  %1487 = vmatpush.bf16.msra.mxu0 %v1320
  %1488 = vmatpush.bf16.msra.mxu0 %v1311
  %1489 = vmatpush.bf16.msra.mxu0 %v1302
  %1490 = vmatpush.bf16.msra.mxu0 %v1293
  %1491 = vmatpush.bf16.msra.mxu0 %v1284
  %1492 = vmatpush.bf16.msra.mxu0 %v1275
  %1493 = vmatpush.bf16.msra.mxu0 %v1266
  %1494 = vmatpush.bf16.msra.mxu0 %v1257
  %1495 = vmatmul.bf16.gmra.mxu0 %v987
  %v1496 = vpop.f32.mrf.mxu0
  %v1497 = vadd.f32 0.0, %v1496
  %v1498 = vpop.f32.mrf.mxu0
  %1499 = vdwg.mxu0
  %1500 = vmatpush.bf16.msra.mxu0 0
  %1501 = vmatpush.bf16.msra.mxu0 0
  %1502 = vmatpush.bf16.msra.mxu0 0
  %1503 = vmatpush.bf16.msra.mxu0 0
  %1504 = vmatpush.bf16.msra.mxu0 0
  %1505 = vmatpush.bf16.msra.mxu0 0
  %1506 = vmatpush.bf16.msra.mxu0 %v1438
  %1507 = vmatpush.bf16.msra.mxu0 %v1329
  %1508 = vmatmul.bf16.gmra.mxu0 %v1429
  %v1509 = vpop.f32.mrf.mxu0
  %v1510 = vadd.f32 %v1497, %v1509
  %v1511 = vpop.f32.mrf.mxu0
  %1512 = vdwg.mxu0
  %1513 = vmatpush.bf16.msra.mxu0 %v1321
  %1514 = vmatpush.bf16.msra.mxu0 %v1312
  %1515 = vmatpush.bf16.msra.mxu0 %v1303
  %1516 = vmatpush.bf16.msra.mxu0 %v1294
  %1517 = vmatpush.bf16.msra.mxu0 %v1285
  %1518 = vmatpush.bf16.msra.mxu0 %v1276
  %1519 = vmatpush.bf16.msra.mxu0 %v1267
  %1520 = vmatpush.bf16.msra.mxu0 %v1258
  %1521 = vmatmul.bf16.gmra.mxu0 %v987
  %v1522 = vpop.f32.mrf.mxu0
  %v1523 = vadd.f32 0.0, %v1522
  %v1524 = vpop.f32.mrf.mxu0
  %1525 = vdwg.mxu0
  %1526 = vmatpush.bf16.msra.mxu0 0
  %1527 = vmatpush.bf16.msra.mxu0 0
  %1528 = vmatpush.bf16.msra.mxu0 0
  %1529 = vmatpush.bf16.msra.mxu0 0
  %1530 = vmatpush.bf16.msra.mxu0 0
  %1531 = vmatpush.bf16.msra.mxu0 0
  %1532 = vmatpush.bf16.msra.mxu0 %v1441
  %1533 = vmatpush.bf16.msra.mxu0 %v1330
  %1534 = vmatmul.bf16.gmra.mxu0 %v1429
  %v1535 = vpop.f32.mrf.mxu0
  %v1536 = vadd.f32 %v1523, %v1535
  %v1537 = vpop.f32.mrf.mxu0
  %1538 = vdwg.mxu0
  %1539 = vmatpush.bf16.msra.mxu0 %v1322
  %1540 = vmatpush.bf16.msra.mxu0 %v1313
  %1541 = vmatpush.bf16.msra.mxu0 %v1304
  %1542 = vmatpush.bf16.msra.mxu0 %v1295
  %1543 = vmatpush.bf16.msra.mxu0 %v1286
  %1544 = vmatpush.bf16.msra.mxu0 %v1277
  %1545 = vmatpush.bf16.msra.mxu0 %v1268
  %1546 = vmatpush.bf16.msra.mxu0 %v1259
  %1547 = vmatmul.bf16.gmra.mxu0 %v987
  %v1548 = vpop.f32.mrf.mxu0
  %v1549 = vadd.f32 0.0, %v1548
  %v1550 = vpop.f32.mrf.mxu0
  %1551 = vdwg.mxu0
  %1552 = vmatpush.bf16.msra.mxu0 0
  %1553 = vmatpush.bf16.msra.mxu0 0
  %1554 = vmatpush.bf16.msra.mxu0 0
  %1555 = vmatpush.bf16.msra.mxu0 0
  %1556 = vmatpush.bf16.msra.mxu0 0
  %1557 = vmatpush.bf16.msra.mxu0 0
  %1558 = vmatpush.bf16.msra.mxu0 %v1444
  %1559 = vmatpush.bf16.msra.mxu0 %v1331
  %1560 = vmatmul.bf16.gmra.mxu0 %v1429
  %v1561 = vpop.f32.mrf.mxu0
  %v1562 = vadd.f32 %v1549, %v1561
  %v1563 = vpop.f32.mrf.mxu0
  %1564 = vdwg.mxu0
  %1565 = vmatpush.bf16.msra.mxu0 %v1323
  %1566 = vmatpush.bf16.msra.mxu0 %v1314
  %1567 = vmatpush.bf16.msra.mxu0 %v1305
  %1568 = vmatpush.bf16.msra.mxu0 %v1296
  %1569 = vmatpush.bf16.msra.mxu0 %v1287
  %1570 = vmatpush.bf16.msra.mxu0 %v1278
  %1571 = vmatpush.bf16.msra.mxu0 %v1269
  %1572 = vmatpush.bf16.msra.mxu0 %v1260
  %1573 = vmatmul.bf16.gmra.mxu0 %v987
  %v1574 = vpop.f32.mrf.mxu0
  %v1575 = vadd.f32 0.0, %v1574
  %v1576 = vpop.f32.mrf.mxu0
  %1577 = vdwg.mxu0
  %1578 = vmatpush.bf16.msra.mxu0 0
  %1579 = vmatpush.bf16.msra.mxu0 0
  %1580 = vmatpush.bf16.msra.mxu0 0
  %1581 = vmatpush.bf16.msra.mxu0 0
  %1582 = vmatpush.bf16.msra.mxu0 0
  %1583 = vmatpush.bf16.msra.mxu0 0
  %1584 = vmatpush.bf16.msra.mxu0 %v1447
  %1585 = vmatpush.bf16.msra.mxu0 %v1332
  %1586 = vmatmul.bf16.gmra.mxu0 %v1429
  %v1587 = vpop.f32.mrf.mxu0
  %v1588 = vadd.f32 %v1575, %v1587
  %v1589 = vpop.f32.mrf.mxu0
  %1590 = vdwg.mxu0
  %1591 = vmatpush.bf16.msra.mxu0 %v1324
  %1592 = vmatpush.bf16.msra.mxu0 %v1315
  %1593 = vmatpush.bf16.msra.mxu0 %v1306
  %1594 = vmatpush.bf16.msra.mxu0 %v1297
  %1595 = vmatpush.bf16.msra.mxu0 %v1288
  %1596 = vmatpush.bf16.msra.mxu0 %v1279
  %1597 = vmatpush.bf16.msra.mxu0 %v1270
  %1598 = vmatpush.bf16.msra.mxu0 %v1261
  %1599 = vmatmul.bf16.gmra.mxu0 %v987
  %v1600 = vpop.f32.mrf.mxu0
  %v1601 = vadd.f32 0.0, %v1600
  %v1602 = vpop.f32.mrf.mxu0
  %1603 = vdwg.mxu0
  %1604 = vmatpush.bf16.msra.mxu0 0
  %1605 = vmatpush.bf16.msra.mxu0 0
  %1606 = vmatpush.bf16.msra.mxu0 0
  %1607 = vmatpush.bf16.msra.mxu0 0
  %1608 = vmatpush.bf16.msra.mxu0 0
  %1609 = vmatpush.bf16.msra.mxu0 0
  %1610 = vmatpush.bf16.msra.mxu0 %v1450
  %1611 = vmatpush.bf16.msra.mxu0 %v1333
  %1612 = vmatmul.bf16.gmra.mxu0 %v1429
  %v1613 = vpop.f32.mrf.mxu0
  %v1614 = vadd.f32 %v1601, %v1613
  %v1615 = vpop.f32.mrf.mxu0
  %1616 = vdwg.mxu0
  %1617 = vmatpush.bf16.msra.mxu0 %v1325
  %1618 = vmatpush.bf16.msra.mxu0 %v1316
  %1619 = vmatpush.bf16.msra.mxu0 %v1307
  %1620 = vmatpush.bf16.msra.mxu0 %v1298
  %1621 = vmatpush.bf16.msra.mxu0 %v1289
  %1622 = vmatpush.bf16.msra.mxu0 %v1280
  %1623 = vmatpush.bf16.msra.mxu0 %v1271
  %1624 = vmatpush.bf16.msra.mxu0 %v1262
  %1625 = vmatmul.bf16.gmra.mxu0 %v987
  %v1626 = vpop.f32.mrf.mxu0
  %v1627 = vadd.f32 0.0, %v1626
  %v1628 = vpop.f32.mrf.mxu0
  %1629 = vdwg.mxu0
  %1630 = vmatpush.bf16.msra.mxu0 0
  %1631 = vmatpush.bf16.msra.mxu0 0
  %1632 = vmatpush.bf16.msra.mxu0 0
  %1633 = vmatpush.bf16.msra.mxu0 0
  %1634 = vmatpush.bf16.msra.mxu0 0
  %1635 = vmatpush.bf16.msra.mxu0 0
  %1636 = vmatpush.bf16.msra.mxu0 %v1453
  %1637 = vmatpush.bf16.msra.mxu0 %v1334
  %1638 = vmatmul.bf16.gmra.mxu0 %v1429
  %v1639 = vpop.f32.mrf.mxu0
  %v1640 = vadd.f32 %v1627, %v1639
  %v1641 = vpop.f32.mrf.mxu0
  %1642 = vdwg.mxu0
  %1643 = vmatpush.bf16.msra.mxu0 %v1326
  %1644 = vmatpush.bf16.msra.mxu0 %v1317
  %1645 = vmatpush.bf16.msra.mxu0 %v1308
  %1646 = vmatpush.bf16.msra.mxu0 %v1299
  %1647 = vmatpush.bf16.msra.mxu0 %v1290
  %1648 = vmatpush.bf16.msra.mxu0 %v1281
  %1649 = vmatpush.bf16.msra.mxu0 %v1272
  %1650 = vmatpush.bf16.msra.mxu0 %v1263
  %1651 = vmatmul.bf16.gmra.mxu0 %v987
  %v1652 = vpop.f32.mrf.mxu0
  %v1653 = vadd.f32 0.0, %v1652
  %v1654 = vpop.f32.mrf.mxu0
  %1655 = vdwg.mxu0
  %1656 = vmatpush.bf16.msra.mxu0 0
  %1657 = vmatpush.bf16.msra.mxu0 0
  %1658 = vmatpush.bf16.msra.mxu0 0
  %1659 = vmatpush.bf16.msra.mxu0 0
  %1660 = vmatpush.bf16.msra.mxu0 0
  %1661 = vmatpush.bf16.msra.mxu0 0
  %1662 = vmatpush.bf16.msra.mxu0 %v1456
  %1663 = vmatpush.bf16.msra.mxu0 %v1335
  %1664 = vmatmul.bf16.gmra.mxu0 %v1429
  %v1665 = vpop.f32.mrf.mxu0
  %v1666 = vadd.f32 %v1653, %v1665
  %v1667 = vpop.f32.mrf.mxu0
  %1668 = vdwg.mxu0
  %1669 = vmatpush.bf16.msra.mxu0 %v1327
  %1670 = vmatpush.bf16.msra.mxu0 %v1318
  %1671 = vmatpush.bf16.msra.mxu0 %v1309
  %1672 = vmatpush.bf16.msra.mxu0 %v1300
  %1673 = vmatpush.bf16.msra.mxu0 %v1291
  %1674 = vmatpush.bf16.msra.mxu0 %v1282
  %1675 = vmatpush.bf16.msra.mxu0 %v1273
  %1676 = vmatpush.bf16.msra.mxu0 %v1264
  %1677 = vmatmul.bf16.gmra.mxu0 %v987
  %v1678 = vpop.f32.mrf.mxu0
  %v1679 = vadd.f32 0.0, %v1678
  %v1680 = vpop.f32.mrf.mxu0
  %1681 = vdwg.mxu0
  %1682 = vmatpush.bf16.msra.mxu0 0
  %1683 = vmatpush.bf16.msra.mxu0 0
  %1684 = vmatpush.bf16.msra.mxu0 0
  %1685 = vmatpush.bf16.msra.mxu0 0
  %1686 = vmatpush.bf16.msra.mxu0 0
  %1687 = vmatpush.bf16.msra.mxu0 0
  %1688 = vmatpush.bf16.msra.mxu0 %v1459
  %1689 = vmatpush.bf16.msra.mxu0 %v1336
  %1690 = vmatmul.bf16.gmra.mxu0 %v1429
  %v1691 = vpop.f32.mrf.mxu0
  %v1692 = vadd.f32 %v1679, %v1691
  %v1693 = vpop.f32.mrf.mxu0
  %1694 = vdwg.mxu0
  %v1695 = vld [vmem:[%s2] ss:$8 sm:$0xf]
  %v1696 = vld [vmem:[%s2] ss:$8 sm:$0xf0]
  %v1697 = vor.u32 %v1695, %v1696
  %s1698 = scalar_lea.vmem %s2, 64
  %v1699 = vld [vmem:[%s1698] ss:$8 sm:$0x1]
  %v1700 = vmax.f32 %v1484, 0.0
  %v1701 = vmax.f32 %v1510, 0.0
  %v1702 = vmax.f32 %v1536, 0.0
  %v1703 = vmax.f32 %v1562, 0.0
  %v1704 = vmax.f32 %v1588, 0.0
  %v1705 = vmax.f32 %v1614, 0.0
  %v1706 = vmax.f32 %v1640, 0.0
  %v1707 = vmax.f32 %v1666, 0.0
  %v1708 = vmax.f32 %v1692, 0.0
  %v1711 = vperm.slane %v1697, 0
  %v1712 = vperm.slane %v1697, 1
  %v1713 = vperm.slane %v1697, 2
  %v1714 = vperm.slane %v1697, 3
  %v1715 = vperm.slane %v1697, 4
  %v1716 = vperm.slane %v1697, 5
  %v1717 = vperm.slane %v1697, 6
  %v1718 = vperm.slane %v1697, 7
  %v1719 = vperm.slane %v1699, 0
  %v1729 = vmul.f32 %v1700, %v1711
  %v1730 = vmul.f32 %v1701, %v1712
  %v1731 = vmul.f32 %v1702, %v1713
  %v1732 = vmul.f32 %v1703, %v1714
  %v1733 = vmul.f32 %v1704, %v1715
  %v1734 = vmul.f32 %v1705, %v1716
  %v1735 = vmul.f32 %v1706, %v1717
  %v1736 = vmul.f32 %v1707, %v1718
  %v1737 = vmul.f32 %v1708, %v1719
  %v1738 = vpack.c.bf16 %v1730, %v1729
  %v1739 = vpack.c.bf16 %v1732, %v1731
  %v1740 = vpack.c.bf16 %v1734, %v1733
  %v1741 = vpack.c.bf16 %v1736, %v1735
  %v1742 = vpack.c.bf16 %v1737, %v1737
  %1743 = vst [vmem:[#allocation3 + $0x4] sm:$0xff] %v1738
  %1744 = vst [vmem:[#allocation3 + $0xc] sm:$0xff] %v1739
  %1745 = vst [vmem:[#allocation3 + $0x14] sm:$0xff] %v1740
  %1746 = vst [vmem:[#allocation3 + $0x1c] sm:$0xff] %v1741
  %1747 = vst.msk [vmem:[#allocation3 + $0x24] sm:$0xf] %vm20, %v1742
  %v1748 = vld [vmem:[#allocation3] sm:$0xff]
  %v1749 = vld [vmem:[#allocation3 + $0x8] sm:$0xff]
  %v1750 = vld [vmem:[#allocation3 + $0x10] sm:$0xff]
  %v1751 = vld [vmem:[#allocation3 + $0x18] sm:$0xff]
  %v1752 = vld [vmem:[#allocation3 + $0x20] sm:$0xff]
  %1758 = vrot.lane.b32.xlu0 %v1748, 35
  %v1759 = vpop.permute.xlu0 %1758
  %1760 = vrot.lane.b32.xlu0 %v1749, 35
  %v1761 = vpop.permute.xlu0 %1760
  %1762 = vrot.lane.b32.xlu0 %v1750, 35
  %v1763 = vpop.permute.xlu0 %1762
  %1764 = vrot.lane.b32.xlu0 %v1751, 35
  %v1765 = vpop.permute.xlu0 %1764
  %1766 = vrot.lane.b32.xlu0 %v1752, 35
  %v1767 = vpop.permute.xlu0 %1766
  %v1768 = vrot.slane %v1759, 4
  %v1769 = vrot.slane %v1761, 4
  %v1770 = vrot.slane %v1763, 4
  %v1771 = vrot.slane %v1765, 4
  %v1772 = vrot.slane %v1767, 4
  %v1773 = vsel %vm354, %v1768, %v1769
  %v1774 = vsel %vm356, %v1759, %v1773
  %v1775 = vsel %vm354, %v1769, %v1770
  %v1776 = vsel %vm356, %v1761, %v1775
  %v1777 = vsel %vm354, %v1770, %v1771
  %v1778 = vsel %vm356, %v1763, %v1777
  %v1779 = vsel %vm354, %v1771, %v1772
  %v1780 = vsel %vm356, %v1765, %v1779
  %v1781 = vsel %vm356, %v1767, %v1772
  %1787 = vst [vmem:[#allocation2] sm:$0xff] %v1774
  %1788 = vst [vmem:[#allocation2 + $0x8] sm:$0xff] %v1776
  %1789 = vst [vmem:[#allocation2 + $0x10] sm:$0xff] %v1778
  %1790 = vst [vmem:[#allocation2 + $0x18] sm:$0xff] %v1780
  %1791 = vst.msk [vmem:[#allocation2 + $0x20] sm:$0xf] %vm20, %v1781
  %v1792 = vld [vmem:[#allocation3] sm:$0xff]
  %v1793 = vld [vmem:[#allocation3 + $0x8] sm:$0xff]
  %v1794 = vld [vmem:[#allocation3 + $0x10] sm:$0xff]
  %v1795 = vld [vmem:[#allocation3 + $0x18] sm:$0xff]
  %v1796 = vld [vmem:[#allocation3 + $0x20] sm:$0xff]
  %1802 = vrot.lane.b32.xlu0 %v1792, 34
  %v1803 = vpop.permute.xlu0 %1802
  %1804 = vrot.lane.b32.xlu0 %v1793, 34
  %v1805 = vpop.permute.xlu0 %1804
  %1806 = vrot.lane.b32.xlu0 %v1794, 34
  %v1807 = vpop.permute.xlu0 %1806
  %1808 = vrot.lane.b32.xlu0 %v1795, 34
  %v1809 = vpop.permute.xlu0 %1808
  %1810 = vrot.lane.b32.xlu0 %v1796, 34
  %v1811 = vpop.permute.xlu0 %1810
  %v1812 = vrot.slane %v1803, 4
  %v1813 = vrot.slane %v1805, 4
  %v1814 = vrot.slane %v1807, 4
  %v1815 = vrot.slane %v1809, 4
  %v1816 = vrot.slane %v1811, 4
  %v1817 = vsel %vm354, %v1812, %v1813
  %v1818 = vsel %vm431, %v1803, %v1817
  %v1819 = vsel %vm354, %v1813, %v1814
  %v1820 = vsel %vm431, %v1805, %v1819
  %v1821 = vsel %vm354, %v1814, %v1815
  %v1822 = vsel %vm431, %v1807, %v1821
  %v1823 = vsel %vm354, %v1815, %v1816
  %v1824 = vsel %vm431, %v1809, %v1823
  %v1825 = vsel %vm431, %v1811, %v1816
  %1831 = vst [vmem:[#allocation2 + $0x48] sm:$0xff] %v1818
  %1832 = vst [vmem:[#allocation2 + $0x50] sm:$0xff] %v1820
  %1833 = vst [vmem:[#allocation2 + $0x58] sm:$0xff] %v1822
  %1834 = vst [vmem:[#allocation2 + $0x60] sm:$0xff] %v1824
  %1835 = vst.msk [vmem:[#allocation2 + $0x68] sm:$0xf] %vm20, %v1825
  %v1836 = vld [vmem:[#allocation3] sm:$0xff]
  %v1837 = vld [vmem:[#allocation3 + $0x8] sm:$0xff]
  %v1838 = vld [vmem:[#allocation3 + $0x10] sm:$0xff]
  %v1839 = vld [vmem:[#allocation3 + $0x18] sm:$0xff]
  %v1840 = vld [vmem:[#allocation3 + $0x20] sm:$0xff]
  %1846 = vrot.lane.b32.xlu0 %v1836, 33
  %v1847 = vpop.permute.xlu0 %1846
  %1848 = vrot.lane.b32.xlu0 %v1837, 33
  %v1849 = vpop.permute.xlu0 %1848
  %1850 = vrot.lane.b32.xlu0 %v1838, 33
  %v1851 = vpop.permute.xlu0 %1850
  %1852 = vrot.lane.b32.xlu0 %v1839, 33
  %v1853 = vpop.permute.xlu0 %1852
  %1854 = vrot.lane.b32.xlu0 %v1840, 33
  %v1855 = vpop.permute.xlu0 %1854
  %v1856 = vrot.slane %v1847, 4
  %v1857 = vrot.slane %v1849, 4
  %v1858 = vrot.slane %v1851, 4
  %v1859 = vrot.slane %v1853, 4
  %v1860 = vrot.slane %v1855, 4
  %v1861 = vsel %vm354, %v1856, %v1857
  %v1862 = vsel %vm497, %v1847, %v1861
  %v1863 = vsel %vm354, %v1857, %v1858
  %v1864 = vsel %vm497, %v1849, %v1863
  %v1865 = vsel %vm354, %v1858, %v1859
  %v1866 = vsel %vm497, %v1851, %v1865
  %v1867 = vsel %vm354, %v1859, %v1860
  %v1868 = vsel %vm497, %v1853, %v1867
  %v1869 = vsel %vm497, %v1855, %v1860
  %1875 = vst [vmem:[#allocation2 + $0x90] sm:$0xff] %v1862
  %1876 = vst [vmem:[#allocation2 + $0x98] sm:$0xff] %v1864
  %1877 = vst [vmem:[#allocation2 + $0xa0] sm:$0xff] %v1866
  %1878 = vst [vmem:[#allocation2 + $0xa8] sm:$0xff] %v1868
  %1879 = vst.msk [vmem:[#allocation2 + $0xb0] sm:$0xf] %vm20, %v1869
  %v1880 = vld [vmem:[#allocation3] sm:$0xff]
  %v1881 = vld [vmem:[#allocation3 + $0x8] sm:$0xff]
  %v1882 = vld [vmem:[#allocation3 + $0x10] sm:$0xff]
  %v1883 = vld [vmem:[#allocation3 + $0x18] sm:$0xff]
  %v1884 = vld [vmem:[#allocation3 + $0x20] sm:$0xff]
  %1890 = vrot.lane.b32.xlu0 %v1880, 1
  %v1891 = vpop.permute.xlu0 %1890
  %1892 = vrot.lane.b32.xlu0 %v1881, 1
  %v1893 = vpop.permute.xlu0 %1892
  %1894 = vrot.lane.b32.xlu0 %v1882, 1
  %v1895 = vpop.permute.xlu0 %1894
  %1896 = vrot.lane.b32.xlu0 %v1883, 1
  %v1897 = vpop.permute.xlu0 %1896
  %1898 = vrot.lane.b32.xlu0 %v1884, 1
  %v1899 = vpop.permute.xlu0 %1898
  %v1900 = vrot.slane %v1891, 4
  %v1901 = vrot.slane %v1893, 4
  %v1902 = vrot.slane %v1895, 4
  %v1903 = vrot.slane %v1897, 4
  %v1904 = vrot.slane %v1899, 4
  %v1905 = vsel %vm354, %v1900, %v1901
  %v1906 = vsel %vm563, %v1891, %v1905
  %v1907 = vsel %vm354, %v1901, %v1902
  %v1908 = vsel %vm563, %v1893, %v1907
  %v1909 = vsel %vm354, %v1902, %v1903
  %v1910 = vsel %vm563, %v1895, %v1909
  %v1911 = vsel %vm354, %v1903, %v1904
  %v1912 = vsel %vm563, %v1897, %v1911
  %v1913 = vsel %vm563, %v1899, %v1904
  %1919 = vst [vmem:[#allocation2 + $0xd8] sm:$0xff] %v1906
  %1920 = vst [vmem:[#allocation2 + $0xe0] sm:$0xff] %v1908
  %1921 = vst [vmem:[#allocation2 + $0xe8] sm:$0xff] %v1910
  %1922 = vst [vmem:[#allocation2 + $0xf0] sm:$0xff] %v1912
  %1923 = vst.msk [vmem:[#allocation2 + $0xf8] sm:$0xf] %vm20, %v1913
  %v1924 = vld [vmem:[#allocation3 + $0x4] sm:$0xff]
  %v1925 = vld [vmem:[#allocation3 + $0xc] sm:$0xff]
  %v1926 = vld [vmem:[#allocation3 + $0x14] sm:$0xff]
  %v1927 = vld [vmem:[#allocation3 + $0x1c] sm:$0xff]
  %v1928 = vld [vmem:[#allocation3 + $0x24] sm:$0xf]
  %1929 = vst [vmem:[#allocation2 + $0x120] sm:$0xff] %v1924
  %1930 = vst [vmem:[#allocation2 + $0x128] sm:$0xff] %v1925
  %1931 = vst [vmem:[#allocation2 + $0x130] sm:$0xff] %v1926
  %1932 = vst [vmem:[#allocation2 + $0x138] sm:$0xff] %v1927
  %1933 = vst.msk [vmem:[#allocation2 + $0x140] sm:$0xf] %vm20, %v1928
  %v1934 = vld [vmem:[#allocation3 + $0x4] sm:$0xff]
  %v1935 = vld [vmem:[#allocation3 + $0xc] sm:$0xff]
  %v1936 = vld [vmem:[#allocation3 + $0x14] sm:$0xff]
  %v1937 = vld [vmem:[#allocation3 + $0x1c] sm:$0xff]
  %v1938 = vld [vmem:[#allocation3 + $0x24] sm:$0xf]
  %1944 = vrot.lane.b32.xlu0 %v1934, 127
  %v1945 = vpop.permute.xlu0 %1944
  %1946 = vrot.lane.b32.xlu0 %v1935, 127
  %v1947 = vpop.permute.xlu0 %1946
  %1948 = vrot.lane.b32.xlu0 %v1936, 127
  %v1949 = vpop.permute.xlu0 %1948
  %1950 = vrot.lane.b32.xlu0 %v1937, 127
  %v1951 = vpop.permute.xlu0 %1950
  %1952 = vrot.lane.b32.xlu0 %v1938, 127
  %v1953 = vpop.permute.xlu0 %1952
  %v1954 = vrot.slane %v1945, 4
  %v1955 = vrot.slane %v1947, 4
  %v1956 = vrot.slane %v1949, 4
  %v1957 = vrot.slane %v1951, 4
  %v1958 = vrot.slane %v1953, 4
  %v1959 = vsel %vm354, %v1954, %v1955
  %v1960 = vsel %vm665, %v1945, %v1959
  %v1961 = vsel %vm354, %v1955, %v1956
  %v1962 = vsel %vm665, %v1947, %v1961
  %v1963 = vsel %vm354, %v1956, %v1957
  %v1964 = vsel %vm665, %v1949, %v1963
  %v1965 = vsel %vm354, %v1957, %v1958
  %v1966 = vsel %vm665, %v1951, %v1965
  %1972 = vst [vmem:[#allocation2 + $0x168] sm:$0xff] %v1960
  %1973 = vst [vmem:[#allocation2 + $0x170] sm:$0xff] %v1962
  %1974 = vst [vmem:[#allocation2 + $0x178] sm:$0xff] %v1964
  %1975 = vst [vmem:[#allocation2 + $0x180] sm:$0xff] %v1966
  %1976 = vst.msk [vmem:[#allocation2 + $0x188] sm:$0xf] %vm20, %v1953
  %v1977 = vld [vmem:[#allocation3 + $0x4] sm:$0xff]
  %v1978 = vld [vmem:[#allocation3 + $0xc] sm:$0xff]
  %v1979 = vld [vmem:[#allocation3 + $0x14] sm:$0xff]
  %v1980 = vld [vmem:[#allocation3 + $0x1c] sm:$0xff]
  %v1981 = vld [vmem:[#allocation3 + $0x24] sm:$0xf]
  %1987 = vrot.lane.b32.xlu0 %v1977, 95
  %v1988 = vpop.permute.xlu0 %1987
  %1989 = vrot.lane.b32.xlu0 %v1978, 95
  %v1990 = vpop.permute.xlu0 %1989
  %1991 = vrot.lane.b32.xlu0 %v1979, 95
  %v1992 = vpop.permute.xlu0 %1991
  %1993 = vrot.lane.b32.xlu0 %v1980, 95
  %v1994 = vpop.permute.xlu0 %1993
  %1995 = vrot.lane.b32.xlu0 %v1981, 95
  %v1996 = vpop.permute.xlu0 %1995
  %v1997 = vrot.slane %v1988, 4
  %v1998 = vrot.slane %v1990, 4
  %v1999 = vrot.slane %v1992, 4
  %v2000 = vrot.slane %v1994, 4
  %v2001 = vrot.slane %v1996, 4
  %v2002 = vsel %vm354, %v1997, %v1998
  %v2003 = vsel %vm730, %v1988, %v2002
  %v2004 = vsel %vm354, %v1998, %v1999
  %v2005 = vsel %vm730, %v1990, %v2004
  %v2006 = vsel %vm354, %v1999, %v2000
  %v2007 = vsel %vm730, %v1992, %v2006
  %v2008 = vsel %vm354, %v2000, %v2001
  %v2009 = vsel %vm730, %v1994, %v2008
  %2015 = vst [vmem:[#allocation2 + $0x1b0] sm:$0xff] %v2003
  %2016 = vst [vmem:[#allocation2 + $0x1b8] sm:$0xff] %v2005
  %2017 = vst [vmem:[#allocation2 + $0x1c0] sm:$0xff] %v2007
  %2018 = vst [vmem:[#allocation2 + $0x1c8] sm:$0xff] %v2009
  %2019 = vst.msk [vmem:[#allocation2 + $0x1d0] sm:$0xf] %vm20, %v1996
  %v2020 = vld [vmem:[#allocation3 + $0x4] sm:$0xff]
  %v2021 = vld [vmem:[#allocation3 + $0xc] sm:$0xff]
  %v2022 = vld [vmem:[#allocation3 + $0x14] sm:$0xff]
  %v2023 = vld [vmem:[#allocation3 + $0x1c] sm:$0xff]
  %v2024 = vld [vmem:[#allocation3 + $0x24] sm:$0xf]
  %2030 = vrot.lane.b32.xlu0 %v2020, 94
  %v2031 = vpop.permute.xlu0 %2030
  %2032 = vrot.lane.b32.xlu0 %v2021, 94
  %v2033 = vpop.permute.xlu0 %2032
  %2034 = vrot.lane.b32.xlu0 %v2022, 94
  %v2035 = vpop.permute.xlu0 %2034
  %2036 = vrot.lane.b32.xlu0 %v2023, 94
  %v2037 = vpop.permute.xlu0 %2036
  %2038 = vrot.lane.b32.xlu0 %v2024, 94
  %v2039 = vpop.permute.xlu0 %2038
  %v2040 = vrot.slane %v2031, 4
  %v2041 = vrot.slane %v2033, 4
  %v2042 = vrot.slane %v2035, 4
  %v2043 = vrot.slane %v2037, 4
  %v2044 = vrot.slane %v2039, 4
  %v2045 = vsel %vm354, %v2040, %v2041
  %v2046 = vsel %vm795, %v2031, %v2045
  %v2047 = vsel %vm354, %v2041, %v2042
  %v2048 = vsel %vm795, %v2033, %v2047
  %v2049 = vsel %vm354, %v2042, %v2043
  %v2050 = vsel %vm795, %v2035, %v2049
  %v2051 = vsel %vm354, %v2043, %v2044
  %v2052 = vsel %vm795, %v2037, %v2051
  %2058 = vst [vmem:[#allocation2 + $0x1f8] sm:$0xff] %v2046
  %2059 = vst [vmem:[#allocation2 + $0x200] sm:$0xff] %v2048
  %2060 = vst [vmem:[#allocation2 + $0x208] sm:$0xff] %v2050
  %2061 = vst [vmem:[#allocation2 + $0x210] sm:$0xff] %v2052
  %2062 = vst.msk [vmem:[#allocation2 + $0x218] sm:$0xf] %vm20, %v2039
  %v2063 = vld [vmem:[#allocation3 + $0x4] sm:$0xff]
  %v2064 = vld [vmem:[#allocation3 + $0xc] sm:$0xff]
  %v2065 = vld [vmem:[#allocation3 + $0x14] sm:$0xff]
  %v2066 = vld [vmem:[#allocation3 + $0x1c] sm:$0xff]
  %v2067 = vld [vmem:[#allocation3 + $0x24] sm:$0xf]
  %2073 = vrot.lane.b32.xlu0 %v2063, 93
  %v2074 = vpop.permute.xlu0 %2073
  %2075 = vrot.lane.b32.xlu0 %v2064, 93
  %v2076 = vpop.permute.xlu0 %2075
  %2077 = vrot.lane.b32.xlu0 %v2065, 93
  %v2078 = vpop.permute.xlu0 %2077
  %2079 = vrot.lane.b32.xlu0 %v2066, 93
  %v2080 = vpop.permute.xlu0 %2079
  %2081 = vrot.lane.b32.xlu0 %v2067, 93
  %v2082 = vpop.permute.xlu0 %2081
  %v2083 = vrot.slane %v2074, 4
  %v2084 = vrot.slane %v2076, 4
  %v2085 = vrot.slane %v2078, 4
  %v2086 = vrot.slane %v2080, 4
  %v2087 = vrot.slane %v2082, 4
  %v2088 = vsel %vm354, %v2083, %v2084
  %v2089 = vsel %vm860, %v2074, %v2088
  %v2090 = vsel %vm354, %v2084, %v2085
  %v2091 = vsel %vm860, %v2076, %v2090
  %v2092 = vsel %vm354, %v2085, %v2086
  %v2093 = vsel %vm860, %v2078, %v2092
  %v2094 = vsel %vm354, %v2086, %v2087
  %v2095 = vsel %vm860, %v2080, %v2094
  %2101 = vst [vmem:[#allocation2 + $0x240] sm:$0xff] %v2089
  %2102 = vst [vmem:[#allocation2 + $0x248] sm:$0xff] %v2091
  %2103 = vst [vmem:[#allocation2 + $0x250] sm:$0xff] %v2093
  %2104 = vst [vmem:[#allocation2 + $0x258] sm:$0xff] %v2095
  %2105 = vst.msk [vmem:[#allocation2 + $0x260] sm:$0xf] %vm20, %v2082
  %v2106 = vld [vmem:[%s1 + $0x18] sm:$0xff]
  %v2107 = vld [vmem:[#allocation2] sm:$0xff]
  %v2108 = vld [vmem:[#allocation2 + $0x8] sm:$0xff]
  %v2109 = vld [vmem:[#allocation2 + $0x10] sm:$0xff]
  %v2110 = vld [vmem:[#allocation2 + $0x18] sm:$0xff]
  %v2111 = vld [vmem:[#allocation2 + $0x20] sm:$0xf]
  %v2112 = vld [vmem:[#allocation2 + $0x24] sm:$0xff]
  %v2113 = vld [vmem:[#allocation2 + $0x2c] sm:$0xff]
  %v2114 = vld [vmem:[#allocation2 + $0x34] sm:$0xff]
  %v2115 = vld [vmem:[#allocation2 + $0x3c] sm:$0xff]
  %v2116 = vld [vmem:[#allocation2 + $0x44] sm:$0xf]
  %v2117 = vld [vmem:[#allocation2 + $0x48] sm:$0xff]
  %v2118 = vld [vmem:[#allocation2 + $0x50] sm:$0xff]
  %v2119 = vld [vmem:[#allocation2 + $0x58] sm:$0xff]
  %v2120 = vld [vmem:[#allocation2 + $0x60] sm:$0xff]
  %v2121 = vld [vmem:[#allocation2 + $0x68] sm:$0xf]
  %v2122 = vld [vmem:[#allocation2 + $0x6c] sm:$0xff]
  %v2123 = vld [vmem:[#allocation2 + $0x74] sm:$0xff]
  %v2124 = vld [vmem:[#allocation2 + $0x7c] sm:$0xff]
  %v2125 = vld [vmem:[#allocation2 + $0x84] sm:$0xff]
  %v2126 = vld [vmem:[#allocation2 + $0x8c] sm:$0xf]
  %v2127 = vld [vmem:[#allocation2 + $0x90] sm:$0xff]
  %v2128 = vld [vmem:[#allocation2 + $0x98] sm:$0xff]
  %v2129 = vld [vmem:[#allocation2 + $0xa0] sm:$0xff]
  %v2130 = vld [vmem:[#allocation2 + $0xa8] sm:$0xff]
  %v2131 = vld [vmem:[#allocation2 + $0xb0] sm:$0xf]
  %v2132 = vld [vmem:[#allocation2 + $0xb4] sm:$0xff]
  %v2133 = vld [vmem:[#allocation2 + $0xbc] sm:$0xff]
  %v2134 = vld [vmem:[#allocation2 + $0xc4] sm:$0xff]
  %v2135 = vld [vmem:[#allocation2 + $0xcc] sm:$0xff]
  %v2136 = vld [vmem:[#allocation2 + $0xd4] sm:$0xf]
  %v2137 = vld [vmem:[#allocation2 + $0xd8] sm:$0xff]
  %v2138 = vld [vmem:[#allocation2 + $0xe0] sm:$0xff]
  %v2139 = vld [vmem:[#allocation2 + $0xe8] sm:$0xff]
  %v2140 = vld [vmem:[#allocation2 + $0xf0] sm:$0xff]
  %v2141 = vld [vmem:[#allocation2 + $0xf8] sm:$0xf]
  %v2142 = vld [vmem:[#allocation2 + $0xfc] sm:$0xff]
  %v2143 = vld [vmem:[#allocation2 + $0x104] sm:$0xff]
  %v2144 = vld [vmem:[#allocation2 + $0x10c] sm:$0xff]
  %v2145 = vld [vmem:[#allocation2 + $0x114] sm:$0xff]
  %v2146 = vld [vmem:[#allocation2 + $0x11c] sm:$0xf]
  %v2147 = vld [vmem:[#allocation2 + $0x120] sm:$0xff]
  %v2148 = vld [vmem:[#allocation2 + $0x128] sm:$0xff]
  %v2149 = vld [vmem:[#allocation2 + $0x130] sm:$0xff]
  %v2150 = vld [vmem:[#allocation2 + $0x138] sm:$0xff]
  %v2151 = vld [vmem:[#allocation2 + $0x140] sm:$0xf]
  %v2152 = vld [vmem:[#allocation2 + $0x144] sm:$0xff]
  %v2153 = vld [vmem:[#allocation2 + $0x14c] sm:$0xff]
  %v2154 = vld [vmem:[#allocation2 + $0x154] sm:$0xff]
  %v2155 = vld [vmem:[#allocation2 + $0x15c] sm:$0xff]
  %v2156 = vld [vmem:[#allocation2 + $0x164] sm:$0xf]
  %v2157 = vld [vmem:[#allocation2 + $0x168] sm:$0xff]
  %v2158 = vld [vmem:[#allocation2 + $0x170] sm:$0xff]
  %v2159 = vld [vmem:[#allocation2 + $0x178] sm:$0xff]
  %v2160 = vld [vmem:[#allocation2 + $0x180] sm:$0xff]
  %v2161 = vld [vmem:[#allocation2 + $0x188] sm:$0xf]
  %v2162 = vld [vmem:[#allocation2 + $0x18c] sm:$0xff]
  %v2163 = vld [vmem:[#allocation2 + $0x194] sm:$0xff]
  %v2164 = vld [vmem:[#allocation2 + $0x19c] sm:$0xff]
  %v2165 = vld [vmem:[#allocation2 + $0x1a4] sm:$0xff]
  %v2166 = vld [vmem:[#allocation2 + $0x1ac] sm:$0xf]
  %v2167 = vld [vmem:[#allocation2 + $0x1b0] sm:$0xff]
  %v2168 = vld [vmem:[#allocation2 + $0x1b8] sm:$0xff]
  %v2169 = vld [vmem:[#allocation2 + $0x1c0] sm:$0xff]
  %v2170 = vld [vmem:[#allocation2 + $0x1c8] sm:$0xff]
  %v2171 = vld [vmem:[#allocation2 + $0x1d0] sm:$0xf]
  %v2172 = vld [vmem:[#allocation2 + $0x1d4] sm:$0xff]
  %v2173 = vld [vmem:[#allocation2 + $0x1dc] sm:$0xff]
  %v2174 = vld [vmem:[#allocation2 + $0x1e4] sm:$0xff]
  %v2175 = vld [vmem:[#allocation2 + $0x1ec] sm:$0xff]
  %v2176 = vld [vmem:[#allocation2 + $0x1f4] sm:$0xf]
  %v2177 = vld [vmem:[#allocation2 + $0x1f8] sm:$0xff]
  %v2178 = vld [vmem:[#allocation2 + $0x200] sm:$0xff]
  %v2179 = vld [vmem:[#allocation2 + $0x208] sm:$0xff]
  %v2180 = vld [vmem:[#allocation2 + $0x210] sm:$0xff]
  %v2181 = vld [vmem:[#allocation2 + $0x218] sm:$0xf]
  %v2182 = vld [vmem:[#allocation2 + $0x21c] sm:$0xff]
  %v2183 = vld [vmem:[#allocation2 + $0x224] sm:$0xff]
  %v2184 = vld [vmem:[#allocation2 + $0x22c] sm:$0xff]
  %v2185 = vld [vmem:[#allocation2 + $0x234] sm:$0xff]
  %v2186 = vld [vmem:[#allocation2 + $0x23c] sm:$0xf]
  %v2187 = vld [vmem:[#allocation2 + $0x240] sm:$0xff]
  %v2188 = vld [vmem:[#allocation2 + $0x248] sm:$0xff]
  %v2189 = vld [vmem:[#allocation2 + $0x250] sm:$0xff]
  %v2190 = vld [vmem:[#allocation2 + $0x258] sm:$0xff]
  %v2191 = vld [vmem:[#allocation2 + $0x260] sm:$0xf]
  %v2192 = vld [vmem:[#allocation2 + $0x264] sm:$0xff]
  %v2193 = vld [vmem:[#allocation2 + $0x26c] sm:$0xff]
  %v2194 = vld [vmem:[#allocation2 + $0x274] sm:$0xff]
  %v2195 = vld [vmem:[#allocation2 + $0x27c] sm:$0xff]
  %v2196 = vld [vmem:[#allocation2 + $0x284] sm:$0xf]
  %v2197 = vld [vmem:[#allocation2 + $0x288] sm:$0x11]
  %v2198 = vld [vmem:[#allocation2 + $0x290] sm:$0x11]
  %v2199 = vld [vmem:[#allocation2 + $0x298] sm:$0x11]
  %v2200 = vld [vmem:[#allocation2 + $0x2a0] sm:$0x11]
  %v2201 = vld [vmem:[#allocation2 + $0x2a8] sm:$0x1]
  %v2203 = vunpack.c.l.b16 %v2106
  %v2204 = vunpack.c.h.b16 %v2106
  %v2205 = vpack.c.b16 %v2203, %v2203
  %v2206 = vpack.c.b16 %v2204, %v2204
  %v2303 = vunpack.c.l.b16 %v2107
  %v2304 = vunpack.c.h.b16 %v2107
  %v2305 = vunpack.c.l.b16 %v2108
  %v2306 = vunpack.c.h.b16 %v2108
  %v2307 = vunpack.c.l.b16 %v2109
  %v2308 = vunpack.c.h.b16 %v2109
  %v2309 = vunpack.c.l.b16 %v2110
  %v2310 = vunpack.c.h.b16 %v2110
  %v2311 = vunpack.c.l.b16 %v2111
  %v2312 = vunpack.c.l.b16 %v2112
  %v2313 = vunpack.c.h.b16 %v2112
  %v2314 = vunpack.c.l.b16 %v2113
  %v2315 = vunpack.c.h.b16 %v2113
  %v2316 = vunpack.c.l.b16 %v2114
  %v2317 = vunpack.c.h.b16 %v2114
  %v2318 = vunpack.c.l.b16 %v2115
  %v2319 = vunpack.c.h.b16 %v2115
  %v2320 = vunpack.c.l.b16 %v2116
  %v2321 = vunpack.c.l.b16 %v2117
  %v2322 = vunpack.c.h.b16 %v2117
  %v2323 = vunpack.c.l.b16 %v2118
  %v2324 = vunpack.c.h.b16 %v2118
  %v2325 = vunpack.c.l.b16 %v2119
  %v2326 = vunpack.c.h.b16 %v2119
  %v2327 = vunpack.c.l.b16 %v2120
  %v2328 = vunpack.c.h.b16 %v2120
  %v2329 = vunpack.c.l.b16 %v2121
  %v2330 = vunpack.c.l.b16 %v2122
  %v2331 = vunpack.c.h.b16 %v2122
  %v2332 = vunpack.c.l.b16 %v2123
  %v2333 = vunpack.c.h.b16 %v2123
  %v2334 = vunpack.c.l.b16 %v2124
  %v2335 = vunpack.c.h.b16 %v2124
  %v2336 = vunpack.c.l.b16 %v2125
  %v2337 = vunpack.c.h.b16 %v2125
  %v2338 = vunpack.c.l.b16 %v2126
  %v2339 = vunpack.c.l.b16 %v2127
  %v2340 = vunpack.c.h.b16 %v2127
  %v2341 = vunpack.c.l.b16 %v2128
  %v2342 = vunpack.c.h.b16 %v2128
  %v2343 = vunpack.c.l.b16 %v2129
  %v2344 = vunpack.c.h.b16 %v2129
  %v2345 = vunpack.c.l.b16 %v2130
  %v2346 = vunpack.c.h.b16 %v2130
  %v2347 = vunpack.c.l.b16 %v2131
  %v2348 = vunpack.c.l.b16 %v2132
  %v2349 = vunpack.c.h.b16 %v2132
  %v2350 = vunpack.c.l.b16 %v2133
  %v2351 = vunpack.c.h.b16 %v2133
  %v2352 = vunpack.c.l.b16 %v2134
  %v2353 = vunpack.c.h.b16 %v2134
  %v2354 = vunpack.c.l.b16 %v2135
  %v2355 = vunpack.c.h.b16 %v2135
  %v2356 = vunpack.c.l.b16 %v2136
  %v2357 = vunpack.c.l.b16 %v2137
  %v2358 = vunpack.c.h.b16 %v2137
  %v2359 = vunpack.c.l.b16 %v2138
  %v2360 = vunpack.c.h.b16 %v2138
  %v2361 = vunpack.c.l.b16 %v2139
  %v2362 = vunpack.c.h.b16 %v2139
  %v2363 = vunpack.c.l.b16 %v2140
  %v2364 = vunpack.c.h.b16 %v2140
  %v2365 = vunpack.c.l.b16 %v2141
  %v2366 = vunpack.c.l.b16 %v2142
  %v2367 = vunpack.c.h.b16 %v2142
  %v2368 = vunpack.c.l.b16 %v2143
  %v2369 = vunpack.c.h.b16 %v2143
  %v2370 = vunpack.c.l.b16 %v2144
  %v2371 = vunpack.c.h.b16 %v2144
  %v2372 = vunpack.c.l.b16 %v2145
  %v2373 = vunpack.c.h.b16 %v2145
  %v2374 = vunpack.c.l.b16 %v2146
  %v2375 = vunpack.c.l.b16 %v2147
  %v2376 = vunpack.c.h.b16 %v2147
  %v2377 = vunpack.c.l.b16 %v2148
  %v2378 = vunpack.c.h.b16 %v2148
  %v2379 = vunpack.c.l.b16 %v2149
  %v2380 = vunpack.c.h.b16 %v2149
  %v2381 = vunpack.c.l.b16 %v2150
  %v2382 = vunpack.c.h.b16 %v2150
  %v2383 = vunpack.c.l.b16 %v2151
  %v2384 = vunpack.c.l.b16 %v2152
  %v2385 = vunpack.c.h.b16 %v2152
  %v2386 = vunpack.c.l.b16 %v2153
  %v2387 = vunpack.c.h.b16 %v2153
  %v2388 = vunpack.c.l.b16 %v2154
  %v2389 = vunpack.c.h.b16 %v2154
  %v2390 = vunpack.c.l.b16 %v2155
  %v2391 = vunpack.c.h.b16 %v2155
  %v2392 = vunpack.c.l.b16 %v2156
  %v2393 = vunpack.c.l.b16 %v2157
  %v2394 = vunpack.c.h.b16 %v2157
  %v2395 = vunpack.c.l.b16 %v2158
  %v2396 = vunpack.c.h.b16 %v2158
  %v2397 = vunpack.c.l.b16 %v2159
  %v2398 = vunpack.c.h.b16 %v2159
  %v2399 = vunpack.c.l.b16 %v2160
  %v2400 = vunpack.c.h.b16 %v2160
  %v2401 = vunpack.c.l.b16 %v2161
  %v2402 = vunpack.c.l.b16 %v2162
  %v2403 = vunpack.c.h.b16 %v2162
  %v2404 = vunpack.c.l.b16 %v2163
  %v2405 = vunpack.c.h.b16 %v2163
  %v2406 = vunpack.c.l.b16 %v2164
  %v2407 = vunpack.c.h.b16 %v2164
  %v2408 = vunpack.c.l.b16 %v2165
  %v2409 = vunpack.c.h.b16 %v2165
  %v2410 = vunpack.c.l.b16 %v2166
  %v2411 = vunpack.c.l.b16 %v2167
  %v2412 = vunpack.c.h.b16 %v2167
  %v2413 = vunpack.c.l.b16 %v2168
  %v2414 = vunpack.c.h.b16 %v2168
  %v2415 = vunpack.c.l.b16 %v2169
  %v2416 = vunpack.c.h.b16 %v2169
  %v2417 = vunpack.c.l.b16 %v2170
  %v2418 = vunpack.c.h.b16 %v2170
  %v2419 = vunpack.c.l.b16 %v2171
  %v2420 = vunpack.c.l.b16 %v2172
  %v2421 = vunpack.c.h.b16 %v2172
  %v2422 = vunpack.c.l.b16 %v2173
  %v2423 = vunpack.c.h.b16 %v2173
  %v2424 = vunpack.c.l.b16 %v2174
  %v2425 = vunpack.c.h.b16 %v2174
  %v2426 = vunpack.c.l.b16 %v2175
  %v2427 = vunpack.c.h.b16 %v2175
  %v2428 = vunpack.c.l.b16 %v2176
  %v2429 = vunpack.c.l.b16 %v2177
  %v2430 = vunpack.c.h.b16 %v2177
  %v2431 = vunpack.c.l.b16 %v2178
  %v2432 = vunpack.c.h.b16 %v2178
  %v2433 = vunpack.c.l.b16 %v2179
  %v2434 = vunpack.c.h.b16 %v2179
  %v2435 = vunpack.c.l.b16 %v2180
  %v2436 = vunpack.c.h.b16 %v2180
  %v2437 = vunpack.c.l.b16 %v2181
  %v2438 = vunpack.c.l.b16 %v2182
  %v2439 = vunpack.c.h.b16 %v2182
  %v2440 = vunpack.c.l.b16 %v2183
  %v2441 = vunpack.c.h.b16 %v2183
  %v2442 = vunpack.c.l.b16 %v2184
  %v2443 = vunpack.c.h.b16 %v2184
  %v2444 = vunpack.c.l.b16 %v2185
  %v2445 = vunpack.c.h.b16 %v2185
  %v2446 = vunpack.c.l.b16 %v2186
  %v2447 = vunpack.c.l.b16 %v2187
  %v2448 = vunpack.c.h.b16 %v2187
  %v2449 = vunpack.c.l.b16 %v2188
  %v2450 = vunpack.c.h.b16 %v2188
  %v2451 = vunpack.c.l.b16 %v2189
  %v2452 = vunpack.c.h.b16 %v2189
  %v2453 = vunpack.c.l.b16 %v2190
  %v2454 = vunpack.c.h.b16 %v2190
  %v2455 = vunpack.c.l.b16 %v2191
  %v2456 = vunpack.c.l.b16 %v2192
  %v2457 = vunpack.c.h.b16 %v2192
  %v2458 = vunpack.c.l.b16 %v2193
  %v2459 = vunpack.c.h.b16 %v2193
  %v2460 = vunpack.c.l.b16 %v2194
  %v2461 = vunpack.c.h.b16 %v2194
  %v2462 = vunpack.c.l.b16 %v2195
  %v2463 = vunpack.c.h.b16 %v2195
  %v2464 = vunpack.c.l.b16 %v2196
  %v2465 = vunpack.c.l.b16 %v2197
  %v2466 = vunpack.c.h.b16 %v2197
  %v2467 = vunpack.c.l.b16 %v2198
  %v2468 = vunpack.c.h.b16 %v2198
  %v2469 = vunpack.c.l.b16 %v2199
  %v2470 = vunpack.c.h.b16 %v2199
  %v2471 = vunpack.c.l.b16 %v2200
  %v2472 = vunpack.c.h.b16 %v2200
  %v2473 = vunpack.c.l.b16 %v2201
  %v2474 = vpack.c.b16 %v2312, %v2303
  %v2475 = vpack.c.b16 %v2313, %v2304
  %v2476 = vpack.c.b16 %v2314, %v2305
  %v2477 = vpack.c.b16 %v2315, %v2306
  %v2478 = vpack.c.b16 %v2316, %v2307
  %v2479 = vpack.c.b16 %v2317, %v2308
  %v2480 = vpack.c.b16 %v2318, %v2309
  %v2481 = vpack.c.b16 %v2319, %v2310
  %v2482 = vpack.c.b16 %v2320, %v2311
  %v2483 = vpack.c.b16 %v2330, %v2321
  %v2484 = vpack.c.b16 %v2331, %v2322
  %v2485 = vpack.c.b16 %v2332, %v2323
  %v2486 = vpack.c.b16 %v2333, %v2324
  %v2487 = vpack.c.b16 %v2334, %v2325
  %v2488 = vpack.c.b16 %v2335, %v2326
  %v2489 = vpack.c.b16 %v2336, %v2327
  %v2490 = vpack.c.b16 %v2337, %v2328
  %v2491 = vpack.c.b16 %v2338, %v2329
  %v2492 = vpack.c.b16 %v2348, %v2339
  %v2493 = vpack.c.b16 %v2349, %v2340
  %v2494 = vpack.c.b16 %v2350, %v2341
  %v2495 = vpack.c.b16 %v2351, %v2342
  %v2496 = vpack.c.b16 %v2352, %v2343
  %v2497 = vpack.c.b16 %v2353, %v2344
  %v2498 = vpack.c.b16 %v2354, %v2345
  %v2499 = vpack.c.b16 %v2355, %v2346
  %v2500 = vpack.c.b16 %v2356, %v2347
  %v2501 = vpack.c.b16 %v2366, %v2357
  %v2502 = vpack.c.b16 %v2367, %v2358
  %v2503 = vpack.c.b16 %v2368, %v2359
  %v2504 = vpack.c.b16 %v2369, %v2360
  %v2505 = vpack.c.b16 %v2370, %v2361
  %v2506 = vpack.c.b16 %v2371, %v2362
  %v2507 = vpack.c.b16 %v2372, %v2363
  %v2508 = vpack.c.b16 %v2373, %v2364
  %v2509 = vpack.c.b16 %v2374, %v2365
  %v2510 = vpack.c.b16 %v2384, %v2375
  %v2511 = vpack.c.b16 %v2385, %v2376
  %v2512 = vpack.c.b16 %v2386, %v2377
  %v2513 = vpack.c.b16 %v2387, %v2378
  %v2514 = vpack.c.b16 %v2388, %v2379
  %v2515 = vpack.c.b16 %v2389, %v2380
  %v2516 = vpack.c.b16 %v2390, %v2381
  %v2517 = vpack.c.b16 %v2391, %v2382
  %v2518 = vpack.c.b16 %v2392, %v2383
  %v2519 = vpack.c.b16 %v2402, %v2393
  %v2520 = vpack.c.b16 %v2403, %v2394
  %v2521 = vpack.c.b16 %v2404, %v2395
  %v2522 = vpack.c.b16 %v2405, %v2396
  %v2523 = vpack.c.b16 %v2406, %v2397
  %v2524 = vpack.c.b16 %v2407, %v2398
  %v2525 = vpack.c.b16 %v2408, %v2399
  %v2526 = vpack.c.b16 %v2409, %v2400
  %v2527 = vpack.c.b16 %v2410, %v2401
  %v2528 = vpack.c.b16 %v2420, %v2411
  %v2529 = vpack.c.b16 %v2421, %v2412
  %v2530 = vpack.c.b16 %v2422, %v2413
  %v2531 = vpack.c.b16 %v2423, %v2414
  %v2532 = vpack.c.b16 %v2424, %v2415
  %v2533 = vpack.c.b16 %v2425, %v2416
  %v2534 = vpack.c.b16 %v2426, %v2417
  %v2535 = vpack.c.b16 %v2427, %v2418
  %v2536 = vpack.c.b16 %v2428, %v2419
  %v2537 = vpack.c.b16 %v2438, %v2429
  %v2538 = vpack.c.b16 %v2439, %v2430
  %v2539 = vpack.c.b16 %v2440, %v2431
  %v2540 = vpack.c.b16 %v2441, %v2432
  %v2541 = vpack.c.b16 %v2442, %v2433
  %v2542 = vpack.c.b16 %v2443, %v2434
  %v2543 = vpack.c.b16 %v2444, %v2435
  %v2544 = vpack.c.b16 %v2445, %v2436
  %v2545 = vpack.c.b16 %v2446, %v2437
  %v2546 = vpack.c.b16 %v2456, %v2447
  %v2547 = vpack.c.b16 %v2457, %v2448
  %v2548 = vpack.c.b16 %v2458, %v2449
  %v2549 = vpack.c.b16 %v2459, %v2450
  %v2550 = vpack.c.b16 %v2460, %v2451
  %v2551 = vpack.c.b16 %v2461, %v2452
  %v2552 = vpack.c.b16 %v2462, %v2453
  %v2553 = vpack.c.b16 %v2463, %v2454
  %v2554 = vpack.c.b16 %v2464, %v2455
  %v2555 = vpack.c.b16 %v2465, %v2465
  %v2556 = vpack.c.b16 %v2466, %v2466
  %v2557 = vpack.c.b16 %v2467, %v2467
  %v2558 = vpack.c.b16 %v2468, %v2468
  %v2559 = vpack.c.b16 %v2469, %v2469
  %v2560 = vpack.c.b16 %v2470, %v2470
  %v2561 = vpack.c.b16 %v2471, %v2471
  %v2562 = vpack.c.b16 %v2472, %v2472
  %v2563 = vpack.c.b16 %v2473, %v2473
  %v2646 = vsel %vm1427, %v2206, 0
  %v2649 = vand.u32 %v2555, %v1433
  %v2652 = vand.u32 %v2556, %v1433
  %v2655 = vand.u32 %v2557, %v1433
  %v2658 = vand.u32 %v2558, %v1433
  %v2661 = vand.u32 %v2559, %v1433
  %v2664 = vand.u32 %v2560, %v1433
  %v2667 = vand.u32 %v2561, %v1433
  %v2670 = vand.u32 %v2562, %v1433
  %v2673 = vand.u32 %v2563, %v1433
  %2675 = vmatpush.bf16.msra.mxu0 %v2537
  %2676 = vmatpush.bf16.msra.mxu0 %v2528
  %2677 = vmatpush.bf16.msra.mxu0 %v2519
  %2678 = vmatpush.bf16.msra.mxu0 %v2510
  %2679 = vmatpush.bf16.msra.mxu0 %v2501
  %2680 = vmatpush.bf16.msra.mxu0 %v2492
  %2681 = vmatpush.bf16.msra.mxu0 %v2483
  %2682 = vmatpush.bf16.msra.mxu0 %v2474
  %2683 = vmatmul.bf16.gmra.mxu0 %v2205
  %v2684 = vpop.f32.mrf.mxu0
  %v2685 = vadd.f32 0.0, %v2684
  %v2686 = vpop.f32.mrf.mxu0
  %2687 = vdwg.mxu0
  %2688 = vmatpush.bf16.msra.mxu0 0
  %2689 = vmatpush.bf16.msra.mxu0 0
  %2690 = vmatpush.bf16.msra.mxu0 0
  %2691 = vmatpush.bf16.msra.mxu0 0
  %2692 = vmatpush.bf16.msra.mxu0 0
  %2693 = vmatpush.bf16.msra.mxu0 0
  %2694 = vmatpush.bf16.msra.mxu0 %v2649
  %2695 = vmatpush.bf16.msra.mxu0 %v2546
  %2696 = vmatmul.bf16.gmra.mxu0 %v2646
  %v2697 = vpop.f32.mrf.mxu0
  %v2698 = vadd.f32 %v2685, %v2697
  %v2699 = vpop.f32.mrf.mxu0
  %2700 = vdwg.mxu0
  %2701 = vmatpush.bf16.msra.mxu0 %v2538
  %2702 = vmatpush.bf16.msra.mxu0 %v2529
  %2703 = vmatpush.bf16.msra.mxu0 %v2520
  %2704 = vmatpush.bf16.msra.mxu0 %v2511
  %2705 = vmatpush.bf16.msra.mxu0 %v2502
  %2706 = vmatpush.bf16.msra.mxu0 %v2493
  %2707 = vmatpush.bf16.msra.mxu0 %v2484
  %2708 = vmatpush.bf16.msra.mxu0 %v2475
  %2709 = vmatmul.bf16.gmra.mxu0 %v2205
  %v2710 = vpop.f32.mrf.mxu0
  %v2711 = vadd.f32 0.0, %v2710
  %v2712 = vpop.f32.mrf.mxu0
  %2713 = vdwg.mxu0
  %2714 = vmatpush.bf16.msra.mxu0 0
  %2715 = vmatpush.bf16.msra.mxu0 0
  %2716 = vmatpush.bf16.msra.mxu0 0
  %2717 = vmatpush.bf16.msra.mxu0 0
  %2718 = vmatpush.bf16.msra.mxu0 0
  %2719 = vmatpush.bf16.msra.mxu0 0
  %2720 = vmatpush.bf16.msra.mxu0 %v2652
  %2721 = vmatpush.bf16.msra.mxu0 %v2547
  %2722 = vmatmul.bf16.gmra.mxu0 %v2646
  %v2723 = vpop.f32.mrf.mxu0
  %v2724 = vadd.f32 %v2711, %v2723
  %v2725 = vpop.f32.mrf.mxu0
  %2726 = vdwg.mxu0
  %2727 = vmatpush.bf16.msra.mxu0 %v2539
  %2728 = vmatpush.bf16.msra.mxu0 %v2530
  %2729 = vmatpush.bf16.msra.mxu0 %v2521
  %2730 = vmatpush.bf16.msra.mxu0 %v2512
  %2731 = vmatpush.bf16.msra.mxu0 %v2503
  %2732 = vmatpush.bf16.msra.mxu0 %v2494
  %2733 = vmatpush.bf16.msra.mxu0 %v2485
  %2734 = vmatpush.bf16.msra.mxu0 %v2476
  %2735 = vmatmul.bf16.gmra.mxu0 %v2205
  %v2736 = vpop.f32.mrf.mxu0
  %v2737 = vadd.f32 0.0, %v2736
  %v2738 = vpop.f32.mrf.mxu0
  %2739 = vdwg.mxu0
  %2740 = vmatpush.bf16.msra.mxu0 0
  %2741 = vmatpush.bf16.msra.mxu0 0
  %2742 = vmatpush.bf16.msra.mxu0 0
  %2743 = vmatpush.bf16.msra.mxu0 0
  %2744 = vmatpush.bf16.msra.mxu0 0
  %2745 = vmatpush.bf16.msra.mxu0 0
  %2746 = vmatpush.bf16.msra.mxu0 %v2655
  %2747 = vmatpush.bf16.msra.mxu0 %v2548
  %2748 = vmatmul.bf16.gmra.mxu0 %v2646
  %v2749 = vpop.f32.mrf.mxu0
  %v2750 = vadd.f32 %v2737, %v2749
  %v2751 = vpop.f32.mrf.mxu0
  %2752 = vdwg.mxu0
  %2753 = vmatpush.bf16.msra.mxu0 %v2540
  %2754 = vmatpush.bf16.msra.mxu0 %v2531
  %2755 = vmatpush.bf16.msra.mxu0 %v2522
  %2756 = vmatpush.bf16.msra.mxu0 %v2513
  %2757 = vmatpush.bf16.msra.mxu0 %v2504
  %2758 = vmatpush.bf16.msra.mxu0 %v2495
  %2759 = vmatpush.bf16.msra.mxu0 %v2486
  %2760 = vmatpush.bf16.msra.mxu0 %v2477
  %2761 = vmatmul.bf16.gmra.mxu0 %v2205
  %v2762 = vpop.f32.mrf.mxu0
  %v2763 = vadd.f32 0.0, %v2762
  %v2764 = vpop.f32.mrf.mxu0
  %2765 = vdwg.mxu0
  %2766 = vmatpush.bf16.msra.mxu0 0
  %2767 = vmatpush.bf16.msra.mxu0 0
  %2768 = vmatpush.bf16.msra.mxu0 0
  %2769 = vmatpush.bf16.msra.mxu0 0
  %2770 = vmatpush.bf16.msra.mxu0 0
  %2771 = vmatpush.bf16.msra.mxu0 0
  %2772 = vmatpush.bf16.msra.mxu0 %v2658
  %2773 = vmatpush.bf16.msra.mxu0 %v2549
  %2774 = vmatmul.bf16.gmra.mxu0 %v2646
  %v2775 = vpop.f32.mrf.mxu0
  %v2776 = vadd.f32 %v2763, %v2775
  %v2777 = vpop.f32.mrf.mxu0
  %2778 = vdwg.mxu0
  %2779 = vmatpush.bf16.msra.mxu0 %v2541
  %2780 = vmatpush.bf16.msra.mxu0 %v2532
  %2781 = vmatpush.bf16.msra.mxu0 %v2523
  %2782 = vmatpush.bf16.msra.mxu0 %v2514
  %2783 = vmatpush.bf16.msra.mxu0 %v2505
  %2784 = vmatpush.bf16.msra.mxu0 %v2496
  %2785 = vmatpush.bf16.msra.mxu0 %v2487
  %2786 = vmatpush.bf16.msra.mxu0 %v2478
  %2787 = vmatmul.bf16.gmra.mxu0 %v2205
  %v2788 = vpop.f32.mrf.mxu0
  %v2789 = vadd.f32 0.0, %v2788
  %v2790 = vpop.f32.mrf.mxu0
  %2791 = vdwg.mxu0
  %2792 = vmatpush.bf16.msra.mxu0 0
  %2793 = vmatpush.bf16.msra.mxu0 0
  %2794 = vmatpush.bf16.msra.mxu0 0
  %2795 = vmatpush.bf16.msra.mxu0 0
  %2796 = vmatpush.bf16.msra.mxu0 0
  %2797 = vmatpush.bf16.msra.mxu0 0
  %2798 = vmatpush.bf16.msra.mxu0 %v2661
  %2799 = vmatpush.bf16.msra.mxu0 %v2550
  %2800 = vmatmul.bf16.gmra.mxu0 %v2646
  %v2801 = vpop.f32.mrf.mxu0
  %v2802 = vadd.f32 %v2789, %v2801
  %v2803 = vpop.f32.mrf.mxu0
  %2804 = vdwg.mxu0
  %2805 = vmatpush.bf16.msra.mxu0 %v2542
  %2806 = vmatpush.bf16.msra.mxu0 %v2533
  %2807 = vmatpush.bf16.msra.mxu0 %v2524
  %2808 = vmatpush.bf16.msra.mxu0 %v2515
  %2809 = vmatpush.bf16.msra.mxu0 %v2506
  %2810 = vmatpush.bf16.msra.mxu0 %v2497
  %2811 = vmatpush.bf16.msra.mxu0 %v2488
  %2812 = vmatpush.bf16.msra.mxu0 %v2479
  %2813 = vmatmul.bf16.gmra.mxu0 %v2205
  %v2814 = vpop.f32.mrf.mxu0
  %v2815 = vadd.f32 0.0, %v2814
  %v2816 = vpop.f32.mrf.mxu0
  %2817 = vdwg.mxu0
  %2818 = vmatpush.bf16.msra.mxu0 0
  %2819 = vmatpush.bf16.msra.mxu0 0
  %2820 = vmatpush.bf16.msra.mxu0 0
  %2821 = vmatpush.bf16.msra.mxu0 0
  %2822 = vmatpush.bf16.msra.mxu0 0
  %2823 = vmatpush.bf16.msra.mxu0 0
  %2824 = vmatpush.bf16.msra.mxu0 %v2664
  %2825 = vmatpush.bf16.msra.mxu0 %v2551
  %2826 = vmatmul.bf16.gmra.mxu0 %v2646
  %v2827 = vpop.f32.mrf.mxu0
  %v2828 = vadd.f32 %v2815, %v2827
  %v2829 = vpop.f32.mrf.mxu0
  %2830 = vdwg.mxu0
  %2831 = vmatpush.bf16.msra.mxu0 %v2543
  %2832 = vmatpush.bf16.msra.mxu0 %v2534
  %2833 = vmatpush.bf16.msra.mxu0 %v2525
  %2834 = vmatpush.bf16.msra.mxu0 %v2516
  %2835 = vmatpush.bf16.msra.mxu0 %v2507
  %2836 = vmatpush.bf16.msra.mxu0 %v2498
  %2837 = vmatpush.bf16.msra.mxu0 %v2489
  %2838 = vmatpush.bf16.msra.mxu0 %v2480
  %2839 = vmatmul.bf16.gmra.mxu0 %v2205
  %v2840 = vpop.f32.mrf.mxu0
  %v2841 = vadd.f32 0.0, %v2840
  %v2842 = vpop.f32.mrf.mxu0
  %2843 = vdwg.mxu0
  %2844 = vmatpush.bf16.msra.mxu0 0
  %2845 = vmatpush.bf16.msra.mxu0 0
  %2846 = vmatpush.bf16.msra.mxu0 0
  %2847 = vmatpush.bf16.msra.mxu0 0
  %2848 = vmatpush.bf16.msra.mxu0 0
  %2849 = vmatpush.bf16.msra.mxu0 0
  %2850 = vmatpush.bf16.msra.mxu0 %v2667
  %2851 = vmatpush.bf16.msra.mxu0 %v2552
  %2852 = vmatmul.bf16.gmra.mxu0 %v2646
  %v2853 = vpop.f32.mrf.mxu0
  %v2854 = vadd.f32 %v2841, %v2853
  %v2855 = vpop.f32.mrf.mxu0
  %2856 = vdwg.mxu0
  %2857 = vmatpush.bf16.msra.mxu0 %v2544
  %2858 = vmatpush.bf16.msra.mxu0 %v2535
  %2859 = vmatpush.bf16.msra.mxu0 %v2526
  %2860 = vmatpush.bf16.msra.mxu0 %v2517
  %2861 = vmatpush.bf16.msra.mxu0 %v2508
  %2862 = vmatpush.bf16.msra.mxu0 %v2499
  %2863 = vmatpush.bf16.msra.mxu0 %v2490
  %2864 = vmatpush.bf16.msra.mxu0 %v2481
  %2865 = vmatmul.bf16.gmra.mxu0 %v2205
  %v2866 = vpop.f32.mrf.mxu0
  %v2867 = vadd.f32 0.0, %v2866
  %v2868 = vpop.f32.mrf.mxu0
  %2869 = vdwg.mxu0
  %2870 = vmatpush.bf16.msra.mxu0 0
  %2871 = vmatpush.bf16.msra.mxu0 0
  %2872 = vmatpush.bf16.msra.mxu0 0
  %2873 = vmatpush.bf16.msra.mxu0 0
  %2874 = vmatpush.bf16.msra.mxu0 0
  %2875 = vmatpush.bf16.msra.mxu0 0
  %2876 = vmatpush.bf16.msra.mxu0 %v2670
  %2877 = vmatpush.bf16.msra.mxu0 %v2553
  %2878 = vmatmul.bf16.gmra.mxu0 %v2646
  %v2879 = vpop.f32.mrf.mxu0
  %v2880 = vadd.f32 %v2867, %v2879
  %v2881 = vpop.f32.mrf.mxu0
  %2882 = vdwg.mxu0
  %2883 = vmatpush.bf16.msra.mxu0 %v2545
  %2884 = vmatpush.bf16.msra.mxu0 %v2536
  %2885 = vmatpush.bf16.msra.mxu0 %v2527
  %2886 = vmatpush.bf16.msra.mxu0 %v2518
  %2887 = vmatpush.bf16.msra.mxu0 %v2509
  %2888 = vmatpush.bf16.msra.mxu0 %v2500
  %2889 = vmatpush.bf16.msra.mxu0 %v2491
  %2890 = vmatpush.bf16.msra.mxu0 %v2482
  %2891 = vmatmul.bf16.gmra.mxu0 %v2205
  %v2892 = vpop.f32.mrf.mxu0
  %v2893 = vadd.f32 0.0, %v2892
  %v2894 = vpop.f32.mrf.mxu0
  %2895 = vdwg.mxu0
  %2896 = vmatpush.bf16.msra.mxu0 0
  %2897 = vmatpush.bf16.msra.mxu0 0
  %2898 = vmatpush.bf16.msra.mxu0 0
  %2899 = vmatpush.bf16.msra.mxu0 0
  %2900 = vmatpush.bf16.msra.mxu0 0
  %2901 = vmatpush.bf16.msra.mxu0 0
  %2902 = vmatpush.bf16.msra.mxu0 %v2673
  %2903 = vmatpush.bf16.msra.mxu0 %v2554
  %2904 = vmatmul.bf16.gmra.mxu0 %v2646
  %v2905 = vpop.f32.mrf.mxu0
  %v2906 = vadd.f32 %v2893, %v2905
  %v2907 = vpop.f32.mrf.mxu0
  %2908 = vdwg.mxu0
  %v2909 = vld [vmem:[%s2] ss:$8 sm:$0xf]
  %v2910 = vld [vmem:[%s2] ss:$8 sm:$0xf0]
  %v2911 = vor.u32 %v2909, %v2910
  %v2912 = vld [vmem:[%s1698] ss:$8 sm:$0x1]
  %v2913 = vmax.f32 %v2698, 0.0
  %v2914 = vmax.f32 %v2724, 0.0
  %v2915 = vmax.f32 %v2750, 0.0
  %v2916 = vmax.f32 %v2776, 0.0
  %v2917 = vmax.f32 %v2802, 0.0
  %v2918 = vmax.f32 %v2828, 0.0
  %v2919 = vmax.f32 %v2854, 0.0
  %v2920 = vmax.f32 %v2880, 0.0
  %v2921 = vmax.f32 %v2906, 0.0
  %v2924 = vperm.slane %v2911, 0
  %v2925 = vperm.slane %v2911, 1
  %v2926 = vperm.slane %v2911, 2
  %v2927 = vperm.slane %v2911, 3
  %v2928 = vperm.slane %v2911, 4
  %v2929 = vperm.slane %v2911, 5
  %v2930 = vperm.slane %v2911, 6
  %v2931 = vperm.slane %v2911, 7
  %v2932 = vperm.slane %v2912, 0
  %v2942 = vmul.f32 %v2913, %v2924
  %v2943 = vmul.f32 %v2914, %v2925
  %v2944 = vmul.f32 %v2915, %v2926
  %v2945 = vmul.f32 %v2916, %v2927
  %v2946 = vmul.f32 %v2917, %v2928
  %v2947 = vmul.f32 %v2918, %v2929
  %v2948 = vmul.f32 %v2919, %v2930
  %v2949 = vmul.f32 %v2920, %v2931
  %v2950 = vmul.f32 %v2921, %v2932
  %v2951 = vpack.c.bf16 %v2943, %v2942
  %v2952 = vpack.c.bf16 %v2945, %v2944
  %v2953 = vpack.c.bf16 %v2947, %v2946
  %v2954 = vpack.c.bf16 %v2949, %v2948
  %v2955 = vpack.c.bf16 %v2950, %v2950
  %2956 = vst [vmem:[#allocation4 + $0x4] sm:$0xff] %v2951
  %2957 = vst [vmem:[#allocation4 + $0xc] sm:$0xff] %v2952
  %2958 = vst [vmem:[#allocation4 + $0x14] sm:$0xff] %v2953
  %2959 = vst [vmem:[#allocation4 + $0x1c] sm:$0xff] %v2954
  %2960 = vst.msk [vmem:[#allocation4 + $0x24] sm:$0xf] %vm20, %v2955
  %v2961 = vld [vmem:[#allocation4 + $0x4] sm:$0xff]
  %v2962 = vld [vmem:[#allocation4 + $0xc] sm:$0xff]
  %v2963 = vld [vmem:[#allocation4 + $0x14] sm:$0xff]
  %v2964 = vld [vmem:[#allocation4 + $0x1c] sm:$0xff]
  %v2965 = vld [vmem:[#allocation4 + $0x24] sm:$0xf]
  %v2966 = vunpack.c.l.bf16 %v2961
  %v2967 = vunpack.c.h.bf16 %v2961
  %v2968 = vunpack.c.l.bf16 %v2962
  %v2969 = vunpack.c.h.bf16 %v2962
  %v2970 = vunpack.c.l.bf16 %v2963
  %v2971 = vunpack.c.h.bf16 %v2963
  %v2972 = vunpack.c.l.bf16 %v2964
  %v2973 = vunpack.c.h.bf16 %v2964
  %v2974 = vunpack.c.l.bf16 %v2965
  %2984 = vrot.lane.b32.xlu0 %v2966, 127
  %v2985 = vpop.permute.xlu0 %2984
  %2986 = vrot.lane.b32.xlu0 %v2967, 127
  %v2987 = vpop.permute.xlu0 %2986
  %2988 = vrot.lane.b32.xlu0 %v2968, 127
  %v2989 = vpop.permute.xlu0 %2988
  %2990 = vrot.lane.b32.xlu0 %v2969, 127
  %v2991 = vpop.permute.xlu0 %2990
  %2992 = vrot.lane.b32.xlu0 %v2970, 127
  %v2993 = vpop.permute.xlu0 %2992
  %2994 = vrot.lane.b32.xlu0 %v2971, 127
  %v2995 = vpop.permute.xlu0 %2994
  %2996 = vrot.lane.b32.xlu0 %v2972, 127
  %v2997 = vpop.permute.xlu0 %2996
  %2998 = vrot.lane.b32.xlu0 %v2973, 127
  %v2999 = vpop.permute.xlu0 %2998
  %3000 = vrot.lane.b32.xlu0 %v2974, 127
  %v3001 = vpop.permute.xlu0 %3000
  %vm3002 = vcmask 1039360
  %v3003 = vsel %vm3002, %v2985, %v2987
  %v3004 = vsel %vm3002, %v2987, %v2989
  %v3005 = vsel %vm3002, %v2989, %v2991
  %v3006 = vsel %vm3002, %v2991, %v2993
  %v3007 = vsel %vm3002, %v2993, %v2995
  %v3008 = vsel %vm3002, %v2995, %v2997
  %v3009 = vsel %vm3002, %v2997, %v2999
  %v3010 = vsel %vm3002, %v2999, %v3001
  %v3020 = vmax.f32 %v2966, %v3003
  %v3021 = vmax.f32 %v2967, %v3004
  %v3022 = vmax.f32 %v2968, %v3005
  %v3023 = vmax.f32 %v2969, %v3006
  %v3024 = vmax.f32 %v2970, %v3007
  %v3025 = vmax.f32 %v2971, %v3008
  %v3026 = vmax.f32 %v2972, %v3009
  %v3027 = vmax.f32 %v2973, %v3010
  %v3028 = vmax.f32 %v2974, %v3001
  %v3029 = vpack.c.bf16 %v3021, %v3020
  %v3030 = vpack.c.bf16 %v3023, %v3022
  %v3031 = vpack.c.bf16 %v3025, %v3024
  %v3032 = vpack.c.bf16 %v3027, %v3026
  %v3033 = vpack.c.bf16 %v3028, %v3028
  %v3034 = vunpack.c.l.bf16 %v3029
  %v3035 = vunpack.c.h.bf16 %v3029
  %v3036 = vunpack.c.l.bf16 %v3030
  %v3037 = vunpack.c.h.bf16 %v3030
  %v3038 = vunpack.c.l.bf16 %v3031
  %v3039 = vunpack.c.h.bf16 %v3031
  %v3040 = vunpack.c.l.bf16 %v3032
  %v3041 = vunpack.c.h.bf16 %v3032
  %v3042 = vunpack.c.l.bf16 %v3033
  %3052 = vrot.lane.b32.xlu0 %v3034, 94
  %v3053 = vpop.permute.xlu0 %3052
  %3054 = vrot.lane.b32.xlu0 %v3035, 94
  %v3055 = vpop.permute.xlu0 %3054
  %3056 = vrot.lane.b32.xlu0 %v3036, 94
  %v3057 = vpop.permute.xlu0 %3056
  %3058 = vrot.lane.b32.xlu0 %v3037, 94
  %v3059 = vpop.permute.xlu0 %3058
  %3060 = vrot.lane.b32.xlu0 %v3038, 94
  %v3061 = vpop.permute.xlu0 %3060
  %3062 = vrot.lane.b32.xlu0 %v3039, 94
  %v3063 = vpop.permute.xlu0 %3062
  %3064 = vrot.lane.b32.xlu0 %v3040, 94
  %v3065 = vpop.permute.xlu0 %3064
  %3066 = vrot.lane.b32.xlu0 %v3041, 94
  %v3067 = vpop.permute.xlu0 %3066
  %3068 = vrot.lane.b32.xlu0 %v3042, 94
  %v3069 = vpop.permute.xlu0 %3068
  %vm3070 = vcmask 769024
  %v3071 = vsel %vm3070, %v3053, %v3055
  %v3072 = vsel %vm3070, %v3055, %v3057
  %v3073 = vsel %vm3070, %v3057, %v3059
  %v3074 = vsel %vm3070, %v3059, %v3061
  %v3075 = vsel %vm3070, %v3061, %v3063
  %v3076 = vsel %vm3070, %v3063, %v3065
  %v3077 = vsel %vm3070, %v3065, %v3067
  %v3078 = vsel %vm3070, %v3067, %v3069
  %v3088 = vmax.f32 %v3034, %v3071
  %v3089 = vmax.f32 %v3035, %v3072
  %v3090 = vmax.f32 %v3036, %v3073
  %v3091 = vmax.f32 %v3037, %v3074
  %v3092 = vmax.f32 %v3038, %v3075
  %v3093 = vmax.f32 %v3039, %v3076
  %v3094 = vmax.f32 %v3040, %v3077
  %v3095 = vmax.f32 %v3041, %v3078
  %v3096 = vmax.f32 %v3042, %v3069
  %v3097 = vpack.c.bf16 %v3088, %v3088
  %v3098 = vpack.c.bf16 %v3089, %v3089
  %v3099 = vpack.c.bf16 %v3090, %v3090
  %v3100 = vpack.c.bf16 %v3091, %v3091
  %v3101 = vpack.c.bf16 %v3092, %v3092
  %v3102 = vpack.c.bf16 %v3093, %v3093
  %v3103 = vpack.c.bf16 %v3094, %v3094
  %v3104 = vpack.c.bf16 %v3095, %v3095
  %v3105 = vpack.c.bf16 %v3096, %v3096
  %v3106 = vld [vmem:[%s1 + $0x1c8] sm:$0xff]
  %v3107 = vld [vmem:[%s1 + $0x1d0] sm:$0xf]
  %v3108 = vld [vmem:[%s1 + $0x1d4] sm:$0xff]
  %v3109 = vld [vmem:[%s1 + $0x1dc] sm:$0xf]
  %v3110 = vld [vmem:[%s1 + $0x1e0] sm:$0xff]
  %v3111 = vld [vmem:[%s1 + $0x1e8] sm:$0xf]
  %v3112 = vld [vmem:[%s1 + $0x1ec] sm:$0xff]
  %v3113 = vld [vmem:[%s1 + $0x1f4] sm:$0xf]
  %v3114 = vld [vmem:[%s1 + $0x1f8] sm:$0xff]
  %v3115 = vld [vmem:[%s1 + $0x200] sm:$0xf]
  %v3116 = vld [vmem:[%s1 + $0x204] sm:$0xff]
  %v3117 = vld [vmem:[%s1 + $0x20c] sm:$0xf]
  %v3118 = vld [vmem:[%s1 + $0x210] sm:$0xff]
  %v3119 = vld [vmem:[%s1 + $0x218] sm:$0xf]
  %v3120 = vld [vmem:[%s1 + $0x21c] sm:$0xff]
  %v3121 = vld [vmem:[%s1 + $0x224] sm:$0xf]
  %v3122 = vld [vmem:[%s1 + $0x228] sm:$0xff]
  %v3123 = vld [vmem:[%s1 + $0x230] sm:$0xf]
  %v3124 = vld [vmem:[%s1 + $0x234] sm:$0xff]
  %v3125 = vld [vmem:[%s1 + $0x23c] sm:$0xf]
  %v3126 = vld [vmem:[%s1 + $0x240] sm:$0xff]
  %v3127 = vld [vmem:[%s1 + $0x248] sm:$0xf]
  %v3128 = vld [vmem:[%s1 + $0x24c] sm:$0xff]
  %v3129 = vld [vmem:[%s1 + $0x254] sm:$0xf]
  %v3130 = vld [vmem:[%s1 + $0x258] sm:$0xff]
  %v3131 = vld [vmem:[%s1 + $0x260] sm:$0xf]
  %v3132 = vld [vmem:[%s1 + $0x264] sm:$0xff]
  %v3133 = vld [vmem:[%s1 + $0x26c] sm:$0xf]
  %v3134 = vld [vmem:[%s1 + $0x270] sm:$0xff]
  %v3135 = vld [vmem:[%s1 + $0x278] sm:$0xf]
  %v3136 = vld [vmem:[%s1 + $0x27c] sm:$0xff]
  %v3137 = vld [vmem:[%s1 + $0x284] sm:$0xf]
  %v3138 = vld [vmem:[%s1 + $0x288] sm:$0xff]
  %v3139 = vld [vmem:[%s1 + $0x290] sm:$0xf]
  %v3140 = vld [vmem:[%s1 + $0x294] sm:$0xff]
  %v3141 = vld [vmem:[%s1 + $0x29c] sm:$0xf]
  %v3142 = vld [vmem:[%s1 + $0x2a0] sm:$0xff]
  %v3143 = vld [vmem:[%s1 + $0x2a8] sm:$0xf]
  %v3144 = vld [vmem:[%s1 + $0x2ac] sm:$0xff]
  %v3145 = vld [vmem:[%s1 + $0x2b4] sm:$0xf]
  %v3146 = vld [vmem:[%s1 + $0x2b8] sm:$0xff]
  %v3147 = vld [vmem:[%s1 + $0x2c0] sm:$0xf]
  %v3148 = vld [vmem:[%s1 + $0x2c4] sm:$0xff]
  %v3149 = vld [vmem:[%s1 + $0x2cc] sm:$0xf]
  %v3150 = vld [vmem:[%s1 + $0x2d0] sm:$0xff]
  %v3151 = vld [vmem:[%s1 + $0x2d8] sm:$0xf]
  %v3152 = vld [vmem:[%s1 + $0x2dc] sm:$0xff]
  %v3153 = vld [vmem:[%s1 + $0x2e4] sm:$0xf]
  %v3154 = vld [vmem:[%s1 + $0x2e8] sm:$0xff]
  %v3155 = vld [vmem:[%s1 + $0x2f0] sm:$0xf]
  %v3156 = vld [vmem:[%s1 + $0x2f4] sm:$0xff]
  %v3157 = vld [vmem:[%s1 + $0x2fc] sm:$0xf]
  %v3158 = vld [vmem:[%s1 + $0x300] sm:$0xff]
  %v3159 = vld [vmem:[%s1 + $0x308] sm:$0xf]
  %v3160 = vld [vmem:[%s1 + $0x30c] sm:$0xff]
  %v3161 = vld [vmem:[%s1 + $0x314] sm:$0xf]
  %v3162 = vld [vmem:[%s1 + $0x318] sm:$0xff]
  %v3163 = vld [vmem:[%s1 + $0x320] sm:$0xf]
  %v3164 = vld [vmem:[%s1 + $0x324] sm:$0xff]
  %v3165 = vld [vmem:[%s1 + $0x32c] sm:$0xf]
  %v3166 = vld [vmem:[%s1 + $0x330] sm:$0xff]
  %v3167 = vld [vmem:[%s1 + $0x338] sm:$0xf]
  %v3168 = vld [vmem:[%s1 + $0x33c] sm:$0xff]
  %v3169 = vld [vmem:[%s1 + $0x344] sm:$0xf]
  %v3170 = vld [vmem:[%s1 + $0x348] sm:$0xff]
  %v3171 = vld [vmem:[%s1 + $0x350] sm:$0xf]
  %v3172 = vld [vmem:[%s1 + $0x354] sm:$0xff]
  %v3173 = vld [vmem:[%s1 + $0x35c] sm:$0xf]
  %v3174 = vld [vmem:[%s1 + $0x360] sm:$0xff]
  %v3175 = vld [vmem:[%s1 + $0x368] sm:$0xf]
  %v3176 = vld [vmem:[%s1 + $0x36c] sm:$0xff]
  %v3177 = vld [vmem:[%s1 + $0x374] sm:$0xf]
  %v3178 = vld [vmem:[%s1 + $0x378] sm:$0xff]
  %v3179 = vld [vmem:[%s1 + $0x380] sm:$0xf]
  %v3180 = vld [vmem:[%s1 + $0x384] sm:$0xff]
  %v3181 = vld [vmem:[%s1 + $0x38c] sm:$0xf]
  %v3182 = vld [vmem:[%s1 + $0x390] sm:$0xff]
  %v3183 = vld [vmem:[%s1 + $0x398] sm:$0xf]
  %v3184 = vld [vmem:[%s1 + $0x39c] sm:$0xff]
  %v3185 = vld [vmem:[%s1 + $0x3a4] sm:$0xf]
  %v3186 = vld [vmem:[%s1 + $0x3a8] sm:$0xff]
  %v3187 = vld [vmem:[%s1 + $0x3b0] sm:$0xf]
  %v3188 = vld [vmem:[%s1 + $0x3b4] sm:$0xff]
  %v3189 = vld [vmem:[%s1 + $0x3bc] sm:$0xf]
  %v3190 = vld [vmem:[%s1 + $0x3c0] sm:$0xff]
  %v3191 = vld [vmem:[%s1 + $0x3c8] sm:$0xf]
  %v3192 = vld [vmem:[%s1 + $0x3cc] sm:$0xff]
  %v3193 = vld [vmem:[%s1 + $0x3d4] sm:$0xf]
  %v3194 = vld [vmem:[%s1 + $0x3d8] sm:$0xff]
  %v3195 = vld [vmem:[%s1 + $0x3e0] sm:$0xf]
  %v3196 = vld [vmem:[%s1 + $0x3e4] sm:$0xff]
  %v3197 = vld [vmem:[%s1 + $0x3ec] sm:$0xf]
  %v3198 = vld [vmem:[%s1 + $0x3f0] sm:$0xff]
  %v3199 = vld [vmem:[%s1 + $0x3f8] sm:$0xf]
  %v3200 = vld [vmem:[%s1 + $0x3fc] sm:$0xff]
  %v3201 = vld [vmem:[%s1 + $0x404] sm:$0xf]
  %v3202 = vld [vmem:[%s1 + $0x408] sm:$0xff]
  %v3203 = vld [vmem:[%s1 + $0x410] sm:$0xf]
  %v3204 = vld [vmem:[%s1 + $0x414] sm:$0xff]
  %v3205 = vld [vmem:[%s1 + $0x41c] sm:$0xf]
  %v3206 = vld [vmem:[%s1 + $0x420] sm:$0xff]
  %v3207 = vld [vmem:[%s1 + $0x428] sm:$0xf]
  %v3208 = vld [vmem:[%s1 + $0x42c] sm:$0xff]
  %v3209 = vld [vmem:[%s1 + $0x434] sm:$0xf]
  %v3210 = vld [vmem:[%s1 + $0x438] sm:$0xff]
  %v3211 = vld [vmem:[%s1 + $0x440] sm:$0xf]
  %v3212 = vld [vmem:[%s1 + $0x444] sm:$0xff]
  %v3213 = vld [vmem:[%s1 + $0x44c] sm:$0xf]
  %v3214 = vld [vmem:[%s1 + $0x450] sm:$0xff]
  %v3215 = vld [vmem:[%s1 + $0x458] sm:$0xf]
  %v3216 = vld [vmem:[%s1 + $0x45c] sm:$0xff]
  %v3217 = vld [vmem:[%s1 + $0x464] sm:$0xf]
  %v3218 = vld [vmem:[%s1 + $0x468] sm:$0xff]
  %v3219 = vld [vmem:[%s1 + $0x470] sm:$0xf]
  %v3220 = vld [vmem:[%s1 + $0x474] sm:$0xff]
  %v3221 = vld [vmem:[%s1 + $0x47c] sm:$0xf]
  %v3222 = vld [vmem:[%s1 + $0x480] sm:$0xff]
  %v3223 = vld [vmem:[%s1 + $0x488] sm:$0xf]
  %v3224 = vld [vmem:[%s1 + $0x48c] sm:$0xff]
  %v3225 = vld [vmem:[%s1 + $0x494] sm:$0xf]
  %v3226 = vld [vmem:[%s1 + $0x498] sm:$0xff]
  %v3227 = vld [vmem:[%s1 + $0x4a0] sm:$0xf]
  %v3228 = vld [vmem:[%s1 + $0x4a4] sm:$0xff]
  %v3229 = vld [vmem:[%s1 + $0x4ac] sm:$0xf]
  %v3230 = vld [vmem:[%s1 + $0x4b0] sm:$0xff]
  %v3231 = vld [vmem:[%s1 + $0x4b8] sm:$0xf]
  %v3232 = vld [vmem:[%s1 + $0x4bc] sm:$0xff]
  %v3233 = vld [vmem:[%s1 + $0x4c4] sm:$0xf]
  %v3234 = vld [vmem:[%s1 + $0x4c8] sm:$0xff]
  %v3235 = vld [vmem:[%s1 + $0x4d0] sm:$0xf]
  %v3236 = vld [vmem:[%s1 + $0x4d4] sm:$0xff]
  %v3237 = vld [vmem:[%s1 + $0x4dc] sm:$0xf]
  %v3238 = vld [vmem:[%s1 + $0x4e0] sm:$0xff]
  %v3239 = vld [vmem:[%s1 + $0x4e8] sm:$0xf]
  %v3240 = vld [vmem:[%s1 + $0x4ec] sm:$0xff]
  %v3241 = vld [vmem:[%s1 + $0x4f4] sm:$0xf]
  %v3242 = vld [vmem:[%s1 + $0x4f8] sm:$0xff]
  %v3243 = vld [vmem:[%s1 + $0x500] sm:$0xf]
  %v3244 = vld [vmem:[%s1 + $0x504] sm:$0xff]
  %v3245 = vld [vmem:[%s1 + $0x50c] sm:$0xf]
  %v3246 = vld [vmem:[%s1 + $0x510] sm:$0xff]
  %v3247 = vld [vmem:[%s1 + $0x518] sm:$0xf]
  %v3248 = vld [vmem:[%s1 + $0x51c] sm:$0xff]
  %v3249 = vld [vmem:[%s1 + $0x524] sm:$0xf]
  %v3250 = vld [vmem:[%s1 + $0x528] sm:$0xff]
  %v3251 = vld [vmem:[%s1 + $0x530] sm:$0xf]
  %v3252 = vld [vmem:[%s1 + $0x534] sm:$0xff]
  %v3253 = vld [vmem:[%s1 + $0x53c] sm:$0xf]
  %v3254 = vld [vmem:[%s1 + $0x540] sm:$0xff]
  %v3255 = vld [vmem:[%s1 + $0x548] sm:$0xf]
  %v3256 = vld [vmem:[%s1 + $0x54c] sm:$0xff]
  %v3257 = vld [vmem:[%s1 + $0x554] sm:$0xf]
  %v3258 = vld [vmem:[%s1 + $0x558] sm:$0xff]
  %v3259 = vld [vmem:[%s1 + $0x560] sm:$0xf]
  %v3260 = vld [vmem:[%s1 + $0x564] sm:$0xff]
  %v3261 = vld [vmem:[%s1 + $0x56c] sm:$0xf]
  %v3262 = vld [vmem:[%s1 + $0x570] sm:$0xff]
  %v3263 = vld [vmem:[%s1 + $0x578] sm:$0xf]
  %v3264 = vld [vmem:[%s1 + $0x57c] sm:$0xff]
  %v3265 = vld [vmem:[%s1 + $0x584] sm:$0xf]
  %v3266 = vld [vmem:[%s1 + $0x588] sm:$0xff]
  %v3267 = vld [vmem:[%s1 + $0x590] sm:$0xf]
  %v3268 = vld [vmem:[%s1 + $0x594] sm:$0xff]
  %v3269 = vld [vmem:[%s1 + $0x59c] sm:$0xf]
  %v3270 = vld [vmem:[%s1 + $0x5a0] sm:$0xff]
  %v3271 = vld [vmem:[%s1 + $0x5a8] sm:$0xf]
  %v3272 = vld [vmem:[%s1 + $0x5ac] sm:$0xff]
  %v3273 = vld [vmem:[%s1 + $0x5b4] sm:$0xf]
  %v3274 = vld [vmem:[%s1 + $0x5b8] sm:$0xff]
  %v3275 = vld [vmem:[%s1 + $0x5c0] sm:$0xf]
  %v3276 = vld [vmem:[%s1 + $0x5c4] sm:$0xff]
  %v3277 = vld [vmem:[%s1 + $0x5cc] sm:$0xf]
  %v3278 = vld [vmem:[%s1 + $0x5d0] sm:$0xff]
  %v3279 = vld [vmem:[%s1 + $0x5d8] sm:$0xf]
  %v3280 = vld [vmem:[%s1 + $0x5dc] sm:$0xff]
  %v3281 = vld [vmem:[%s1 + $0x5e4] sm:$0xf]
  %v3282 = vld [vmem:[%s1 + $0x5e8] sm:$0xff]
  %v3283 = vld [vmem:[%s1 + $0x5f0] sm:$0xf]
  %v3284 = vld [vmem:[%s1 + $0x5f4] sm:$0xff]
  %v3285 = vld [vmem:[%s1 + $0x5fc] sm:$0xf]
  %v3286 = vld [vmem:[%s1 + $0x600] sm:$0xff]
  %v3287 = vld [vmem:[%s1 + $0x608] sm:$0xf]
  %v3288 = vld [vmem:[%s1 + $0x60c] sm:$0xff]
  %v3289 = vld [vmem:[%s1 + $0x614] sm:$0xf]
  %v3290 = vld [vmem:[%s1 + $0x618] sm:$0xff]
  %v3291 = vld [vmem:[%s1 + $0x620] sm:$0xf]
  %v3292 = vld [vmem:[%s1 + $0x624] sm:$0xff]
  %v3293 = vld [vmem:[%s1 + $0x62c] sm:$0xf]
  %v3294 = vld [vmem:[%s1 + $0x630] sm:$0xff]
  %v3295 = vld [vmem:[%s1 + $0x638] sm:$0xf]
  %v3296 = vld [vmem:[%s1 + $0x63c] sm:$0xff]
  %v3297 = vld [vmem:[%s1 + $0x644] sm:$0xf]
  %v3298 = vld [vmem:[%s1 + $0x648] sm:$0xff]
  %v3299 = vld [vmem:[%s1 + $0x650] sm:$0xf]
  %v3300 = vld [vmem:[%s1 + $0x654] sm:$0xff]
  %v3301 = vld [vmem:[%s1 + $0x65c] sm:$0xf]
  %v3302 = vld [vmem:[%s1 + $0x660] sm:$0xff]
  %v3303 = vld [vmem:[%s1 + $0x668] sm:$0xf]
  %v3304 = vld [vmem:[%s1 + $0x66c] sm:$0xff]
  %v3305 = vld [vmem:[%s1 + $0x674] sm:$0xf]
  %v3306 = vld [vmem:[%s1 + $0x678] sm:$0xff]
  %v3307 = vld [vmem:[%s1 + $0x680] sm:$0xf]
  %v3308 = vld [vmem:[%s1 + $0x684] sm:$0xff]
  %v3309 = vld [vmem:[%s1 + $0x68c] sm:$0xf]
  %v3310 = vld [vmem:[%s1 + $0x690] sm:$0xff]
  %v3311 = vld [vmem:[%s1 + $0x698] sm:$0xf]
  %v3312 = vld [vmem:[%s1 + $0x69c] sm:$0xff]
  %v3313 = vld [vmem:[%s1 + $0x6a4] sm:$0xf]
  %v3314 = vld [vmem:[%s1 + $0x6a8] sm:$0xff]
  %v3315 = vld [vmem:[%s1 + $0x6b0] sm:$0xf]
  %v3316 = vld [vmem:[%s1 + $0x6b4] sm:$0xff]
  %v3317 = vld [vmem:[%s1 + $0x6bc] sm:$0xf]
  %v3318 = vld [vmem:[%s1 + $0x6c0] sm:$0xff]
  %v3319 = vld [vmem:[%s1 + $0x6c8] sm:$0xf]
  %v3320 = vld [vmem:[%s1 + $0x6cc] sm:$0xff]
  %v3321 = vld [vmem:[%s1 + $0x6d4] sm:$0xf]
  %v3322 = vld [vmem:[%s1 + $0x6d8] sm:$0xff]
  %v3323 = vld [vmem:[%s1 + $0x6e0] sm:$0xf]
  %v3324 = vld [vmem:[%s1 + $0x6e4] sm:$0xff]
  %v3325 = vld [vmem:[%s1 + $0x6ec] sm:$0xf]
  %v3326 = vld [vmem:[%s1 + $0x6f0] sm:$0xff]
  %v3327 = vld [vmem:[%s1 + $0x6f8] sm:$0xf]
  %v3328 = vld [vmem:[%s1 + $0x6fc] sm:$0xff]
  %v3329 = vld [vmem:[%s1 + $0x704] sm:$0xf]
  %v3330 = vld [vmem:[%s1 + $0x708] sm:$0xff]
  %v3331 = vld [vmem:[%s1 + $0x710] sm:$0xf]
  %v3332 = vld [vmem:[%s1 + $0x714] sm:$0xff]
  %v3333 = vld [vmem:[%s1 + $0x71c] sm:$0xf]
  %v3334 = vld [vmem:[%s1 + $0x720] sm:$0xff]
  %v3335 = vld [vmem:[%s1 + $0x728] sm:$0xf]
  %v3336 = vld [vmem:[%s1 + $0x72c] sm:$0xff]
  %v3337 = vld [vmem:[%s1 + $0x734] sm:$0xf]
  %v3338 = vld [vmem:[%s1 + $0x738] sm:$0xff]
  %v3339 = vld [vmem:[%s1 + $0x740] sm:$0xf]
  %v3340 = vld [vmem:[%s1 + $0x744] sm:$0xff]
  %v3341 = vld [vmem:[%s1 + $0x74c] sm:$0xf]
  %v3342 = vld [vmem:[%s1 + $0x750] sm:$0xff]
  %v3343 = vld [vmem:[%s1 + $0x758] sm:$0xf]
  %v3344 = vld [vmem:[%s1 + $0x75c] sm:$0xff]
  %v3345 = vld [vmem:[%s1 + $0x764] sm:$0xf]
  %v3346 = vld [vmem:[%s1 + $0x768] sm:$0xff]
  %v3347 = vld [vmem:[%s1 + $0x770] sm:$0xf]
  %v3348 = vld [vmem:[%s1 + $0x774] sm:$0xff]
  %v3349 = vld [vmem:[%s1 + $0x77c] sm:$0xf]
  %v3350 = vld [vmem:[%s1 + $0x780] sm:$0xff]
  %v3351 = vld [vmem:[%s1 + $0x788] sm:$0xf]
  %v3352 = vld [vmem:[%s1 + $0x78c] sm:$0xff]
  %v3353 = vld [vmem:[%s1 + $0x794] sm:$0xf]
  %v3354 = vld [vmem:[%s1 + $0x798] sm:$0xff]
  %v3355 = vld [vmem:[%s1 + $0x7a0] sm:$0xf]
  %v3356 = vld [vmem:[%s1 + $0x7a4] sm:$0xff]
  %v3357 = vld [vmem:[%s1 + $0x7ac] sm:$0xf]
  %v3358 = vld [vmem:[%s1 + $0x7b0] sm:$0xff]
  %v3359 = vld [vmem:[%s1 + $0x7b8] sm:$0xf]
  %v3360 = vld [vmem:[%s1 + $0x7bc] sm:$0xff]
  %v3361 = vld [vmem:[%s1 + $0x7c4] sm:$0xf]
  %v3362 = vld [vmem:[%s1 + $0x7c8] sm:$0xff]
  %v3363 = vld [vmem:[%s1 + $0x7d0] sm:$0xf]
  %v3364 = vld [vmem:[%s1 + $0x7d4] sm:$0xff]
  %v3365 = vld [vmem:[%s1 + $0x7dc] sm:$0xf]
  %v3366 = vld [vmem:[%s1 + $0x7e0] sm:$0xff]
  %v3367 = vld [vmem:[%s1 + $0x7e8] sm:$0xf]
  %v3368 = vld [vmem:[%s1 + $0x7ec] sm:$0xff]
  %v3369 = vld [vmem:[%s1 + $0x7f4] sm:$0xf]
  %v3370 = vld [vmem:[%s1 + $0x7f8] sm:$0xff]
  %v3371 = vld [vmem:[%s1 + $0x800] sm:$0xf]
  %v3372 = vld [vmem:[%s1 + $0x804] sm:$0xff]
  %v3373 = vld [vmem:[%s1 + $0x80c] sm:$0xf]
  %v3374 = vld [vmem:[%s1 + $0x810] sm:$0xff]
  %v3375 = vld [vmem:[%s1 + $0x818] sm:$0xf]
  %v3376 = vld [vmem:[%s1 + $0x81c] sm:$0xff]
  %v3377 = vld [vmem:[%s1 + $0x824] sm:$0xf]
  %v3650 = vunpack.c.l.b16 %v3106
  %v3651 = vunpack.c.h.b16 %v3106
  %v3652 = vunpack.c.l.b16 %v3107
  %v3653 = vunpack.c.l.b16 %v3108
  %v3654 = vunpack.c.h.b16 %v3108
  %v3655 = vunpack.c.l.b16 %v3109
  %v3656 = vunpack.c.l.b16 %v3110
  %v3657 = vunpack.c.h.b16 %v3110
  %v3658 = vunpack.c.l.b16 %v3111
  %v3659 = vunpack.c.l.b16 %v3112
  %v3660 = vunpack.c.h.b16 %v3112
  %v3661 = vunpack.c.l.b16 %v3113
  %v3662 = vunpack.c.l.b16 %v3114
  %v3663 = vunpack.c.h.b16 %v3114
  %v3664 = vunpack.c.l.b16 %v3115
  %v3665 = vunpack.c.l.b16 %v3116
  %v3666 = vunpack.c.h.b16 %v3116
  %v3667 = vunpack.c.l.b16 %v3117
  %v3668 = vunpack.c.l.b16 %v3118
  %v3669 = vunpack.c.h.b16 %v3118
  %v3670 = vunpack.c.l.b16 %v3119
  %v3671 = vunpack.c.l.b16 %v3120
  %v3672 = vunpack.c.h.b16 %v3120
  %v3673 = vunpack.c.l.b16 %v3121
  %v3674 = vunpack.c.l.b16 %v3122
  %v3675 = vunpack.c.h.b16 %v3122
  %v3676 = vunpack.c.l.b16 %v3123
  %v3677 = vunpack.c.l.b16 %v3124
  %v3678 = vunpack.c.h.b16 %v3124
  %v3679 = vunpack.c.l.b16 %v3125
  %v3680 = vunpack.c.l.b16 %v3126
  %v3681 = vunpack.c.h.b16 %v3126
  %v3682 = vunpack.c.l.b16 %v3127
  %v3683 = vunpack.c.l.b16 %v3128
  %v3684 = vunpack.c.h.b16 %v3128
  %v3685 = vunpack.c.l.b16 %v3129
  %v3686 = vunpack.c.l.b16 %v3130
  %v3687 = vunpack.c.h.b16 %v3130
  %v3688 = vunpack.c.l.b16 %v3131
  %v3689 = vunpack.c.l.b16 %v3132
  %v3690 = vunpack.c.h.b16 %v3132
  %v3691 = vunpack.c.l.b16 %v3133
  %v3692 = vunpack.c.l.b16 %v3134
  %v3693 = vunpack.c.h.b16 %v3134
  %v3694 = vunpack.c.l.b16 %v3135
  %v3695 = vunpack.c.l.b16 %v3136
  %v3696 = vunpack.c.h.b16 %v3136
  %v3697 = vunpack.c.l.b16 %v3137
  %v3698 = vunpack.c.l.b16 %v3138
  %v3699 = vunpack.c.h.b16 %v3138
  %v3700 = vunpack.c.l.b16 %v3139
  %v3701 = vunpack.c.l.b16 %v3140
  %v3702 = vunpack.c.h.b16 %v3140
  %v3703 = vunpack.c.l.b16 %v3141
  %v3704 = vunpack.c.l.b16 %v3142
  %v3705 = vunpack.c.h.b16 %v3142
  %v3706 = vunpack.c.l.b16 %v3143
  %v3707 = vunpack.c.l.b16 %v3144
  %v3708 = vunpack.c.h.b16 %v3144
  %v3709 = vunpack.c.l.b16 %v3145
  %v3710 = vunpack.c.l.b16 %v3146
  %v3711 = vunpack.c.h.b16 %v3146
  %v3712 = vunpack.c.l.b16 %v3147
  %v3713 = vunpack.c.l.b16 %v3148
  %v3714 = vunpack.c.h.b16 %v3148
  %v3715 = vunpack.c.l.b16 %v3149
  %v3716 = vunpack.c.l.b16 %v3150
  %v3717 = vunpack.c.h.b16 %v3150
  %v3718 = vunpack.c.l.b16 %v3151
  %v3719 = vunpack.c.l.b16 %v3152
  %v3720 = vunpack.c.h.b16 %v3152
  %v3721 = vunpack.c.l.b16 %v3153
  %v3722 = vunpack.c.l.b16 %v3154
  %v3723 = vunpack.c.h.b16 %v3154
  %v3724 = vunpack.c.l.b16 %v3155
  %v3725 = vunpack.c.l.b16 %v3156
  %v3726 = vunpack.c.h.b16 %v3156
  %v3727 = vunpack.c.l.b16 %v3157
  %v3728 = vunpack.c.l.b16 %v3158
  %v3729 = vunpack.c.h.b16 %v3158
  %v3730 = vunpack.c.l.b16 %v3159
  %v3731 = vunpack.c.l.b16 %v3160
  %v3732 = vunpack.c.h.b16 %v3160
  %v3733 = vunpack.c.l.b16 %v3161
  %v3734 = vunpack.c.l.b16 %v3162
  %v3735 = vunpack.c.h.b16 %v3162
  %v3736 = vunpack.c.l.b16 %v3163
  %v3737 = vunpack.c.l.b16 %v3164
  %v3738 = vunpack.c.h.b16 %v3164
  %v3739 = vunpack.c.l.b16 %v3165
  %v3740 = vunpack.c.l.b16 %v3166
  %v3741 = vunpack.c.h.b16 %v3166
  %v3742 = vunpack.c.l.b16 %v3167
  %v3743 = vunpack.c.l.b16 %v3168
  %v3744 = vunpack.c.h.b16 %v3168
  %v3745 = vunpack.c.l.b16 %v3169
  %v3746 = vunpack.c.l.b16 %v3170
  %v3747 = vunpack.c.h.b16 %v3170
  %v3748 = vunpack.c.l.b16 %v3171
  %v3749 = vunpack.c.l.b16 %v3172
  %v3750 = vunpack.c.h.b16 %v3172
  %v3751 = vunpack.c.l.b16 %v3173
  %v3752 = vunpack.c.l.b16 %v3174
  %v3753 = vunpack.c.h.b16 %v3174
  %v3754 = vunpack.c.l.b16 %v3175
  %v3755 = vunpack.c.l.b16 %v3176
  %v3756 = vunpack.c.h.b16 %v3176
  %v3757 = vunpack.c.l.b16 %v3177
  %v3758 = vunpack.c.l.b16 %v3178
  %v3759 = vunpack.c.h.b16 %v3178
  %v3760 = vunpack.c.l.b16 %v3179
  %v3761 = vunpack.c.l.b16 %v3180
  %v3762 = vunpack.c.h.b16 %v3180
  %v3763 = vunpack.c.l.b16 %v3181
  %v3764 = vunpack.c.l.b16 %v3182
  %v3765 = vunpack.c.h.b16 %v3182
  %v3766 = vunpack.c.l.b16 %v3183
  %v3767 = vunpack.c.l.b16 %v3184
  %v3768 = vunpack.c.h.b16 %v3184
  %v3769 = vunpack.c.l.b16 %v3185
  %v3770 = vunpack.c.l.b16 %v3186
  %v3771 = vunpack.c.h.b16 %v3186
  %v3772 = vunpack.c.l.b16 %v3187
  %v3773 = vunpack.c.l.b16 %v3188
  %v3774 = vunpack.c.h.b16 %v3188
  %v3775 = vunpack.c.l.b16 %v3189
  %v3776 = vunpack.c.l.b16 %v3190
  %v3777 = vunpack.c.h.b16 %v3190
  %v3778 = vunpack.c.l.b16 %v3191
  %v3779 = vunpack.c.l.b16 %v3192
  %v3780 = vunpack.c.h.b16 %v3192
  %v3781 = vunpack.c.l.b16 %v3193
  %v3782 = vunpack.c.l.b16 %v3194
  %v3783 = vunpack.c.h.b16 %v3194
  %v3784 = vunpack.c.l.b16 %v3195
  %v3785 = vunpack.c.l.b16 %v3196
  %v3786 = vunpack.c.h.b16 %v3196
  %v3787 = vunpack.c.l.b16 %v3197
  %v3788 = vunpack.c.l.b16 %v3198
  %v3789 = vunpack.c.h.b16 %v3198
  %v3790 = vunpack.c.l.b16 %v3199
  %v3791 = vunpack.c.l.b16 %v3200
  %v3792 = vunpack.c.h.b16 %v3200
  %v3793 = vunpack.c.l.b16 %v3201
  %v3794 = vunpack.c.l.b16 %v3202
  %v3795 = vunpack.c.h.b16 %v3202
  %v3796 = vunpack.c.l.b16 %v3203
  %v3797 = vunpack.c.l.b16 %v3204
  %v3798 = vunpack.c.h.b16 %v3204
  %v3799 = vunpack.c.l.b16 %v3205
  %v3800 = vunpack.c.l.b16 %v3206
  %v3801 = vunpack.c.h.b16 %v3206
  %v3802 = vunpack.c.l.b16 %v3207
  %v3803 = vunpack.c.l.b16 %v3208
  %v3804 = vunpack.c.h.b16 %v3208
  %v3805 = vunpack.c.l.b16 %v3209
  %v3806 = vunpack.c.l.b16 %v3210
  %v3807 = vunpack.c.h.b16 %v3210
  %v3808 = vunpack.c.l.b16 %v3211
  %v3809 = vunpack.c.l.b16 %v3212
  %v3810 = vunpack.c.h.b16 %v3212
  %v3811 = vunpack.c.l.b16 %v3213
  %v3812 = vunpack.c.l.b16 %v3214
  %v3813 = vunpack.c.h.b16 %v3214
  %v3814 = vunpack.c.l.b16 %v3215
  %v3815 = vunpack.c.l.b16 %v3216
  %v3816 = vunpack.c.h.b16 %v3216
  %v3817 = vunpack.c.l.b16 %v3217
  %v3818 = vunpack.c.l.b16 %v3218
  %v3819 = vunpack.c.h.b16 %v3218
  %v3820 = vunpack.c.l.b16 %v3219
  %v3821 = vunpack.c.l.b16 %v3220
  %v3822 = vunpack.c.h.b16 %v3220
  %v3823 = vunpack.c.l.b16 %v3221
  %v3824 = vunpack.c.l.b16 %v3222
  %v3825 = vunpack.c.h.b16 %v3222
  %v3826 = vunpack.c.l.b16 %v3223
  %v3827 = vunpack.c.l.b16 %v3224
  %v3828 = vunpack.c.h.b16 %v3224
  %v3829 = vunpack.c.l.b16 %v3225
  %v3830 = vunpack.c.l.b16 %v3226
  %v3831 = vunpack.c.h.b16 %v3226
  %v3832 = vunpack.c.l.b16 %v3227
  %v3833 = vunpack.c.l.b16 %v3228
  %v3834 = vunpack.c.h.b16 %v3228
  %v3835 = vunpack.c.l.b16 %v3229
  %v3836 = vunpack.c.l.b16 %v3230
  %v3837 = vunpack.c.h.b16 %v3230
  %v3838 = vunpack.c.l.b16 %v3231
  %v3839 = vunpack.c.l.b16 %v3232
  %v3840 = vunpack.c.h.b16 %v3232
  %v3841 = vunpack.c.l.b16 %v3233
  %v3842 = vunpack.c.l.b16 %v3234
  %v3843 = vunpack.c.h.b16 %v3234
  %v3844 = vunpack.c.l.b16 %v3235
  %v3845 = vunpack.c.l.b16 %v3236
  %v3846 = vunpack.c.h.b16 %v3236
  %v3847 = vunpack.c.l.b16 %v3237
  %v3848 = vunpack.c.l.b16 %v3238
  %v3849 = vunpack.c.h.b16 %v3238
  %v3850 = vunpack.c.l.b16 %v3239
  %v3851 = vunpack.c.l.b16 %v3240
  %v3852 = vunpack.c.h.b16 %v3240
  %v3853 = vunpack.c.l.b16 %v3241
  %v3854 = vunpack.c.l.b16 %v3242
  %v3855 = vunpack.c.h.b16 %v3242
  %v3856 = vunpack.c.l.b16 %v3243
  %v3857 = vunpack.c.l.b16 %v3244
  %v3858 = vunpack.c.h.b16 %v3244
  %v3859 = vunpack.c.l.b16 %v3245
  %v3860 = vunpack.c.l.b16 %v3246
  %v3861 = vunpack.c.h.b16 %v3246
  %v3862 = vunpack.c.l.b16 %v3247
  %v3863 = vunpack.c.l.b16 %v3248
  %v3864 = vunpack.c.h.b16 %v3248
  %v3865 = vunpack.c.l.b16 %v3249
  %v3866 = vunpack.c.l.b16 %v3250
  %v3867 = vunpack.c.h.b16 %v3250
  %v3868 = vunpack.c.l.b16 %v3251
  %v3869 = vunpack.c.l.b16 %v3252
  %v3870 = vunpack.c.h.b16 %v3252
  %v3871 = vunpack.c.l.b16 %v3253
  %v3872 = vunpack.c.l.b16 %v3254
  %v3873 = vunpack.c.h.b16 %v3254
  %v3874 = vunpack.c.l.b16 %v3255
  %v3875 = vunpack.c.l.b16 %v3256
  %v3876 = vunpack.c.h.b16 %v3256
  %v3877 = vunpack.c.l.b16 %v3257
  %v3878 = vunpack.c.l.b16 %v3258
  %v3879 = vunpack.c.h.b16 %v3258
  %v3880 = vunpack.c.l.b16 %v3259
  %v3881 = vunpack.c.l.b16 %v3260
  %v3882 = vunpack.c.h.b16 %v3260
  %v3883 = vunpack.c.l.b16 %v3261
  %v3884 = vunpack.c.l.b16 %v3262
  %v3885 = vunpack.c.h.b16 %v3262
  %v3886 = vunpack.c.l.b16 %v3263
  %v3887 = vunpack.c.l.b16 %v3264
  %v3888 = vunpack.c.h.b16 %v3264
  %v3889 = vunpack.c.l.b16 %v3265
  %v3890 = vunpack.c.l.b16 %v3266
  %v3891 = vunpack.c.h.b16 %v3266
  %v3892 = vunpack.c.l.b16 %v3267
  %v3893 = vunpack.c.l.b16 %v3268
  %v3894 = vunpack.c.h.b16 %v3268
  %v3895 = vunpack.c.l.b16 %v3269
  %v3896 = vunpack.c.l.b16 %v3270
  %v3897 = vunpack.c.h.b16 %v3270
  %v3898 = vunpack.c.l.b16 %v3271
  %v3899 = vunpack.c.l.b16 %v3272
  %v3900 = vunpack.c.h.b16 %v3272
  %v3901 = vunpack.c.l.b16 %v3273
  %v3902 = vunpack.c.l.b16 %v3274
  %v3903 = vunpack.c.h.b16 %v3274
  %v3904 = vunpack.c.l.b16 %v3275
  %v3905 = vunpack.c.l.b16 %v3276
  %v3906 = vunpack.c.h.b16 %v3276
  %v3907 = vunpack.c.l.b16 %v3277
  %v3908 = vunpack.c.l.b16 %v3278
  %v3909 = vunpack.c.h.b16 %v3278
  %v3910 = vunpack.c.l.b16 %v3279
  %v3911 = vunpack.c.l.b16 %v3280
  %v3912 = vunpack.c.h.b16 %v3280
  %v3913 = vunpack.c.l.b16 %v3281
  %v3914 = vunpack.c.l.b16 %v3282
  %v3915 = vunpack.c.h.b16 %v3282
  %v3916 = vunpack.c.l.b16 %v3283
  %v3917 = vunpack.c.l.b16 %v3284
  %v3918 = vunpack.c.h.b16 %v3284
  %v3919 = vunpack.c.l.b16 %v3285
  %v3920 = vunpack.c.l.b16 %v3286
  %v3921 = vunpack.c.h.b16 %v3286
  %v3922 = vunpack.c.l.b16 %v3287
  %v3923 = vunpack.c.l.b16 %v3288
  %v3924 = vunpack.c.h.b16 %v3288
  %v3925 = vunpack.c.l.b16 %v3289
  %v3926 = vunpack.c.l.b16 %v3290
  %v3927 = vunpack.c.h.b16 %v3290
  %v3928 = vunpack.c.l.b16 %v3291
  %v3929 = vunpack.c.l.b16 %v3292
  %v3930 = vunpack.c.h.b16 %v3292
  %v3931 = vunpack.c.l.b16 %v3293
  %v3932 = vunpack.c.l.b16 %v3294
  %v3933 = vunpack.c.h.b16 %v3294
  %v3934 = vunpack.c.l.b16 %v3295
  %v3935 = vunpack.c.l.b16 %v3296
  %v3936 = vunpack.c.h.b16 %v3296
  %v3937 = vunpack.c.l.b16 %v3297
  %v3938 = vunpack.c.l.b16 %v3298
  %v3939 = vunpack.c.h.b16 %v3298
  %v3940 = vunpack.c.l.b16 %v3299
  %v3941 = vunpack.c.l.b16 %v3300
  %v3942 = vunpack.c.h.b16 %v3300
  %v3943 = vunpack.c.l.b16 %v3301
  %v3944 = vunpack.c.l.b16 %v3302
  %v3945 = vunpack.c.h.b16 %v3302
  %v3946 = vunpack.c.l.b16 %v3303
  %v3947 = vunpack.c.l.b16 %v3304
  %v3948 = vunpack.c.h.b16 %v3304
  %v3949 = vunpack.c.l.b16 %v3305
  %v3950 = vunpack.c.l.b16 %v3306
  %v3951 = vunpack.c.h.b16 %v3306
  %v3952 = vunpack.c.l.b16 %v3307
  %v3953 = vunpack.c.l.b16 %v3308
  %v3954 = vunpack.c.h.b16 %v3308
  %v3955 = vunpack.c.l.b16 %v3309
  %v3956 = vunpack.c.l.b16 %v3310
  %v3957 = vunpack.c.h.b16 %v3310
  %v3958 = vunpack.c.l.b16 %v3311
  %v3959 = vunpack.c.l.b16 %v3312
  %v3960 = vunpack.c.h.b16 %v3312
  %v3961 = vunpack.c.l.b16 %v3313
  %v3962 = vunpack.c.l.b16 %v3314
  %v3963 = vunpack.c.h.b16 %v3314
  %v3964 = vunpack.c.l.b16 %v3315
  %v3965 = vunpack.c.l.b16 %v3316
  %v3966 = vunpack.c.h.b16 %v3316
  %v3967 = vunpack.c.l.b16 %v3317
  %v3968 = vunpack.c.l.b16 %v3318
  %v3969 = vunpack.c.h.b16 %v3318
  %v3970 = vunpack.c.l.b16 %v3319
  %v3971 = vunpack.c.l.b16 %v3320
  %v3972 = vunpack.c.h.b16 %v3320
  %v3973 = vunpack.c.l.b16 %v3321
  %v3974 = vunpack.c.l.b16 %v3322
  %v3975 = vunpack.c.h.b16 %v3322
  %v3976 = vunpack.c.l.b16 %v3323
  %v3977 = vunpack.c.l.b16 %v3324
  %v3978 = vunpack.c.h.b16 %v3324
  %v3979 = vunpack.c.l.b16 %v3325
  %v3980 = vunpack.c.l.b16 %v3326
  %v3981 = vunpack.c.h.b16 %v3326
  %v3982 = vunpack.c.l.b16 %v3327
  %v3983 = vunpack.c.l.b16 %v3328
  %v3984 = vunpack.c.h.b16 %v3328
  %v3985 = vunpack.c.l.b16 %v3329
  %v3986 = vunpack.c.l.b16 %v3330
  %v3987 = vunpack.c.h.b16 %v3330
  %v3988 = vunpack.c.l.b16 %v3331
  %v3989 = vunpack.c.l.b16 %v3332
  %v3990 = vunpack.c.h.b16 %v3332
  %v3991 = vunpack.c.l.b16 %v3333
  %v3992 = vunpack.c.l.b16 %v3334
  %v3993 = vunpack.c.h.b16 %v3334
  %v3994 = vunpack.c.l.b16 %v3335
  %v3995 = vunpack.c.l.b16 %v3336
  %v3996 = vunpack.c.h.b16 %v3336
  %v3997 = vunpack.c.l.b16 %v3337
  %v3998 = vunpack.c.l.b16 %v3338
  %v3999 = vunpack.c.h.b16 %v3338
  %v4000 = vunpack.c.l.b16 %v3339
  %v4001 = vunpack.c.l.b16 %v3340
  %v4002 = vunpack.c.h.b16 %v3340
  %v4003 = vunpack.c.l.b16 %v3341
  %v4004 = vunpack.c.l.b16 %v3342
  %v4005 = vunpack.c.h.b16 %v3342
  %v4006 = vunpack.c.l.b16 %v3343
  %v4007 = vunpack.c.l.b16 %v3344
  %v4008 = vunpack.c.h.b16 %v3344
  %v4009 = vunpack.c.l.b16 %v3345
  %v4010 = vunpack.c.l.b16 %v3346
  %v4011 = vunpack.c.h.b16 %v3346
  %v4012 = vunpack.c.l.b16 %v3347
  %v4013 = vunpack.c.l.b16 %v3348
  %v4014 = vunpack.c.h.b16 %v3348
  %v4015 = vunpack.c.l.b16 %v3349
  %v4016 = vunpack.c.l.b16 %v3350
  %v4017 = vunpack.c.h.b16 %v3350
  %v4018 = vunpack.c.l.b16 %v3351
  %v4019 = vunpack.c.l.b16 %v3352
  %v4020 = vunpack.c.h.b16 %v3352
  %v4021 = vunpack.c.l.b16 %v3353
  %v4022 = vunpack.c.l.b16 %v3354
  %v4023 = vunpack.c.h.b16 %v3354
  %v4024 = vunpack.c.l.b16 %v3355
  %v4025 = vunpack.c.l.b16 %v3356
  %v4026 = vunpack.c.h.b16 %v3356
  %v4027 = vunpack.c.l.b16 %v3357
  %v4028 = vunpack.c.l.b16 %v3358
  %v4029 = vunpack.c.h.b16 %v3358
  %v4030 = vunpack.c.l.b16 %v3359
  %v4031 = vunpack.c.l.b16 %v3360
  %v4032 = vunpack.c.h.b16 %v3360
  %v4033 = vunpack.c.l.b16 %v3361
  %v4034 = vunpack.c.l.b16 %v3362
  %v4035 = vunpack.c.h.b16 %v3362
  %v4036 = vunpack.c.l.b16 %v3363
  %v4037 = vunpack.c.l.b16 %v3364
  %v4038 = vunpack.c.h.b16 %v3364
  %v4039 = vunpack.c.l.b16 %v3365
  %v4040 = vunpack.c.l.b16 %v3366
  %v4041 = vunpack.c.h.b16 %v3366
  %v4042 = vunpack.c.l.b16 %v3367
  %v4043 = vunpack.c.l.b16 %v3368
  %v4044 = vunpack.c.h.b16 %v3368
  %v4045 = vunpack.c.l.b16 %v3369
  %v4046 = vunpack.c.l.b16 %v3370
  %v4047 = vunpack.c.h.b16 %v3370
  %v4048 = vunpack.c.l.b16 %v3371
  %v4049 = vunpack.c.l.b16 %v3372
  %v4050 = vunpack.c.h.b16 %v3372
  %v4051 = vunpack.c.l.b16 %v3373
  %v4052 = vunpack.c.l.b16 %v3374
  %v4053 = vunpack.c.h.b16 %v3374
  %v4054 = vunpack.c.l.b16 %v3375
  %v4055 = vunpack.c.l.b16 %v3376
  %v4056 = vunpack.c.h.b16 %v3376
  %v4057 = vunpack.c.l.b16 %v3377
  %v4058 = vpack.c.b16 %v3653, %v3650
  %v4059 = vpack.c.b16 %v3654, %v3651
  %v4060 = vpack.c.b16 %v3655, %v3652
  %v4061 = vpack.c.b16 %v3659, %v3656
  %v4062 = vpack.c.b16 %v3660, %v3657
  %v4063 = vpack.c.b16 %v3661, %v3658
  %v4064 = vpack.c.b16 %v3665, %v3662
  %v4065 = vpack.c.b16 %v3666, %v3663
  %v4066 = vpack.c.b16 %v3667, %v3664
  %v4067 = vpack.c.b16 %v3671, %v3668
  %v4068 = vpack.c.b16 %v3672, %v3669
  %v4069 = vpack.c.b16 %v3673, %v3670
  %v4070 = vpack.c.b16 %v3677, %v3674
  %v4071 = vpack.c.b16 %v3678, %v3675
  %v4072 = vpack.c.b16 %v3679, %v3676
  %v4073 = vpack.c.b16 %v3683, %v3680
  %v4074 = vpack.c.b16 %v3684, %v3681
  %v4075 = vpack.c.b16 %v3685, %v3682
  %v4076 = vpack.c.b16 %v3689, %v3686
  %v4077 = vpack.c.b16 %v3690, %v3687
  %v4078 = vpack.c.b16 %v3691, %v3688
  %v4079 = vpack.c.b16 %v3695, %v3692
  %v4080 = vpack.c.b16 %v3696, %v3693
  %v4081 = vpack.c.b16 %v3697, %v3694
  %v4082 = vpack.c.b16 %v3701, %v3698
  %v4083 = vpack.c.b16 %v3702, %v3699
  %v4084 = vpack.c.b16 %v3703, %v3700
  %v4085 = vpack.c.b16 %v3707, %v3704
  %v4086 = vpack.c.b16 %v3708, %v3705
  %v4087 = vpack.c.b16 %v3709, %v3706
  %v4088 = vpack.c.b16 %v3713, %v3710
  %v4089 = vpack.c.b16 %v3714, %v3711
  %v4090 = vpack.c.b16 %v3715, %v3712
  %v4091 = vpack.c.b16 %v3719, %v3716
  %v4092 = vpack.c.b16 %v3720, %v3717
  %v4093 = vpack.c.b16 %v3721, %v3718
  %v4094 = vpack.c.b16 %v3725, %v3722
  %v4095 = vpack.c.b16 %v3726, %v3723
  %v4096 = vpack.c.b16 %v3727, %v3724
  %v4097 = vpack.c.b16 %v3731, %v3728
  %v4098 = vpack.c.b16 %v3732, %v3729
  %v4099 = vpack.c.b16 %v3733, %v3730
  %v4100 = vpack.c.b16 %v3737, %v3734
  %v4101 = vpack.c.b16 %v3738, %v3735
  %v4102 = vpack.c.b16 %v3739, %v3736
  %v4103 = vpack.c.b16 %v3743, %v3740
  %v4104 = vpack.c.b16 %v3744, %v3741
  %v4105 = vpack.c.b16 %v3745, %v3742
  %v4106 = vpack.c.b16 %v3749, %v3746
  %v4107 = vpack.c.b16 %v3750, %v3747
  %v4108 = vpack.c.b16 %v3751, %v3748
  %v4109 = vpack.c.b16 %v3755, %v3752
  %v4110 = vpack.c.b16 %v3756, %v3753
  %v4111 = vpack.c.b16 %v3757, %v3754
  %v4112 = vpack.c.b16 %v3761, %v3758
  %v4113 = vpack.c.b16 %v3762, %v3759
  %v4114 = vpack.c.b16 %v3763, %v3760
  %v4115 = vpack.c.b16 %v3767, %v3764
  %v4116 = vpack.c.b16 %v3768, %v3765
  %v4117 = vpack.c.b16 %v3769, %v3766
  %v4118 = vpack.c.b16 %v3773, %v3770
  %v4119 = vpack.c.b16 %v3774, %v3771
  %v4120 = vpack.c.b16 %v3775, %v3772
  %v4121 = vpack.c.b16 %v3779, %v3776
  %v4122 = vpack.c.b16 %v3780, %v3777
  %v4123 = vpack.c.b16 %v3781, %v3778
  %v4124 = vpack.c.b16 %v3785, %v3782
  %v4125 = vpack.c.b16 %v3786, %v3783
  %v4126 = vpack.c.b16 %v3787, %v3784
  %v4127 = vpack.c.b16 %v3791, %v3788
  %v4128 = vpack.c.b16 %v3792, %v3789
  %v4129 = vpack.c.b16 %v3793, %v3790
  %v4130 = vpack.c.b16 %v3797, %v3794
  %v4131 = vpack.c.b16 %v3798, %v3795
  %v4132 = vpack.c.b16 %v3799, %v3796
  %v4133 = vpack.c.b16 %v3803, %v3800
  %v4134 = vpack.c.b16 %v3804, %v3801
  %v4135 = vpack.c.b16 %v3805, %v3802
  %v4136 = vpack.c.b16 %v3809, %v3806
  %v4137 = vpack.c.b16 %v3810, %v3807
  %v4138 = vpack.c.b16 %v3811, %v3808
  %v4139 = vpack.c.b16 %v3815, %v3812
  %v4140 = vpack.c.b16 %v3816, %v3813
  %v4141 = vpack.c.b16 %v3817, %v3814
  %v4142 = vpack.c.b16 %v3821, %v3818
  %v4143 = vpack.c.b16 %v3822, %v3819
  %v4144 = vpack.c.b16 %v3823, %v3820
  %v4145 = vpack.c.b16 %v3827, %v3824
  %v4146 = vpack.c.b16 %v3828, %v3825
  %v4147 = vpack.c.b16 %v3829, %v3826
  %v4148 = vpack.c.b16 %v3833, %v3830
  %v4149 = vpack.c.b16 %v3834, %v3831
  %v4150 = vpack.c.b16 %v3835, %v3832
  %v4151 = vpack.c.b16 %v3839, %v3836
  %v4152 = vpack.c.b16 %v3840, %v3837
  %v4153 = vpack.c.b16 %v3841, %v3838
  %v4154 = vpack.c.b16 %v3845, %v3842
  %v4155 = vpack.c.b16 %v3846, %v3843
  %v4156 = vpack.c.b16 %v3847, %v3844
  %v4157 = vpack.c.b16 %v3851, %v3848
  %v4158 = vpack.c.b16 %v3852, %v3849
  %v4159 = vpack.c.b16 %v3853, %v3850
  %v4160 = vpack.c.b16 %v3857, %v3854
  %v4161 = vpack.c.b16 %v3858, %v3855
  %v4162 = vpack.c.b16 %v3859, %v3856
  %v4163 = vpack.c.b16 %v3863, %v3860
  %v4164 = vpack.c.b16 %v3864, %v3861
  %v4165 = vpack.c.b16 %v3865, %v3862
  %v4166 = vpack.c.b16 %v3869, %v3866
  %v4167 = vpack.c.b16 %v3870, %v3867
  %v4168 = vpack.c.b16 %v3871, %v3868
  %v4169 = vpack.c.b16 %v3875, %v3872
  %v4170 = vpack.c.b16 %v3876, %v3873
  %v4171 = vpack.c.b16 %v3877, %v3874
  %v4172 = vpack.c.b16 %v3881, %v3878
  %v4173 = vpack.c.b16 %v3882, %v3879
  %v4174 = vpack.c.b16 %v3883, %v3880
  %v4175 = vpack.c.b16 %v3887, %v3884
  %v4176 = vpack.c.b16 %v3888, %v3885
  %v4177 = vpack.c.b16 %v3889, %v3886
  %v4178 = vpack.c.b16 %v3893, %v3890
  %v4179 = vpack.c.b16 %v3894, %v3891
  %v4180 = vpack.c.b16 %v3895, %v3892
  %v4181 = vpack.c.b16 %v3899, %v3896
  %v4182 = vpack.c.b16 %v3900, %v3897
  %v4183 = vpack.c.b16 %v3901, %v3898
  %v4184 = vpack.c.b16 %v3905, %v3902
  %v4185 = vpack.c.b16 %v3906, %v3903
  %v4186 = vpack.c.b16 %v3907, %v3904
  %v4187 = vpack.c.b16 %v3911, %v3908
  %v4188 = vpack.c.b16 %v3912, %v3909
  %v4189 = vpack.c.b16 %v3913, %v3910
  %v4190 = vpack.c.b16 %v3917, %v3914
  %v4191 = vpack.c.b16 %v3918, %v3915
  %v4192 = vpack.c.b16 %v3919, %v3916
  %v4193 = vpack.c.b16 %v3923, %v3920
  %v4194 = vpack.c.b16 %v3924, %v3921
  %v4195 = vpack.c.b16 %v3925, %v3922
  %v4196 = vpack.c.b16 %v3929, %v3926
  %v4197 = vpack.c.b16 %v3930, %v3927
  %v4198 = vpack.c.b16 %v3931, %v3928
  %v4199 = vpack.c.b16 %v3935, %v3932
  %v4200 = vpack.c.b16 %v3936, %v3933
  %v4201 = vpack.c.b16 %v3937, %v3934
  %v4202 = vpack.c.b16 %v3941, %v3938
  %v4203 = vpack.c.b16 %v3942, %v3939
  %v4204 = vpack.c.b16 %v3943, %v3940
  %v4205 = vpack.c.b16 %v3947, %v3944
  %v4206 = vpack.c.b16 %v3948, %v3945
  %v4207 = vpack.c.b16 %v3949, %v3946
  %v4208 = vpack.c.b16 %v3953, %v3950
  %v4209 = vpack.c.b16 %v3954, %v3951
  %v4210 = vpack.c.b16 %v3955, %v3952
  %v4211 = vpack.c.b16 %v3959, %v3956
  %v4212 = vpack.c.b16 %v3960, %v3957
  %v4213 = vpack.c.b16 %v3961, %v3958
  %v4214 = vpack.c.b16 %v3965, %v3962
  %v4215 = vpack.c.b16 %v3966, %v3963
  %v4216 = vpack.c.b16 %v3967, %v3964
  %v4217 = vpack.c.b16 %v3971, %v3968
  %v4218 = vpack.c.b16 %v3972, %v3969
  %v4219 = vpack.c.b16 %v3973, %v3970
  %v4220 = vpack.c.b16 %v3977, %v3974
  %v4221 = vpack.c.b16 %v3978, %v3975
  %v4222 = vpack.c.b16 %v3979, %v3976
  %v4223 = vpack.c.b16 %v3983, %v3980
  %v4224 = vpack.c.b16 %v3984, %v3981
  %v4225 = vpack.c.b16 %v3985, %v3982
  %v4226 = vpack.c.b16 %v3989, %v3986
  %v4227 = vpack.c.b16 %v3990, %v3987
  %v4228 = vpack.c.b16 %v3991, %v3988
  %v4229 = vpack.c.b16 %v3995, %v3992
  %v4230 = vpack.c.b16 %v3996, %v3993
  %v4231 = vpack.c.b16 %v3997, %v3994
  %v4232 = vpack.c.b16 %v4001, %v3998
  %v4233 = vpack.c.b16 %v4002, %v3999
  %v4234 = vpack.c.b16 %v4003, %v4000
  %v4235 = vpack.c.b16 %v4007, %v4004
  %v4236 = vpack.c.b16 %v4008, %v4005
  %v4237 = vpack.c.b16 %v4009, %v4006
  %v4238 = vpack.c.b16 %v4013, %v4010
  %v4239 = vpack.c.b16 %v4014, %v4011
  %v4240 = vpack.c.b16 %v4015, %v4012
  %v4241 = vpack.c.b16 %v4019, %v4016
  %v4242 = vpack.c.b16 %v4020, %v4017
  %v4243 = vpack.c.b16 %v4021, %v4018
  %v4244 = vpack.c.b16 %v4025, %v4022
  %v4245 = vpack.c.b16 %v4026, %v4023
  %v4246 = vpack.c.b16 %v4027, %v4024
  %v4247 = vpack.c.b16 %v4031, %v4028
  %v4248 = vpack.c.b16 %v4032, %v4029
  %v4249 = vpack.c.b16 %v4033, %v4030
  %v4250 = vpack.c.b16 %v4037, %v4034
  %v4251 = vpack.c.b16 %v4038, %v4035
  %v4252 = vpack.c.b16 %v4039, %v4036
  %v4253 = vpack.c.b16 %v4043, %v4040
  %v4254 = vpack.c.b16 %v4044, %v4041
  %v4255 = vpack.c.b16 %v4045, %v4042
  %v4256 = vpack.c.b16 %v4049, %v4046
  %v4257 = vpack.c.b16 %v4050, %v4047
  %v4258 = vpack.c.b16 %v4051, %v4048
  %v4259 = vpack.c.b16 %v4055, %v4052
  %v4260 = vpack.c.b16 %v4056, %v4053
  %v4261 = vpack.c.b16 %v4057, %v4054
  %vm4466 = vcmask 523264
  %v4468 = vsel %vm4466, %v3105, 0
  %4470 = vmatpush.bf16.msra.mxu0 %v4079
  %4471 = vmatpush.bf16.msra.mxu0 %v4076
  %4472 = vmatpush.bf16.msra.mxu0 %v4073
  %4473 = vmatpush.bf16.msra.mxu0 %v4070
  %4474 = vmatpush.bf16.msra.mxu0 %v4067
  %4475 = vmatpush.bf16.msra.mxu0 %v4064
  %4476 = vmatpush.bf16.msra.mxu0 %v4061
  %4477 = vmatpush.bf16.msra.mxu0 %v4058
  %4478 = vmatmul.bf16.gmra.mxu0 %v3097
  %v4479 = vpop.f32.mrf.mxu0
  %v4480 = vadd.f32 0.0, %v4479
  %v4481 = vpop.f32.mrf.mxu0
  %4482 = vdwg.mxu0
  %4483 = vmatpush.bf16.msra.mxu0 %v4103
  %4484 = vmatpush.bf16.msra.mxu0 %v4100
  %4485 = vmatpush.bf16.msra.mxu0 %v4097
  %4486 = vmatpush.bf16.msra.mxu0 %v4094
  %4487 = vmatpush.bf16.msra.mxu0 %v4091
  %4488 = vmatpush.bf16.msra.mxu0 %v4088
  %4489 = vmatpush.bf16.msra.mxu0 %v4085
  %4490 = vmatpush.bf16.msra.mxu0 %v4082
  %4491 = vmatmul.bf16.gmra.mxu0 %v3098
  %v4492 = vpop.f32.mrf.mxu0
  %v4493 = vadd.f32 %v4480, %v4492
  %v4494 = vpop.f32.mrf.mxu0
  %4495 = vdwg.mxu0
  %4496 = vmatpush.bf16.msra.mxu0 %v4127
  %4497 = vmatpush.bf16.msra.mxu0 %v4124
  %4498 = vmatpush.bf16.msra.mxu0 %v4121
  %4499 = vmatpush.bf16.msra.mxu0 %v4118
  %4500 = vmatpush.bf16.msra.mxu0 %v4115
  %4501 = vmatpush.bf16.msra.mxu0 %v4112
  %4502 = vmatpush.bf16.msra.mxu0 %v4109
  %4503 = vmatpush.bf16.msra.mxu0 %v4106
  %4504 = vmatmul.bf16.gmra.mxu0 %v3099
  %v4505 = vpop.f32.mrf.mxu0
  %v4506 = vadd.f32 %v4493, %v4505
  %v4507 = vpop.f32.mrf.mxu0
  %4508 = vdwg.mxu0
  %4509 = vmatpush.bf16.msra.mxu0 %v4151
  %4510 = vmatpush.bf16.msra.mxu0 %v4148
  %4511 = vmatpush.bf16.msra.mxu0 %v4145
  %4512 = vmatpush.bf16.msra.mxu0 %v4142
  %4513 = vmatpush.bf16.msra.mxu0 %v4139
  %4514 = vmatpush.bf16.msra.mxu0 %v4136
  %4515 = vmatpush.bf16.msra.mxu0 %v4133
  %4516 = vmatpush.bf16.msra.mxu0 %v4130
  %4517 = vmatmul.bf16.gmra.mxu0 %v3100
  %v4518 = vpop.f32.mrf.mxu0
  %v4519 = vadd.f32 %v4506, %v4518
  %v4520 = vpop.f32.mrf.mxu0
  %4521 = vdwg.mxu0
  %4522 = vmatpush.bf16.msra.mxu0 %v4175
  %4523 = vmatpush.bf16.msra.mxu0 %v4172
  %4524 = vmatpush.bf16.msra.mxu0 %v4169
  %4525 = vmatpush.bf16.msra.mxu0 %v4166
  %4526 = vmatpush.bf16.msra.mxu0 %v4163
  %4527 = vmatpush.bf16.msra.mxu0 %v4160
  %4528 = vmatpush.bf16.msra.mxu0 %v4157
  %4529 = vmatpush.bf16.msra.mxu0 %v4154
  %4530 = vmatmul.bf16.gmra.mxu0 %v3101
  %v4531 = vpop.f32.mrf.mxu0
  %v4532 = vadd.f32 %v4519, %v4531
  %v4533 = vpop.f32.mrf.mxu0
  %4534 = vdwg.mxu0
  %4535 = vmatpush.bf16.msra.mxu0 %v4199
  %4536 = vmatpush.bf16.msra.mxu0 %v4196
  %4537 = vmatpush.bf16.msra.mxu0 %v4193
  %4538 = vmatpush.bf16.msra.mxu0 %v4190
  %4539 = vmatpush.bf16.msra.mxu0 %v4187
  %4540 = vmatpush.bf16.msra.mxu0 %v4184
  %4541 = vmatpush.bf16.msra.mxu0 %v4181
  %4542 = vmatpush.bf16.msra.mxu0 %v4178
  %4543 = vmatmul.bf16.gmra.mxu0 %v3102
  %v4544 = vpop.f32.mrf.mxu0
  %v4545 = vadd.f32 %v4532, %v4544
  %v4546 = vpop.f32.mrf.mxu0
  %4547 = vdwg.mxu0
  %4548 = vmatpush.bf16.msra.mxu0 %v4223
  %4549 = vmatpush.bf16.msra.mxu0 %v4220
  %4550 = vmatpush.bf16.msra.mxu0 %v4217
  %4551 = vmatpush.bf16.msra.mxu0 %v4214
  %4552 = vmatpush.bf16.msra.mxu0 %v4211
  %4553 = vmatpush.bf16.msra.mxu0 %v4208
  %4554 = vmatpush.bf16.msra.mxu0 %v4205
  %4555 = vmatpush.bf16.msra.mxu0 %v4202
  %4556 = vmatmul.bf16.gmra.mxu0 %v3103
  %v4557 = vpop.f32.mrf.mxu0
  %v4558 = vadd.f32 %v4545, %v4557
  %v4559 = vpop.f32.mrf.mxu0
  %4560 = vdwg.mxu0
  %4561 = vmatpush.bf16.msra.mxu0 %v4247
  %4562 = vmatpush.bf16.msra.mxu0 %v4244
  %4563 = vmatpush.bf16.msra.mxu0 %v4241
  %4564 = vmatpush.bf16.msra.mxu0 %v4238
  %4565 = vmatpush.bf16.msra.mxu0 %v4235
  %4566 = vmatpush.bf16.msra.mxu0 %v4232
  %4567 = vmatpush.bf16.msra.mxu0 %v4229
  %4568 = vmatpush.bf16.msra.mxu0 %v4226
  %4569 = vmatmul.bf16.gmra.mxu0 %v3104
  %v4570 = vpop.f32.mrf.mxu0
  %v4571 = vadd.f32 %v4558, %v4570
  %v4572 = vpop.f32.mrf.mxu0
  %4573 = vdwg.mxu0
  %4574 = vmatpush.bf16.msra.mxu0 0
  %4575 = vmatpush.bf16.msra.mxu0 0
  %4576 = vmatpush.bf16.msra.mxu0 0
  %4577 = vmatpush.bf16.msra.mxu0 0
  %4578 = vmatpush.bf16.msra.mxu0 %v4259
  %4579 = vmatpush.bf16.msra.mxu0 %v4256
  %4580 = vmatpush.bf16.msra.mxu0 %v4253
  %4581 = vmatpush.bf16.msra.mxu0 %v4250
  %4582 = vmatmul.bf16.gmra.mxu0 %v4468
  %v4583 = vpop.f32.mrf.mxu0
  %v4584 = vadd.f32 %v4571, %v4583
  %v4585 = vpop.f32.mrf.mxu0
  %4586 = vdwg.mxu0
  %4587 = vmatpush.bf16.msra.mxu0 %v4080
  %4588 = vmatpush.bf16.msra.mxu0 %v4077
  %4589 = vmatpush.bf16.msra.mxu0 %v4074
  %4590 = vmatpush.bf16.msra.mxu0 %v4071
  %4591 = vmatpush.bf16.msra.mxu0 %v4068
  %4592 = vmatpush.bf16.msra.mxu0 %v4065
  %4593 = vmatpush.bf16.msra.mxu0 %v4062
  %4594 = vmatpush.bf16.msra.mxu0 %v4059
  %4595 = vmatmul.bf16.gmra.mxu0 %v3097
  %v4596 = vpop.f32.mrf.mxu0
  %v4597 = vadd.f32 0.0, %v4596
  %v4598 = vpop.f32.mrf.mxu0
  %4599 = vdwg.mxu0
  %4600 = vmatpush.bf16.msra.mxu0 %v4104
  %4601 = vmatpush.bf16.msra.mxu0 %v4101
  %4602 = vmatpush.bf16.msra.mxu0 %v4098
  %4603 = vmatpush.bf16.msra.mxu0 %v4095
  %4604 = vmatpush.bf16.msra.mxu0 %v4092
  %4605 = vmatpush.bf16.msra.mxu0 %v4089
  %4606 = vmatpush.bf16.msra.mxu0 %v4086
  %4607 = vmatpush.bf16.msra.mxu0 %v4083
  %4608 = vmatmul.bf16.gmra.mxu0 %v3098
  %v4609 = vpop.f32.mrf.mxu0
  %v4610 = vadd.f32 %v4597, %v4609
  %v4611 = vpop.f32.mrf.mxu0
  %4612 = vdwg.mxu0
  %4613 = vmatpush.bf16.msra.mxu0 %v4128
  %4614 = vmatpush.bf16.msra.mxu0 %v4125
  %4615 = vmatpush.bf16.msra.mxu0 %v4122
  %4616 = vmatpush.bf16.msra.mxu0 %v4119
  %4617 = vmatpush.bf16.msra.mxu0 %v4116
  %4618 = vmatpush.bf16.msra.mxu0 %v4113
  %4619 = vmatpush.bf16.msra.mxu0 %v4110
  %4620 = vmatpush.bf16.msra.mxu0 %v4107
  %4621 = vmatmul.bf16.gmra.mxu0 %v3099
  %v4622 = vpop.f32.mrf.mxu0
  %v4623 = vadd.f32 %v4610, %v4622
  %v4624 = vpop.f32.mrf.mxu0
  %4625 = vdwg.mxu0
  %4626 = vmatpush.bf16.msra.mxu0 %v4152
  %4627 = vmatpush.bf16.msra.mxu0 %v4149
  %4628 = vmatpush.bf16.msra.mxu0 %v4146
  %4629 = vmatpush.bf16.msra.mxu0 %v4143
  %4630 = vmatpush.bf16.msra.mxu0 %v4140
  %4631 = vmatpush.bf16.msra.mxu0 %v4137
  %4632 = vmatpush.bf16.msra.mxu0 %v4134
  %4633 = vmatpush.bf16.msra.mxu0 %v4131
  %4634 = vmatmul.bf16.gmra.mxu0 %v3100
  %v4635 = vpop.f32.mrf.mxu0
  %v4636 = vadd.f32 %v4623, %v4635
  %v4637 = vpop.f32.mrf.mxu0
  %4638 = vdwg.mxu0
  %4639 = vmatpush.bf16.msra.mxu0 %v4176
  %4640 = vmatpush.bf16.msra.mxu0 %v4173
  %4641 = vmatpush.bf16.msra.mxu0 %v4170
  %4642 = vmatpush.bf16.msra.mxu0 %v4167
  %4643 = vmatpush.bf16.msra.mxu0 %v4164
  %4644 = vmatpush.bf16.msra.mxu0 %v4161
  %4645 = vmatpush.bf16.msra.mxu0 %v4158
  %4646 = vmatpush.bf16.msra.mxu0 %v4155
  %4647 = vmatmul.bf16.gmra.mxu0 %v3101
  %v4648 = vpop.f32.mrf.mxu0
  %v4649 = vadd.f32 %v4636, %v4648
  %v4650 = vpop.f32.mrf.mxu0
  %4651 = vdwg.mxu0
  %4652 = vmatpush.bf16.msra.mxu0 %v4200
  %4653 = vmatpush.bf16.msra.mxu0 %v4197
  %4654 = vmatpush.bf16.msra.mxu0 %v4194
  %4655 = vmatpush.bf16.msra.mxu0 %v4191
  %4656 = vmatpush.bf16.msra.mxu0 %v4188
  %4657 = vmatpush.bf16.msra.mxu0 %v4185
  %4658 = vmatpush.bf16.msra.mxu0 %v4182
  %4659 = vmatpush.bf16.msra.mxu0 %v4179
  %4660 = vmatmul.bf16.gmra.mxu0 %v3102
  %v4661 = vpop.f32.mrf.mxu0
  %v4662 = vadd.f32 %v4649, %v4661
  %v4663 = vpop.f32.mrf.mxu0
  %4664 = vdwg.mxu0
  %4665 = vmatpush.bf16.msra.mxu0 %v4224
  %4666 = vmatpush.bf16.msra.mxu0 %v4221
  %4667 = vmatpush.bf16.msra.mxu0 %v4218
  %4668 = vmatpush.bf16.msra.mxu0 %v4215
  %4669 = vmatpush.bf16.msra.mxu0 %v4212
  %4670 = vmatpush.bf16.msra.mxu0 %v4209
  %4671 = vmatpush.bf16.msra.mxu0 %v4206
  %4672 = vmatpush.bf16.msra.mxu0 %v4203
  %4673 = vmatmul.bf16.gmra.mxu0 %v3103
  %v4674 = vpop.f32.mrf.mxu0
  %v4675 = vadd.f32 %v4662, %v4674
  %v4676 = vpop.f32.mrf.mxu0
  %4677 = vdwg.mxu0
  %4678 = vmatpush.bf16.msra.mxu0 %v4248
  %4679 = vmatpush.bf16.msra.mxu0 %v4245
  %4680 = vmatpush.bf16.msra.mxu0 %v4242
  %4681 = vmatpush.bf16.msra.mxu0 %v4239
  %4682 = vmatpush.bf16.msra.mxu0 %v4236
  %4683 = vmatpush.bf16.msra.mxu0 %v4233
  %4684 = vmatpush.bf16.msra.mxu0 %v4230
  %4685 = vmatpush.bf16.msra.mxu0 %v4227
  %4686 = vmatmul.bf16.gmra.mxu0 %v3104
  %v4687 = vpop.f32.mrf.mxu0
  %v4688 = vadd.f32 %v4675, %v4687
  %v4689 = vpop.f32.mrf.mxu0
  %4690 = vdwg.mxu0
  %4691 = vmatpush.bf16.msra.mxu0 0
  %4692 = vmatpush.bf16.msra.mxu0 0
  %4693 = vmatpush.bf16.msra.mxu0 0
  %4694 = vmatpush.bf16.msra.mxu0 0
  %4695 = vmatpush.bf16.msra.mxu0 %v4260
  %4696 = vmatpush.bf16.msra.mxu0 %v4257
  %4697 = vmatpush.bf16.msra.mxu0 %v4254
  %4698 = vmatpush.bf16.msra.mxu0 %v4251
  %4699 = vmatmul.bf16.gmra.mxu0 %v4468
  %v4700 = vpop.f32.mrf.mxu0
  %v4701 = vadd.f32 %v4688, %v4700
  %v4702 = vpop.f32.mrf.mxu0
  %4703 = vdwg.mxu0
  %4704 = vmatpush.bf16.msra.mxu0 %v4081
  %4705 = vmatpush.bf16.msra.mxu0 %v4078
  %4706 = vmatpush.bf16.msra.mxu0 %v4075
  %4707 = vmatpush.bf16.msra.mxu0 %v4072
  %4708 = vmatpush.bf16.msra.mxu0 %v4069
  %4709 = vmatpush.bf16.msra.mxu0 %v4066
  %4710 = vmatpush.bf16.msra.mxu0 %v4063
  %4711 = vmatpush.bf16.msra.mxu0 %v4060
  %4712 = vmatmul.bf16.gmra.mxu0 %v3097
  %v4713 = vpop.f32.mrf.mxu0
  %v4714 = vadd.f32 0.0, %v4713
  %v4715 = vpop.f32.mrf.mxu0
  %4716 = vdwg.mxu0
  %4717 = vmatpush.bf16.msra.mxu0 %v4105
  %4718 = vmatpush.bf16.msra.mxu0 %v4102
  %4719 = vmatpush.bf16.msra.mxu0 %v4099
  %4720 = vmatpush.bf16.msra.mxu0 %v4096
  %4721 = vmatpush.bf16.msra.mxu0 %v4093
  %4722 = vmatpush.bf16.msra.mxu0 %v4090
  %4723 = vmatpush.bf16.msra.mxu0 %v4087
  %4724 = vmatpush.bf16.msra.mxu0 %v4084
  %4725 = vmatmul.bf16.gmra.mxu0 %v3098
  %v4726 = vpop.f32.mrf.mxu0
  %v4727 = vadd.f32 %v4714, %v4726
  %v4728 = vpop.f32.mrf.mxu0
  %4729 = vdwg.mxu0
  %4730 = vmatpush.bf16.msra.mxu0 %v4129
  %4731 = vmatpush.bf16.msra.mxu0 %v4126
  %4732 = vmatpush.bf16.msra.mxu0 %v4123
  %4733 = vmatpush.bf16.msra.mxu0 %v4120
  %4734 = vmatpush.bf16.msra.mxu0 %v4117
  %4735 = vmatpush.bf16.msra.mxu0 %v4114
  %4736 = vmatpush.bf16.msra.mxu0 %v4111
  %4737 = vmatpush.bf16.msra.mxu0 %v4108
  %4738 = vmatmul.bf16.gmra.mxu0 %v3099
  %v4739 = vpop.f32.mrf.mxu0
  %v4740 = vadd.f32 %v4727, %v4739
  %v4741 = vpop.f32.mrf.mxu0
  %4742 = vdwg.mxu0
  %4743 = vmatpush.bf16.msra.mxu0 %v4153
  %4744 = vmatpush.bf16.msra.mxu0 %v4150
  %4745 = vmatpush.bf16.msra.mxu0 %v4147
  %4746 = vmatpush.bf16.msra.mxu0 %v4144
  %4747 = vmatpush.bf16.msra.mxu0 %v4141
  %4748 = vmatpush.bf16.msra.mxu0 %v4138
  %4749 = vmatpush.bf16.msra.mxu0 %v4135
  %4750 = vmatpush.bf16.msra.mxu0 %v4132
  %4751 = vmatmul.bf16.gmra.mxu0 %v3100
  %v4752 = vpop.f32.mrf.mxu0
  %v4753 = vadd.f32 %v4740, %v4752
  %v4754 = vpop.f32.mrf.mxu0
  %4755 = vdwg.mxu0
  %4756 = vmatpush.bf16.msra.mxu0 %v4177
  %4757 = vmatpush.bf16.msra.mxu0 %v4174
  %4758 = vmatpush.bf16.msra.mxu0 %v4171
  %4759 = vmatpush.bf16.msra.mxu0 %v4168
  %4760 = vmatpush.bf16.msra.mxu0 %v4165
  %4761 = vmatpush.bf16.msra.mxu0 %v4162
  %4762 = vmatpush.bf16.msra.mxu0 %v4159
  %4763 = vmatpush.bf16.msra.mxu0 %v4156
  %4764 = vmatmul.bf16.gmra.mxu0 %v3101
  %v4765 = vpop.f32.mrf.mxu0
  %v4766 = vadd.f32 %v4753, %v4765
  %v4767 = vpop.f32.mrf.mxu0
  %4768 = vdwg.mxu0
  %4769 = vmatpush.bf16.msra.mxu0 %v4201
  %4770 = vmatpush.bf16.msra.mxu0 %v4198
  %4771 = vmatpush.bf16.msra.mxu0 %v4195
  %4772 = vmatpush.bf16.msra.mxu0 %v4192
  %4773 = vmatpush.bf16.msra.mxu0 %v4189
  %4774 = vmatpush.bf16.msra.mxu0 %v4186
  %4775 = vmatpush.bf16.msra.mxu0 %v4183
  %4776 = vmatpush.bf16.msra.mxu0 %v4180
  %4777 = vmatmul.bf16.gmra.mxu0 %v3102
  %v4778 = vpop.f32.mrf.mxu0
  %v4779 = vadd.f32 %v4766, %v4778
  %v4780 = vpop.f32.mrf.mxu0
  %4781 = vdwg.mxu0
  %4782 = vmatpush.bf16.msra.mxu0 %v4225
  %4783 = vmatpush.bf16.msra.mxu0 %v4222
  %4784 = vmatpush.bf16.msra.mxu0 %v4219
  %4785 = vmatpush.bf16.msra.mxu0 %v4216
  %4786 = vmatpush.bf16.msra.mxu0 %v4213
  %4787 = vmatpush.bf16.msra.mxu0 %v4210
  %4788 = vmatpush.bf16.msra.mxu0 %v4207
  %4789 = vmatpush.bf16.msra.mxu0 %v4204
  %4790 = vmatmul.bf16.gmra.mxu0 %v3103
  %v4791 = vpop.f32.mrf.mxu0
  %v4792 = vadd.f32 %v4779, %v4791
  %v4793 = vpop.f32.mrf.mxu0
  %4794 = vdwg.mxu0
  %4795 = vmatpush.bf16.msra.mxu0 %v4249
  %4796 = vmatpush.bf16.msra.mxu0 %v4246
  %4797 = vmatpush.bf16.msra.mxu0 %v4243
  %4798 = vmatpush.bf16.msra.mxu0 %v4240
  %4799 = vmatpush.bf16.msra.mxu0 %v4237
  %4800 = vmatpush.bf16.msra.mxu0 %v4234
  %4801 = vmatpush.bf16.msra.mxu0 %v4231
  %4802 = vmatpush.bf16.msra.mxu0 %v4228
  %4803 = vmatmul.bf16.gmra.mxu0 %v3104
  %v4804 = vpop.f32.mrf.mxu0
  %v4805 = vadd.f32 %v4792, %v4804
  %v4806 = vpop.f32.mrf.mxu0
  %4807 = vdwg.mxu0
  %4808 = vmatpush.bf16.msra.mxu0 0
  %4809 = vmatpush.bf16.msra.mxu0 0
  %4810 = vmatpush.bf16.msra.mxu0 0
  %4811 = vmatpush.bf16.msra.mxu0 0
  %4812 = vmatpush.bf16.msra.mxu0 %v4261
  %4813 = vmatpush.bf16.msra.mxu0 %v4258
  %4814 = vmatpush.bf16.msra.mxu0 %v4255
  %4815 = vmatpush.bf16.msra.mxu0 %v4252
  %4816 = vmatmul.bf16.gmra.mxu0 %v4468
  %v4817 = vpop.f32.mrf.mxu0
  %v4818 = vadd.f32 %v4805, %v4817
  %v4819 = vpop.f32.mrf.mxu0
  %4820 = vdwg.mxu0
  %v4821 = vpack.c.bf16 %v4701, %v4584
  %v4822 = vpack.c.bf16 %v4818, %v4818
  %4823 = vst [vmem:[#allocation5 + $0x4] sm:$0xff] %v4821
  %vm4824 = vcmask 257024
  %4825 = vst.msk [vmem:[#allocation5 + $0xc] sm:$0xf] %vm4824, %v4822
  %v4826 = vld [vmem:[#allocation5] sm:$0xff]
  %v4827 = vld [vmem:[#allocation5 + $0x8] sm:$0xff]
  %4830 = vrot.lane.b32.xlu0 %v4826, 19
  %v4831 = vpop.permute.xlu0 %4830
  %4832 = vrot.lane.b32.xlu0 %v4827, 19
  %v4833 = vpop.permute.xlu0 %4832
  %v4834 = vrot.slane %v4831, 4
  %v4835 = vrot.slane %v4833, 4
  %v4836 = vsel %vm354, %v4834, %v4835
  %vm4837 = vcmask 154624
  %v4838 = vsel %vm4837, %v4831, %v4836
  %v4839 = vsel %vm4837, %v4833, %v4835
  %4842 = vst [vmem:[#allocation2] sm:$0xff] %v4838
  %4843 = vst.msk [vmem:[#allocation2 + $0x8] sm:$0xf] %vm4824, %v4839
  %v4844 = vld [vmem:[#allocation5] sm:$0xff]
  %v4845 = vld [vmem:[#allocation5 + $0x8] sm:$0xff]
  %4848 = vrot.lane.b32.xlu0 %v4844, 18
  %v4849 = vpop.permute.xlu0 %4848
  %4850 = vrot.lane.b32.xlu0 %v4845, 18
  %v4851 = vpop.permute.xlu0 %4850
  %v4852 = vrot.slane %v4849, 4
  %v4853 = vrot.slane %v4851, 4
  %v4854 = vsel %vm354, %v4852, %v4853
  %vm4855 = vcmask 146432
  %v4856 = vsel %vm4855, %v4849, %v4854
  %v4857 = vsel %vm4855, %v4851, %v4853
  %4860 = vst [vmem:[#allocation2 + $0x48] sm:$0xff] %v4856
  %4861 = vst.msk [vmem:[#allocation2 + $0x50] sm:$0xf] %vm4824, %v4857
  %v4862 = vld [vmem:[#allocation5] sm:$0xff]
  %v4863 = vld [vmem:[#allocation5 + $0x8] sm:$0xff]
  %4866 = vrot.lane.b32.xlu0 %v4862, 17
  %v4867 = vpop.permute.xlu0 %4866
  %4868 = vrot.lane.b32.xlu0 %v4863, 17
  %v4869 = vpop.permute.xlu0 %4868
  %v4870 = vrot.slane %v4867, 4
  %v4871 = vrot.slane %v4869, 4
  %v4872 = vsel %vm354, %v4870, %v4871
  %vm4873 = vcmask 138240
  %v4874 = vsel %vm4873, %v4867, %v4872
  %v4875 = vsel %vm4873, %v4869, %v4871
  %4878 = vst [vmem:[#allocation2 + $0x90] sm:$0xff] %v4874
  %4879 = vst.msk [vmem:[#allocation2 + $0x98] sm:$0xf] %vm4824, %v4875
  %v4880 = vld [vmem:[#allocation5] sm:$0xff]
  %v4881 = vld [vmem:[#allocation5 + $0x8] sm:$0xff]
  %4884 = vrot.lane.b32.xlu0 %v4880, 1
  %v4885 = vpop.permute.xlu0 %4884
  %4886 = vrot.lane.b32.xlu0 %v4881, 1
  %v4887 = vpop.permute.xlu0 %4886
  %v4888 = vrot.slane %v4885, 4
  %v4889 = vrot.slane %v4887, 4
  %v4890 = vsel %vm354, %v4888, %v4889
  %v4891 = vsel %vm563, %v4885, %v4890
  %v4892 = vsel %vm563, %v4887, %v4889
  %4895 = vst [vmem:[#allocation2 + $0xd8] sm:$0xff] %v4891
  %4896 = vst.msk [vmem:[#allocation2 + $0xe0] sm:$0xf] %vm4824, %v4892
  %v4897 = vld [vmem:[#allocation5 + $0x4] sm:$0xff]
  %v4898 = vld [vmem:[#allocation5 + $0xc] sm:$0xf]
  %4899 = vst [vmem:[#allocation2 + $0x120] sm:$0xff] %v4897
  %4900 = vst.msk [vmem:[#allocation2 + $0x128] sm:$0xf] %vm4824, %v4898
  %v4901 = vld [vmem:[#allocation5 + $0x4] sm:$0xff]
  %v4902 = vld [vmem:[#allocation5 + $0xc] sm:$0xf]
  %4905 = vrot.lane.b32.xlu0 %v4901, 127
  %v4906 = vpop.permute.xlu0 %4905
  %4907 = vrot.lane.b32.xlu0 %v4902, 127
  %v4908 = vpop.permute.xlu0 %4907
  %v4909 = vrot.slane %v4906, 4
  %v4910 = vrot.slane %v4908, 4
  %v4911 = vsel %vm354, %v4909, %v4910
  %v4912 = vsel %vm665, %v4906, %v4911
  %4915 = vst [vmem:[#allocation2 + $0x168] sm:$0xff] %v4912
  %4916 = vst.msk [vmem:[#allocation2 + $0x170] sm:$0xf] %vm4824, %v4908
  %v4917 = vld [vmem:[#allocation5 + $0x4] sm:$0xff]
  %v4918 = vld [vmem:[#allocation5 + $0xc] sm:$0xf]
  %4921 = vrot.lane.b32.xlu0 %v4917, 111
  %v4922 = vpop.permute.xlu0 %4921
  %4923 = vrot.lane.b32.xlu0 %v4918, 111
  %v4924 = vpop.permute.xlu0 %4923
  %v4925 = vrot.slane %v4922, 4
  %v4926 = vrot.slane %v4924, 4
  %v4927 = vsel %vm354, %v4925, %v4926
  %vm4928 = vcmask 908288
  %v4929 = vsel %vm4928, %v4922, %v4927
  %4932 = vst [vmem:[#allocation2 + $0x1b0] sm:$0xff] %v4929
  %4933 = vst.msk [vmem:[#allocation2 + $0x1b8] sm:$0xf] %vm4824, %v4924
  %v4934 = vld [vmem:[#allocation5 + $0x4] sm:$0xff]
  %v4935 = vld [vmem:[#allocation5 + $0xc] sm:$0xf]
  %4938 = vrot.lane.b32.xlu0 %v4934, 110
  %v4939 = vpop.permute.xlu0 %4938
  %4940 = vrot.lane.b32.xlu0 %v4935, 110
  %v4941 = vpop.permute.xlu0 %4940
  %v4942 = vrot.slane %v4939, 4
  %v4943 = vrot.slane %v4941, 4
  %v4944 = vsel %vm354, %v4942, %v4943
  %vm4945 = vcmask 900096
  %v4946 = vsel %vm4945, %v4939, %v4944
  %4949 = vst [vmem:[#allocation2 + $0x1f8] sm:$0xff] %v4946
  %4950 = vst.msk [vmem:[#allocation2 + $0x200] sm:$0xf] %vm4824, %v4941
  %v4951 = vld [vmem:[#allocation5 + $0x4] sm:$0xff]
  %v4952 = vld [vmem:[#allocation5 + $0xc] sm:$0xf]
  %4955 = vrot.lane.b32.xlu0 %v4951, 109
  %v4956 = vpop.permute.xlu0 %4955
  %4957 = vrot.lane.b32.xlu0 %v4952, 109
  %v4958 = vpop.permute.xlu0 %4957
  %v4959 = vrot.slane %v4956, 4
  %v4960 = vrot.slane %v4958, 4
  %v4961 = vsel %vm354, %v4959, %v4960
  %vm4962 = vcmask 891904
  %v4963 = vsel %vm4962, %v4956, %v4961
  %4966 = vst [vmem:[#allocation2 + $0x240] sm:$0xff] %v4963
  %4967 = vst.msk [vmem:[#allocation2 + $0x248] sm:$0xf] %vm4824, %v4958
  %v4968 = vld [vmem:[%s1 + $0x30] sm:$0xff]
  %v4969 = vld [vmem:[%s1 + $0x3c] sm:$0xff]
  %v4970 = vld [vmem:[#allocation2] sm:$0xff]
  %v4971 = vld [vmem:[#allocation2 + $0x8] sm:$0xf]
  %v4972 = vld [vmem:[#allocation2 + $0x24] sm:$0xff]
  %v4973 = vld [vmem:[#allocation2 + $0x2c] sm:$0xf]
  %v4974 = vld [vmem:[#allocation2 + $0x48] sm:$0xff]
  %v4975 = vld [vmem:[#allocation2 + $0x50] sm:$0xf]
  %v4976 = vld [vmem:[#allocation2 + $0x6c] sm:$0xff]
  %v4977 = vld [vmem:[#allocation2 + $0x74] sm:$0xf]
  %v4978 = vld [vmem:[#allocation2 + $0x90] sm:$0xff]
  %v4979 = vld [vmem:[#allocation2 + $0x98] sm:$0xf]
  %v4980 = vld [vmem:[#allocation2 + $0xb4] sm:$0xff]
  %v4981 = vld [vmem:[#allocation2 + $0xbc] sm:$0xf]
  %v4982 = vld [vmem:[#allocation2 + $0xd8] sm:$0xff]
  %v4983 = vld [vmem:[#allocation2 + $0xe0] sm:$0xf]
  %v4984 = vld [vmem:[#allocation2 + $0xfc] sm:$0xff]
  %v4985 = vld [vmem:[#allocation2 + $0x104] sm:$0xf]
  %v4986 = vld [vmem:[#allocation2 + $0x120] sm:$0xff]
  %v4987 = vld [vmem:[#allocation2 + $0x128] sm:$0xf]
  %v4988 = vld [vmem:[#allocation2 + $0x144] sm:$0xff]
  %v4989 = vld [vmem:[#allocation2 + $0x14c] sm:$0xf]
  %v4990 = vld [vmem:[#allocation2 + $0x168] sm:$0xff]
  %v4991 = vld [vmem:[#allocation2 + $0x170] sm:$0xf]
  %v4992 = vld [vmem:[#allocation2 + $0x18c] sm:$0xff]
  %v4993 = vld [vmem:[#allocation2 + $0x194] sm:$0xf]
  %v4994 = vld [vmem:[#allocation2 + $0x1b0] sm:$0xff]
  %v4995 = vld [vmem:[#allocation2 + $0x1b8] sm:$0xf]
  %v4996 = vld [vmem:[#allocation2 + $0x1d4] sm:$0xff]
  %v4997 = vld [vmem:[#allocation2 + $0x1dc] sm:$0xf]
  %v4998 = vld [vmem:[#allocation2 + $0x1f8] sm:$0xff]
  %v4999 = vld [vmem:[#allocation2 + $0x200] sm:$0xf]
  %v5000 = vld [vmem:[#allocation2 + $0x21c] sm:$0xff]
  %v5001 = vld [vmem:[#allocation2 + $0x224] sm:$0xf]
  %v5002 = vld [vmem:[#allocation2 + $0x240] sm:$0xff]
  %v5003 = vld [vmem:[#allocation2 + $0x248] sm:$0xf]
  %v5004 = vld [vmem:[#allocation2 + $0x264] sm:$0xff]
  %v5005 = vld [vmem:[#allocation2 + $0x26c] sm:$0xf]
  %v5006 = vld [vmem:[#allocation2 + $0x288] sm:$0x11]
  %v5007 = vld [vmem:[#allocation2 + $0x290] sm:$0x1]
  %v5010 = vunpack.c.l.b16 %v4968
  %v5011 = vunpack.c.h.b16 %v4968
  %v5012 = vunpack.c.l.b16 %v4969
  %v5013 = vunpack.c.h.b16 %v4969
  %v5014 = vpack.c.b16 %v5012, %v5010
  %v5015 = vpack.c.b16 %v5013, %v5011
  %v5055 = vunpack.c.l.b16 %v4970
  %v5056 = vunpack.c.h.b16 %v4970
  %v5057 = vunpack.c.l.b16 %v4971
  %v5058 = vunpack.c.l.b16 %v4972
  %v5059 = vunpack.c.h.b16 %v4972
  %v5060 = vunpack.c.l.b16 %v4973
  %v5061 = vunpack.c.l.b16 %v4974
  %v5062 = vunpack.c.h.b16 %v4974
  %v5063 = vunpack.c.l.b16 %v4975
  %v5064 = vunpack.c.l.b16 %v4976
  %v5065 = vunpack.c.h.b16 %v4976
  %v5066 = vunpack.c.l.b16 %v4977
  %v5067 = vunpack.c.l.b16 %v4978
  %v5068 = vunpack.c.h.b16 %v4978
  %v5069 = vunpack.c.l.b16 %v4979
  %v5070 = vunpack.c.l.b16 %v4980
  %v5071 = vunpack.c.h.b16 %v4980
  %v5072 = vunpack.c.l.b16 %v4981
  %v5073 = vunpack.c.l.b16 %v4982
  %v5074 = vunpack.c.h.b16 %v4982
  %v5075 = vunpack.c.l.b16 %v4983
  %v5076 = vunpack.c.l.b16 %v4984
  %v5077 = vunpack.c.h.b16 %v4984
  %v5078 = vunpack.c.l.b16 %v4985
  %v5079 = vunpack.c.l.b16 %v4986
  %v5080 = vunpack.c.h.b16 %v4986
  %v5081 = vunpack.c.l.b16 %v4987
  %v5082 = vunpack.c.l.b16 %v4988
  %v5083 = vunpack.c.h.b16 %v4988
  %v5084 = vunpack.c.l.b16 %v4989
  %v5085 = vunpack.c.l.b16 %v4990
  %v5086 = vunpack.c.h.b16 %v4990
  %v5087 = vunpack.c.l.b16 %v4991
  %v5088 = vunpack.c.l.b16 %v4992
  %v5089 = vunpack.c.h.b16 %v4992
  %v5090 = vunpack.c.l.b16 %v4993
  %v5091 = vunpack.c.l.b16 %v4994
  %v5092 = vunpack.c.h.b16 %v4994
  %v5093 = vunpack.c.l.b16 %v4995
  %v5094 = vunpack.c.l.b16 %v4996
  %v5095 = vunpack.c.h.b16 %v4996
  %v5096 = vunpack.c.l.b16 %v4997
  %v5097 = vunpack.c.l.b16 %v4998
  %v5098 = vunpack.c.h.b16 %v4998
  %v5099 = vunpack.c.l.b16 %v4999
  %v5100 = vunpack.c.l.b16 %v5000
  %v5101 = vunpack.c.h.b16 %v5000
  %v5102 = vunpack.c.l.b16 %v5001
  %v5103 = vunpack.c.l.b16 %v5002
  %v5104 = vunpack.c.h.b16 %v5002
  %v5105 = vunpack.c.l.b16 %v5003
  %v5106 = vunpack.c.l.b16 %v5004
  %v5107 = vunpack.c.h.b16 %v5004
  %v5108 = vunpack.c.l.b16 %v5005
  %v5109 = vunpack.c.l.b16 %v5006
  %v5110 = vunpack.c.h.b16 %v5006
  %v5111 = vunpack.c.l.b16 %v5007
  %v5112 = vpack.c.b16 %v5058, %v5055
  %v5113 = vpack.c.b16 %v5059, %v5056
  %v5114 = vpack.c.b16 %v5060, %v5057
  %v5115 = vpack.c.b16 %v5064, %v5061
  %v5116 = vpack.c.b16 %v5065, %v5062
  %v5117 = vpack.c.b16 %v5066, %v5063
  %v5118 = vpack.c.b16 %v5070, %v5067
  %v5119 = vpack.c.b16 %v5071, %v5068
  %v5120 = vpack.c.b16 %v5072, %v5069
  %v5121 = vpack.c.b16 %v5076, %v5073
  %v5122 = vpack.c.b16 %v5077, %v5074
  %v5123 = vpack.c.b16 %v5078, %v5075
  %v5124 = vpack.c.b16 %v5082, %v5079
  %v5125 = vpack.c.b16 %v5083, %v5080
  %v5126 = vpack.c.b16 %v5084, %v5081
  %v5127 = vpack.c.b16 %v5088, %v5085
  %v5128 = vpack.c.b16 %v5089, %v5086
  %v5129 = vpack.c.b16 %v5090, %v5087
  %v5130 = vpack.c.b16 %v5094, %v5091
  %v5131 = vpack.c.b16 %v5095, %v5092
  %v5132 = vpack.c.b16 %v5096, %v5093
  %v5133 = vpack.c.b16 %v5100, %v5097
  %v5134 = vpack.c.b16 %v5101, %v5098
  %v5135 = vpack.c.b16 %v5102, %v5099
  %v5136 = vpack.c.b16 %v5106, %v5103
  %v5137 = vpack.c.b16 %v5107, %v5104
  %v5138 = vpack.c.b16 %v5108, %v5105
  %v5139 = vpack.c.b16 %v5109, %v5109
  %v5140 = vpack.c.b16 %v5110, %v5110
  %v5141 = vpack.c.b16 %v5111, %v5111
  %v5170 = vsel %vm1427, %v5015, 0
  %v5173 = vand.u32 %v5139, %v1433
  %v5176 = vand.u32 %v5140, %v1433
  %v5179 = vand.u32 %v5141, %v1433
  %5181 = vmatpush.bf16.msra.mxu0 %v5133
  %5182 = vmatpush.bf16.msra.mxu0 %v5130
  %5183 = vmatpush.bf16.msra.mxu0 %v5127
  %5184 = vmatpush.bf16.msra.mxu0 %v5124
  %5185 = vmatpush.bf16.msra.mxu0 %v5121
  %5186 = vmatpush.bf16.msra.mxu0 %v5118
  %5187 = vmatpush.bf16.msra.mxu0 %v5115
  %5188 = vmatpush.bf16.msra.mxu0 %v5112
  %5189 = vmatmul.bf16.gmra.mxu0 %v5014
  %v5190 = vpop.f32.mrf.mxu0
  %v5191 = vadd.f32 0.0, %v5190
  %v5192 = vpop.f32.mrf.mxu0
  %v5193 = vadd.f32 0.0, %v5192
  %5194 = vdwg.mxu0
  %5195 = vmatpush.bf16.msra.mxu0 0
  %5196 = vmatpush.bf16.msra.mxu0 0
  %5197 = vmatpush.bf16.msra.mxu0 0
  %5198 = vmatpush.bf16.msra.mxu0 0
  %5199 = vmatpush.bf16.msra.mxu0 0
  %5200 = vmatpush.bf16.msra.mxu0 0
  %5201 = vmatpush.bf16.msra.mxu0 %v5173
  %5202 = vmatpush.bf16.msra.mxu0 %v5136
  %5203 = vmatmul.bf16.gmra.mxu0 %v5170
  %v5204 = vpop.f32.mrf.mxu0
  %v5205 = vadd.f32 %v5191, %v5204
  %v5206 = vpop.f32.mrf.mxu0
  %v5207 = vadd.f32 %v5193, %v5206
  %5208 = vdwg.mxu0
  %5209 = vmatpush.bf16.msra.mxu0 %v5134
  %5210 = vmatpush.bf16.msra.mxu0 %v5131
  %5211 = vmatpush.bf16.msra.mxu0 %v5128
  %5212 = vmatpush.bf16.msra.mxu0 %v5125
  %5213 = vmatpush.bf16.msra.mxu0 %v5122
  %5214 = vmatpush.bf16.msra.mxu0 %v5119
  %5215 = vmatpush.bf16.msra.mxu0 %v5116
  %5216 = vmatpush.bf16.msra.mxu0 %v5113
  %5217 = vmatmul.bf16.gmra.mxu0 %v5014
  %v5218 = vpop.f32.mrf.mxu0
  %v5219 = vadd.f32 0.0, %v5218
  %v5220 = vpop.f32.mrf.mxu0
  %v5221 = vadd.f32 0.0, %v5220
  %5222 = vdwg.mxu0
  %5223 = vmatpush.bf16.msra.mxu0 0
  %5224 = vmatpush.bf16.msra.mxu0 0
  %5225 = vmatpush.bf16.msra.mxu0 0
  %5226 = vmatpush.bf16.msra.mxu0 0
  %5227 = vmatpush.bf16.msra.mxu0 0
  %5228 = vmatpush.bf16.msra.mxu0 0
  %5229 = vmatpush.bf16.msra.mxu0 %v5176
  %5230 = vmatpush.bf16.msra.mxu0 %v5137
  %5231 = vmatmul.bf16.gmra.mxu0 %v5170
  %v5232 = vpop.f32.mrf.mxu0
  %v5233 = vadd.f32 %v5219, %v5232
  %v5234 = vpop.f32.mrf.mxu0
  %v5235 = vadd.f32 %v5221, %v5234
  %5236 = vdwg.mxu0
  %5237 = vmatpush.bf16.msra.mxu0 %v5135
  %5238 = vmatpush.bf16.msra.mxu0 %v5132
  %5239 = vmatpush.bf16.msra.mxu0 %v5129
  %5240 = vmatpush.bf16.msra.mxu0 %v5126
  %5241 = vmatpush.bf16.msra.mxu0 %v5123
  %5242 = vmatpush.bf16.msra.mxu0 %v5120
  %5243 = vmatpush.bf16.msra.mxu0 %v5117
  %5244 = vmatpush.bf16.msra.mxu0 %v5114
  %5245 = vmatmul.bf16.gmra.mxu0 %v5014
  %v5246 = vpop.f32.mrf.mxu0
  %v5247 = vadd.f32 0.0, %v5246
  %v5248 = vpop.f32.mrf.mxu0
  %v5249 = vadd.f32 0.0, %v5248
  %5250 = vdwg.mxu0
  %5251 = vmatpush.bf16.msra.mxu0 0
  %5252 = vmatpush.bf16.msra.mxu0 0
  %5253 = vmatpush.bf16.msra.mxu0 0
  %5254 = vmatpush.bf16.msra.mxu0 0
  %5255 = vmatpush.bf16.msra.mxu0 0
  %5256 = vmatpush.bf16.msra.mxu0 0
  %5257 = vmatpush.bf16.msra.mxu0 %v5179
  %5258 = vmatpush.bf16.msra.mxu0 %v5138
  %5259 = vmatmul.bf16.gmra.mxu0 %v5170
  %v5260 = vpop.f32.mrf.mxu0
  %v5261 = vadd.f32 %v5247, %v5260
  %v5262 = vpop.f32.mrf.mxu0
  %v5263 = vadd.f32 %v5249, %v5262
  %5264 = vdwg.mxu0
  %s5265 = scalar_lea.vmem %s2, 1
  %v5266 = vld [vmem:[%s5265] ss:$8 sm:$0x7]
  %v5267 = vmax.f32 %v5205, 0.0
  %v5268 = vmax.f32 %v5233, 0.0
  %v5269 = vmax.f32 %v5261, 0.0
  %v5270 = vmax.f32 %v5207, 0.0
  %v5271 = vmax.f32 %v5235, 0.0
  %v5272 = vmax.f32 %v5263, 0.0
  %v5274 = vperm.slane %v5266, 0
  %v5275 = vperm.slane %v5266, 1
  %v5276 = vperm.slane %v5266, 2
  %v5280 = vmul.f32 %v5267, %v5274
  %v5281 = vmul.f32 %v5268, %v5275
  %v5282 = vmul.f32 %v5269, %v5276
  %v5283 = vmul.f32 %v5270, %v5274
  %v5284 = vmul.f32 %v5271, %v5275
  %v5285 = vmul.f32 %v5272, %v5276
  %v5286 = vpack.c.bf16 %v5281, %v5280
  %v5287 = vpack.c.bf16 %v5282, %v5282
  %v5288 = vpack.c.bf16 %v5284, %v5283
  %v5289 = vpack.c.bf16 %v5285, %v5285
  %5290 = vst [vmem:[#allocation6 + $0x4] sm:$0xff] %v5286
  %5291 = vst.msk [vmem:[#allocation6 + $0xc] sm:$0xf] %vm4824, %v5287
  %5292 = vst [vmem:[#allocation6 + $0x18] sm:$0xff] %v5288
  %5293 = vst.msk [vmem:[#allocation6 + $0x20] sm:$0xf] %vm4824, %v5289
  %v5294 = vld [vmem:[#allocation6] sm:$0xff]
  %v5295 = vld [vmem:[#allocation6 + $0x8] sm:$0xff]
  %v5296 = vld [vmem:[#allocation6 + $0x14] sm:$0xff]
  %v5297 = vld [vmem:[#allocation6 + $0x1c] sm:$0xff]
  %5302 = vrot.lane.b32.xlu0 %v5294, 19
  %v5303 = vpop.permute.xlu0 %5302
  %5304 = vrot.lane.b32.xlu0 %v5295, 19
  %v5305 = vpop.permute.xlu0 %5304
  %5306 = vrot.lane.b32.xlu0 %v5296, 19
  %v5307 = vpop.permute.xlu0 %5306
  %5308 = vrot.lane.b32.xlu0 %v5297, 19
  %v5309 = vpop.permute.xlu0 %5308
  %v5310 = vrot.slane %v5303, 4
  %v5311 = vrot.slane %v5305, 4
  %v5312 = vrot.slane %v5307, 4
  %v5313 = vrot.slane %v5309, 4
  %v5314 = vsel %vm354, %v5310, %v5311
  %v5315 = vsel %vm4837, %v5303, %v5314
  %v5316 = vsel %vm4837, %v5305, %v5311
  %v5317 = vsel %vm354, %v5312, %v5313
  %v5318 = vsel %vm4837, %v5307, %v5317
  %v5319 = vsel %vm4837, %v5309, %v5313
  %5324 = vst [vmem:[#allocation2] sm:$0xff] %v5315
  %5325 = vst.msk [vmem:[#allocation2 + $0x8] sm:$0xf] %vm4824, %v5316
  %5326 = vst [vmem:[#allocation2 + $0x24] sm:$0xff] %v5318
  %5327 = vst.msk [vmem:[#allocation2 + $0x2c] sm:$0xf] %vm4824, %v5319
  %v5328 = vld [vmem:[#allocation6] sm:$0xff]
  %v5329 = vld [vmem:[#allocation6 + $0x8] sm:$0xff]
  %v5330 = vld [vmem:[#allocation6 + $0x14] sm:$0xff]
  %v5331 = vld [vmem:[#allocation6 + $0x1c] sm:$0xff]
  %5336 = vrot.lane.b32.xlu0 %v5328, 18
  %v5337 = vpop.permute.xlu0 %5336
  %5338 = vrot.lane.b32.xlu0 %v5329, 18
  %v5339 = vpop.permute.xlu0 %5338
  %5340 = vrot.lane.b32.xlu0 %v5330, 18
  %v5341 = vpop.permute.xlu0 %5340
  %5342 = vrot.lane.b32.xlu0 %v5331, 18
  %v5343 = vpop.permute.xlu0 %5342
  %v5344 = vrot.slane %v5337, 4
  %v5345 = vrot.slane %v5339, 4
  %v5346 = vrot.slane %v5341, 4
  %v5347 = vrot.slane %v5343, 4
  %v5348 = vsel %vm354, %v5344, %v5345
  %v5349 = vsel %vm4855, %v5337, %v5348
  %v5350 = vsel %vm4855, %v5339, %v5345
  %v5351 = vsel %vm354, %v5346, %v5347
  %v5352 = vsel %vm4855, %v5341, %v5351
  %v5353 = vsel %vm4855, %v5343, %v5347
  %5358 = vst [vmem:[#allocation2 + $0x48] sm:$0xff] %v5349
  %5359 = vst.msk [vmem:[#allocation2 + $0x50] sm:$0xf] %vm4824, %v5350
  %5360 = vst [vmem:[#allocation2 + $0x6c] sm:$0xff] %v5352
  %5361 = vst.msk [vmem:[#allocation2 + $0x74] sm:$0xf] %vm4824, %v5353
  %v5362 = vld [vmem:[#allocation6] sm:$0xff]
  %v5363 = vld [vmem:[#allocation6 + $0x8] sm:$0xff]
  %v5364 = vld [vmem:[#allocation6 + $0x14] sm:$0xff]
  %v5365 = vld [vmem:[#allocation6 + $0x1c] sm:$0xff]
  %5370 = vrot.lane.b32.xlu0 %v5362, 17
  %v5371 = vpop.permute.xlu0 %5370
  %5372 = vrot.lane.b32.xlu0 %v5363, 17
  %v5373 = vpop.permute.xlu0 %5372
  %5374 = vrot.lane.b32.xlu0 %v5364, 17
  %v5375 = vpop.permute.xlu0 %5374
  %5376 = vrot.lane.b32.xlu0 %v5365, 17
  %v5377 = vpop.permute.xlu0 %5376
  %v5378 = vrot.slane %v5371, 4
  %v5379 = vrot.slane %v5373, 4
  %v5380 = vrot.slane %v5375, 4
  %v5381 = vrot.slane %v5377, 4
  %v5382 = vsel %vm354, %v5378, %v5379
  %v5383 = vsel %vm4873, %v5371, %v5382
  %v5384 = vsel %vm4873, %v5373, %v5379
  %v5385 = vsel %vm354, %v5380, %v5381
  %v5386 = vsel %vm4873, %v5375, %v5385
  %v5387 = vsel %vm4873, %v5377, %v5381
  %5392 = vst [vmem:[#allocation2 + $0x90] sm:$0xff] %v5383
  %5393 = vst.msk [vmem:[#allocation2 + $0x98] sm:$0xf] %vm4824, %v5384
  %5394 = vst [vmem:[#allocation2 + $0xb4] sm:$0xff] %v5386
  %5395 = vst.msk [vmem:[#allocation2 + $0xbc] sm:$0xf] %vm4824, %v5387
  %v5396 = vld [vmem:[#allocation6] sm:$0xff]
  %v5397 = vld [vmem:[#allocation6 + $0x8] sm:$0xff]
  %v5398 = vld [vmem:[#allocation6 + $0x14] sm:$0xff]
  %v5399 = vld [vmem:[#allocation6 + $0x1c] sm:$0xff]
  %5404 = vrot.lane.b32.xlu0 %v5396, 1
  %v5405 = vpop.permute.xlu0 %5404
  %5406 = vrot.lane.b32.xlu0 %v5397, 1
  %v5407 = vpop.permute.xlu0 %5406
  %5408 = vrot.lane.b32.xlu0 %v5398, 1
  %v5409 = vpop.permute.xlu0 %5408
  %5410 = vrot.lane.b32.xlu0 %v5399, 1
  %v5411 = vpop.permute.xlu0 %5410
  %v5412 = vrot.slane %v5405, 4
  %v5413 = vrot.slane %v5407, 4
  %v5414 = vrot.slane %v5409, 4
  %v5415 = vrot.slane %v5411, 4
  %v5416 = vsel %vm354, %v5412, %v5413
  %v5417 = vsel %vm563, %v5405, %v5416
  %v5418 = vsel %vm563, %v5407, %v5413
  %v5419 = vsel %vm354, %v5414, %v5415
  %v5420 = vsel %vm563, %v5409, %v5419
  %v5421 = vsel %vm563, %v5411, %v5415
  %5426 = vst [vmem:[#allocation2 + $0xd8] sm:$0xff] %v5417
  %5427 = vst.msk [vmem:[#allocation2 + $0xe0] sm:$0xf] %vm4824, %v5418
  %5428 = vst [vmem:[#allocation2 + $0xfc] sm:$0xff] %v5420
  %5429 = vst.msk [vmem:[#allocation2 + $0x104] sm:$0xf] %vm4824, %v5421
  %v5430 = vld [vmem:[#allocation6 + $0x4] sm:$0xff]
  %v5431 = vld [vmem:[#allocation6 + $0xc] sm:$0xf]
  %v5432 = vld [vmem:[#allocation6 + $0x18] sm:$0xff]
  %v5433 = vld [vmem:[#allocation6 + $0x20] sm:$0xf]
  %5434 = vst [vmem:[#allocation2 + $0x120] sm:$0xff] %v5430
  %5435 = vst.msk [vmem:[#allocation2 + $0x128] sm:$0xf] %vm4824, %v5431
  %5436 = vst [vmem:[#allocation2 + $0x144] sm:$0xff] %v5432
  %5437 = vst.msk [vmem:[#allocation2 + $0x14c] sm:$0xf] %vm4824, %v5433
  %v5438 = vld [vmem:[#allocation6 + $0x4] sm:$0xff]
  %v5439 = vld [vmem:[#allocation6 + $0xc] sm:$0xf]
  %v5440 = vld [vmem:[#allocation6 + $0x18] sm:$0xff]
  %v5441 = vld [vmem:[#allocation6 + $0x20] sm:$0xf]
  %5446 = vrot.lane.b32.xlu0 %v5438, 127
  %v5447 = vpop.permute.xlu0 %5446
  %5448 = vrot.lane.b32.xlu0 %v5439, 127
  %v5449 = vpop.permute.xlu0 %5448
  %5450 = vrot.lane.b32.xlu0 %v5440, 127
  %v5451 = vpop.permute.xlu0 %5450
  %5452 = vrot.lane.b32.xlu0 %v5441, 127
  %v5453 = vpop.permute.xlu0 %5452
  %v5454 = vrot.slane %v5447, 4
  %v5455 = vrot.slane %v5449, 4
  %v5456 = vrot.slane %v5451, 4
  %v5457 = vrot.slane %v5453, 4
  %v5458 = vsel %vm354, %v5454, %v5455
  %v5459 = vsel %vm665, %v5447, %v5458
  %v5460 = vsel %vm354, %v5456, %v5457
  %v5461 = vsel %vm665, %v5451, %v5460
  %5466 = vst [vmem:[#allocation2 + $0x168] sm:$0xff] %v5459
  %5467 = vst.msk [vmem:[#allocation2 + $0x170] sm:$0xf] %vm4824, %v5449
  %5468 = vst [vmem:[#allocation2 + $0x18c] sm:$0xff] %v5461
  %5469 = vst.msk [vmem:[#allocation2 + $0x194] sm:$0xf] %vm4824, %v5453
  %v5470 = vld [vmem:[#allocation6 + $0x4] sm:$0xff]
  %v5471 = vld [vmem:[#allocation6 + $0xc] sm:$0xf]
  %v5472 = vld [vmem:[#allocation6 + $0x18] sm:$0xff]
  %v5473 = vld [vmem:[#allocation6 + $0x20] sm:$0xf]
  %5478 = vrot.lane.b32.xlu0 %v5470, 111
  %v5479 = vpop.permute.xlu0 %5478
  %5480 = vrot.lane.b32.xlu0 %v5471, 111
  %v5481 = vpop.permute.xlu0 %5480
  %5482 = vrot.lane.b32.xlu0 %v5472, 111
  %v5483 = vpop.permute.xlu0 %5482
  %5484 = vrot.lane.b32.xlu0 %v5473, 111
  %v5485 = vpop.permute.xlu0 %5484
  %v5486 = vrot.slane %v5479, 4
  %v5487 = vrot.slane %v5481, 4
  %v5488 = vrot.slane %v5483, 4
  %v5489 = vrot.slane %v5485, 4
  %v5490 = vsel %vm354, %v5486, %v5487
  %v5491 = vsel %vm4928, %v5479, %v5490
  %v5492 = vsel %vm354, %v5488, %v5489
  %v5493 = vsel %vm4928, %v5483, %v5492
  %5498 = vst [vmem:[#allocation2 + $0x1b0] sm:$0xff] %v5491
  %5499 = vst.msk [vmem:[#allocation2 + $0x1b8] sm:$0xf] %vm4824, %v5481
  %5500 = vst [vmem:[#allocation2 + $0x1d4] sm:$0xff] %v5493
  %5501 = vst.msk [vmem:[#allocation2 + $0x1dc] sm:$0xf] %vm4824, %v5485
  %v5502 = vld [vmem:[#allocation6 + $0x4] sm:$0xff]
  %v5503 = vld [vmem:[#allocation6 + $0xc] sm:$0xf]
  %v5504 = vld [vmem:[#allocation6 + $0x18] sm:$0xff]
  %v5505 = vld [vmem:[#allocation6 + $0x20] sm:$0xf]
  %5510 = vrot.lane.b32.xlu0 %v5502, 110
  %v5511 = vpop.permute.xlu0 %5510
  %5512 = vrot.lane.b32.xlu0 %v5503, 110
  %v5513 = vpop.permute.xlu0 %5512
  %5514 = vrot.lane.b32.xlu0 %v5504, 110
  %v5515 = vpop.permute.xlu0 %5514
  %5516 = vrot.lane.b32.xlu0 %v5505, 110
  %v5517 = vpop.permute.xlu0 %5516
  %v5518 = vrot.slane %v5511, 4
  %v5519 = vrot.slane %v5513, 4
  %v5520 = vrot.slane %v5515, 4
  %v5521 = vrot.slane %v5517, 4
  %v5522 = vsel %vm354, %v5518, %v5519
  %v5523 = vsel %vm4945, %v5511, %v5522
  %v5524 = vsel %vm354, %v5520, %v5521
  %v5525 = vsel %vm4945, %v5515, %v5524
  %5530 = vst [vmem:[#allocation2 + $0x1f8] sm:$0xff] %v5523
  %5531 = vst.msk [vmem:[#allocation2 + $0x200] sm:$0xf] %vm4824, %v5513
  %5532 = vst [vmem:[#allocation2 + $0x21c] sm:$0xff] %v5525
  %5533 = vst.msk [vmem:[#allocation2 + $0x224] sm:$0xf] %vm4824, %v5517
  %v5534 = vld [vmem:[#allocation6 + $0x4] sm:$0xff]
  %v5535 = vld [vmem:[#allocation6 + $0xc] sm:$0xf]
  %v5536 = vld [vmem:[#allocation6 + $0x18] sm:$0xff]
  %v5537 = vld [vmem:[#allocation6 + $0x20] sm:$0xf]
  %5542 = vrot.lane.b32.xlu0 %v5534, 109
  %v5543 = vpop.permute.xlu0 %5542
  %5544 = vrot.lane.b32.xlu0 %v5535, 109
  %v5545 = vpop.permute.xlu0 %5544
  %5546 = vrot.lane.b32.xlu0 %v5536, 109
  %v5547 = vpop.permute.xlu0 %5546
  %5548 = vrot.lane.b32.xlu0 %v5537, 109
  %v5549 = vpop.permute.xlu0 %5548
  %v5550 = vrot.slane %v5543, 4
  %v5551 = vrot.slane %v5545, 4
  %v5552 = vrot.slane %v5547, 4
  %v5553 = vrot.slane %v5549, 4
  %v5554 = vsel %vm354, %v5550, %v5551
  %v5555 = vsel %vm4962, %v5543, %v5554
  %v5556 = vsel %vm354, %v5552, %v5553
  %v5557 = vsel %vm4962, %v5547, %v5556
  %5562 = vst [vmem:[#allocation2 + $0x240] sm:$0xff] %v5555
  %5563 = vst.msk [vmem:[#allocation2 + $0x248] sm:$0xf] %vm4824, %v5545
  %5564 = vst [vmem:[#allocation2 + $0x264] sm:$0xff] %v5557
  %5565 = vst.msk [vmem:[#allocation2 + $0x26c] sm:$0xf] %vm4824, %v5549
  %v5566 = vld [vmem:[%s1 + $0x48] sm:$0xff]
  %v5567 = vld [vmem:[%s1 + $0x54] sm:$0xff]
  %v5568 = vld [vmem:[#allocation2] sm:$0xff]
  %v5569 = vld [vmem:[#allocation2 + $0x8] sm:$0xf]
  %v5570 = vld [vmem:[#allocation2 + $0x24] sm:$0xff]
  %v5571 = vld [vmem:[#allocation2 + $0x2c] sm:$0xf]
  %v5572 = vld [vmem:[#allocation2 + $0x48] sm:$0xff]
  %v5573 = vld [vmem:[#allocation2 + $0x50] sm:$0xf]
  %v5574 = vld [vmem:[#allocation2 + $0x6c] sm:$0xff]
  %v5575 = vld [vmem:[#allocation2 + $0x74] sm:$0xf]
  %v5576 = vld [vmem:[#allocation2 + $0x90] sm:$0xff]
  %v5577 = vld [vmem:[#allocation2 + $0x98] sm:$0xf]
  %v5578 = vld [vmem:[#allocation2 + $0xb4] sm:$0xff]
  %v5579 = vld [vmem:[#allocation2 + $0xbc] sm:$0xf]
  %v5580 = vld [vmem:[#allocation2 + $0xd8] sm:$0xff]
  %v5581 = vld [vmem:[#allocation2 + $0xe0] sm:$0xf]
  %v5582 = vld [vmem:[#allocation2 + $0xfc] sm:$0xff]
  %v5583 = vld [vmem:[#allocation2 + $0x104] sm:$0xf]
  %v5584 = vld [vmem:[#allocation2 + $0x120] sm:$0xff]
  %v5585 = vld [vmem:[#allocation2 + $0x128] sm:$0xf]
  %v5586 = vld [vmem:[#allocation2 + $0x144] sm:$0xff]
  %v5587 = vld [vmem:[#allocation2 + $0x14c] sm:$0xf]
  %v5588 = vld [vmem:[#allocation2 + $0x168] sm:$0xff]
  %v5589 = vld [vmem:[#allocation2 + $0x170] sm:$0xf]
  %v5590 = vld [vmem:[#allocation2 + $0x18c] sm:$0xff]
  %v5591 = vld [vmem:[#allocation2 + $0x194] sm:$0xf]
  %v5592 = vld [vmem:[#allocation2 + $0x1b0] sm:$0xff]
  %v5593 = vld [vmem:[#allocation2 + $0x1b8] sm:$0xf]
  %v5594 = vld [vmem:[#allocation2 + $0x1d4] sm:$0xff]
  %v5595 = vld [vmem:[#allocation2 + $0x1dc] sm:$0xf]
  %v5596 = vld [vmem:[#allocation2 + $0x1f8] sm:$0xff]
  %v5597 = vld [vmem:[#allocation2 + $0x200] sm:$0xf]
  %v5598 = vld [vmem:[#allocation2 + $0x21c] sm:$0xff]
  %v5599 = vld [vmem:[#allocation2 + $0x224] sm:$0xf]
  %v5600 = vld [vmem:[#allocation2 + $0x240] sm:$0xff]
  %v5601 = vld [vmem:[#allocation2 + $0x248] sm:$0xf]
  %v5602 = vld [vmem:[#allocation2 + $0x264] sm:$0xff]
  %v5603 = vld [vmem:[#allocation2 + $0x26c] sm:$0xf]
  %v5604 = vld [vmem:[#allocation2 + $0x288] sm:$0x11]
  %v5605 = vld [vmem:[#allocation2 + $0x290] sm:$0x1]
  %v5608 = vunpack.c.l.b16 %v5566
  %v5609 = vunpack.c.h.b16 %v5566
  %v5610 = vunpack.c.l.b16 %v5567
  %v5611 = vunpack.c.h.b16 %v5567
  %v5612 = vpack.c.b16 %v5610, %v5608
  %v5613 = vpack.c.b16 %v5611, %v5609
  %v5653 = vunpack.c.l.b16 %v5568
  %v5654 = vunpack.c.h.b16 %v5568
  %v5655 = vunpack.c.l.b16 %v5569
  %v5656 = vunpack.c.l.b16 %v5570
  %v5657 = vunpack.c.h.b16 %v5570
  %v5658 = vunpack.c.l.b16 %v5571
  %v5659 = vunpack.c.l.b16 %v5572
  %v5660 = vunpack.c.h.b16 %v5572
  %v5661 = vunpack.c.l.b16 %v5573
  %v5662 = vunpack.c.l.b16 %v5574
  %v5663 = vunpack.c.h.b16 %v5574
  %v5664 = vunpack.c.l.b16 %v5575
  %v5665 = vunpack.c.l.b16 %v5576
  %v5666 = vunpack.c.h.b16 %v5576
  %v5667 = vunpack.c.l.b16 %v5577
  %v5668 = vunpack.c.l.b16 %v5578
  %v5669 = vunpack.c.h.b16 %v5578
  %v5670 = vunpack.c.l.b16 %v5579
  %v5671 = vunpack.c.l.b16 %v5580
  %v5672 = vunpack.c.h.b16 %v5580
  %v5673 = vunpack.c.l.b16 %v5581
  %v5674 = vunpack.c.l.b16 %v5582
  %v5675 = vunpack.c.h.b16 %v5582
  %v5676 = vunpack.c.l.b16 %v5583
  %v5677 = vunpack.c.l.b16 %v5584
  %v5678 = vunpack.c.h.b16 %v5584
  %v5679 = vunpack.c.l.b16 %v5585
  %v5680 = vunpack.c.l.b16 %v5586
  %v5681 = vunpack.c.h.b16 %v5586
  %v5682 = vunpack.c.l.b16 %v5587
  %v5683 = vunpack.c.l.b16 %v5588
  %v5684 = vunpack.c.h.b16 %v5588
  %v5685 = vunpack.c.l.b16 %v5589
  %v5686 = vunpack.c.l.b16 %v5590
  %v5687 = vunpack.c.h.b16 %v5590
  %v5688 = vunpack.c.l.b16 %v5591
  %v5689 = vunpack.c.l.b16 %v5592
  %v5690 = vunpack.c.h.b16 %v5592
  %v5691 = vunpack.c.l.b16 %v5593
  %v5692 = vunpack.c.l.b16 %v5594
  %v5693 = vunpack.c.h.b16 %v5594
  %v5694 = vunpack.c.l.b16 %v5595
  %v5695 = vunpack.c.l.b16 %v5596
  %v5696 = vunpack.c.h.b16 %v5596
  %v5697 = vunpack.c.l.b16 %v5597
  %v5698 = vunpack.c.l.b16 %v5598
  %v5699 = vunpack.c.h.b16 %v5598
  %v5700 = vunpack.c.l.b16 %v5599
  %v5701 = vunpack.c.l.b16 %v5600
  %v5702 = vunpack.c.h.b16 %v5600
  %v5703 = vunpack.c.l.b16 %v5601
  %v5704 = vunpack.c.l.b16 %v5602
  %v5705 = vunpack.c.h.b16 %v5602
  %v5706 = vunpack.c.l.b16 %v5603
  %v5707 = vunpack.c.l.b16 %v5604
  %v5708 = vunpack.c.h.b16 %v5604
  %v5709 = vunpack.c.l.b16 %v5605
  %v5710 = vpack.c.b16 %v5656, %v5653
  %v5711 = vpack.c.b16 %v5657, %v5654
  %v5712 = vpack.c.b16 %v5658, %v5655
  %v5713 = vpack.c.b16 %v5662, %v5659
  %v5714 = vpack.c.b16 %v5663, %v5660
  %v5715 = vpack.c.b16 %v5664, %v5661
  %v5716 = vpack.c.b16 %v5668, %v5665
  %v5717 = vpack.c.b16 %v5669, %v5666
  %v5718 = vpack.c.b16 %v5670, %v5667
  %v5719 = vpack.c.b16 %v5674, %v5671
  %v5720 = vpack.c.b16 %v5675, %v5672
  %v5721 = vpack.c.b16 %v5676, %v5673
  %v5722 = vpack.c.b16 %v5680, %v5677
  %v5723 = vpack.c.b16 %v5681, %v5678
  %v5724 = vpack.c.b16 %v5682, %v5679
  %v5725 = vpack.c.b16 %v5686, %v5683
  %v5726 = vpack.c.b16 %v5687, %v5684
  %v5727 = vpack.c.b16 %v5688, %v5685
  %v5728 = vpack.c.b16 %v5692, %v5689
  %v5729 = vpack.c.b16 %v5693, %v5690
  %v5730 = vpack.c.b16 %v5694, %v5691
  %v5731 = vpack.c.b16 %v5698, %v5695
  %v5732 = vpack.c.b16 %v5699, %v5696
  %v5733 = vpack.c.b16 %v5700, %v5697
  %v5734 = vpack.c.b16 %v5704, %v5701
  %v5735 = vpack.c.b16 %v5705, %v5702
  %v5736 = vpack.c.b16 %v5706, %v5703
  %v5737 = vpack.c.b16 %v5707, %v5707
  %v5738 = vpack.c.b16 %v5708, %v5708
  %v5739 = vpack.c.b16 %v5709, %v5709
  %v5768 = vsel %vm1427, %v5613, 0
  %v5771 = vand.u32 %v5737, %v1433
  %v5774 = vand.u32 %v5738, %v1433
  %v5777 = vand.u32 %v5739, %v1433
  %5779 = vmatpush.bf16.msra.mxu0 %v5731
  %5780 = vmatpush.bf16.msra.mxu0 %v5728
  %5781 = vmatpush.bf16.msra.mxu0 %v5725
  %5782 = vmatpush.bf16.msra.mxu0 %v5722
  %5783 = vmatpush.bf16.msra.mxu0 %v5719
  %5784 = vmatpush.bf16.msra.mxu0 %v5716
  %5785 = vmatpush.bf16.msra.mxu0 %v5713
  %5786 = vmatpush.bf16.msra.mxu0 %v5710
  %5787 = vmatmul.bf16.gmra.mxu0 %v5612
  %v5788 = vpop.f32.mrf.mxu0
  %v5789 = vadd.f32 0.0, %v5788
  %v5790 = vpop.f32.mrf.mxu0
  %v5791 = vadd.f32 0.0, %v5790
  %5792 = vdwg.mxu0
  %5793 = vmatpush.bf16.msra.mxu0 0
  %5794 = vmatpush.bf16.msra.mxu0 0
  %5795 = vmatpush.bf16.msra.mxu0 0
  %5796 = vmatpush.bf16.msra.mxu0 0
  %5797 = vmatpush.bf16.msra.mxu0 0
  %5798 = vmatpush.bf16.msra.mxu0 0
  %5799 = vmatpush.bf16.msra.mxu0 %v5771
  %5800 = vmatpush.bf16.msra.mxu0 %v5734
  %5801 = vmatmul.bf16.gmra.mxu0 %v5768
  %v5802 = vpop.f32.mrf.mxu0
  %v5803 = vadd.f32 %v5789, %v5802
  %v5804 = vpop.f32.mrf.mxu0
  %v5805 = vadd.f32 %v5791, %v5804
  %5806 = vdwg.mxu0
  %5807 = vmatpush.bf16.msra.mxu0 %v5732
  %5808 = vmatpush.bf16.msra.mxu0 %v5729
  %5809 = vmatpush.bf16.msra.mxu0 %v5726
  %5810 = vmatpush.bf16.msra.mxu0 %v5723
  %5811 = vmatpush.bf16.msra.mxu0 %v5720
  %5812 = vmatpush.bf16.msra.mxu0 %v5717
  %5813 = vmatpush.bf16.msra.mxu0 %v5714
  %5814 = vmatpush.bf16.msra.mxu0 %v5711
  %5815 = vmatmul.bf16.gmra.mxu0 %v5612
  %v5816 = vpop.f32.mrf.mxu0
  %v5817 = vadd.f32 0.0, %v5816
  %v5818 = vpop.f32.mrf.mxu0
  %v5819 = vadd.f32 0.0, %v5818
  %5820 = vdwg.mxu0
  %5821 = vmatpush.bf16.msra.mxu0 0
  %5822 = vmatpush.bf16.msra.mxu0 0
  %5823 = vmatpush.bf16.msra.mxu0 0
  %5824 = vmatpush.bf16.msra.mxu0 0
  %5825 = vmatpush.bf16.msra.mxu0 0
  %5826 = vmatpush.bf16.msra.mxu0 0
  %5827 = vmatpush.bf16.msra.mxu0 %v5774
  %5828 = vmatpush.bf16.msra.mxu0 %v5735
  %5829 = vmatmul.bf16.gmra.mxu0 %v5768
  %v5830 = vpop.f32.mrf.mxu0
  %v5831 = vadd.f32 %v5817, %v5830
  %v5832 = vpop.f32.mrf.mxu0
  %v5833 = vadd.f32 %v5819, %v5832
  %5834 = vdwg.mxu0
  %5835 = vmatpush.bf16.msra.mxu0 %v5733
  %5836 = vmatpush.bf16.msra.mxu0 %v5730
  %5837 = vmatpush.bf16.msra.mxu0 %v5727
  %5838 = vmatpush.bf16.msra.mxu0 %v5724
  %5839 = vmatpush.bf16.msra.mxu0 %v5721
  %5840 = vmatpush.bf16.msra.mxu0 %v5718
  %5841 = vmatpush.bf16.msra.mxu0 %v5715
  %5842 = vmatpush.bf16.msra.mxu0 %v5712
  %5843 = vmatmul.bf16.gmra.mxu0 %v5612
  %v5844 = vpop.f32.mrf.mxu0
  %v5845 = vadd.f32 0.0, %v5844
  %v5846 = vpop.f32.mrf.mxu0
  %v5847 = vadd.f32 0.0, %v5846
  %5848 = vdwg.mxu0
  %5849 = vmatpush.bf16.msra.mxu0 0
  %5850 = vmatpush.bf16.msra.mxu0 0
  %5851 = vmatpush.bf16.msra.mxu0 0
  %5852 = vmatpush.bf16.msra.mxu0 0
  %5853 = vmatpush.bf16.msra.mxu0 0
  %5854 = vmatpush.bf16.msra.mxu0 0
  %5855 = vmatpush.bf16.msra.mxu0 %v5777
  %5856 = vmatpush.bf16.msra.mxu0 %v5736
  %5857 = vmatmul.bf16.gmra.mxu0 %v5768
  %v5858 = vpop.f32.mrf.mxu0
  %v5859 = vadd.f32 %v5845, %v5858
  %v5860 = vpop.f32.mrf.mxu0
  %v5861 = vadd.f32 %v5847, %v5860
  %5862 = vdwg.mxu0
  %v5863 = vld [vmem:[%s5265] ss:$8 sm:$0x7]
  %v5864 = vmax.f32 %v5803, 0.0
  %v5865 = vmax.f32 %v5831, 0.0
  %v5866 = vmax.f32 %v5859, 0.0
  %v5867 = vmax.f32 %v5805, 0.0
  %v5868 = vmax.f32 %v5833, 0.0
  %v5869 = vmax.f32 %v5861, 0.0
  %v5871 = vperm.slane %v5863, 0
  %v5872 = vperm.slane %v5863, 1
  %v5873 = vperm.slane %v5863, 2
  %v5877 = vmul.f32 %v5864, %v5871
  %v5878 = vmul.f32 %v5865, %v5872
  %v5879 = vmul.f32 %v5866, %v5873
  %v5880 = vmul.f32 %v5867, %v5871
  %v5881 = vmul.f32 %v5868, %v5872
  %v5882 = vmul.f32 %v5869, %v5873
  %v5883 = vpack.c.bf16 %v5878, %v5877
  %v5884 = vpack.c.bf16 %v5879, %v5879
  %v5885 = vpack.c.bf16 %v5881, %v5880
  %v5886 = vpack.c.bf16 %v5882, %v5882
  %5887 = vst [vmem:[#allocation5 + $0x4] sm:$0xff] %v5883
  %5888 = vst.msk [vmem:[#allocation5 + $0xc] sm:$0xf] %vm4824, %v5884
  %5889 = vst [vmem:[#allocation5 + $0x18] sm:$0xff] %v5885
  %5890 = vst.msk [vmem:[#allocation5 + $0x20] sm:$0xf] %vm4824, %v5886
  %v5891 = vld [vmem:[#allocation5 + $0x4] sm:$0xff]
  %v5892 = vld [vmem:[#allocation5 + $0xc] sm:$0xf]
  %v5893 = vld [vmem:[#allocation5 + $0x18] sm:$0xff]
  %v5894 = vld [vmem:[#allocation5 + $0x20] sm:$0xf]
  %v5895 = vunpack.c.l.bf16 %v5891
  %v5896 = vunpack.c.h.bf16 %v5891
  %v5897 = vunpack.c.l.bf16 %v5892
  %v5898 = vunpack.c.l.bf16 %v5893
  %v5899 = vunpack.c.h.bf16 %v5893
  %v5900 = vunpack.c.l.bf16 %v5894
  %5907 = vrot.lane.b32.xlu0 %v5895, 127
  %v5908 = vpop.permute.xlu0 %5907
  %5909 = vrot.lane.b32.xlu0 %v5896, 127
  %v5910 = vpop.permute.xlu0 %5909
  %5911 = vrot.lane.b32.xlu0 %v5897, 127
  %v5912 = vpop.permute.xlu0 %5911
  %5913 = vrot.lane.b32.xlu0 %v5898, 127
  %v5914 = vpop.permute.xlu0 %5913
  %5915 = vrot.lane.b32.xlu0 %v5899, 127
  %v5916 = vpop.permute.xlu0 %5915
  %5917 = vrot.lane.b32.xlu0 %v5900, 127
  %v5918 = vpop.permute.xlu0 %5917
  %v5919 = vsel %vm3002, %v5908, %v5910
  %v5920 = vsel %vm3002, %v5910, %v5912
  %v5921 = vsel %vm3002, %v5914, %v5916
  %v5922 = vsel %vm3002, %v5916, %v5918
  %v5929 = vmax.f32 %v5895, %v5919
  %v5930 = vmax.f32 %v5896, %v5920
  %v5931 = vmax.f32 %v5897, %v5912
  %v5932 = vmax.f32 %v5898, %v5921
  %v5933 = vmax.f32 %v5899, %v5922
  %v5934 = vmax.f32 %v5900, %v5918
  %v5935 = vpack.c.bf16 %v5930, %v5929
  %v5936 = vpack.c.bf16 %v5931, %v5931
  %v5937 = vpack.c.bf16 %v5933, %v5932
  %v5938 = vpack.c.bf16 %v5934, %v5934
  %v5939 = vunpack.c.l.bf16 %v5935
  %v5940 = vunpack.c.h.bf16 %v5935
  %v5941 = vunpack.c.l.bf16 %v5936
  %v5942 = vunpack.c.l.bf16 %v5937
  %v5943 = vunpack.c.h.bf16 %v5937
  %v5944 = vunpack.c.l.bf16 %v5938
  %5951 = vrot.lane.b32.xlu0 %v5939, 110
  %v5952 = vpop.permute.xlu0 %5951
  %5953 = vrot.lane.b32.xlu0 %v5940, 110
  %v5954 = vpop.permute.xlu0 %5953
  %5955 = vrot.lane.b32.xlu0 %v5941, 110
  %v5956 = vpop.permute.xlu0 %5955
  %5957 = vrot.lane.b32.xlu0 %v5942, 110
  %v5958 = vpop.permute.xlu0 %5957
  %5959 = vrot.lane.b32.xlu0 %v5943, 110
  %v5960 = vpop.permute.xlu0 %5959
  %5961 = vrot.lane.b32.xlu0 %v5944, 110
  %v5962 = vpop.permute.xlu0 %5961
  %vm5963 = vcmask 900096
  %v5964 = vsel %vm5963, %v5952, %v5954
  %v5965 = vsel %vm5963, %v5954, %v5956
  %v5966 = vsel %vm5963, %v5958, %v5960
  %v5967 = vsel %vm5963, %v5960, %v5962
  %v5974 = vmax.f32 %v5939, %v5964
  %v5975 = vmax.f32 %v5940, %v5965
  %v5976 = vmax.f32 %v5941, %v5956
  %v5977 = vmax.f32 %v5942, %v5966
  %v5978 = vmax.f32 %v5943, %v5967
  %v5979 = vmax.f32 %v5944, %v5962
  %v5980 = vpack.c.bf16 %v5977, %v5974
  %v5981 = vpack.c.bf16 %v5978, %v5975
  %v5982 = vpack.c.bf16 %v5979, %v5976
  %v5983 = vld [vmem:[%s1 + $0x828] sm:$0xf]
  %v5984 = vld [vmem:[%s1 + $0x834] sm:$0xf]
  %v5985 = vld [vmem:[%s1 + $0x840] sm:$0xf]
  %v5986 = vld [vmem:[%s1 + $0x84c] sm:$0xf]
  %v5987 = vld [vmem:[%s1 + $0x858] sm:$0xf]
  %v5988 = vld [vmem:[%s1 + $0x864] sm:$0xf]
  %v5989 = vld [vmem:[%s1 + $0x870] sm:$0xf]
  %v5990 = vld [vmem:[%s1 + $0x87c] sm:$0xf]
  %v5991 = vld [vmem:[%s1 + $0x888] sm:$0xf]
  %v5992 = vld [vmem:[%s1 + $0x894] sm:$0xf]
  %v5993 = vld [vmem:[%s1 + $0x8a0] sm:$0xf]
  %v5994 = vld [vmem:[%s1 + $0x8ac] sm:$0xf]
  %v5995 = vld [vmem:[%s1 + $0x8b8] sm:$0xf]
  %v5996 = vld [vmem:[%s1 + $0x8c4] sm:$0xf]
  %v5997 = vld [vmem:[%s1 + $0x8d0] sm:$0xf]
  %v5998 = vld [vmem:[%s1 + $0x8dc] sm:$0xf]
  %v5999 = vld [vmem:[%s1 + $0x8e8] sm:$0xf]
  %v6000 = vld [vmem:[%s1 + $0x8f4] sm:$0xf]
  %v6001 = vld [vmem:[%s1 + $0x900] sm:$0xf]
  %v6002 = vld [vmem:[%s1 + $0x90c] sm:$0xf]
  %v6003 = vld [vmem:[%s1 + $0x918] sm:$0xf]
  %v6004 = vld [vmem:[%s1 + $0x924] sm:$0xf]
  %v6005 = vld [vmem:[%s1 + $0x930] sm:$0xf]
  %v6006 = vld [vmem:[%s1 + $0x93c] sm:$0xf]
  %v6007 = vld [vmem:[%s1 + $0x948] sm:$0xf]
  %v6008 = vld [vmem:[%s1 + $0x954] sm:$0xf]
  %v6009 = vld [vmem:[%s1 + $0x960] sm:$0xf]
  %v6010 = vld [vmem:[%s1 + $0x96c] sm:$0xf]
  %v6011 = vld [vmem:[%s1 + $0x978] sm:$0xf]
  %v6012 = vld [vmem:[%s1 + $0x984] sm:$0xf]
  %v6013 = vld [vmem:[%s1 + $0x990] sm:$0xf]
  %v6014 = vld [vmem:[%s1 + $0x99c] sm:$0xf]
  %v6015 = vld [vmem:[%s1 + $0x9a8] sm:$0xf]
  %v6016 = vld [vmem:[%s1 + $0x9b4] sm:$0xf]
  %v6017 = vld [vmem:[%s1 + $0x9c0] sm:$0xf]
  %v6018 = vld [vmem:[%s1 + $0x9cc] sm:$0xf]
  %v6055 = vunpack.c.l.b16 %v5983
  %v6056 = vunpack.c.l.b16 %v5984
  %v6057 = vunpack.c.l.b16 %v5985
  %v6058 = vunpack.c.l.b16 %v5986
  %v6059 = vunpack.c.l.b16 %v5987
  %v6060 = vunpack.c.l.b16 %v5988
  %v6061 = vunpack.c.l.b16 %v5989
  %v6062 = vunpack.c.l.b16 %v5990
  %v6063 = vunpack.c.l.b16 %v5991
  %v6064 = vunpack.c.l.b16 %v5992
  %v6065 = vunpack.c.l.b16 %v5993
  %v6066 = vunpack.c.l.b16 %v5994
  %v6067 = vunpack.c.l.b16 %v5995
  %v6068 = vunpack.c.l.b16 %v5996
  %v6069 = vunpack.c.l.b16 %v5997
  %v6070 = vunpack.c.l.b16 %v5998
  %v6071 = vunpack.c.l.b16 %v5999
  %v6072 = vunpack.c.l.b16 %v6000
  %v6073 = vunpack.c.l.b16 %v6001
  %v6074 = vunpack.c.l.b16 %v6002
  %v6075 = vunpack.c.l.b16 %v6003
  %v6076 = vunpack.c.l.b16 %v6004
  %v6077 = vunpack.c.l.b16 %v6005
  %v6078 = vunpack.c.l.b16 %v6006
  %v6079 = vunpack.c.l.b16 %v6007
  %v6080 = vunpack.c.l.b16 %v6008
  %v6081 = vunpack.c.l.b16 %v6009
  %v6082 = vunpack.c.l.b16 %v6010
  %v6083 = vunpack.c.l.b16 %v6011
  %v6084 = vunpack.c.l.b16 %v6012
  %v6085 = vunpack.c.l.b16 %v6013
  %v6086 = vunpack.c.l.b16 %v6014
  %v6087 = vunpack.c.l.b16 %v6015
  %v6088 = vunpack.c.l.b16 %v6016
  %v6089 = vunpack.c.l.b16 %v6017
  %v6090 = vunpack.c.l.b16 %v6018
  %v6091 = vpack.c.b16 %v6056, %v6055
  %v6092 = vpack.c.b16 %v6058, %v6057
  %v6093 = vpack.c.b16 %v6060, %v6059
  %v6094 = vpack.c.b16 %v6062, %v6061
  %v6095 = vpack.c.b16 %v6064, %v6063
  %v6096 = vpack.c.b16 %v6066, %v6065
  %v6097 = vpack.c.b16 %v6068, %v6067
  %v6098 = vpack.c.b16 %v6070, %v6069
  %v6099 = vpack.c.b16 %v6072, %v6071
  %v6100 = vpack.c.b16 %v6074, %v6073
  %v6101 = vpack.c.b16 %v6076, %v6075
  %v6102 = vpack.c.b16 %v6078, %v6077
  %v6103 = vpack.c.b16 %v6080, %v6079
  %v6104 = vpack.c.b16 %v6082, %v6081
  %v6105 = vpack.c.b16 %v6084, %v6083
  %v6106 = vpack.c.b16 %v6086, %v6085
  %v6107 = vpack.c.b16 %v6088, %v6087
  %v6108 = vpack.c.b16 %v6090, %v6089
  %vm6127 = vcmask 261120
  %v6129 = vsel %vm6127, %v5982, 0
  %6131 = vmatpush.bf16.msra.mxu0 %v6098
  %6132 = vmatpush.bf16.msra.mxu0 %v6097
  %6133 = vmatpush.bf16.msra.mxu0 %v6096
  %6134 = vmatpush.bf16.msra.mxu0 %v6095
  %6135 = vmatpush.bf16.msra.mxu0 %v6094
  %6136 = vmatpush.bf16.msra.mxu0 %v6093
  %6137 = vmatpush.bf16.msra.mxu0 %v6092
  %6138 = vmatpush.bf16.msra.mxu0 %v6091
  %6139 = vmatmul.bf16.gmra.mxu0 %v5980
  %v6140 = vpop.f32.mrf.mxu0
  %v6141 = vadd.f32 0.0, %v6140
  %v6142 = vpop.f32.mrf.mxu0
  %v6143 = vadd.f32 0.0, %v6142
  %6144 = vdwg.mxu0
  %6145 = vmatpush.bf16.msra.mxu0 %v6106
  %6146 = vmatpush.bf16.msra.mxu0 %v6105
  %6147 = vmatpush.bf16.msra.mxu0 %v6104
  %6148 = vmatpush.bf16.msra.mxu0 %v6103
  %6149 = vmatpush.bf16.msra.mxu0 %v6102
  %6150 = vmatpush.bf16.msra.mxu0 %v6101
  %6151 = vmatpush.bf16.msra.mxu0 %v6100
  %6152 = vmatpush.bf16.msra.mxu0 %v6099
  %6153 = vmatmul.bf16.gmra.mxu0 %v5981
  %v6154 = vpop.f32.mrf.mxu0
  %v6155 = vadd.f32 %v6141, %v6154
  %v6156 = vpop.f32.mrf.mxu0
  %v6157 = vadd.f32 %v6143, %v6156
  %6158 = vdwg.mxu0
  %6159 = vmatpush.bf16.msra.mxu0 0
  %6160 = vmatpush.bf16.msra.mxu0 0
  %6161 = vmatpush.bf16.msra.mxu0 0
  %6162 = vmatpush.bf16.msra.mxu0 0
  %6163 = vmatpush.bf16.msra.mxu0 0
  %6164 = vmatpush.bf16.msra.mxu0 0
  %6165 = vmatpush.bf16.msra.mxu0 %v6108
  %6166 = vmatpush.bf16.msra.mxu0 %v6107
  %6167 = vmatmul.bf16.gmra.mxu0 %v6129
  %v6168 = vpop.f32.mrf.mxu0
  %v6169 = vadd.f32 %v6155, %v6168
  %v6170 = vpop.f32.mrf.mxu0
  %v6171 = vadd.f32 %v6157, %v6170
  %6172 = vdwg.mxu0
  %v6173 = vpack.c.bf16 %v6169, %v6169
  %v6174 = vpack.c.bf16 %v6171, %v6171
  %vm6175 = vcmask 650240
  %6176 = vst.msk [vmem:[#allocation7 + $0x4] sm:$0xf] %vm6175, %v6173
  %6177 = vst.msk [vmem:[#allocation7 + $0x10] sm:$0xf] %vm6175, %v6174
  %v6178 = vld [vmem:[#allocation7] sm:$0xff]
  %v6179 = vld [vmem:[#allocation7 + $0xc] sm:$0xff]
  %6182 = vrot.lane.b32.xlu0 %v6178, 11
  %v6183 = vpop.permute.xlu0 %6182
  %6184 = vrot.lane.b32.xlu0 %v6179, 11
  %v6185 = vpop.permute.xlu0 %6184
  %v6186 = vrot.slane %v6183, 4
  %v6187 = vrot.slane %v6185, 4
  %vm6188 = vcmask 89088
  %v6189 = vsel %vm6188, %v6183, %v6186
  %v6190 = vsel %vm6188, %v6185, %v6187
  %6193 = vst.msk [vmem:[#allocation2] sm:$0xf] %vm6175, %v6189
  %6194 = vst.msk [vmem:[#allocation2 + $0x24] sm:$0xf] %vm6175, %v6190
  %v6195 = vld [vmem:[#allocation7] sm:$0xff]
  %v6196 = vld [vmem:[#allocation7 + $0xc] sm:$0xff]
  %6199 = vrot.lane.b32.xlu0 %v6195, 10
  %v6200 = vpop.permute.xlu0 %6199
  %6201 = vrot.lane.b32.xlu0 %v6196, 10
  %v6202 = vpop.permute.xlu0 %6201
  %v6203 = vrot.slane %v6200, 4
  %v6204 = vrot.slane %v6202, 4
  %vm6205 = vcmask 80896
  %v6206 = vsel %vm6205, %v6200, %v6203
  %v6207 = vsel %vm6205, %v6202, %v6204
  %6210 = vst.msk [vmem:[#allocation2 + $0x48] sm:$0xf] %vm6175, %v6206
  %6211 = vst.msk [vmem:[#allocation2 + $0x6c] sm:$0xf] %vm6175, %v6207
  %v6212 = vld [vmem:[#allocation7] sm:$0xff]
  %v6213 = vld [vmem:[#allocation7 + $0xc] sm:$0xff]
  %6216 = vrot.lane.b32.xlu0 %v6212, 9
  %v6217 = vpop.permute.xlu0 %6216
  %6218 = vrot.lane.b32.xlu0 %v6213, 9
  %v6219 = vpop.permute.xlu0 %6218
  %v6220 = vrot.slane %v6217, 4
  %v6221 = vrot.slane %v6219, 4
  %vm6222 = vcmask 72704
  %v6223 = vsel %vm6222, %v6217, %v6220
  %v6224 = vsel %vm6222, %v6219, %v6221
  %6227 = vst.msk [vmem:[#allocation2 + $0x90] sm:$0xf] %vm6175, %v6223
  %6228 = vst.msk [vmem:[#allocation2 + $0xb4] sm:$0xf] %vm6175, %v6224
  %v6229 = vld [vmem:[#allocation7] sm:$0xff]
  %v6230 = vld [vmem:[#allocation7 + $0xc] sm:$0xff]
  %6233 = vrot.lane.b32.xlu0 %v6229, 1
  %v6234 = vpop.permute.xlu0 %6233
  %6235 = vrot.lane.b32.xlu0 %v6230, 1
  %v6236 = vpop.permute.xlu0 %6235
  %v6237 = vrot.slane %v6234, 4
  %v6238 = vrot.slane %v6236, 4
  %v6239 = vsel %vm563, %v6234, %v6237
  %v6240 = vsel %vm563, %v6236, %v6238
  %6243 = vst.msk [vmem:[#allocation2 + $0xd8] sm:$0xf] %vm6175, %v6239
  %6244 = vst.msk [vmem:[#allocation2 + $0xfc] sm:$0xf] %vm6175, %v6240
  %v6245 = vld [vmem:[#allocation7 + $0x4] sm:$0xf]
  %v6246 = vld [vmem:[#allocation7 + $0x10] sm:$0xf]
  %6247 = vst.msk [vmem:[#allocation2 + $0x120] sm:$0xf] %vm6175, %v6245
  %6248 = vst.msk [vmem:[#allocation2 + $0x144] sm:$0xf] %vm6175, %v6246
  %v6249 = vld [vmem:[#allocation7 + $0x4] sm:$0xf]
  %v6250 = vld [vmem:[#allocation7 + $0x10] sm:$0xf]
  %6253 = vrot.lane.b32.xlu0 %v6249, 127
  %v6254 = vpop.permute.xlu0 %6253
  %6255 = vrot.lane.b32.xlu0 %v6250, 127
  %v6256 = vpop.permute.xlu0 %6255
  %6259 = vst.msk [vmem:[#allocation2 + $0x168] sm:$0xf] %vm6175, %v6254
  %6260 = vst.msk [vmem:[#allocation2 + $0x18c] sm:$0xf] %vm6175, %v6256
  %v6261 = vld [vmem:[#allocation7 + $0x4] sm:$0xf]
  %v6262 = vld [vmem:[#allocation7 + $0x10] sm:$0xf]
  %6265 = vrot.lane.b32.xlu0 %v6261, 119
  %v6266 = vpop.permute.xlu0 %6265
  %6267 = vrot.lane.b32.xlu0 %v6262, 119
  %v6268 = vpop.permute.xlu0 %6267
  %6271 = vst.msk [vmem:[#allocation2 + $0x1b0] sm:$0xf] %vm6175, %v6266
  %6272 = vst.msk [vmem:[#allocation2 + $0x1d4] sm:$0xf] %vm6175, %v6268
  %v6273 = vld [vmem:[#allocation7 + $0x4] sm:$0xf]
  %v6274 = vld [vmem:[#allocation7 + $0x10] sm:$0xf]
  %6277 = vrot.lane.b32.xlu0 %v6273, 118
  %v6278 = vpop.permute.xlu0 %6277
  %6279 = vrot.lane.b32.xlu0 %v6274, 118
  %v6280 = vpop.permute.xlu0 %6279
  %6283 = vst.msk [vmem:[#allocation2 + $0x1f8] sm:$0xf] %vm6175, %v6278
  %6284 = vst.msk [vmem:[#allocation2 + $0x21c] sm:$0xf] %vm6175, %v6280
  %v6285 = vld [vmem:[#allocation7 + $0x4] sm:$0xf]
  %v6286 = vld [vmem:[#allocation7 + $0x10] sm:$0xf]
  %6289 = vrot.lane.b32.xlu0 %v6285, 117
  %v6290 = vpop.permute.xlu0 %6289
  %6291 = vrot.lane.b32.xlu0 %v6286, 117
  %v6292 = vpop.permute.xlu0 %6291
  %6295 = vst.msk [vmem:[#allocation2 + $0x240] sm:$0xf] %vm6175, %v6290
  %6296 = vst.msk [vmem:[#allocation2 + $0x264] sm:$0xf] %vm6175, %v6292
  %v6297 = vld [vmem:[%s1 + $0x60] sm:$0xff]
  %v6298 = vld [vmem:[%s1 + $0x6c] sm:$0xff]
  %v6299 = vld [vmem:[#allocation2] sm:$0xf]
  %v6300 = vld [vmem:[#allocation2 + $0x24] sm:$0xf]
  %v6301 = vld [vmem:[#allocation2 + $0x48] sm:$0xf]
  %v6302 = vld [vmem:[#allocation2 + $0x6c] sm:$0xf]
  %v6303 = vld [vmem:[#allocation2 + $0x90] sm:$0xf]
  %v6304 = vld [vmem:[#allocation2 + $0xb4] sm:$0xf]
  %v6305 = vld [vmem:[#allocation2 + $0xd8] sm:$0xf]
  %v6306 = vld [vmem:[#allocation2 + $0xfc] sm:$0xf]
  %v6307 = vld [vmem:[#allocation2 + $0x120] sm:$0xf]
  %v6308 = vld [vmem:[#allocation2 + $0x144] sm:$0xf]
  %v6309 = vld [vmem:[#allocation2 + $0x168] sm:$0xf]
  %v6310 = vld [vmem:[#allocation2 + $0x18c] sm:$0xf]
  %v6311 = vld [vmem:[#allocation2 + $0x1b0] sm:$0xf]
  %v6312 = vld [vmem:[#allocation2 + $0x1d4] sm:$0xf]
  %v6313 = vld [vmem:[#allocation2 + $0x1f8] sm:$0xf]
  %v6314 = vld [vmem:[#allocation2 + $0x21c] sm:$0xf]
  %v6315 = vld [vmem:[#allocation2 + $0x240] sm:$0xf]
  %v6316 = vld [vmem:[#allocation2 + $0x264] sm:$0xf]
  %v6317 = vld [vmem:[#allocation2 + $0x288] sm:$0x1]
  %v6320 = vunpack.c.l.b16 %v6297
  %v6321 = vunpack.c.h.b16 %v6297
  %v6322 = vunpack.c.l.b16 %v6298
  %v6323 = vunpack.c.h.b16 %v6298
  %v6324 = vpack.c.b16 %v6322, %v6320
  %v6325 = vpack.c.b16 %v6323, %v6321
  %v6346 = vunpack.c.l.b16 %v6299
  %v6347 = vunpack.c.l.b16 %v6300
  %v6348 = vunpack.c.l.b16 %v6301
  %v6349 = vunpack.c.l.b16 %v6302
  %v6350 = vunpack.c.l.b16 %v6303
  %v6351 = vunpack.c.l.b16 %v6304
  %v6352 = vunpack.c.l.b16 %v6305
  %v6353 = vunpack.c.l.b16 %v6306
  %v6354 = vunpack.c.l.b16 %v6307
  %v6355 = vunpack.c.l.b16 %v6308
  %v6356 = vunpack.c.l.b16 %v6309
  %v6357 = vunpack.c.l.b16 %v6310
  %v6358 = vunpack.c.l.b16 %v6311
  %v6359 = vunpack.c.l.b16 %v6312
  %v6360 = vunpack.c.l.b16 %v6313
  %v6361 = vunpack.c.l.b16 %v6314
  %v6362 = vunpack.c.l.b16 %v6315
  %v6363 = vunpack.c.l.b16 %v6316
  %v6364 = vunpack.c.l.b16 %v6317
  %v6365 = vpack.c.b16 %v6347, %v6346
  %v6366 = vpack.c.b16 %v6349, %v6348
  %v6367 = vpack.c.b16 %v6351, %v6350
  %v6368 = vpack.c.b16 %v6353, %v6352
  %v6369 = vpack.c.b16 %v6355, %v6354
  %v6370 = vpack.c.b16 %v6357, %v6356
  %v6371 = vpack.c.b16 %v6359, %v6358
  %v6372 = vpack.c.b16 %v6361, %v6360
  %v6373 = vpack.c.b16 %v6363, %v6362
  %v6374 = vpack.c.b16 %v6364, %v6364
  %v6385 = vsel %vm1427, %v6325, 0
  %v6388 = vand.u32 %v6374, %v1433
  %6390 = vmatpush.bf16.msra.mxu0 %v6372
  %6391 = vmatpush.bf16.msra.mxu0 %v6371
  %6392 = vmatpush.bf16.msra.mxu0 %v6370
  %6393 = vmatpush.bf16.msra.mxu0 %v6369
  %6394 = vmatpush.bf16.msra.mxu0 %v6368
  %6395 = vmatpush.bf16.msra.mxu0 %v6367
  %6396 = vmatpush.bf16.msra.mxu0 %v6366
  %6397 = vmatpush.bf16.msra.mxu0 %v6365
  %6398 = vmatmul.bf16.gmra.mxu0 %v6324
  %v6399 = vpop.f32.mrf.mxu0
  %v6400 = vadd.f32 0.0, %v6399
  %v6401 = vpop.f32.mrf.mxu0
  %v6402 = vadd.f32 0.0, %v6401
  %6403 = vdwg.mxu0
  %6404 = vmatpush.bf16.msra.mxu0 0
  %6405 = vmatpush.bf16.msra.mxu0 0
  %6406 = vmatpush.bf16.msra.mxu0 0
  %6407 = vmatpush.bf16.msra.mxu0 0
  %6408 = vmatpush.bf16.msra.mxu0 0
  %6409 = vmatpush.bf16.msra.mxu0 0
  %6410 = vmatpush.bf16.msra.mxu0 %v6388
  %6411 = vmatpush.bf16.msra.mxu0 %v6373
  %6412 = vmatmul.bf16.gmra.mxu0 %v6385
  %v6413 = vpop.f32.mrf.mxu0
  %v6414 = vadd.f32 %v6400, %v6413
  %v6415 = vpop.f32.mrf.mxu0
  %v6416 = vadd.f32 %v6402, %v6415
  %6417 = vdwg.mxu0
  %v6418 = vld [vmem:[%s2 + $0x2] ss:$0 sm:$0xff]
  %v6419 = vmax.f32 %v6414, 0.0
  %v6420 = vmax.f32 %v6416, 0.0
  %v6421 = vmul.f32 %v6419, %v6418
  %v6422 = vmul.f32 %v6420, %v6418
  %v6423 = vpack.c.bf16 %v6421, %v6421
  %v6424 = vpack.c.bf16 %v6422, %v6422
  %6425 = vst.msk [vmem:[#allocation8 + $0x4] sm:$0xf] %vm6175, %v6423
  %6426 = vst.msk [vmem:[#allocation8 + $0x10] sm:$0xf] %vm6175, %v6424
  %v6427 = vld [vmem:[#allocation8] sm:$0xff]
  %v6428 = vld [vmem:[#allocation8 + $0xc] sm:$0xff]
  %6431 = vrot.lane.b32.xlu0 %v6427, 11
  %v6432 = vpop.permute.xlu0 %6431
  %6433 = vrot.lane.b32.xlu0 %v6428, 11
  %v6434 = vpop.permute.xlu0 %6433
  %v6435 = vrot.slane %v6432, 4
  %v6436 = vrot.slane %v6434, 4
  %v6437 = vsel %vm6188, %v6432, %v6435
  %v6438 = vsel %vm6188, %v6434, %v6436
  %6441 = vst.msk [vmem:[#allocation2] sm:$0xf] %vm6175, %v6437
  %6442 = vst.msk [vmem:[#allocation2 + $0x24] sm:$0xf] %vm6175, %v6438
  %v6443 = vld [vmem:[#allocation8] sm:$0xff]
  %v6444 = vld [vmem:[#allocation8 + $0xc] sm:$0xff]
  %6447 = vrot.lane.b32.xlu0 %v6443, 10
  %v6448 = vpop.permute.xlu0 %6447
  %6449 = vrot.lane.b32.xlu0 %v6444, 10
  %v6450 = vpop.permute.xlu0 %6449
  %v6451 = vrot.slane %v6448, 4
  %v6452 = vrot.slane %v6450, 4
  %v6453 = vsel %vm6205, %v6448, %v6451
  %v6454 = vsel %vm6205, %v6450, %v6452
  %6457 = vst.msk [vmem:[#allocation2 + $0x48] sm:$0xf] %vm6175, %v6453
  %6458 = vst.msk [vmem:[#allocation2 + $0x6c] sm:$0xf] %vm6175, %v6454
  %v6459 = vld [vmem:[#allocation8] sm:$0xff]
  %v6460 = vld [vmem:[#allocation8 + $0xc] sm:$0xff]
  %6463 = vrot.lane.b32.xlu0 %v6459, 9
  %v6464 = vpop.permute.xlu0 %6463
  %6465 = vrot.lane.b32.xlu0 %v6460, 9
  %v6466 = vpop.permute.xlu0 %6465
  %v6467 = vrot.slane %v6464, 4
  %v6468 = vrot.slane %v6466, 4
  %v6469 = vsel %vm6222, %v6464, %v6467
  %v6470 = vsel %vm6222, %v6466, %v6468
  %6473 = vst.msk [vmem:[#allocation2 + $0x90] sm:$0xf] %vm6175, %v6469
  %6474 = vst.msk [vmem:[#allocation2 + $0xb4] sm:$0xf] %vm6175, %v6470
  %v6475 = vld [vmem:[#allocation8] sm:$0xff]
  %v6476 = vld [vmem:[#allocation8 + $0xc] sm:$0xff]
  %6479 = vrot.lane.b32.xlu0 %v6475, 1
  %v6480 = vpop.permute.xlu0 %6479
  %6481 = vrot.lane.b32.xlu0 %v6476, 1
  %v6482 = vpop.permute.xlu0 %6481
  %v6483 = vrot.slane %v6480, 4
  %v6484 = vrot.slane %v6482, 4
  %v6485 = vsel %vm563, %v6480, %v6483
  %v6486 = vsel %vm563, %v6482, %v6484
  %6489 = vst.msk [vmem:[#allocation2 + $0xd8] sm:$0xf] %vm6175, %v6485
  %6490 = vst.msk [vmem:[#allocation2 + $0xfc] sm:$0xf] %vm6175, %v6486
  %v6491 = vld [vmem:[#allocation8 + $0x4] sm:$0xf]
  %v6492 = vld [vmem:[#allocation8 + $0x10] sm:$0xf]
  %6493 = vst.msk [vmem:[#allocation2 + $0x120] sm:$0xf] %vm6175, %v6491
  %6494 = vst.msk [vmem:[#allocation2 + $0x144] sm:$0xf] %vm6175, %v6492
  %v6495 = vld [vmem:[#allocation8 + $0x4] sm:$0xf]
  %v6496 = vld [vmem:[#allocation8 + $0x10] sm:$0xf]
  %6499 = vrot.lane.b32.xlu0 %v6495, 127
  %v6500 = vpop.permute.xlu0 %6499
  %6501 = vrot.lane.b32.xlu0 %v6496, 127
  %v6502 = vpop.permute.xlu0 %6501
  %6505 = vst.msk [vmem:[#allocation2 + $0x168] sm:$0xf] %vm6175, %v6500
  %6506 = vst.msk [vmem:[#allocation2 + $0x18c] sm:$0xf] %vm6175, %v6502
  %v6507 = vld [vmem:[#allocation8 + $0x4] sm:$0xf]
  %v6508 = vld [vmem:[#allocation8 + $0x10] sm:$0xf]
  %6511 = vrot.lane.b32.xlu0 %v6507, 119
  %v6512 = vpop.permute.xlu0 %6511
  %6513 = vrot.lane.b32.xlu0 %v6508, 119
  %v6514 = vpop.permute.xlu0 %6513
  %6517 = vst.msk [vmem:[#allocation2 + $0x1b0] sm:$0xf] %vm6175, %v6512
  %6518 = vst.msk [vmem:[#allocation2 + $0x1d4] sm:$0xf] %vm6175, %v6514
  %v6519 = vld [vmem:[#allocation8 + $0x4] sm:$0xf]
  %v6520 = vld [vmem:[#allocation8 + $0x10] sm:$0xf]
  %6523 = vrot.lane.b32.xlu0 %v6519, 118
  %v6524 = vpop.permute.xlu0 %6523
  %6525 = vrot.lane.b32.xlu0 %v6520, 118
  %v6526 = vpop.permute.xlu0 %6525
  %6529 = vst.msk [vmem:[#allocation2 + $0x1f8] sm:$0xf] %vm6175, %v6524
  %6530 = vst.msk [vmem:[#allocation2 + $0x21c] sm:$0xf] %vm6175, %v6526
  %v6531 = vld [vmem:[#allocation8 + $0x4] sm:$0xf]
  %v6532 = vld [vmem:[#allocation8 + $0x10] sm:$0xf]
  %6535 = vrot.lane.b32.xlu0 %v6531, 117
  %v6536 = vpop.permute.xlu0 %6535
  %6537 = vrot.lane.b32.xlu0 %v6532, 117
  %v6538 = vpop.permute.xlu0 %6537
  %6541 = vst.msk [vmem:[#allocation2 + $0x240] sm:$0xf] %vm6175, %v6536
  %6542 = vst.msk [vmem:[#allocation2 + $0x264] sm:$0xf] %vm6175, %v6538
  %v6543 = vld [vmem:[%s1 + $0x78] sm:$0xff]
  %v6544 = vld [vmem:[%s1 + $0x84] sm:$0xff]
  %v6545 = vld [vmem:[#allocation2] sm:$0xf]
  %v6546 = vld [vmem:[#allocation2 + $0x24] sm:$0xf]
  %v6547 = vld [vmem:[#allocation2 + $0x48] sm:$0xf]
  %v6548 = vld [vmem:[#allocation2 + $0x6c] sm:$0xf]
  %v6549 = vld [vmem:[#allocation2 + $0x90] sm:$0xf]
  %v6550 = vld [vmem:[#allocation2 + $0xb4] sm:$0xf]
  %v6551 = vld [vmem:[#allocation2 + $0xd8] sm:$0xf]
  %v6552 = vld [vmem:[#allocation2 + $0xfc] sm:$0xf]
  %v6553 = vld [vmem:[#allocation2 + $0x120] sm:$0xf]
  %v6554 = vld [vmem:[#allocation2 + $0x144] sm:$0xf]
  %v6555 = vld [vmem:[#allocation2 + $0x168] sm:$0xf]
  %v6556 = vld [vmem:[#allocation2 + $0x18c] sm:$0xf]
  %v6557 = vld [vmem:[#allocation2 + $0x1b0] sm:$0xf]
  %v6558 = vld [vmem:[#allocation2 + $0x1d4] sm:$0xf]
  %v6559 = vld [vmem:[#allocation2 + $0x1f8] sm:$0xf]
  %v6560 = vld [vmem:[#allocation2 + $0x21c] sm:$0xf]
  %v6561 = vld [vmem:[#allocation2 + $0x240] sm:$0xf]
  %v6562 = vld [vmem:[#allocation2 + $0x264] sm:$0xf]
  %v6563 = vld [vmem:[#allocation2 + $0x288] sm:$0x1]
  %v6566 = vunpack.c.l.b16 %v6543
  %v6567 = vunpack.c.h.b16 %v6543
  %v6568 = vunpack.c.l.b16 %v6544
  %v6569 = vunpack.c.h.b16 %v6544
  %v6570 = vpack.c.b16 %v6568, %v6566
  %v6571 = vpack.c.b16 %v6569, %v6567
  %v6592 = vunpack.c.l.b16 %v6545
  %v6593 = vunpack.c.l.b16 %v6546
  %v6594 = vunpack.c.l.b16 %v6547
  %v6595 = vunpack.c.l.b16 %v6548
  %v6596 = vunpack.c.l.b16 %v6549
  %v6597 = vunpack.c.l.b16 %v6550
  %v6598 = vunpack.c.l.b16 %v6551
  %v6599 = vunpack.c.l.b16 %v6552
  %v6600 = vunpack.c.l.b16 %v6553
  %v6601 = vunpack.c.l.b16 %v6554
  %v6602 = vunpack.c.l.b16 %v6555
  %v6603 = vunpack.c.l.b16 %v6556
  %v6604 = vunpack.c.l.b16 %v6557
  %v6605 = vunpack.c.l.b16 %v6558
  %v6606 = vunpack.c.l.b16 %v6559
  %v6607 = vunpack.c.l.b16 %v6560
  %v6608 = vunpack.c.l.b16 %v6561
  %v6609 = vunpack.c.l.b16 %v6562
  %v6610 = vunpack.c.l.b16 %v6563
  %v6611 = vpack.c.b16 %v6593, %v6592
  %v6612 = vpack.c.b16 %v6595, %v6594
  %v6613 = vpack.c.b16 %v6597, %v6596
  %v6614 = vpack.c.b16 %v6599, %v6598
  %v6615 = vpack.c.b16 %v6601, %v6600
  %v6616 = vpack.c.b16 %v6603, %v6602
  %v6617 = vpack.c.b16 %v6605, %v6604
  %v6618 = vpack.c.b16 %v6607, %v6606
  %v6619 = vpack.c.b16 %v6609, %v6608
  %v6620 = vpack.c.b16 %v6610, %v6610
  %v6631 = vsel %vm1427, %v6571, 0
  %v6634 = vand.u32 %v6620, %v1433
  %6636 = vmatpush.bf16.msra.mxu0 %v6618
  %6637 = vmatpush.bf16.msra.mxu0 %v6617
  %6638 = vmatpush.bf16.msra.mxu0 %v6616
  %6639 = vmatpush.bf16.msra.mxu0 %v6615
  %6640 = vmatpush.bf16.msra.mxu0 %v6614
  %6641 = vmatpush.bf16.msra.mxu0 %v6613
  %6642 = vmatpush.bf16.msra.mxu0 %v6612
  %6643 = vmatpush.bf16.msra.mxu0 %v6611
  %6644 = vmatmul.bf16.gmra.mxu0 %v6570
  %v6645 = vpop.f32.mrf.mxu0
  %v6646 = vadd.f32 0.0, %v6645
  %v6647 = vpop.f32.mrf.mxu0
  %v6648 = vadd.f32 0.0, %v6647
  %6649 = vdwg.mxu0
  %6650 = vmatpush.bf16.msra.mxu0 0
  %6651 = vmatpush.bf16.msra.mxu0 0
  %6652 = vmatpush.bf16.msra.mxu0 0
  %6653 = vmatpush.bf16.msra.mxu0 0
  %6654 = vmatpush.bf16.msra.mxu0 0
  %6655 = vmatpush.bf16.msra.mxu0 0
  %6656 = vmatpush.bf16.msra.mxu0 %v6634
  %6657 = vmatpush.bf16.msra.mxu0 %v6619
  %6658 = vmatmul.bf16.gmra.mxu0 %v6631
  %v6659 = vpop.f32.mrf.mxu0
  %v6660 = vadd.f32 %v6646, %v6659
  %v6661 = vpop.f32.mrf.mxu0
  %v6662 = vadd.f32 %v6648, %v6661
  %6663 = vdwg.mxu0
  %v6664 = vld [vmem:[%s2 + $0x2] ss:$0 sm:$0xff]
  %v6665 = vmax.f32 %v6660, 0.0
  %v6666 = vmax.f32 %v6662, 0.0
  %v6667 = vmul.f32 %v6665, %v6664
  %v6668 = vmul.f32 %v6666, %v6664
  %v6669 = vpack.c.bf16 %v6667, %v6667
  %v6670 = vpack.c.bf16 %v6668, %v6668
  %6671 = vst.msk [vmem:[#allocation7 + $0x4] sm:$0xf] %vm6175, %v6669
  %6672 = vst.msk [vmem:[#allocation7 + $0x10] sm:$0xf] %vm6175, %v6670
  %v6673 = vld [vmem:[#allocation7] sm:$0xff]
  %v6674 = vld [vmem:[#allocation7 + $0xc] sm:$0xff]
  %6677 = vrot.lane.b32.xlu0 %v6673, 11
  %v6678 = vpop.permute.xlu0 %6677
  %6679 = vrot.lane.b32.xlu0 %v6674, 11
  %v6680 = vpop.permute.xlu0 %6679
  %v6681 = vrot.slane %v6678, 4
  %v6682 = vrot.slane %v6680, 4
  %v6683 = vsel %vm6188, %v6678, %v6681
  %v6684 = vsel %vm6188, %v6680, %v6682
  %6687 = vst.msk [vmem:[#allocation2] sm:$0xf] %vm6175, %v6683
  %6688 = vst.msk [vmem:[#allocation2 + $0x24] sm:$0xf] %vm6175, %v6684
  %v6689 = vld [vmem:[#allocation7] sm:$0xff]
  %v6690 = vld [vmem:[#allocation7 + $0xc] sm:$0xff]
  %6693 = vrot.lane.b32.xlu0 %v6689, 10
  %v6694 = vpop.permute.xlu0 %6693
  %6695 = vrot.lane.b32.xlu0 %v6690, 10
  %v6696 = vpop.permute.xlu0 %6695
  %v6697 = vrot.slane %v6694, 4
  %v6698 = vrot.slane %v6696, 4
  %v6699 = vsel %vm6205, %v6694, %v6697
  %v6700 = vsel %vm6205, %v6696, %v6698
  %6703 = vst.msk [vmem:[#allocation2 + $0x48] sm:$0xf] %vm6175, %v6699
  %6704 = vst.msk [vmem:[#allocation2 + $0x6c] sm:$0xf] %vm6175, %v6700
  %v6705 = vld [vmem:[#allocation7] sm:$0xff]
  %v6706 = vld [vmem:[#allocation7 + $0xc] sm:$0xff]
  %6709 = vrot.lane.b32.xlu0 %v6705, 9
  %v6710 = vpop.permute.xlu0 %6709
  %6711 = vrot.lane.b32.xlu0 %v6706, 9
  %v6712 = vpop.permute.xlu0 %6711
  %v6713 = vrot.slane %v6710, 4
  %v6714 = vrot.slane %v6712, 4
  %v6715 = vsel %vm6222, %v6710, %v6713
  %v6716 = vsel %vm6222, %v6712, %v6714
  %6719 = vst.msk [vmem:[#allocation2 + $0x90] sm:$0xf] %vm6175, %v6715
  %6720 = vst.msk [vmem:[#allocation2 + $0xb4] sm:$0xf] %vm6175, %v6716
  %v6721 = vld [vmem:[#allocation7] sm:$0xff]
  %v6722 = vld [vmem:[#allocation7 + $0xc] sm:$0xff]
  %6725 = vrot.lane.b32.xlu0 %v6721, 1
  %v6726 = vpop.permute.xlu0 %6725
  %6727 = vrot.lane.b32.xlu0 %v6722, 1
  %v6728 = vpop.permute.xlu0 %6727
  %v6729 = vrot.slane %v6726, 4
  %v6730 = vrot.slane %v6728, 4
  %v6731 = vsel %vm563, %v6726, %v6729
  %v6732 = vsel %vm563, %v6728, %v6730
  %6735 = vst.msk [vmem:[#allocation2 + $0xd8] sm:$0xf] %vm6175, %v6731
  %6736 = vst.msk [vmem:[#allocation2 + $0xfc] sm:$0xf] %vm6175, %v6732
  %v6737 = vld [vmem:[#allocation7 + $0x4] sm:$0xf]
  %v6738 = vld [vmem:[#allocation7 + $0x10] sm:$0xf]
  %6739 = vst.msk [vmem:[#allocation2 + $0x120] sm:$0xf] %vm6175, %v6737
  %6740 = vst.msk [vmem:[#allocation2 + $0x144] sm:$0xf] %vm6175, %v6738
  %v6741 = vld [vmem:[#allocation7 + $0x4] sm:$0xf]
  %v6742 = vld [vmem:[#allocation7 + $0x10] sm:$0xf]
  %6745 = vrot.lane.b32.xlu0 %v6741, 127
  %v6746 = vpop.permute.xlu0 %6745
  %6747 = vrot.lane.b32.xlu0 %v6742, 127
  %v6748 = vpop.permute.xlu0 %6747
  %6751 = vst.msk [vmem:[#allocation2 + $0x168] sm:$0xf] %vm6175, %v6746
  %6752 = vst.msk [vmem:[#allocation2 + $0x18c] sm:$0xf] %vm6175, %v6748
  %v6753 = vld [vmem:[#allocation7 + $0x4] sm:$0xf]
  %v6754 = vld [vmem:[#allocation7 + $0x10] sm:$0xf]
  %6757 = vrot.lane.b32.xlu0 %v6753, 119
  %v6758 = vpop.permute.xlu0 %6757
  %6759 = vrot.lane.b32.xlu0 %v6754, 119
  %v6760 = vpop.permute.xlu0 %6759
  %6763 = vst.msk [vmem:[#allocation2 + $0x1b0] sm:$0xf] %vm6175, %v6758
  %6764 = vst.msk [vmem:[#allocation2 + $0x1d4] sm:$0xf] %vm6175, %v6760
  %v6765 = vld [vmem:[#allocation7 + $0x4] sm:$0xf]
  %v6766 = vld [vmem:[#allocation7 + $0x10] sm:$0xf]
  %6769 = vrot.lane.b32.xlu0 %v6765, 118
  %v6770 = vpop.permute.xlu0 %6769
  %6771 = vrot.lane.b32.xlu0 %v6766, 118
  %v6772 = vpop.permute.xlu0 %6771
  %6775 = vst.msk [vmem:[#allocation2 + $0x1f8] sm:$0xf] %vm6175, %v6770
  %6776 = vst.msk [vmem:[#allocation2 + $0x21c] sm:$0xf] %vm6175, %v6772
  %v6777 = vld [vmem:[#allocation7 + $0x4] sm:$0xf]
  %v6778 = vld [vmem:[#allocation7 + $0x10] sm:$0xf]
  %6781 = vrot.lane.b32.xlu0 %v6777, 117
  %v6782 = vpop.permute.xlu0 %6781
  %6783 = vrot.lane.b32.xlu0 %v6778, 117
  %v6784 = vpop.permute.xlu0 %6783
  %6787 = vst.msk [vmem:[#allocation2 + $0x240] sm:$0xf] %vm6175, %v6782
  %6788 = vst.msk [vmem:[#allocation2 + $0x264] sm:$0xf] %vm6175, %v6784
  %v6789 = vld [vmem:[%s1 + $0x90] sm:$0xff]
  %v6790 = vld [vmem:[%s1 + $0x9c] sm:$0xff]
  %v6791 = vld [vmem:[#allocation2] sm:$0xf]
  %v6792 = vld [vmem:[#allocation2 + $0x24] sm:$0xf]
  %v6793 = vld [vmem:[#allocation2 + $0x48] sm:$0xf]
  %v6794 = vld [vmem:[#allocation2 + $0x6c] sm:$0xf]
  %v6795 = vld [vmem:[#allocation2 + $0x90] sm:$0xf]
  %v6796 = vld [vmem:[#allocation2 + $0xb4] sm:$0xf]
  %v6797 = vld [vmem:[#allocation2 + $0xd8] sm:$0xf]
  %v6798 = vld [vmem:[#allocation2 + $0xfc] sm:$0xf]
  %v6799 = vld [vmem:[#allocation2 + $0x120] sm:$0xf]
  %v6800 = vld [vmem:[#allocation2 + $0x144] sm:$0xf]
  %v6801 = vld [vmem:[#allocation2 + $0x168] sm:$0xf]
  %v6802 = vld [vmem:[#allocation2 + $0x18c] sm:$0xf]
  %v6803 = vld [vmem:[#allocation2 + $0x1b0] sm:$0xf]
  %v6804 = vld [vmem:[#allocation2 + $0x1d4] sm:$0xf]
  %v6805 = vld [vmem:[#allocation2 + $0x1f8] sm:$0xf]
  %v6806 = vld [vmem:[#allocation2 + $0x21c] sm:$0xf]
  %v6807 = vld [vmem:[#allocation2 + $0x240] sm:$0xf]
  %v6808 = vld [vmem:[#allocation2 + $0x264] sm:$0xf]
  %v6809 = vld [vmem:[#allocation2 + $0x288] sm:$0x1]
  %v6812 = vunpack.c.l.b16 %v6789
  %v6813 = vunpack.c.h.b16 %v6789
  %v6814 = vunpack.c.l.b16 %v6790
  %v6815 = vunpack.c.h.b16 %v6790
  %v6816 = vpack.c.b16 %v6814, %v6812
  %v6817 = vpack.c.b16 %v6815, %v6813
  %v6838 = vunpack.c.l.b16 %v6791
  %v6839 = vunpack.c.l.b16 %v6792
  %v6840 = vunpack.c.l.b16 %v6793
  %v6841 = vunpack.c.l.b16 %v6794
  %v6842 = vunpack.c.l.b16 %v6795
  %v6843 = vunpack.c.l.b16 %v6796
  %v6844 = vunpack.c.l.b16 %v6797
  %v6845 = vunpack.c.l.b16 %v6798
  %v6846 = vunpack.c.l.b16 %v6799
  %v6847 = vunpack.c.l.b16 %v6800
  %v6848 = vunpack.c.l.b16 %v6801
  %v6849 = vunpack.c.l.b16 %v6802
  %v6850 = vunpack.c.l.b16 %v6803
  %v6851 = vunpack.c.l.b16 %v6804
  %v6852 = vunpack.c.l.b16 %v6805
  %v6853 = vunpack.c.l.b16 %v6806
  %v6854 = vunpack.c.l.b16 %v6807
  %v6855 = vunpack.c.l.b16 %v6808
  %v6856 = vunpack.c.l.b16 %v6809
  %v6857 = vpack.c.b16 %v6839, %v6838
  %v6858 = vpack.c.b16 %v6841, %v6840
  %v6859 = vpack.c.b16 %v6843, %v6842
  %v6860 = vpack.c.b16 %v6845, %v6844
  %v6861 = vpack.c.b16 %v6847, %v6846
  %v6862 = vpack.c.b16 %v6849, %v6848
  %v6863 = vpack.c.b16 %v6851, %v6850
  %v6864 = vpack.c.b16 %v6853, %v6852
  %v6865 = vpack.c.b16 %v6855, %v6854
  %v6866 = vpack.c.b16 %v6856, %v6856
  %v6877 = vsel %vm1427, %v6817, 0
  %v6880 = vand.u32 %v6866, %v1433
  %6882 = vmatpush.bf16.msra.mxu0 %v6864
  %6883 = vmatpush.bf16.msra.mxu0 %v6863
  %6884 = vmatpush.bf16.msra.mxu0 %v6862
  %6885 = vmatpush.bf16.msra.mxu0 %v6861
  %6886 = vmatpush.bf16.msra.mxu0 %v6860
  %6887 = vmatpush.bf16.msra.mxu0 %v6859
  %6888 = vmatpush.bf16.msra.mxu0 %v6858
  %6889 = vmatpush.bf16.msra.mxu0 %v6857
  %6890 = vmatmul.bf16.gmra.mxu0 %v6816
  %v6891 = vpop.f32.mrf.mxu0
  %v6892 = vadd.f32 0.0, %v6891
  %v6893 = vpop.f32.mrf.mxu0
  %v6894 = vadd.f32 0.0, %v6893
  %6895 = vdwg.mxu0
  %6896 = vmatpush.bf16.msra.mxu0 0
  %6897 = vmatpush.bf16.msra.mxu0 0
  %6898 = vmatpush.bf16.msra.mxu0 0
  %6899 = vmatpush.bf16.msra.mxu0 0
  %6900 = vmatpush.bf16.msra.mxu0 0
  %6901 = vmatpush.bf16.msra.mxu0 0
  %6902 = vmatpush.bf16.msra.mxu0 %v6880
  %6903 = vmatpush.bf16.msra.mxu0 %v6865
  %6904 = vmatmul.bf16.gmra.mxu0 %v6877
  %v6905 = vpop.f32.mrf.mxu0
  %v6906 = vadd.f32 %v6892, %v6905
  %v6907 = vpop.f32.mrf.mxu0
  %v6908 = vadd.f32 %v6894, %v6907
  %6909 = vdwg.mxu0
  %v6910 = vld [vmem:[%s2 + $0x2] ss:$0 sm:$0xff]
  %v6911 = vmax.f32 %v6906, 0.0
  %v6912 = vmax.f32 %v6908, 0.0
  %v6913 = vmul.f32 %v6911, %v6910
  %v6914 = vmul.f32 %v6912, %v6910
  %v6915 = vpack.c.bf16 %v6913, %v6913
  %v6916 = vpack.c.bf16 %v6914, %v6914
  %6917 = vst.msk [vmem:[#allocation8 + $0x4] sm:$0xf] %vm6175, %v6915
  %6918 = vst.msk [vmem:[#allocation8 + $0x10] sm:$0xf] %vm6175, %v6916
  %v6919 = vld [vmem:[#allocation8 + $0x4] sm:$0xf]
  %v6920 = vld [vmem:[#allocation8 + $0x10] sm:$0xf]
  %v6921 = vunpack.c.l.bf16 %v6919
  %v6922 = vunpack.c.l.bf16 %v6920
  %6925 = vrot.lane.b32.xlu0 %v6921, 127
  %v6926 = vpop.permute.xlu0 %6925
  %6927 = vrot.lane.b32.xlu0 %v6922, 127
  %v6928 = vpop.permute.xlu0 %6927
  %v6931 = vmax.f32 %v6921, %v6926
  %v6932 = vmax.f32 %v6922, %v6928
  %v6933 = vpack.c.bf16 %v6931, %v6931
  %v6934 = vpack.c.bf16 %v6932, %v6932
  %v6935 = vunpack.c.l.bf16 %v6933
  %v6936 = vunpack.c.l.bf16 %v6934
  %6939 = vrot.lane.b32.xlu0 %v6935, 118
  %v6940 = vpop.permute.xlu0 %6939
  %6941 = vrot.lane.b32.xlu0 %v6936, 118
  %v6942 = vpop.permute.xlu0 %6941
  %v6945 = vmax.f32 %v6935, %v6940
  %v6946 = vmax.f32 %v6936, %v6942
  %v6947 = vpack.c.bf16 %v6946, %v6945
  %v6948 = vld [vmem:[%s1 + $0x9d8] sm:$0xf]
  %v6949 = vld [vmem:[%s1 + $0x9e4] sm:$0xf]
  %v6950 = vld [vmem:[%s1 + $0x9f0] sm:$0xf]
  %v6951 = vld [vmem:[%s1 + $0x9fc] sm:$0xf]
  %v6952 = vld [vmem:[%s1 + $0xa08] sm:$0xf]
  %v6953 = vld [vmem:[%s1 + $0xa14] sm:$0xf]
  %v6954 = vld [vmem:[%s1 + $0xa20] sm:$0xf]
  %v6955 = vld [vmem:[%s1 + $0xa2c] sm:$0xf]
  %v6956 = vld [vmem:[%s1 + $0xa38] sm:$0xf]
  %v6957 = vld [vmem:[%s1 + $0xa44] sm:$0xf]
  %v6968 = vunpack.c.l.b16 %v6948
  %v6969 = vunpack.c.l.b16 %v6949
  %v6970 = vunpack.c.l.b16 %v6950
  %v6971 = vunpack.c.l.b16 %v6951
  %v6972 = vunpack.c.l.b16 %v6952
  %v6973 = vunpack.c.l.b16 %v6953
  %v6974 = vunpack.c.l.b16 %v6954
  %v6975 = vunpack.c.l.b16 %v6955
  %v6976 = vunpack.c.l.b16 %v6956
  %v6977 = vunpack.c.l.b16 %v6957
  %v6978 = vpack.c.b16 %v6969, %v6968
  %v6979 = vpack.c.b16 %v6971, %v6970
  %v6980 = vpack.c.b16 %v6973, %v6972
  %v6981 = vpack.c.b16 %v6975, %v6974
  %v6982 = vpack.c.b16 %v6977, %v6976
  %vm6988 = vcmask 654336
  %v6990 = vsel %vm6988, %v6947, 0
  %6992 = vmatpush.bf16.msra.mxu0 0
  %6993 = vmatpush.bf16.msra.mxu0 0
  %6994 = vmatpush.bf16.msra.mxu0 0
  %6995 = vmatpush.bf16.msra.mxu0 %v6982
  %6996 = vmatpush.bf16.msra.mxu0 %v6981
  %6997 = vmatpush.bf16.msra.mxu0 %v6980
  %6998 = vmatpush.bf16.msra.mxu0 %v6979
  %6999 = vmatpush.bf16.msra.mxu0 %v6978
  %7000 = vmatmul.bf16.gmra.mxu0 %v6990
  %v7001 = vpop.f32.mrf.mxu0
  %v7002 = vadd.f32 0.0, %v7001
  %v7003 = vpop.f32.mrf.mxu0
  %v7004 = vadd.f32 0.0, %v7003
  %7005 = vdwg.mxu0
  %v7006 = vpack.c.bf16 %v7002, %v7002
  %v7007 = vpack.c.bf16 %v7004, %v7004
  %vm7008 = vcmask 191488
  %7009 = vst.msk [vmem:[#allocation9 + $0x4] sm:$0xf] %vm7008, %v7006
  %7010 = vst.msk [vmem:[#allocation9 + $0x10] sm:$0xf] %vm7008, %v7007
  %v7011 = vld [vmem:[#allocation9] sm:$0xff]
  %v7012 = vld [vmem:[#allocation9 + $0xc] sm:$0xff]
  %7015 = vrot.lane.b32.xlu0 %v7011, 7
  %v7016 = vpop.permute.xlu0 %7015
  %7017 = vrot.lane.b32.xlu0 %v7012, 7
  %v7018 = vpop.permute.xlu0 %7017
  %v7019 = vrot.slane %v7016, 4
  %v7020 = vrot.slane %v7018, 4
  %vm7021 = vcmask 56320
  %v7022 = vsel %vm7021, %v7016, %v7019
  %v7023 = vsel %vm7021, %v7018, %v7020
  %7026 = vst.msk [vmem:[#allocation2] sm:$0xf] %vm7008, %v7022
  %7027 = vst.msk [vmem:[#allocation2 + $0x24] sm:$0xf] %vm7008, %v7023
  %v7028 = vld [vmem:[#allocation9] sm:$0xff]
  %v7029 = vld [vmem:[#allocation9 + $0xc] sm:$0xff]
  %7032 = vrot.lane.b32.xlu0 %v7028, 6
  %v7033 = vpop.permute.xlu0 %7032
  %7034 = vrot.lane.b32.xlu0 %v7029, 6
  %v7035 = vpop.permute.xlu0 %7034
  %v7036 = vrot.slane %v7033, 4
  %v7037 = vrot.slane %v7035, 4
  %vm7038 = vcmask 48128
  %v7039 = vsel %vm7038, %v7033, %v7036
  %v7040 = vsel %vm7038, %v7035, %v7037
  %7043 = vst.msk [vmem:[#allocation2 + $0x48] sm:$0xf] %vm7008, %v7039
  %7044 = vst.msk [vmem:[#allocation2 + $0x6c] sm:$0xf] %vm7008, %v7040
  %v7045 = vld [vmem:[#allocation9] sm:$0xff]
  %v7046 = vld [vmem:[#allocation9 + $0xc] sm:$0xff]
  %7049 = vrot.lane.b32.xlu0 %v7045, 5
  %v7050 = vpop.permute.xlu0 %7049
  %7051 = vrot.lane.b32.xlu0 %v7046, 5
  %v7052 = vpop.permute.xlu0 %7051
  %v7053 = vrot.slane %v7050, 4
  %v7054 = vrot.slane %v7052, 4
  %vm7055 = vcmask 39936
  %v7056 = vsel %vm7055, %v7050, %v7053
  %v7057 = vsel %vm7055, %v7052, %v7054
  %7060 = vst.msk [vmem:[#allocation2 + $0x90] sm:$0xf] %vm7008, %v7056
  %7061 = vst.msk [vmem:[#allocation2 + $0xb4] sm:$0xf] %vm7008, %v7057
  %v7062 = vld [vmem:[#allocation9] sm:$0xff]
  %v7063 = vld [vmem:[#allocation9 + $0xc] sm:$0xff]
  %7066 = vrot.lane.b32.xlu0 %v7062, 1
  %v7067 = vpop.permute.xlu0 %7066
  %7068 = vrot.lane.b32.xlu0 %v7063, 1
  %v7069 = vpop.permute.xlu0 %7068
  %v7070 = vrot.slane %v7067, 4
  %v7071 = vrot.slane %v7069, 4
  %v7072 = vsel %vm563, %v7067, %v7070
  %v7073 = vsel %vm563, %v7069, %v7071
  %7076 = vst.msk [vmem:[#allocation2 + $0xd8] sm:$0xf] %vm7008, %v7072
  %7077 = vst.msk [vmem:[#allocation2 + $0xfc] sm:$0xf] %vm7008, %v7073
  %v7078 = vld [vmem:[#allocation9 + $0x4] sm:$0xf]
  %v7079 = vld [vmem:[#allocation9 + $0x10] sm:$0xf]
  %7080 = vst.msk [vmem:[#allocation2 + $0x120] sm:$0xf] %vm7008, %v7078
  %7081 = vst.msk [vmem:[#allocation2 + $0x144] sm:$0xf] %vm7008, %v7079
  %v7082 = vld [vmem:[#allocation9 + $0x4] sm:$0xf]
  %v7083 = vld [vmem:[#allocation9 + $0x10] sm:$0xf]
  %7086 = vrot.lane.b32.xlu0 %v7082, 127
  %v7087 = vpop.permute.xlu0 %7086
  %7088 = vrot.lane.b32.xlu0 %v7083, 127
  %v7089 = vpop.permute.xlu0 %7088
  %7092 = vst.msk [vmem:[#allocation2 + $0x168] sm:$0xf] %vm7008, %v7087
  %7093 = vst.msk [vmem:[#allocation2 + $0x18c] sm:$0xf] %vm7008, %v7089
  %v7094 = vld [vmem:[#allocation9 + $0x4] sm:$0xf]
  %v7095 = vld [vmem:[#allocation9 + $0x10] sm:$0xf]
  %7098 = vrot.lane.b32.xlu0 %v7094, 123
  %v7099 = vpop.permute.xlu0 %7098
  %7100 = vrot.lane.b32.xlu0 %v7095, 123
  %v7101 = vpop.permute.xlu0 %7100
  %7104 = vst.msk [vmem:[#allocation2 + $0x1b0] sm:$0xf] %vm7008, %v7099
  %7105 = vst.msk [vmem:[#allocation2 + $0x1d4] sm:$0xf] %vm7008, %v7101
  %v7106 = vld [vmem:[#allocation9 + $0x4] sm:$0xf]
  %v7107 = vld [vmem:[#allocation9 + $0x10] sm:$0xf]
  %7110 = vrot.lane.b32.xlu0 %v7106, 122
  %v7111 = vpop.permute.xlu0 %7110
  %7112 = vrot.lane.b32.xlu0 %v7107, 122
  %v7113 = vpop.permute.xlu0 %7112
  %7116 = vst.msk [vmem:[#allocation2 + $0x1f8] sm:$0xf] %vm7008, %v7111
  %7117 = vst.msk [vmem:[#allocation2 + $0x21c] sm:$0xf] %vm7008, %v7113
  %v7118 = vld [vmem:[#allocation9 + $0x4] sm:$0xf]
  %v7119 = vld [vmem:[#allocation9 + $0x10] sm:$0xf]
  %7122 = vrot.lane.b32.xlu0 %v7118, 121
  %v7123 = vpop.permute.xlu0 %7122
  %7124 = vrot.lane.b32.xlu0 %v7119, 121
  %v7125 = vpop.permute.xlu0 %7124
  %7128 = vst.msk [vmem:[#allocation2 + $0x240] sm:$0xf] %vm7008, %v7123
  %7129 = vst.msk [vmem:[#allocation2 + $0x264] sm:$0xf] %vm7008, %v7125
  %v7130 = vld [vmem:[%s1 + $0xa8] sm:$0xff]
  %v7131 = vld [vmem:[%s1 + $0xb4] sm:$0xff]
  %v7132 = vld [vmem:[%s1 + $0xc0] sm:$0xff]
  %v7133 = vld [vmem:[%s1 + $0xcc] sm:$0xff]
  %v7134 = vld [vmem:[#allocation2] sm:$0xf]
  %v7135 = vld [vmem:[#allocation2 + $0x24] sm:$0xf]
  %v7136 = vld [vmem:[#allocation2 + $0x48] sm:$0xf]
  %v7137 = vld [vmem:[#allocation2 + $0x6c] sm:$0xf]
  %v7138 = vld [vmem:[#allocation2 + $0x90] sm:$0xf]
  %v7139 = vld [vmem:[#allocation2 + $0xb4] sm:$0xf]
  %v7140 = vld [vmem:[#allocation2 + $0xd8] sm:$0xf]
  %v7141 = vld [vmem:[#allocation2 + $0xfc] sm:$0xf]
  %v7142 = vld [vmem:[#allocation2 + $0x120] sm:$0xf]
  %v7143 = vld [vmem:[#allocation2 + $0x144] sm:$0xf]
  %v7144 = vld [vmem:[#allocation2 + $0x168] sm:$0xf]
  %v7145 = vld [vmem:[#allocation2 + $0x18c] sm:$0xf]
  %v7146 = vld [vmem:[#allocation2 + $0x1b0] sm:$0xf]
  %v7147 = vld [vmem:[#allocation2 + $0x1d4] sm:$0xf]
  %v7148 = vld [vmem:[#allocation2 + $0x1f8] sm:$0xf]
  %v7149 = vld [vmem:[#allocation2 + $0x21c] sm:$0xf]
  %v7150 = vld [vmem:[#allocation2 + $0x240] sm:$0xf]
  %v7151 = vld [vmem:[#allocation2 + $0x264] sm:$0xf]
  %v7152 = vld [vmem:[#allocation2 + $0x288] sm:$0x1]
  %v7157 = vunpack.c.l.b16 %v7130
  %v7158 = vunpack.c.h.b16 %v7130
  %v7159 = vunpack.c.l.b16 %v7131
  %v7160 = vunpack.c.h.b16 %v7131
  %v7161 = vunpack.c.l.b16 %v7132
  %v7162 = vunpack.c.h.b16 %v7132
  %v7163 = vunpack.c.l.b16 %v7133
  %v7164 = vunpack.c.h.b16 %v7133
  %v7165 = vpack.c.b16 %v7159, %v7157
  %v7166 = vpack.c.b16 %v7160, %v7158
  %v7167 = vpack.c.b16 %v7163, %v7161
  %v7168 = vpack.c.b16 %v7164, %v7162
  %v7190 = vunpack.c.l.b16 %v7134
  %v7191 = vunpack.c.l.b16 %v7135
  %v7192 = vunpack.c.l.b16 %v7136
  %v7193 = vunpack.c.l.b16 %v7137
  %v7194 = vunpack.c.l.b16 %v7138
  %v7195 = vunpack.c.l.b16 %v7139
  %v7196 = vunpack.c.l.b16 %v7140
  %v7197 = vunpack.c.l.b16 %v7141
  %v7198 = vunpack.c.l.b16 %v7142
  %v7199 = vunpack.c.l.b16 %v7143
  %v7200 = vunpack.c.l.b16 %v7144
  %v7201 = vunpack.c.l.b16 %v7145
  %v7202 = vunpack.c.l.b16 %v7146
  %v7203 = vunpack.c.l.b16 %v7147
  %v7204 = vunpack.c.l.b16 %v7148
  %v7205 = vunpack.c.l.b16 %v7149
  %v7206 = vunpack.c.l.b16 %v7150
  %v7207 = vunpack.c.l.b16 %v7151
  %v7208 = vunpack.c.l.b16 %v7152
  %v7209 = vpack.c.b16 %v7191, %v7190
  %v7210 = vpack.c.b16 %v7193, %v7192
  %v7211 = vpack.c.b16 %v7195, %v7194
  %v7212 = vpack.c.b16 %v7197, %v7196
  %v7213 = vpack.c.b16 %v7199, %v7198
  %v7214 = vpack.c.b16 %v7201, %v7200
  %v7215 = vpack.c.b16 %v7203, %v7202
  %v7216 = vpack.c.b16 %v7205, %v7204
  %v7217 = vpack.c.b16 %v7207, %v7206
  %v7218 = vpack.c.b16 %v7208, %v7208
  %v7229 = vsel %vm1427, %v7166, 0
  %v7232 = vsel %vm1427, %v7168, 0
  %v7235 = vand.u32 %v7218, %v1433
  %7237 = vmatpush.bf16.msra.mxu0 %v7216
  %7238 = vmatpush.bf16.msra.mxu0 %v7215
  %7239 = vmatpush.bf16.msra.mxu0 %v7214
  %7240 = vmatpush.bf16.msra.mxu0 %v7213
  %7241 = vmatpush.bf16.msra.mxu0 %v7212
  %7242 = vmatpush.bf16.msra.mxu0 %v7211
  %7243 = vmatpush.bf16.msra.mxu0 %v7210
  %7244 = vmatpush.bf16.msra.mxu0 %v7209
  %7245 = vmatmul.bf16.gmra.mxu0 %v7165
  %v7246 = vpop.f32.mrf.mxu0
  %v7247 = vadd.f32 0.0, %v7246
  %v7248 = vpop.f32.mrf.mxu0
  %v7249 = vadd.f32 0.0, %v7248
  %7250 = vmatmul.bf16.gmra.mxu0 %v7167
  %v7251 = vpop.f32.mrf.mxu0
  %v7252 = vadd.f32 0.0, %v7251
  %v7253 = vpop.f32.mrf.mxu0
  %v7254 = vadd.f32 0.0, %v7253
  %7255 = vdwg.mxu0
  %7256 = vmatpush.bf16.msra.mxu0 0
  %7257 = vmatpush.bf16.msra.mxu0 0
  %7258 = vmatpush.bf16.msra.mxu0 0
  %7259 = vmatpush.bf16.msra.mxu0 0
  %7260 = vmatpush.bf16.msra.mxu0 0
  %7261 = vmatpush.bf16.msra.mxu0 0
  %7262 = vmatpush.bf16.msra.mxu0 %v7235
  %7263 = vmatpush.bf16.msra.mxu0 %v7217
  %7264 = vmatmul.bf16.gmra.mxu0 %v7229
  %v7265 = vpop.f32.mrf.mxu0
  %v7266 = vadd.f32 %v7247, %v7265
  %v7267 = vpop.f32.mrf.mxu0
  %v7268 = vadd.f32 %v7249, %v7267
  %7269 = vmatmul.bf16.gmra.mxu0 %v7232
  %v7270 = vpop.f32.mrf.mxu0
  %v7271 = vadd.f32 %v7252, %v7270
  %v7272 = vpop.f32.mrf.mxu0
  %v7273 = vadd.f32 %v7254, %v7272
  %7274 = vdwg.mxu0
  %v7275 = vld [vmem:[%s2 + $0x3] ss:$0 sm:$0xff]
  %v7276 = vmax.f32 %v7266, 0.0
  %v7277 = vmax.f32 %v7268, 0.0
  %v7278 = vmax.f32 %v7271, 0.0
  %v7279 = vmax.f32 %v7273, 0.0
  %v7280 = vmul.f32 %v7276, %v7275
  %v7281 = vmul.f32 %v7277, %v7275
  %v7282 = vmul.f32 %v7278, %v7275
  %v7283 = vmul.f32 %v7279, %v7275
  %v7284 = vpack.c.bf16 %v7280, %v7280
  %v7285 = vpack.c.bf16 %v7281, %v7281
  %v7286 = vpack.c.bf16 %v7282, %v7282
  %v7287 = vpack.c.bf16 %v7283, %v7283
  %7288 = vst.msk [vmem:[#allocation10 + $0x4] sm:$0xf] %vm7008, %v7284
  %7289 = vst.msk [vmem:[#allocation10 + $0x10] sm:$0xf] %vm7008, %v7285
  %7290 = vst.msk [vmem:[#allocation10 + $0x1c] sm:$0xf] %vm7008, %v7286
  %7291 = vst.msk [vmem:[#allocation10 + $0x28] sm:$0xf] %vm7008, %v7287
  %v7292 = vld [vmem:[#allocation10] sm:$0xff]
  %v7293 = vld [vmem:[#allocation10 + $0xc] sm:$0xff]
  %v7294 = vld [vmem:[#allocation10 + $0x18] sm:$0xff]
  %v7295 = vld [vmem:[#allocation10 + $0x24] sm:$0xff]
  %7300 = vrot.lane.b32.xlu0 %v7292, 7
  %v7301 = vpop.permute.xlu0 %7300
  %7302 = vrot.lane.b32.xlu0 %v7293, 7
  %v7303 = vpop.permute.xlu0 %7302
  %7304 = vrot.lane.b32.xlu0 %v7294, 7
  %v7305 = vpop.permute.xlu0 %7304
  %7306 = vrot.lane.b32.xlu0 %v7295, 7
  %v7307 = vpop.permute.xlu0 %7306
  %v7308 = vrot.slane %v7301, 4
  %v7309 = vrot.slane %v7303, 4
  %v7310 = vrot.slane %v7305, 4
  %v7311 = vrot.slane %v7307, 4
  %v7312 = vsel %vm7021, %v7301, %v7308
  %v7313 = vsel %vm7021, %v7303, %v7309
  %v7314 = vsel %vm7021, %v7305, %v7310
  %v7315 = vsel %vm7021, %v7307, %v7311
  %7320 = vst.msk [vmem:[#allocation2] sm:$0xf] %vm7008, %v7312
  %7321 = vst.msk [vmem:[#allocation2 + $0x24] sm:$0xf] %vm7008, %v7313
  %7322 = vst.msk [vmem:[#allocation2 + $0x48] sm:$0xf] %vm7008, %v7314
  %7323 = vst.msk [vmem:[#allocation2 + $0x6c] sm:$0xf] %vm7008, %v7315
  %v7324 = vld [vmem:[#allocation10] sm:$0xff]
  %v7325 = vld [vmem:[#allocation10 + $0xc] sm:$0xff]
  %v7326 = vld [vmem:[#allocation10 + $0x18] sm:$0xff]
  %v7327 = vld [vmem:[#allocation10 + $0x24] sm:$0xff]
  %7332 = vrot.lane.b32.xlu0 %v7324, 6
  %v7333 = vpop.permute.xlu0 %7332
  %7334 = vrot.lane.b32.xlu0 %v7325, 6
  %v7335 = vpop.permute.xlu0 %7334
  %7336 = vrot.lane.b32.xlu0 %v7326, 6
  %v7337 = vpop.permute.xlu0 %7336
  %7338 = vrot.lane.b32.xlu0 %v7327, 6
  %v7339 = vpop.permute.xlu0 %7338
  %v7340 = vrot.slane %v7333, 4
  %v7341 = vrot.slane %v7335, 4
  %v7342 = vrot.slane %v7337, 4
  %v7343 = vrot.slane %v7339, 4
  %v7344 = vsel %vm7038, %v7333, %v7340
  %v7345 = vsel %vm7038, %v7335, %v7341
  %v7346 = vsel %vm7038, %v7337, %v7342
  %v7347 = vsel %vm7038, %v7339, %v7343
  %7352 = vst.msk [vmem:[#allocation2 + $0x90] sm:$0xf] %vm7008, %v7344
  %7353 = vst.msk [vmem:[#allocation2 + $0xb4] sm:$0xf] %vm7008, %v7345
  %7354 = vst.msk [vmem:[#allocation2 + $0xd8] sm:$0xf] %vm7008, %v7346
  %7355 = vst.msk [vmem:[#allocation2 + $0xfc] sm:$0xf] %vm7008, %v7347
  %v7356 = vld [vmem:[#allocation10] sm:$0xff]
  %v7357 = vld [vmem:[#allocation10 + $0xc] sm:$0xff]
  %v7358 = vld [vmem:[#allocation10 + $0x18] sm:$0xff]
  %v7359 = vld [vmem:[#allocation10 + $0x24] sm:$0xff]
  %7364 = vrot.lane.b32.xlu0 %v7356, 5
  %v7365 = vpop.permute.xlu0 %7364
  %7366 = vrot.lane.b32.xlu0 %v7357, 5
  %v7367 = vpop.permute.xlu0 %7366
  %7368 = vrot.lane.b32.xlu0 %v7358, 5
  %v7369 = vpop.permute.xlu0 %7368
  %7370 = vrot.lane.b32.xlu0 %v7359, 5
  %v7371 = vpop.permute.xlu0 %7370
  %v7372 = vrot.slane %v7365, 4
  %v7373 = vrot.slane %v7367, 4
  %v7374 = vrot.slane %v7369, 4
  %v7375 = vrot.slane %v7371, 4
  %v7376 = vsel %vm7055, %v7365, %v7372
  %v7377 = vsel %vm7055, %v7367, %v7373
  %v7378 = vsel %vm7055, %v7369, %v7374
  %v7379 = vsel %vm7055, %v7371, %v7375
  %7384 = vst.msk [vmem:[#allocation2 + $0x120] sm:$0xf] %vm7008, %v7376
  %7385 = vst.msk [vmem:[#allocation2 + $0x144] sm:$0xf] %vm7008, %v7377
  %7386 = vst.msk [vmem:[#allocation2 + $0x168] sm:$0xf] %vm7008, %v7378
  %7387 = vst.msk [vmem:[#allocation2 + $0x18c] sm:$0xf] %vm7008, %v7379
  %v7388 = vld [vmem:[#allocation10] sm:$0xff]
  %v7389 = vld [vmem:[#allocation10 + $0xc] sm:$0xff]
  %v7390 = vld [vmem:[#allocation10 + $0x18] sm:$0xff]
  %v7391 = vld [vmem:[#allocation10 + $0x24] sm:$0xff]
  %7396 = vrot.lane.b32.xlu0 %v7388, 1
  %v7397 = vpop.permute.xlu0 %7396
  %7398 = vrot.lane.b32.xlu0 %v7389, 1
  %v7399 = vpop.permute.xlu0 %7398
  %7400 = vrot.lane.b32.xlu0 %v7390, 1
  %v7401 = vpop.permute.xlu0 %7400
  %7402 = vrot.lane.b32.xlu0 %v7391, 1
  %v7403 = vpop.permute.xlu0 %7402
  %v7404 = vrot.slane %v7397, 4
  %v7405 = vrot.slane %v7399, 4
  %v7406 = vrot.slane %v7401, 4
  %v7407 = vrot.slane %v7403, 4
  %v7408 = vsel %vm563, %v7397, %v7404
  %v7409 = vsel %vm563, %v7399, %v7405
  %v7410 = vsel %vm563, %v7401, %v7406
  %v7411 = vsel %vm563, %v7403, %v7407
  %7416 = vst.msk [vmem:[#allocation2 + $0x1b0] sm:$0xf] %vm7008, %v7408
  %7417 = vst.msk [vmem:[#allocation2 + $0x1d4] sm:$0xf] %vm7008, %v7409
  %7418 = vst.msk [vmem:[#allocation2 + $0x1f8] sm:$0xf] %vm7008, %v7410
  %7419 = vst.msk [vmem:[#allocation2 + $0x21c] sm:$0xf] %vm7008, %v7411
  %v7420 = vld [vmem:[#allocation10 + $0x4] sm:$0xf]
  %v7421 = vld [vmem:[#allocation10 + $0x10] sm:$0xf]
  %v7422 = vld [vmem:[#allocation10 + $0x1c] sm:$0xf]
  %v7423 = vld [vmem:[#allocation10 + $0x28] sm:$0xf]
  %7424 = vst.msk [vmem:[#allocation2 + $0x240] sm:$0xf] %vm7008, %v7420
  %7425 = vst.msk [vmem:[#allocation2 + $0x264] sm:$0xf] %vm7008, %v7421
  %7426 = vst.msk [vmem:[#allocation2 + $0x288] sm:$0xf] %vm7008, %v7422
  %7427 = vst.msk [vmem:[#allocation2 + $0x2ac] sm:$0xf] %vm7008, %v7423
  %v7428 = vld [vmem:[#allocation10 + $0x4] sm:$0xf]
  %v7429 = vld [vmem:[#allocation10 + $0x10] sm:$0xf]
  %v7430 = vld [vmem:[#allocation10 + $0x1c] sm:$0xf]
  %v7431 = vld [vmem:[#allocation10 + $0x28] sm:$0xf]
  %7436 = vrot.lane.b32.xlu0 %v7428, 127
  %v7437 = vpop.permute.xlu0 %7436
  %7438 = vrot.lane.b32.xlu0 %v7429, 127
  %v7439 = vpop.permute.xlu0 %7438
  %7440 = vrot.lane.b32.xlu0 %v7430, 127
  %v7441 = vpop.permute.xlu0 %7440
  %7442 = vrot.lane.b32.xlu0 %v7431, 127
  %v7443 = vpop.permute.xlu0 %7442
  %7448 = vst.msk [vmem:[#allocation2 + $0x2d0] sm:$0xf] %vm7008, %v7437
  %7449 = vst.msk [vmem:[#allocation2 + $0x2f4] sm:$0xf] %vm7008, %v7439
  %7450 = vst.msk [vmem:[#allocation2 + $0x318] sm:$0xf] %vm7008, %v7441
  %7451 = vst.msk [vmem:[#allocation2 + $0x33c] sm:$0xf] %vm7008, %v7443
  %v7452 = vld [vmem:[#allocation10 + $0x4] sm:$0xf]
  %v7453 = vld [vmem:[#allocation10 + $0x10] sm:$0xf]
  %v7454 = vld [vmem:[#allocation10 + $0x1c] sm:$0xf]
  %v7455 = vld [vmem:[#allocation10 + $0x28] sm:$0xf]
  %7460 = vrot.lane.b32.xlu0 %v7452, 123
  %v7461 = vpop.permute.xlu0 %7460
  %7462 = vrot.lane.b32.xlu0 %v7453, 123
  %v7463 = vpop.permute.xlu0 %7462
  %7464 = vrot.lane.b32.xlu0 %v7454, 123
  %v7465 = vpop.permute.xlu0 %7464
  %7466 = vrot.lane.b32.xlu0 %v7455, 123
  %v7467 = vpop.permute.xlu0 %7466
  %7472 = vst.msk [vmem:[#allocation2 + $0x360] sm:$0xf] %vm7008, %v7461
  %7473 = vst.msk [vmem:[#allocation2 + $0x384] sm:$0xf] %vm7008, %v7463
  %7474 = vst.msk [vmem:[#allocation2 + $0x3a8] sm:$0xf] %vm7008, %v7465
  %7475 = vst.msk [vmem:[#allocation2 + $0x3cc] sm:$0xf] %vm7008, %v7467
  %v7476 = vld [vmem:[#allocation10 + $0x4] sm:$0xf]
  %v7477 = vld [vmem:[#allocation10 + $0x10] sm:$0xf]
  %v7478 = vld [vmem:[#allocation10 + $0x1c] sm:$0xf]
  %v7479 = vld [vmem:[#allocation10 + $0x28] sm:$0xf]
  %7484 = vrot.lane.b32.xlu0 %v7476, 122
  %v7485 = vpop.permute.xlu0 %7484
  %7486 = vrot.lane.b32.xlu0 %v7477, 122
  %v7487 = vpop.permute.xlu0 %7486
  %7488 = vrot.lane.b32.xlu0 %v7478, 122
  %v7489 = vpop.permute.xlu0 %7488
  %7490 = vrot.lane.b32.xlu0 %v7479, 122
  %v7491 = vpop.permute.xlu0 %7490
  %7496 = vst.msk [vmem:[#allocation2 + $0x3f0] sm:$0xf] %vm7008, %v7485
  %7497 = vst.msk [vmem:[#allocation2 + $0x414] sm:$0xf] %vm7008, %v7487
  %7498 = vst.msk [vmem:[#allocation2 + $0x438] sm:$0xf] %vm7008, %v7489
  %7499 = vst.msk [vmem:[#allocation2 + $0x45c] sm:$0xf] %vm7008, %v7491
  %v7500 = vld [vmem:[#allocation10 + $0x4] sm:$0xf]
  %v7501 = vld [vmem:[#allocation10 + $0x10] sm:$0xf]
  %v7502 = vld [vmem:[#allocation10 + $0x1c] sm:$0xf]
  %v7503 = vld [vmem:[#allocation10 + $0x28] sm:$0xf]
  %7508 = vrot.lane.b32.xlu0 %v7500, 121
  %v7509 = vpop.permute.xlu0 %7508
  %7510 = vrot.lane.b32.xlu0 %v7501, 121
  %v7511 = vpop.permute.xlu0 %7510
  %7512 = vrot.lane.b32.xlu0 %v7502, 121
  %v7513 = vpop.permute.xlu0 %7512
  %7514 = vrot.lane.b32.xlu0 %v7503, 121
  %v7515 = vpop.permute.xlu0 %7514
  %7520 = vst.msk [vmem:[#allocation2 + $0x480] sm:$0xf] %vm7008, %v7509
  %7521 = vst.msk [vmem:[#allocation2 + $0x4a4] sm:$0xf] %vm7008, %v7511
  %7522 = vst.msk [vmem:[#allocation2 + $0x4c8] sm:$0xf] %vm7008, %v7513
  %7523 = vst.msk [vmem:[#allocation2 + $0x4ec] sm:$0xf] %vm7008, %v7515
  %v7524 = vld [vmem:[%s1 + $0xd8] sm:$0xff]
  %v7525 = vld [vmem:[%s1 + $0xe0] sm:$0xf]
  %v7526 = vld [vmem:[%s1 + $0xe4] sm:$0xff]
  %v7527 = vld [vmem:[%s1 + $0xec] sm:$0xf]
  %v7528 = vld [vmem:[%s1 + $0xf0] sm:$0xff]
  %v7529 = vld [vmem:[%s1 + $0xf8] sm:$0xf]
  %v7530 = vld [vmem:[%s1 + $0xfc] sm:$0xff]
  %v7531 = vld [vmem:[%s1 + $0x104] sm:$0xf]
  %v7532 = vld [vmem:[#allocation2] sm:$0xf]
  %v7533 = vld [vmem:[#allocation2 + $0x24] sm:$0xf]
  %v7534 = vld [vmem:[#allocation2 + $0x48] sm:$0xf]
  %v7535 = vld [vmem:[#allocation2 + $0x6c] sm:$0xf]
  %v7536 = vld [vmem:[#allocation2 + $0x90] sm:$0xf]
  %v7537 = vld [vmem:[#allocation2 + $0xb4] sm:$0xf]
  %v7538 = vld [vmem:[#allocation2 + $0xd8] sm:$0xf]
  %v7539 = vld [vmem:[#allocation2 + $0xfc] sm:$0xf]
  %v7540 = vld [vmem:[#allocation2 + $0x120] sm:$0xf]
  %v7541 = vld [vmem:[#allocation2 + $0x144] sm:$0xf]
  %v7542 = vld [vmem:[#allocation2 + $0x168] sm:$0xf]
  %v7543 = vld [vmem:[#allocation2 + $0x18c] sm:$0xf]
  %v7544 = vld [vmem:[#allocation2 + $0x1b0] sm:$0xf]
  %v7545 = vld [vmem:[#allocation2 + $0x1d4] sm:$0xf]
  %v7546 = vld [vmem:[#allocation2 + $0x1f8] sm:$0xf]
  %v7547 = vld [vmem:[#allocation2 + $0x21c] sm:$0xf]
  %v7548 = vld [vmem:[#allocation2 + $0x240] sm:$0xf]
  %v7549 = vld [vmem:[#allocation2 + $0x264] sm:$0xf]
  %v7550 = vld [vmem:[#allocation2 + $0x288] sm:$0xf]
  %v7551 = vld [vmem:[#allocation2 + $0x2ac] sm:$0xf]
  %v7552 = vld [vmem:[#allocation2 + $0x2d0] sm:$0xf]
  %v7553 = vld [vmem:[#allocation2 + $0x2f4] sm:$0xf]
  %v7554 = vld [vmem:[#allocation2 + $0x318] sm:$0xf]
  %v7555 = vld [vmem:[#allocation2 + $0x33c] sm:$0xf]
  %v7556 = vld [vmem:[#allocation2 + $0x360] sm:$0xf]
  %v7557 = vld [vmem:[#allocation2 + $0x384] sm:$0xf]
  %v7558 = vld [vmem:[#allocation2 + $0x3a8] sm:$0xf]
  %v7559 = vld [vmem:[#allocation2 + $0x3cc] sm:$0xf]
  %v7560 = vld [vmem:[#allocation2 + $0x3f0] sm:$0xf]
  %v7561 = vld [vmem:[#allocation2 + $0x414] sm:$0xf]
  %v7562 = vld [vmem:[#allocation2 + $0x438] sm:$0xf]
  %v7563 = vld [vmem:[#allocation2 + $0x45c] sm:$0xf]
  %v7564 = vld [vmem:[#allocation2 + $0x480] sm:$0xf]
  %v7565 = vld [vmem:[#allocation2 + $0x4a4] sm:$0xf]
  %v7566 = vld [vmem:[#allocation2 + $0x4c8] sm:$0xf]
  %v7567 = vld [vmem:[#allocation2 + $0x4ec] sm:$0xf]
  %v7568 = vld [vmem:[#allocation2 + $0x510] sm:$0x1]
  %v7577 = vunpack.c.l.b16 %v7524
  %v7578 = vunpack.c.h.b16 %v7524
  %v7579 = vunpack.c.l.b16 %v7525
  %v7580 = vunpack.c.l.b16 %v7526
  %v7581 = vunpack.c.h.b16 %v7526
  %v7582 = vunpack.c.l.b16 %v7527
  %v7583 = vunpack.c.l.b16 %v7528
  %v7584 = vunpack.c.h.b16 %v7528
  %v7585 = vunpack.c.l.b16 %v7529
  %v7586 = vunpack.c.l.b16 %v7530
  %v7587 = vunpack.c.h.b16 %v7530
  %v7588 = vunpack.c.l.b16 %v7531
  %v7589 = vpack.c.b16 %v7580, %v7577
  %v7590 = vpack.c.b16 %v7581, %v7578
  %v7591 = vpack.c.b16 %v7582, %v7579
  %v7592 = vpack.c.b16 %v7586, %v7583
  %v7593 = vpack.c.b16 %v7587, %v7584
  %v7594 = vpack.c.b16 %v7588, %v7585
  %v7636 = vunpack.c.l.b16 %v7532
  %v7637 = vunpack.c.l.b16 %v7533
  %v7638 = vunpack.c.l.b16 %v7534
  %v7639 = vunpack.c.l.b16 %v7535
  %v7640 = vunpack.c.l.b16 %v7536
  %v7641 = vunpack.c.l.b16 %v7537
  %v7642 = vunpack.c.l.b16 %v7538
  %v7643 = vunpack.c.l.b16 %v7539
  %v7644 = vunpack.c.l.b16 %v7540
  %v7645 = vunpack.c.l.b16 %v7541
  %v7646 = vunpack.c.l.b16 %v7542
  %v7647 = vunpack.c.l.b16 %v7543
  %v7648 = vunpack.c.l.b16 %v7544
  %v7649 = vunpack.c.l.b16 %v7545
  %v7650 = vunpack.c.l.b16 %v7546
  %v7651 = vunpack.c.l.b16 %v7547
  %v7652 = vunpack.c.l.b16 %v7548
  %v7653 = vunpack.c.l.b16 %v7549
  %v7654 = vunpack.c.l.b16 %v7550
  %v7655 = vunpack.c.l.b16 %v7551
  %v7656 = vunpack.c.l.b16 %v7552
  %v7657 = vunpack.c.l.b16 %v7553
  %v7658 = vunpack.c.l.b16 %v7554
  %v7659 = vunpack.c.l.b16 %v7555
  %v7660 = vunpack.c.l.b16 %v7556
  %v7661 = vunpack.c.l.b16 %v7557
  %v7662 = vunpack.c.l.b16 %v7558
  %v7663 = vunpack.c.l.b16 %v7559
  %v7664 = vunpack.c.l.b16 %v7560
  %v7665 = vunpack.c.l.b16 %v7561
  %v7666 = vunpack.c.l.b16 %v7562
  %v7667 = vunpack.c.l.b16 %v7563
  %v7668 = vunpack.c.l.b16 %v7564
  %v7669 = vunpack.c.l.b16 %v7565
  %v7670 = vunpack.c.l.b16 %v7566
  %v7671 = vunpack.c.l.b16 %v7567
  %v7672 = vunpack.c.l.b16 %v7568
  %v7673 = vpack.c.b16 %v7637, %v7636
  %v7674 = vpack.c.b16 %v7639, %v7638
  %v7675 = vpack.c.b16 %v7641, %v7640
  %v7676 = vpack.c.b16 %v7643, %v7642
  %v7677 = vpack.c.b16 %v7645, %v7644
  %v7678 = vpack.c.b16 %v7647, %v7646
  %v7679 = vpack.c.b16 %v7649, %v7648
  %v7680 = vpack.c.b16 %v7651, %v7650
  %v7681 = vpack.c.b16 %v7653, %v7652
  %v7682 = vpack.c.b16 %v7655, %v7654
  %v7683 = vpack.c.b16 %v7657, %v7656
  %v7684 = vpack.c.b16 %v7659, %v7658
  %v7685 = vpack.c.b16 %v7661, %v7660
  %v7686 = vpack.c.b16 %v7663, %v7662
  %v7687 = vpack.c.b16 %v7665, %v7664
  %v7688 = vpack.c.b16 %v7667, %v7666
  %v7689 = vpack.c.b16 %v7669, %v7668
  %v7690 = vpack.c.b16 %v7671, %v7670
  %v7691 = vpack.c.b16 %v7672, %v7672
  %vm7710 = vcmask 269312
  %v7712 = vsel %vm7710, %v7591, 0
  %v7715 = vsel %vm7710, %v7594, 0
  %v7718 = vand.u32 %v7691, %v1433
  %7720 = vmatpush.bf16.msra.mxu0 %v7680
  %7721 = vmatpush.bf16.msra.mxu0 %v7679
  %7722 = vmatpush.bf16.msra.mxu0 %v7678
  %7723 = vmatpush.bf16.msra.mxu0 %v7677
  %7724 = vmatpush.bf16.msra.mxu0 %v7676
  %7725 = vmatpush.bf16.msra.mxu0 %v7675
  %7726 = vmatpush.bf16.msra.mxu0 %v7674
  %7727 = vmatpush.bf16.msra.mxu0 %v7673
  %7728 = vmatmul.bf16.gmra.mxu0 %v7589
  %v7729 = vpop.f32.mrf.mxu0
  %v7730 = vadd.f32 0.0, %v7729
  %v7731 = vpop.f32.mrf.mxu0
  %v7732 = vadd.f32 0.0, %v7731
  %7733 = vmatmul.bf16.gmra.mxu0 %v7592
  %v7734 = vpop.f32.mrf.mxu0
  %v7735 = vadd.f32 0.0, %v7734
  %v7736 = vpop.f32.mrf.mxu0
  %v7737 = vadd.f32 0.0, %v7736
  %7738 = vdwg.mxu0
  %7739 = vmatpush.bf16.msra.mxu0 %v7688
  %7740 = vmatpush.bf16.msra.mxu0 %v7687
  %7741 = vmatpush.bf16.msra.mxu0 %v7686
  %7742 = vmatpush.bf16.msra.mxu0 %v7685
  %7743 = vmatpush.bf16.msra.mxu0 %v7684
  %7744 = vmatpush.bf16.msra.mxu0 %v7683
  %7745 = vmatpush.bf16.msra.mxu0 %v7682
  %7746 = vmatpush.bf16.msra.mxu0 %v7681
  %7747 = vmatmul.bf16.gmra.mxu0 %v7590
  %v7748 = vpop.f32.mrf.mxu0
  %v7749 = vadd.f32 %v7730, %v7748
  %v7750 = vpop.f32.mrf.mxu0
  %v7751 = vadd.f32 %v7732, %v7750
  %7752 = vmatmul.bf16.gmra.mxu0 %v7593
  %v7753 = vpop.f32.mrf.mxu0
  %v7754 = vadd.f32 %v7735, %v7753
  %v7755 = vpop.f32.mrf.mxu0
  %v7756 = vadd.f32 %v7737, %v7755
  %7757 = vdwg.mxu0
  %7758 = vmatpush.bf16.msra.mxu0 0
  %7759 = vmatpush.bf16.msra.mxu0 0
  %7760 = vmatpush.bf16.msra.mxu0 0
  %7761 = vmatpush.bf16.msra.mxu0 0
  %7762 = vmatpush.bf16.msra.mxu0 0
  %7763 = vmatpush.bf16.msra.mxu0 %v7718
  %7764 = vmatpush.bf16.msra.mxu0 %v7690
  %7765 = vmatpush.bf16.msra.mxu0 %v7689
  %7766 = vmatmul.bf16.gmra.mxu0 %v7712
  %v7767 = vpop.f32.mrf.mxu0
  %v7768 = vadd.f32 %v7749, %v7767
  %v7769 = vpop.f32.mrf.mxu0
  %v7770 = vadd.f32 %v7751, %v7769
  %7771 = vmatmul.bf16.gmra.mxu0 %v7715
  %v7772 = vpop.f32.mrf.mxu0
  %v7773 = vadd.f32 %v7754, %v7772
  %v7774 = vpop.f32.mrf.mxu0
  %v7775 = vadd.f32 %v7756, %v7774
  %7776 = vdwg.mxu0
  %v7777 = vld [vmem:[%s2 + $0x3] ss:$0 sm:$0xff]
  %v7778 = vmax.f32 %v7768, 0.0
  %v7779 = vmax.f32 %v7770, 0.0
  %v7780 = vmax.f32 %v7773, 0.0
  %v7781 = vmax.f32 %v7775, 0.0
  %v7782 = vmul.f32 %v7778, %v7777
  %v7783 = vmul.f32 %v7779, %v7777
  %v7784 = vmul.f32 %v7780, %v7777
  %v7785 = vmul.f32 %v7781, %v7777
  %v7786 = vpack.c.bf16 %v7782, %v7782
  %v7787 = vpack.c.bf16 %v7783, %v7783
  %v7788 = vpack.c.bf16 %v7784, %v7784
  %v7789 = vpack.c.bf16 %v7785, %v7785
  %7790 = vst.msk [vmem:[#allocation9 + $0x4] sm:$0xf] %vm7008, %v7786
  %7791 = vst.msk [vmem:[#allocation9 + $0x10] sm:$0xf] %vm7008, %v7787
  %7792 = vst.msk [vmem:[#allocation9 + $0x1c] sm:$0xf] %vm7008, %v7788
  %7793 = vst.msk [vmem:[#allocation9 + $0x28] sm:$0xf] %vm7008, %v7789
  %v7794 = vld [vmem:[#allocation9] sm:$0xff]
  %v7795 = vld [vmem:[#allocation9 + $0xc] sm:$0xff]
  %v7796 = vld [vmem:[#allocation9 + $0x18] sm:$0xff]
  %v7797 = vld [vmem:[#allocation9 + $0x24] sm:$0xff]
  %7802 = vrot.lane.b32.xlu0 %v7794, 7
  %v7803 = vpop.permute.xlu0 %7802
  %7804 = vrot.lane.b32.xlu0 %v7795, 7
  %v7805 = vpop.permute.xlu0 %7804
  %7806 = vrot.lane.b32.xlu0 %v7796, 7
  %v7807 = vpop.permute.xlu0 %7806
  %7808 = vrot.lane.b32.xlu0 %v7797, 7
  %v7809 = vpop.permute.xlu0 %7808
  %v7810 = vrot.slane %v7803, 4
  %v7811 = vrot.slane %v7805, 4
  %v7812 = vrot.slane %v7807, 4
  %v7813 = vrot.slane %v7809, 4
  %v7814 = vsel %vm7021, %v7803, %v7810
  %v7815 = vsel %vm7021, %v7805, %v7811
  %v7816 = vsel %vm7021, %v7807, %v7812
  %v7817 = vsel %vm7021, %v7809, %v7813
  %7822 = vst.msk [vmem:[#allocation2] sm:$0xf] %vm7008, %v7814
  %7823 = vst.msk [vmem:[#allocation2 + $0x24] sm:$0xf] %vm7008, %v7815
  %7824 = vst.msk [vmem:[#allocation2 + $0x48] sm:$0xf] %vm7008, %v7816
  %7825 = vst.msk [vmem:[#allocation2 + $0x6c] sm:$0xf] %vm7008, %v7817
  %v7826 = vld [vmem:[#allocation9] sm:$0xff]
  %v7827 = vld [vmem:[#allocation9 + $0xc] sm:$0xff]
  %v7828 = vld [vmem:[#allocation9 + $0x18] sm:$0xff]
  %v7829 = vld [vmem:[#allocation9 + $0x24] sm:$0xff]
  %7834 = vrot.lane.b32.xlu0 %v7826, 6
  %v7835 = vpop.permute.xlu0 %7834
  %7836 = vrot.lane.b32.xlu0 %v7827, 6
  %v7837 = vpop.permute.xlu0 %7836
  %7838 = vrot.lane.b32.xlu0 %v7828, 6
  %v7839 = vpop.permute.xlu0 %7838
  %7840 = vrot.lane.b32.xlu0 %v7829, 6
  %v7841 = vpop.permute.xlu0 %7840
  %v7842 = vrot.slane %v7835, 4
  %v7843 = vrot.slane %v7837, 4
  %v7844 = vrot.slane %v7839, 4
  %v7845 = vrot.slane %v7841, 4
  %v7846 = vsel %vm7038, %v7835, %v7842
  %v7847 = vsel %vm7038, %v7837, %v7843
  %v7848 = vsel %vm7038, %v7839, %v7844
  %v7849 = vsel %vm7038, %v7841, %v7845
  %7854 = vst.msk [vmem:[#allocation2 + $0x90] sm:$0xf] %vm7008, %v7846
  %7855 = vst.msk [vmem:[#allocation2 + $0xb4] sm:$0xf] %vm7008, %v7847
  %7856 = vst.msk [vmem:[#allocation2 + $0xd8] sm:$0xf] %vm7008, %v7848
  %7857 = vst.msk [vmem:[#allocation2 + $0xfc] sm:$0xf] %vm7008, %v7849
  %v7858 = vld [vmem:[#allocation9] sm:$0xff]
  %v7859 = vld [vmem:[#allocation9 + $0xc] sm:$0xff]
  %v7860 = vld [vmem:[#allocation9 + $0x18] sm:$0xff]
  %v7861 = vld [vmem:[#allocation9 + $0x24] sm:$0xff]
  %7866 = vrot.lane.b32.xlu0 %v7858, 5
  %v7867 = vpop.permute.xlu0 %7866
  %7868 = vrot.lane.b32.xlu0 %v7859, 5
  %v7869 = vpop.permute.xlu0 %7868
  %7870 = vrot.lane.b32.xlu0 %v7860, 5
  %v7871 = vpop.permute.xlu0 %7870
  %7872 = vrot.lane.b32.xlu0 %v7861, 5
  %v7873 = vpop.permute.xlu0 %7872
  %v7874 = vrot.slane %v7867, 4
  %v7875 = vrot.slane %v7869, 4
  %v7876 = vrot.slane %v7871, 4
  %v7877 = vrot.slane %v7873, 4
  %v7878 = vsel %vm7055, %v7867, %v7874
  %v7879 = vsel %vm7055, %v7869, %v7875
  %v7880 = vsel %vm7055, %v7871, %v7876
  %v7881 = vsel %vm7055, %v7873, %v7877
  %7886 = vst.msk [vmem:[#allocation2 + $0x120] sm:$0xf] %vm7008, %v7878
  %7887 = vst.msk [vmem:[#allocation2 + $0x144] sm:$0xf] %vm7008, %v7879
  %7888 = vst.msk [vmem:[#allocation2 + $0x168] sm:$0xf] %vm7008, %v7880
  %7889 = vst.msk [vmem:[#allocation2 + $0x18c] sm:$0xf] %vm7008, %v7881
  %v7890 = vld [vmem:[#allocation9] sm:$0xff]
  %v7891 = vld [vmem:[#allocation9 + $0xc] sm:$0xff]
  %v7892 = vld [vmem:[#allocation9 + $0x18] sm:$0xff]
  %v7893 = vld [vmem:[#allocation9 + $0x24] sm:$0xff]
  %7898 = vrot.lane.b32.xlu0 %v7890, 1
  %v7899 = vpop.permute.xlu0 %7898
  %7900 = vrot.lane.b32.xlu0 %v7891, 1
  %v7901 = vpop.permute.xlu0 %7900
  %7902 = vrot.lane.b32.xlu0 %v7892, 1
  %v7903 = vpop.permute.xlu0 %7902
  %7904 = vrot.lane.b32.xlu0 %v7893, 1
  %v7905 = vpop.permute.xlu0 %7904
  %v7906 = vrot.slane %v7899, 4
  %v7907 = vrot.slane %v7901, 4
  %v7908 = vrot.slane %v7903, 4
  %v7909 = vrot.slane %v7905, 4
  %v7910 = vsel %vm563, %v7899, %v7906
  %v7911 = vsel %vm563, %v7901, %v7907
  %v7912 = vsel %vm563, %v7903, %v7908
  %v7913 = vsel %vm563, %v7905, %v7909
  %7918 = vst.msk [vmem:[#allocation2 + $0x1b0] sm:$0xf] %vm7008, %v7910
  %7919 = vst.msk [vmem:[#allocation2 + $0x1d4] sm:$0xf] %vm7008, %v7911
  %7920 = vst.msk [vmem:[#allocation2 + $0x1f8] sm:$0xf] %vm7008, %v7912
  %7921 = vst.msk [vmem:[#allocation2 + $0x21c] sm:$0xf] %vm7008, %v7913
  %v7922 = vld [vmem:[#allocation9 + $0x4] sm:$0xf]
  %v7923 = vld [vmem:[#allocation9 + $0x10] sm:$0xf]
  %v7924 = vld [vmem:[#allocation9 + $0x1c] sm:$0xf]
  %v7925 = vld [vmem:[#allocation9 + $0x28] sm:$0xf]
  %7926 = vst.msk [vmem:[#allocation2 + $0x240] sm:$0xf] %vm7008, %v7922
  %7927 = vst.msk [vmem:[#allocation2 + $0x264] sm:$0xf] %vm7008, %v7923
  %7928 = vst.msk [vmem:[#allocation2 + $0x288] sm:$0xf] %vm7008, %v7924
  %7929 = vst.msk [vmem:[#allocation2 + $0x2ac] sm:$0xf] %vm7008, %v7925
  %v7930 = vld [vmem:[#allocation9 + $0x4] sm:$0xf]
  %v7931 = vld [vmem:[#allocation9 + $0x10] sm:$0xf]
  %v7932 = vld [vmem:[#allocation9 + $0x1c] sm:$0xf]
  %v7933 = vld [vmem:[#allocation9 + $0x28] sm:$0xf]
  %7938 = vrot.lane.b32.xlu0 %v7930, 127
  %v7939 = vpop.permute.xlu0 %7938
  %7940 = vrot.lane.b32.xlu0 %v7931, 127
  %v7941 = vpop.permute.xlu0 %7940
  %7942 = vrot.lane.b32.xlu0 %v7932, 127
  %v7943 = vpop.permute.xlu0 %7942
  %7944 = vrot.lane.b32.xlu0 %v7933, 127
  %v7945 = vpop.permute.xlu0 %7944
  %7950 = vst.msk [vmem:[#allocation2 + $0x2d0] sm:$0xf] %vm7008, %v7939
  %7951 = vst.msk [vmem:[#allocation2 + $0x2f4] sm:$0xf] %vm7008, %v7941
  %7952 = vst.msk [vmem:[#allocation2 + $0x318] sm:$0xf] %vm7008, %v7943
  %7953 = vst.msk [vmem:[#allocation2 + $0x33c] sm:$0xf] %vm7008, %v7945
  %v7954 = vld [vmem:[#allocation9 + $0x4] sm:$0xf]
  %v7955 = vld [vmem:[#allocation9 + $0x10] sm:$0xf]
  %v7956 = vld [vmem:[#allocation9 + $0x1c] sm:$0xf]
  %v7957 = vld [vmem:[#allocation9 + $0x28] sm:$0xf]
  %7962 = vrot.lane.b32.xlu0 %v7954, 123
  %v7963 = vpop.permute.xlu0 %7962
  %7964 = vrot.lane.b32.xlu0 %v7955, 123
  %v7965 = vpop.permute.xlu0 %7964
  %7966 = vrot.lane.b32.xlu0 %v7956, 123
  %v7967 = vpop.permute.xlu0 %7966
  %7968 = vrot.lane.b32.xlu0 %v7957, 123
  %v7969 = vpop.permute.xlu0 %7968
  %7974 = vst.msk [vmem:[#allocation2 + $0x360] sm:$0xf] %vm7008, %v7963
  %7975 = vst.msk [vmem:[#allocation2 + $0x384] sm:$0xf] %vm7008, %v7965
  %7976 = vst.msk [vmem:[#allocation2 + $0x3a8] sm:$0xf] %vm7008, %v7967
  %7977 = vst.msk [vmem:[#allocation2 + $0x3cc] sm:$0xf] %vm7008, %v7969
  %v7978 = vld [vmem:[#allocation9 + $0x4] sm:$0xf]
  %v7979 = vld [vmem:[#allocation9 + $0x10] sm:$0xf]
  %v7980 = vld [vmem:[#allocation9 + $0x1c] sm:$0xf]
  %v7981 = vld [vmem:[#allocation9 + $0x28] sm:$0xf]
  %7986 = vrot.lane.b32.xlu0 %v7978, 122
  %v7987 = vpop.permute.xlu0 %7986
  %7988 = vrot.lane.b32.xlu0 %v7979, 122
  %v7989 = vpop.permute.xlu0 %7988
  %7990 = vrot.lane.b32.xlu0 %v7980, 122
  %v7991 = vpop.permute.xlu0 %7990
  %7992 = vrot.lane.b32.xlu0 %v7981, 122
  %v7993 = vpop.permute.xlu0 %7992
  %7998 = vst.msk [vmem:[#allocation2 + $0x3f0] sm:$0xf] %vm7008, %v7987
  %7999 = vst.msk [vmem:[#allocation2 + $0x414] sm:$0xf] %vm7008, %v7989
  %8000 = vst.msk [vmem:[#allocation2 + $0x438] sm:$0xf] %vm7008, %v7991
  %8001 = vst.msk [vmem:[#allocation2 + $0x45c] sm:$0xf] %vm7008, %v7993
  %v8002 = vld [vmem:[#allocation9 + $0x4] sm:$0xf]
  %v8003 = vld [vmem:[#allocation9 + $0x10] sm:$0xf]
  %v8004 = vld [vmem:[#allocation9 + $0x1c] sm:$0xf]
  %v8005 = vld [vmem:[#allocation9 + $0x28] sm:$0xf]
  %8010 = vrot.lane.b32.xlu0 %v8002, 121
  %v8011 = vpop.permute.xlu0 %8010
  %8012 = vrot.lane.b32.xlu0 %v8003, 121
  %v8013 = vpop.permute.xlu0 %8012
  %8014 = vrot.lane.b32.xlu0 %v8004, 121
  %v8015 = vpop.permute.xlu0 %8014
  %8016 = vrot.lane.b32.xlu0 %v8005, 121
  %v8017 = vpop.permute.xlu0 %8016
  %8022 = vst.msk [vmem:[#allocation2 + $0x480] sm:$0xf] %vm7008, %v8011
  %8023 = vst.msk [vmem:[#allocation2 + $0x4a4] sm:$0xf] %vm7008, %v8013
  %8024 = vst.msk [vmem:[#allocation2 + $0x4c8] sm:$0xf] %vm7008, %v8015
  %8025 = vst.msk [vmem:[#allocation2 + $0x4ec] sm:$0xf] %vm7008, %v8017
  %v8026 = vld [vmem:[%s1 + $0x108] sm:$0xff]
  %v8027 = vld [vmem:[%s1 + $0x110] sm:$0xf]
  %v8028 = vld [vmem:[%s1 + $0x114] sm:$0xff]
  %v8029 = vld [vmem:[%s1 + $0x11c] sm:$0xf]
  %v8030 = vld [vmem:[%s1 + $0x120] sm:$0xff]
  %v8031 = vld [vmem:[%s1 + $0x128] sm:$0xf]
  %v8032 = vld [vmem:[%s1 + $0x12c] sm:$0xff]
  %v8033 = vld [vmem:[%s1 + $0x134] sm:$0xf]
  %v8034 = vld [vmem:[#allocation2] sm:$0xf]
  %v8035 = vld [vmem:[#allocation2 + $0x24] sm:$0xf]
  %v8036 = vld [vmem:[#allocation2 + $0x48] sm:$0xf]
  %v8037 = vld [vmem:[#allocation2 + $0x6c] sm:$0xf]
  %v8038 = vld [vmem:[#allocation2 + $0x90] sm:$0xf]
  %v8039 = vld [vmem:[#allocation2 + $0xb4] sm:$0xf]
  %v8040 = vld [vmem:[#allocation2 + $0xd8] sm:$0xf]
  %v8041 = vld [vmem:[#allocation2 + $0xfc] sm:$0xf]
  %v8042 = vld [vmem:[#allocation2 + $0x120] sm:$0xf]
  %v8043 = vld [vmem:[#allocation2 + $0x144] sm:$0xf]
  %v8044 = vld [vmem:[#allocation2 + $0x168] sm:$0xf]
  %v8045 = vld [vmem:[#allocation2 + $0x18c] sm:$0xf]
  %v8046 = vld [vmem:[#allocation2 + $0x1b0] sm:$0xf]
  %v8047 = vld [vmem:[#allocation2 + $0x1d4] sm:$0xf]
  %v8048 = vld [vmem:[#allocation2 + $0x1f8] sm:$0xf]
  %v8049 = vld [vmem:[#allocation2 + $0x21c] sm:$0xf]
  %v8050 = vld [vmem:[#allocation2 + $0x240] sm:$0xf]
  %v8051 = vld [vmem:[#allocation2 + $0x264] sm:$0xf]
  %v8052 = vld [vmem:[#allocation2 + $0x288] sm:$0xf]
  %v8053 = vld [vmem:[#allocation2 + $0x2ac] sm:$0xf]
  %v8054 = vld [vmem:[#allocation2 + $0x2d0] sm:$0xf]
  %v8055 = vld [vmem:[#allocation2 + $0x2f4] sm:$0xf]
  %v8056 = vld [vmem:[#allocation2 + $0x318] sm:$0xf]
  %v8057 = vld [vmem:[#allocation2 + $0x33c] sm:$0xf]
  %v8058 = vld [vmem:[#allocation2 + $0x360] sm:$0xf]
  %v8059 = vld [vmem:[#allocation2 + $0x384] sm:$0xf]
  %v8060 = vld [vmem:[#allocation2 + $0x3a8] sm:$0xf]
  %v8061 = vld [vmem:[#allocation2 + $0x3cc] sm:$0xf]
  %v8062 = vld [vmem:[#allocation2 + $0x3f0] sm:$0xf]
  %v8063 = vld [vmem:[#allocation2 + $0x414] sm:$0xf]
  %v8064 = vld [vmem:[#allocation2 + $0x438] sm:$0xf]
  %v8065 = vld [vmem:[#allocation2 + $0x45c] sm:$0xf]
  %v8066 = vld [vmem:[#allocation2 + $0x480] sm:$0xf]
  %v8067 = vld [vmem:[#allocation2 + $0x4a4] sm:$0xf]
  %v8068 = vld [vmem:[#allocation2 + $0x4c8] sm:$0xf]
  %v8069 = vld [vmem:[#allocation2 + $0x4ec] sm:$0xf]
  %v8070 = vld [vmem:[#allocation2 + $0x510] sm:$0x1]
  %v8079 = vunpack.c.l.b16 %v8026
  %v8080 = vunpack.c.h.b16 %v8026
  %v8081 = vunpack.c.l.b16 %v8027
  %v8082 = vunpack.c.l.b16 %v8028
  %v8083 = vunpack.c.h.b16 %v8028
  %v8084 = vunpack.c.l.b16 %v8029
  %v8085 = vunpack.c.l.b16 %v8030
  %v8086 = vunpack.c.h.b16 %v8030
  %v8087 = vunpack.c.l.b16 %v8031
  %v8088 = vunpack.c.l.b16 %v8032
  %v8089 = vunpack.c.h.b16 %v8032
  %v8090 = vunpack.c.l.b16 %v8033
  %v8091 = vpack.c.b16 %v8082, %v8079
  %v8092 = vpack.c.b16 %v8083, %v8080
  %v8093 = vpack.c.b16 %v8084, %v8081
  %v8094 = vpack.c.b16 %v8088, %v8085
  %v8095 = vpack.c.b16 %v8089, %v8086
  %v8096 = vpack.c.b16 %v8090, %v8087
  %v8138 = vunpack.c.l.b16 %v8034
  %v8139 = vunpack.c.l.b16 %v8035
  %v8140 = vunpack.c.l.b16 %v8036
  %v8141 = vunpack.c.l.b16 %v8037
  %v8142 = vunpack.c.l.b16 %v8038
  %v8143 = vunpack.c.l.b16 %v8039
  %v8144 = vunpack.c.l.b16 %v8040
  %v8145 = vunpack.c.l.b16 %v8041
  %v8146 = vunpack.c.l.b16 %v8042
  %v8147 = vunpack.c.l.b16 %v8043
  %v8148 = vunpack.c.l.b16 %v8044
  %v8149 = vunpack.c.l.b16 %v8045
  %v8150 = vunpack.c.l.b16 %v8046
  %v8151 = vunpack.c.l.b16 %v8047
  %v8152 = vunpack.c.l.b16 %v8048
  %v8153 = vunpack.c.l.b16 %v8049
  %v8154 = vunpack.c.l.b16 %v8050
  %v8155 = vunpack.c.l.b16 %v8051
  %v8156 = vunpack.c.l.b16 %v8052
  %v8157 = vunpack.c.l.b16 %v8053
  %v8158 = vunpack.c.l.b16 %v8054
  %v8159 = vunpack.c.l.b16 %v8055
  %v8160 = vunpack.c.l.b16 %v8056
  %v8161 = vunpack.c.l.b16 %v8057
  %v8162 = vunpack.c.l.b16 %v8058
  %v8163 = vunpack.c.l.b16 %v8059
  %v8164 = vunpack.c.l.b16 %v8060
  %v8165 = vunpack.c.l.b16 %v8061
  %v8166 = vunpack.c.l.b16 %v8062
  %v8167 = vunpack.c.l.b16 %v8063
  %v8168 = vunpack.c.l.b16 %v8064
  %v8169 = vunpack.c.l.b16 %v8065
  %v8170 = vunpack.c.l.b16 %v8066
  %v8171 = vunpack.c.l.b16 %v8067
  %v8172 = vunpack.c.l.b16 %v8068
  %v8173 = vunpack.c.l.b16 %v8069
  %v8174 = vunpack.c.l.b16 %v8070
  %v8175 = vpack.c.b16 %v8139, %v8138
  %v8176 = vpack.c.b16 %v8141, %v8140
  %v8177 = vpack.c.b16 %v8143, %v8142
  %v8178 = vpack.c.b16 %v8145, %v8144
  %v8179 = vpack.c.b16 %v8147, %v8146
  %v8180 = vpack.c.b16 %v8149, %v8148
  %v8181 = vpack.c.b16 %v8151, %v8150
  %v8182 = vpack.c.b16 %v8153, %v8152
  %v8183 = vpack.c.b16 %v8155, %v8154
  %v8184 = vpack.c.b16 %v8157, %v8156
  %v8185 = vpack.c.b16 %v8159, %v8158
  %v8186 = vpack.c.b16 %v8161, %v8160
  %v8187 = vpack.c.b16 %v8163, %v8162
  %v8188 = vpack.c.b16 %v8165, %v8164
  %v8189 = vpack.c.b16 %v8167, %v8166
  %v8190 = vpack.c.b16 %v8169, %v8168
  %v8191 = vpack.c.b16 %v8171, %v8170
  %v8192 = vpack.c.b16 %v8173, %v8172
  %v8193 = vpack.c.b16 %v8174, %v8174
  %v8213 = vsel %vm7710, %v8093, 0
  %v8216 = vsel %vm7710, %v8096, 0
  %v8219 = vand.u32 %v8193, %v1433
  %8221 = vmatpush.bf16.msra.mxu0 %v8182
  %8222 = vmatpush.bf16.msra.mxu0 %v8181
  %8223 = vmatpush.bf16.msra.mxu0 %v8180
  %8224 = vmatpush.bf16.msra.mxu0 %v8179
  %8225 = vmatpush.bf16.msra.mxu0 %v8178
  %8226 = vmatpush.bf16.msra.mxu0 %v8177
  %8227 = vmatpush.bf16.msra.mxu0 %v8176
  %8228 = vmatpush.bf16.msra.mxu0 %v8175
  %8229 = vmatmul.bf16.gmra.mxu0 %v8091
  %v8230 = vpop.f32.mrf.mxu0
  %v8231 = vadd.f32 0.0, %v8230
  %v8232 = vpop.f32.mrf.mxu0
  %v8233 = vadd.f32 0.0, %v8232
  %8234 = vmatmul.bf16.gmra.mxu0 %v8094
  %v8235 = vpop.f32.mrf.mxu0
  %v8236 = vadd.f32 0.0, %v8235
  %v8237 = vpop.f32.mrf.mxu0
  %v8238 = vadd.f32 0.0, %v8237
  %8239 = vdwg.mxu0
  %8240 = vmatpush.bf16.msra.mxu0 %v8190
  %8241 = vmatpush.bf16.msra.mxu0 %v8189
  %8242 = vmatpush.bf16.msra.mxu0 %v8188
  %8243 = vmatpush.bf16.msra.mxu0 %v8187
  %8244 = vmatpush.bf16.msra.mxu0 %v8186
  %8245 = vmatpush.bf16.msra.mxu0 %v8185
  %8246 = vmatpush.bf16.msra.mxu0 %v8184
  %8247 = vmatpush.bf16.msra.mxu0 %v8183
  %8248 = vmatmul.bf16.gmra.mxu0 %v8092
  %v8249 = vpop.f32.mrf.mxu0
  %v8250 = vadd.f32 %v8231, %v8249
  %v8251 = vpop.f32.mrf.mxu0
  %v8252 = vadd.f32 %v8233, %v8251
  %8253 = vmatmul.bf16.gmra.mxu0 %v8095
  %v8254 = vpop.f32.mrf.mxu0
  %v8255 = vadd.f32 %v8236, %v8254
  %v8256 = vpop.f32.mrf.mxu0
  %v8257 = vadd.f32 %v8238, %v8256
  %8258 = vdwg.mxu0
  %8259 = vmatpush.bf16.msra.mxu0 0
  %8260 = vmatpush.bf16.msra.mxu0 0
  %8261 = vmatpush.bf16.msra.mxu0 0
  %8262 = vmatpush.bf16.msra.mxu0 0
  %8263 = vmatpush.bf16.msra.mxu0 0
  %8264 = vmatpush.bf16.msra.mxu0 %v8219
  %8265 = vmatpush.bf16.msra.mxu0 %v8192
  %8266 = vmatpush.bf16.msra.mxu0 %v8191
  %8267 = vmatmul.bf16.gmra.mxu0 %v8213
  %v8268 = vpop.f32.mrf.mxu0
  %v8269 = vadd.f32 %v8250, %v8268
  %v8270 = vpop.f32.mrf.mxu0
  %v8271 = vadd.f32 %v8252, %v8270
  %8272 = vmatmul.bf16.gmra.mxu0 %v8216
  %v8273 = vpop.f32.mrf.mxu0
  %v8274 = vadd.f32 %v8255, %v8273
  %v8275 = vpop.f32.mrf.mxu0
  %v8276 = vadd.f32 %v8257, %v8275
  %8277 = vdwg.mxu0
  %v8278 = vld [vmem:[%s2 + $0x3] ss:$0 sm:$0xff]
  %v8279 = vmax.f32 %v8269, 0.0
  %v8280 = vmax.f32 %v8271, 0.0
  %v8281 = vmax.f32 %v8274, 0.0
  %v8282 = vmax.f32 %v8276, 0.0
  %v8283 = vmul.f32 %v8279, %v8278
  %v8284 = vmul.f32 %v8280, %v8278
  %v8285 = vmul.f32 %v8281, %v8278
  %v8286 = vmul.f32 %v8282, %v8278
  %v8287 = vpack.c.bf16 %v8283, %v8283
  %v8288 = vpack.c.bf16 %v8284, %v8284
  %v8289 = vpack.c.bf16 %v8285, %v8285
  %v8290 = vpack.c.bf16 %v8286, %v8286
  %8291 = vst.msk [vmem:[#allocation10 + $0x4] sm:$0xf] %vm7008, %v8287
  %8292 = vst.msk [vmem:[#allocation10 + $0x10] sm:$0xf] %vm7008, %v8288
  %8293 = vst.msk [vmem:[#allocation10 + $0x1c] sm:$0xf] %vm7008, %v8289
  %8294 = vst.msk [vmem:[#allocation10 + $0x28] sm:$0xf] %vm7008, %v8290
  %v8295 = vld [vmem:[#allocation10 + $0x4] sm:$0xf]
  %v8296 = vld [vmem:[#allocation10 + $0x10] sm:$0xf]
  %v8297 = vld [vmem:[#allocation10 + $0x1c] sm:$0xf]
  %v8298 = vld [vmem:[#allocation10 + $0x28] sm:$0xf]
  %v8299 = vunpack.c.l.bf16 %v8295
  %v8300 = vunpack.c.l.bf16 %v8296
  %v8301 = vunpack.c.l.bf16 %v8297
  %v8302 = vunpack.c.l.bf16 %v8298
  %8307 = vrot.lane.b32.xlu0 %v8299, 127
  %v8308 = vpop.permute.xlu0 %8307
  %8309 = vrot.lane.b32.xlu0 %v8300, 127
  %v8310 = vpop.permute.xlu0 %8309
  %8311 = vrot.lane.b32.xlu0 %v8301, 127
  %v8312 = vpop.permute.xlu0 %8311
  %8313 = vrot.lane.b32.xlu0 %v8302, 127
  %v8314 = vpop.permute.xlu0 %8313
  %v8319 = vmax.f32 %v8299, %v8308
  %v8320 = vmax.f32 %v8300, %v8310
  %v8321 = vmax.f32 %v8301, %v8312
  %v8322 = vmax.f32 %v8302, %v8314
  %v8323 = vpack.c.bf16 %v8319, %v8319
  %v8324 = vpack.c.bf16 %v8320, %v8320
  %v8325 = vpack.c.bf16 %v8321, %v8321
  %v8326 = vpack.c.bf16 %v8322, %v8322
  %v8327 = vunpack.c.l.bf16 %v8323
  %v8328 = vunpack.c.l.bf16 %v8324
  %v8329 = vunpack.c.l.bf16 %v8325
  %v8330 = vunpack.c.l.bf16 %v8326
  %8335 = vrot.lane.b32.xlu0 %v8327, 122
  %v8336 = vpop.permute.xlu0 %8335
  %8337 = vrot.lane.b32.xlu0 %v8328, 122
  %v8338 = vpop.permute.xlu0 %8337
  %8339 = vrot.lane.b32.xlu0 %v8329, 122
  %v8340 = vpop.permute.xlu0 %8339
  %8341 = vrot.lane.b32.xlu0 %v8330, 122
  %v8342 = vpop.permute.xlu0 %8341
  %v8347 = vmax.f32 %v8327, %v8336
  %v8348 = vmax.f32 %v8328, %v8338
  %v8349 = vmax.f32 %v8329, %v8340
  %v8350 = vmax.f32 %v8330, %v8342
  %v8351 = vpack.c.bf16 %v8348, %v8347
  %v8352 = vpack.c.bf16 %v8350, %v8349
  %v8353 = vld [vmem:[%s1 + $0xa50] sm:$0xf]
  %v8354 = vld [vmem:[%s1 + $0xa5c] sm:$0xf]
  %v8355 = vld [vmem:[%s1 + $0xa68] sm:$0xf]
  %v8359 = vunpack.c.l.b16 %v8353
  %v8360 = vunpack.c.l.b16 %v8354
  %v8361 = vunpack.c.l.b16 %v8355
  %v8362 = vpack.c.b16 %v8360, %v8359
  %v8363 = vpack.c.b16 %v8361, %v8361
  %vm8365 = vcmask 195584
  %v8367 = vsel %vm8365, %v8351, 0
  %v8370 = vsel %vm8365, %v8352, 0
  %vm8372 = vcmask 1043456
  %v8374 = vsel %vm8372, %v8363, 0
  %8376 = vmatpush.bf16.msra.mxu0 0
  %8377 = vmatpush.bf16.msra.mxu0 0
  %8378 = vmatpush.bf16.msra.mxu0 0
  %8379 = vmatpush.bf16.msra.mxu0 0
  %8380 = vmatpush.bf16.msra.mxu0 0
  %8381 = vmatpush.bf16.msra.mxu0 0
  %8382 = vmatpush.bf16.msra.mxu0 %v8374
  %8383 = vmatpush.bf16.msra.mxu0 %v8362
  %8384 = vmatmul.bf16.gmra.mxu0 %v8367
  %v8385 = vpop.f32.mrf.mxu0
  %v8386 = vadd.f32 0.0, %v8385
  %v8387 = vpop.f32.mrf.mxu0
  %v8388 = vadd.f32 0.0, %v8387
  %8389 = vmatmul.bf16.gmra.mxu0 %v8370
  %v8390 = vpop.f32.mrf.mxu0
  %v8391 = vadd.f32 0.0, %v8390
  %v8392 = vpop.f32.mrf.mxu0
  %v8393 = vadd.f32 0.0, %v8392
  %8394 = vdwg.mxu0
  %v8395 = vpack.c.bf16 %v8386, %v8386
  %v8396 = vpack.c.bf16 %v8388, %v8388
  %v8397 = vpack.c.bf16 %v8391, %v8391
  %v8398 = vpack.c.bf16 %v8393, %v8393
  %vm8399 = vcmask 60416
  %8400 = vst.msk [vmem:[#allocation11 + $0x4] sm:$0xf] %vm8399, %v8395
  %8401 = vst.msk [vmem:[#allocation11 + $0x10] sm:$0xf] %vm8399, %v8396
  %8402 = vst.msk [vmem:[#allocation11 + $0x1c] sm:$0xf] %vm8399, %v8397
  %8403 = vst.msk [vmem:[#allocation11 + $0x28] sm:$0xf] %vm8399, %v8398
  %v8404 = vld [vmem:[#allocation11] sm:$0xff]
  %v8405 = vld [vmem:[#allocation11 + $0xc] sm:$0xff]
  %v8406 = vld [vmem:[#allocation11 + $0x18] sm:$0xff]
  %v8407 = vld [vmem:[#allocation11 + $0x24] sm:$0xff]
  %8412 = vrot.lane.b32.xlu0 %v8404, 5
  %v8413 = vpop.permute.xlu0 %8412
  %8414 = vrot.lane.b32.xlu0 %v8405, 5
  %v8415 = vpop.permute.xlu0 %8414
  %8416 = vrot.lane.b32.xlu0 %v8406, 5
  %v8417 = vpop.permute.xlu0 %8416
  %8418 = vrot.lane.b32.xlu0 %v8407, 5
  %v8419 = vpop.permute.xlu0 %8418
  %v8420 = vrot.slane %v8413, 4
  %v8421 = vrot.slane %v8415, 4
  %v8422 = vrot.slane %v8417, 4
  %v8423 = vrot.slane %v8419, 4
  %v8424 = vsel %vm7055, %v8413, %v8420
  %v8425 = vsel %vm7055, %v8415, %v8421
  %v8426 = vsel %vm7055, %v8417, %v8422
  %v8427 = vsel %vm7055, %v8419, %v8423
  %8432 = vst.msk [vmem:[#allocation2] sm:$0xf] %vm8399, %v8424
  %8433 = vst.msk [vmem:[#allocation2 + $0x24] sm:$0xf] %vm8399, %v8425
  %8434 = vst.msk [vmem:[#allocation2 + $0x48] sm:$0xf] %vm8399, %v8426
  %8435 = vst.msk [vmem:[#allocation2 + $0x6c] sm:$0xf] %vm8399, %v8427
  %v8436 = vld [vmem:[#allocation11] sm:$0xff]
  %v8437 = vld [vmem:[#allocation11 + $0xc] sm:$0xff]
  %v8438 = vld [vmem:[#allocation11 + $0x18] sm:$0xff]
  %v8439 = vld [vmem:[#allocation11 + $0x24] sm:$0xff]
  %8444 = vrot.lane.b32.xlu0 %v8436, 4
  %v8445 = vpop.permute.xlu0 %8444
  %8446 = vrot.lane.b32.xlu0 %v8437, 4
  %v8447 = vpop.permute.xlu0 %8446
  %8448 = vrot.lane.b32.xlu0 %v8438, 4
  %v8449 = vpop.permute.xlu0 %8448
  %8450 = vrot.lane.b32.xlu0 %v8439, 4
  %v8451 = vpop.permute.xlu0 %8450
  %v8452 = vrot.slane %v8445, 4
  %v8453 = vrot.slane %v8447, 4
  %v8454 = vrot.slane %v8449, 4
  %v8455 = vrot.slane %v8451, 4
  %vm8456 = vcmask 31744
  %v8457 = vsel %vm8456, %v8445, %v8452
  %v8458 = vsel %vm8456, %v8447, %v8453
  %v8459 = vsel %vm8456, %v8449, %v8454
  %v8460 = vsel %vm8456, %v8451, %v8455
  %8465 = vst.msk [vmem:[#allocation2 + $0x90] sm:$0xf] %vm8399, %v8457
  %8466 = vst.msk [vmem:[#allocation2 + $0xb4] sm:$0xf] %vm8399, %v8458
  %8467 = vst.msk [vmem:[#allocation2 + $0xd8] sm:$0xf] %vm8399, %v8459
  %8468 = vst.msk [vmem:[#allocation2 + $0xfc] sm:$0xf] %vm8399, %v8460
  %v8469 = vld [vmem:[#allocation11] sm:$0xff]
  %v8470 = vld [vmem:[#allocation11 + $0xc] sm:$0xff]
  %v8471 = vld [vmem:[#allocation11 + $0x18] sm:$0xff]
  %v8472 = vld [vmem:[#allocation11 + $0x24] sm:$0xff]
  %8477 = vrot.lane.b32.xlu0 %v8469, 3
  %v8478 = vpop.permute.xlu0 %8477
  %8479 = vrot.lane.b32.xlu0 %v8470, 3
  %v8480 = vpop.permute.xlu0 %8479
  %8481 = vrot.lane.b32.xlu0 %v8471, 3
  %v8482 = vpop.permute.xlu0 %8481
  %8483 = vrot.lane.b32.xlu0 %v8472, 3
  %v8484 = vpop.permute.xlu0 %8483
  %v8485 = vrot.slane %v8478, 4
  %v8486 = vrot.slane %v8480, 4
  %v8487 = vrot.slane %v8482, 4
  %v8488 = vrot.slane %v8484, 4
  %vm8489 = vcmask 23552
  %v8490 = vsel %vm8489, %v8478, %v8485
  %v8491 = vsel %vm8489, %v8480, %v8486
  %v8492 = vsel %vm8489, %v8482, %v8487
  %v8493 = vsel %vm8489, %v8484, %v8488
  %8498 = vst.msk [vmem:[#allocation2 + $0x120] sm:$0xf] %vm8399, %v8490
  %8499 = vst.msk [vmem:[#allocation2 + $0x144] sm:$0xf] %vm8399, %v8491
  %8500 = vst.msk [vmem:[#allocation2 + $0x168] sm:$0xf] %vm8399, %v8492
  %8501 = vst.msk [vmem:[#allocation2 + $0x18c] sm:$0xf] %vm8399, %v8493
  %v8502 = vld [vmem:[#allocation11] sm:$0xff]
  %v8503 = vld [vmem:[#allocation11 + $0xc] sm:$0xff]
  %v8504 = vld [vmem:[#allocation11 + $0x18] sm:$0xff]
  %v8505 = vld [vmem:[#allocation11 + $0x24] sm:$0xff]
  %8510 = vrot.lane.b32.xlu0 %v8502, 1
  %v8511 = vpop.permute.xlu0 %8510
  %8512 = vrot.lane.b32.xlu0 %v8503, 1
  %v8513 = vpop.permute.xlu0 %8512
  %8514 = vrot.lane.b32.xlu0 %v8504, 1
  %v8515 = vpop.permute.xlu0 %8514
  %8516 = vrot.lane.b32.xlu0 %v8505, 1
  %v8517 = vpop.permute.xlu0 %8516
  %v8518 = vrot.slane %v8511, 4
  %v8519 = vrot.slane %v8513, 4
  %v8520 = vrot.slane %v8515, 4
  %v8521 = vrot.slane %v8517, 4
  %v8522 = vsel %vm563, %v8511, %v8518
  %v8523 = vsel %vm563, %v8513, %v8519
  %v8524 = vsel %vm563, %v8515, %v8520
  %v8525 = vsel %vm563, %v8517, %v8521
  %8530 = vst.msk [vmem:[#allocation2 + $0x1b0] sm:$0xf] %vm8399, %v8522
  %8531 = vst.msk [vmem:[#allocation2 + $0x1d4] sm:$0xf] %vm8399, %v8523
  %8532 = vst.msk [vmem:[#allocation2 + $0x1f8] sm:$0xf] %vm8399, %v8524
  %8533 = vst.msk [vmem:[#allocation2 + $0x21c] sm:$0xf] %vm8399, %v8525
  %v8534 = vld [vmem:[#allocation11 + $0x4] sm:$0xf]
  %v8535 = vld [vmem:[#allocation11 + $0x10] sm:$0xf]
  %v8536 = vld [vmem:[#allocation11 + $0x1c] sm:$0xf]
  %v8537 = vld [vmem:[#allocation11 + $0x28] sm:$0xf]
  %8538 = vst.msk [vmem:[#allocation2 + $0x240] sm:$0xf] %vm8399, %v8534
  %8539 = vst.msk [vmem:[#allocation2 + $0x264] sm:$0xf] %vm8399, %v8535
  %8540 = vst.msk [vmem:[#allocation2 + $0x288] sm:$0xf] %vm8399, %v8536
  %8541 = vst.msk [vmem:[#allocation2 + $0x2ac] sm:$0xf] %vm8399, %v8537
  %v8542 = vld [vmem:[#allocation11 + $0x4] sm:$0xf]
  %v8543 = vld [vmem:[#allocation11 + $0x10] sm:$0xf]
  %v8544 = vld [vmem:[#allocation11 + $0x1c] sm:$0xf]
  %v8545 = vld [vmem:[#allocation11 + $0x28] sm:$0xf]
  %8550 = vrot.lane.b32.xlu0 %v8542, 127
  %v8551 = vpop.permute.xlu0 %8550
  %8552 = vrot.lane.b32.xlu0 %v8543, 127
  %v8553 = vpop.permute.xlu0 %8552
  %8554 = vrot.lane.b32.xlu0 %v8544, 127
  %v8555 = vpop.permute.xlu0 %8554
  %8556 = vrot.lane.b32.xlu0 %v8545, 127
  %v8557 = vpop.permute.xlu0 %8556
  %8562 = vst.msk [vmem:[#allocation2 + $0x2d0] sm:$0xf] %vm8399, %v8551
  %8563 = vst.msk [vmem:[#allocation2 + $0x2f4] sm:$0xf] %vm8399, %v8553
  %8564 = vst.msk [vmem:[#allocation2 + $0x318] sm:$0xf] %vm8399, %v8555
  %8565 = vst.msk [vmem:[#allocation2 + $0x33c] sm:$0xf] %vm8399, %v8557
  %v8566 = vld [vmem:[#allocation11 + $0x4] sm:$0xf]
  %v8567 = vld [vmem:[#allocation11 + $0x10] sm:$0xf]
  %v8568 = vld [vmem:[#allocation11 + $0x1c] sm:$0xf]
  %v8569 = vld [vmem:[#allocation11 + $0x28] sm:$0xf]
  %8574 = vrot.lane.b32.xlu0 %v8566, 125
  %v8575 = vpop.permute.xlu0 %8574
  %8576 = vrot.lane.b32.xlu0 %v8567, 125
  %v8577 = vpop.permute.xlu0 %8576
  %8578 = vrot.lane.b32.xlu0 %v8568, 125
  %v8579 = vpop.permute.xlu0 %8578
  %8580 = vrot.lane.b32.xlu0 %v8569, 125
  %v8581 = vpop.permute.xlu0 %8580
  %8586 = vst.msk [vmem:[#allocation2 + $0x360] sm:$0xf] %vm8399, %v8575
  %8587 = vst.msk [vmem:[#allocation2 + $0x384] sm:$0xf] %vm8399, %v8577
  %8588 = vst.msk [vmem:[#allocation2 + $0x3a8] sm:$0xf] %vm8399, %v8579
  %8589 = vst.msk [vmem:[#allocation2 + $0x3cc] sm:$0xf] %vm8399, %v8581
  %v8590 = vld [vmem:[#allocation11 + $0x4] sm:$0xf]
  %v8591 = vld [vmem:[#allocation11 + $0x10] sm:$0xf]
  %v8592 = vld [vmem:[#allocation11 + $0x1c] sm:$0xf]
  %v8593 = vld [vmem:[#allocation11 + $0x28] sm:$0xf]
  %8598 = vrot.lane.b32.xlu0 %v8590, 124
  %v8599 = vpop.permute.xlu0 %8598
  %8600 = vrot.lane.b32.xlu0 %v8591, 124
  %v8601 = vpop.permute.xlu0 %8600
  %8602 = vrot.lane.b32.xlu0 %v8592, 124
  %v8603 = vpop.permute.xlu0 %8602
  %8604 = vrot.lane.b32.xlu0 %v8593, 124
  %v8605 = vpop.permute.xlu0 %8604
  %8610 = vst.msk [vmem:[#allocation2 + $0x3f0] sm:$0xf] %vm8399, %v8599
  %8611 = vst.msk [vmem:[#allocation2 + $0x414] sm:$0xf] %vm8399, %v8601
  %8612 = vst.msk [vmem:[#allocation2 + $0x438] sm:$0xf] %vm8399, %v8603
  %8613 = vst.msk [vmem:[#allocation2 + $0x45c] sm:$0xf] %vm8399, %v8605
  %v8614 = vld [vmem:[#allocation11 + $0x4] sm:$0xf]
  %v8615 = vld [vmem:[#allocation11 + $0x10] sm:$0xf]
  %v8616 = vld [vmem:[#allocation11 + $0x1c] sm:$0xf]
  %v8617 = vld [vmem:[#allocation11 + $0x28] sm:$0xf]
  %8622 = vrot.lane.b32.xlu0 %v8614, 123
  %v8623 = vpop.permute.xlu0 %8622
  %8624 = vrot.lane.b32.xlu0 %v8615, 123
  %v8625 = vpop.permute.xlu0 %8624
  %8626 = vrot.lane.b32.xlu0 %v8616, 123
  %v8627 = vpop.permute.xlu0 %8626
  %8628 = vrot.lane.b32.xlu0 %v8617, 123
  %v8629 = vpop.permute.xlu0 %8628
  %8634 = vst.msk [vmem:[#allocation2 + $0x480] sm:$0xf] %vm8399, %v8623
  %8635 = vst.msk [vmem:[#allocation2 + $0x4a4] sm:$0xf] %vm8399, %v8625
  %8636 = vst.msk [vmem:[#allocation2 + $0x4c8] sm:$0xf] %vm8399, %v8627
  %8637 = vst.msk [vmem:[#allocation2 + $0x4ec] sm:$0xf] %vm8399, %v8629
  %v8638 = vld [vmem:[%s1 + $0x138] sm:$0xff]
  %v8639 = vld [vmem:[%s1 + $0x140] sm:$0xf]
  %v8640 = vld [vmem:[%s1 + $0x144] sm:$0xff]
  %v8641 = vld [vmem:[%s1 + $0x14c] sm:$0xf]
  %v8642 = vld [vmem:[%s1 + $0x150] sm:$0xff]
  %v8643 = vld [vmem:[%s1 + $0x158] sm:$0xf]
  %v8644 = vld [vmem:[%s1 + $0x15c] sm:$0xff]
  %v8645 = vld [vmem:[%s1 + $0x164] sm:$0xf]
  %v8646 = vld [vmem:[#allocation2] sm:$0xf]
  %v8647 = vld [vmem:[#allocation2 + $0x24] sm:$0xf]
  %v8648 = vld [vmem:[#allocation2 + $0x48] sm:$0xf]
  %v8649 = vld [vmem:[#allocation2 + $0x6c] sm:$0xf]
  %v8650 = vld [vmem:[#allocation2 + $0x90] sm:$0xf]
  %v8651 = vld [vmem:[#allocation2 + $0xb4] sm:$0xf]
  %v8652 = vld [vmem:[#allocation2 + $0xd8] sm:$0xf]
  %v8653 = vld [vmem:[#allocation2 + $0xfc] sm:$0xf]
  %v8654 = vld [vmem:[#allocation2 + $0x120] sm:$0xf]
  %v8655 = vld [vmem:[#allocation2 + $0x144] sm:$0xf]
  %v8656 = vld [vmem:[#allocation2 + $0x168] sm:$0xf]
  %v8657 = vld [vmem:[#allocation2 + $0x18c] sm:$0xf]
  %v8658 = vld [vmem:[#allocation2 + $0x1b0] sm:$0xf]
  %v8659 = vld [vmem:[#allocation2 + $0x1d4] sm:$0xf]
  %v8660 = vld [vmem:[#allocation2 + $0x1f8] sm:$0xf]
  %v8661 = vld [vmem:[#allocation2 + $0x21c] sm:$0xf]
  %v8662 = vld [vmem:[#allocation2 + $0x240] sm:$0xf]
  %v8663 = vld [vmem:[#allocation2 + $0x264] sm:$0xf]
  %v8664 = vld [vmem:[#allocation2 + $0x288] sm:$0xf]
  %v8665 = vld [vmem:[#allocation2 + $0x2ac] sm:$0xf]
  %v8666 = vld [vmem:[#allocation2 + $0x2d0] sm:$0xf]
  %v8667 = vld [vmem:[#allocation2 + $0x2f4] sm:$0xf]
  %v8668 = vld [vmem:[#allocation2 + $0x318] sm:$0xf]
  %v8669 = vld [vmem:[#allocation2 + $0x33c] sm:$0xf]
  %v8670 = vld [vmem:[#allocation2 + $0x360] sm:$0xf]
  %v8671 = vld [vmem:[#allocation2 + $0x384] sm:$0xf]
  %v8672 = vld [vmem:[#allocation2 + $0x3a8] sm:$0xf]
  %v8673 = vld [vmem:[#allocation2 + $0x3cc] sm:$0xf]
  %v8674 = vld [vmem:[#allocation2 + $0x3f0] sm:$0xf]
  %v8675 = vld [vmem:[#allocation2 + $0x414] sm:$0xf]
  %v8676 = vld [vmem:[#allocation2 + $0x438] sm:$0xf]
  %v8677 = vld [vmem:[#allocation2 + $0x45c] sm:$0xf]
  %v8678 = vld [vmem:[#allocation2 + $0x480] sm:$0xf]
  %v8679 = vld [vmem:[#allocation2 + $0x4a4] sm:$0xf]
  %v8680 = vld [vmem:[#allocation2 + $0x4c8] sm:$0xf]
  %v8681 = vld [vmem:[#allocation2 + $0x4ec] sm:$0xf]
  %v8682 = vld [vmem:[#allocation2 + $0x510] sm:$0x1]
  %v8691 = vunpack.c.l.b16 %v8638
  %v8692 = vunpack.c.h.b16 %v8638
  %v8693 = vunpack.c.l.b16 %v8639
  %v8694 = vunpack.c.l.b16 %v8640
  %v8695 = vunpack.c.h.b16 %v8640
  %v8696 = vunpack.c.l.b16 %v8641
  %v8697 = vunpack.c.l.b16 %v8642
  %v8698 = vunpack.c.h.b16 %v8642
  %v8699 = vunpack.c.l.b16 %v8643
  %v8700 = vunpack.c.l.b16 %v8644
  %v8701 = vunpack.c.h.b16 %v8644
  %v8702 = vunpack.c.l.b16 %v8645
  %v8703 = vpack.c.b16 %v8694, %v8691
  %v8704 = vpack.c.b16 %v8695, %v8692
  %v8705 = vpack.c.b16 %v8696, %v8693
  %v8706 = vpack.c.b16 %v8700, %v8697
  %v8707 = vpack.c.b16 %v8701, %v8698
  %v8708 = vpack.c.b16 %v8702, %v8699
  %v8750 = vunpack.c.l.b16 %v8646
  %v8751 = vunpack.c.l.b16 %v8647
  %v8752 = vunpack.c.l.b16 %v8648
  %v8753 = vunpack.c.l.b16 %v8649
  %v8754 = vunpack.c.l.b16 %v8650
  %v8755 = vunpack.c.l.b16 %v8651
  %v8756 = vunpack.c.l.b16 %v8652
  %v8757 = vunpack.c.l.b16 %v8653
  %v8758 = vunpack.c.l.b16 %v8654
  %v8759 = vunpack.c.l.b16 %v8655
  %v8760 = vunpack.c.l.b16 %v8656
  %v8761 = vunpack.c.l.b16 %v8657
  %v8762 = vunpack.c.l.b16 %v8658
  %v8763 = vunpack.c.l.b16 %v8659
  %v8764 = vunpack.c.l.b16 %v8660
  %v8765 = vunpack.c.l.b16 %v8661
  %v8766 = vunpack.c.l.b16 %v8662
  %v8767 = vunpack.c.l.b16 %v8663
  %v8768 = vunpack.c.l.b16 %v8664
  %v8769 = vunpack.c.l.b16 %v8665
  %v8770 = vunpack.c.l.b16 %v8666
  %v8771 = vunpack.c.l.b16 %v8667
  %v8772 = vunpack.c.l.b16 %v8668
  %v8773 = vunpack.c.l.b16 %v8669
  %v8774 = vunpack.c.l.b16 %v8670
  %v8775 = vunpack.c.l.b16 %v8671
  %v8776 = vunpack.c.l.b16 %v8672
  %v8777 = vunpack.c.l.b16 %v8673
  %v8778 = vunpack.c.l.b16 %v8674
  %v8779 = vunpack.c.l.b16 %v8675
  %v8780 = vunpack.c.l.b16 %v8676
  %v8781 = vunpack.c.l.b16 %v8677
  %v8782 = vunpack.c.l.b16 %v8678
  %v8783 = vunpack.c.l.b16 %v8679
  %v8784 = vunpack.c.l.b16 %v8680
  %v8785 = vunpack.c.l.b16 %v8681
  %v8786 = vunpack.c.l.b16 %v8682
  %v8787 = vpack.c.b16 %v8751, %v8750
  %v8788 = vpack.c.b16 %v8753, %v8752
  %v8789 = vpack.c.b16 %v8755, %v8754
  %v8790 = vpack.c.b16 %v8757, %v8756
  %v8791 = vpack.c.b16 %v8759, %v8758
  %v8792 = vpack.c.b16 %v8761, %v8760
  %v8793 = vpack.c.b16 %v8763, %v8762
  %v8794 = vpack.c.b16 %v8765, %v8764
  %v8795 = vpack.c.b16 %v8767, %v8766
  %v8796 = vpack.c.b16 %v8769, %v8768
  %v8797 = vpack.c.b16 %v8771, %v8770
  %v8798 = vpack.c.b16 %v8773, %v8772
  %v8799 = vpack.c.b16 %v8775, %v8774
  %v8800 = vpack.c.b16 %v8777, %v8776
  %v8801 = vpack.c.b16 %v8779, %v8778
  %v8802 = vpack.c.b16 %v8781, %v8780
  %v8803 = vpack.c.b16 %v8783, %v8782
  %v8804 = vpack.c.b16 %v8785, %v8784
  %v8805 = vpack.c.b16 %v8786, %v8786
  %v8825 = vsel %vm7710, %v8705, 0
  %v8828 = vsel %vm7710, %v8708, 0
  %v8831 = vand.u32 %v8805, %v1433
  %8833 = vmatpush.bf16.msra.mxu0 %v8794
  %8834 = vmatpush.bf16.msra.mxu0 %v8793
  %8835 = vmatpush.bf16.msra.mxu0 %v8792
  %8836 = vmatpush.bf16.msra.mxu0 %v8791
  %8837 = vmatpush.bf16.msra.mxu0 %v8790
  %8838 = vmatpush.bf16.msra.mxu0 %v8789
  %8839 = vmatpush.bf16.msra.mxu0 %v8788
  %8840 = vmatpush.bf16.msra.mxu0 %v8787
  %8841 = vmatmul.bf16.gmra.mxu0 %v8703
  %v8842 = vpop.f32.mrf.mxu0
  %v8843 = vadd.f32 0.0, %v8842
  %v8844 = vpop.f32.mrf.mxu0
  %v8845 = vadd.f32 0.0, %v8844
  %8846 = vmatmul.bf16.gmra.mxu0 %v8706
  %v8847 = vpop.f32.mrf.mxu0
  %v8848 = vadd.f32 0.0, %v8847
  %v8849 = vpop.f32.mrf.mxu0
  %v8850 = vadd.f32 0.0, %v8849
  %8851 = vdwg.mxu0
  %8852 = vmatpush.bf16.msra.mxu0 %v8802
  %8853 = vmatpush.bf16.msra.mxu0 %v8801
  %8854 = vmatpush.bf16.msra.mxu0 %v8800
  %8855 = vmatpush.bf16.msra.mxu0 %v8799
  %8856 = vmatpush.bf16.msra.mxu0 %v8798
  %8857 = vmatpush.bf16.msra.mxu0 %v8797
  %8858 = vmatpush.bf16.msra.mxu0 %v8796
  %8859 = vmatpush.bf16.msra.mxu0 %v8795
  %8860 = vmatmul.bf16.gmra.mxu0 %v8704
  %v8861 = vpop.f32.mrf.mxu0
  %v8862 = vadd.f32 %v8843, %v8861
  %v8863 = vpop.f32.mrf.mxu0
  %v8864 = vadd.f32 %v8845, %v8863
  %8865 = vmatmul.bf16.gmra.mxu0 %v8707
  %v8866 = vpop.f32.mrf.mxu0
  %v8867 = vadd.f32 %v8848, %v8866
  %v8868 = vpop.f32.mrf.mxu0
  %v8869 = vadd.f32 %v8850, %v8868
  %8870 = vdwg.mxu0
  %8871 = vmatpush.bf16.msra.mxu0 0
  %8872 = vmatpush.bf16.msra.mxu0 0
  %8873 = vmatpush.bf16.msra.mxu0 0
  %8874 = vmatpush.bf16.msra.mxu0 0
  %8875 = vmatpush.bf16.msra.mxu0 0
  %8876 = vmatpush.bf16.msra.mxu0 %v8831
  %8877 = vmatpush.bf16.msra.mxu0 %v8804
  %8878 = vmatpush.bf16.msra.mxu0 %v8803
  %8879 = vmatmul.bf16.gmra.mxu0 %v8825
  %v8880 = vpop.f32.mrf.mxu0
  %v8881 = vadd.f32 %v8862, %v8880
  %v8882 = vpop.f32.mrf.mxu0
  %v8883 = vadd.f32 %v8864, %v8882
  %8884 = vmatmul.bf16.gmra.mxu0 %v8828
  %v8885 = vpop.f32.mrf.mxu0
  %v8886 = vadd.f32 %v8867, %v8885
  %v8887 = vpop.f32.mrf.mxu0
  %v8888 = vadd.f32 %v8869, %v8887
  %8889 = vdwg.mxu0
  %v8890 = vld [vmem:[%s2 + $0x4] ss:$0 sm:$0xff]
  %v8891 = vmax.f32 %v8881, 0.0
  %v8892 = vmax.f32 %v8883, 0.0
  %v8893 = vmax.f32 %v8886, 0.0
  %v8894 = vmax.f32 %v8888, 0.0
  %v8895 = vmul.f32 %v8891, %v8890
  %v8896 = vmul.f32 %v8892, %v8890
  %v8897 = vmul.f32 %v8893, %v8890
  %v8898 = vmul.f32 %v8894, %v8890
  %v8899 = vpack.c.bf16 %v8895, %v8895
  %v8900 = vpack.c.bf16 %v8896, %v8896
  %v8901 = vpack.c.bf16 %v8897, %v8897
  %v8902 = vpack.c.bf16 %v8898, %v8898
  %8903 = vst.msk [vmem:[#allocation12 + $0x4] sm:$0xf] %vm8399, %v8899
  %8904 = vst.msk [vmem:[#allocation12 + $0x10] sm:$0xf] %vm8399, %v8900
  %8905 = vst.msk [vmem:[#allocation12 + $0x1c] sm:$0xf] %vm8399, %v8901
  %8906 = vst.msk [vmem:[#allocation12 + $0x28] sm:$0xf] %vm8399, %v8902
  %v8907 = vld [vmem:[#allocation12] sm:$0xff]
  %v8908 = vld [vmem:[#allocation12 + $0xc] sm:$0xff]
  %v8909 = vld [vmem:[#allocation12 + $0x18] sm:$0xff]
  %v8910 = vld [vmem:[#allocation12 + $0x24] sm:$0xff]
  %8915 = vrot.lane.b32.xlu0 %v8907, 5
  %v8916 = vpop.permute.xlu0 %8915
  %8917 = vrot.lane.b32.xlu0 %v8908, 5
  %v8918 = vpop.permute.xlu0 %8917
  %8919 = vrot.lane.b32.xlu0 %v8909, 5
  %v8920 = vpop.permute.xlu0 %8919
  %8921 = vrot.lane.b32.xlu0 %v8910, 5
  %v8922 = vpop.permute.xlu0 %8921
  %v8923 = vrot.slane %v8916, 4
  %v8924 = vrot.slane %v8918, 4
  %v8925 = vrot.slane %v8920, 4
  %v8926 = vrot.slane %v8922, 4
  %v8927 = vsel %vm7055, %v8916, %v8923
  %v8928 = vsel %vm7055, %v8918, %v8924
  %v8929 = vsel %vm7055, %v8920, %v8925
  %v8930 = vsel %vm7055, %v8922, %v8926
  %8935 = vst.msk [vmem:[#allocation2] sm:$0xf] %vm8399, %v8927
  %8936 = vst.msk [vmem:[#allocation2 + $0x24] sm:$0xf] %vm8399, %v8928
  %8937 = vst.msk [vmem:[#allocation2 + $0x48] sm:$0xf] %vm8399, %v8929
  %8938 = vst.msk [vmem:[#allocation2 + $0x6c] sm:$0xf] %vm8399, %v8930
  %v8939 = vld [vmem:[#allocation12] sm:$0xff]
  %v8940 = vld [vmem:[#allocation12 + $0xc] sm:$0xff]
  %v8941 = vld [vmem:[#allocation12 + $0x18] sm:$0xff]
  %v8942 = vld [vmem:[#allocation12 + $0x24] sm:$0xff]
  %8947 = vrot.lane.b32.xlu0 %v8939, 4
  %v8948 = vpop.permute.xlu0 %8947
  %8949 = vrot.lane.b32.xlu0 %v8940, 4
  %v8950 = vpop.permute.xlu0 %8949
  %8951 = vrot.lane.b32.xlu0 %v8941, 4
  %v8952 = vpop.permute.xlu0 %8951
  %8953 = vrot.lane.b32.xlu0 %v8942, 4
  %v8954 = vpop.permute.xlu0 %8953
  %v8955 = vrot.slane %v8948, 4
  %v8956 = vrot.slane %v8950, 4
  %v8957 = vrot.slane %v8952, 4
  %v8958 = vrot.slane %v8954, 4
  %v8959 = vsel %vm8456, %v8948, %v8955
  %v8960 = vsel %vm8456, %v8950, %v8956
  %v8961 = vsel %vm8456, %v8952, %v8957
  %v8962 = vsel %vm8456, %v8954, %v8958
  %8967 = vst.msk [vmem:[#allocation2 + $0x90] sm:$0xf] %vm8399, %v8959
  %8968 = vst.msk [vmem:[#allocation2 + $0xb4] sm:$0xf] %vm8399, %v8960
  %8969 = vst.msk [vmem:[#allocation2 + $0xd8] sm:$0xf] %vm8399, %v8961
  %8970 = vst.msk [vmem:[#allocation2 + $0xfc] sm:$0xf] %vm8399, %v8962
  %v8971 = vld [vmem:[#allocation12] sm:$0xff]
  %v8972 = vld [vmem:[#allocation12 + $0xc] sm:$0xff]
  %v8973 = vld [vmem:[#allocation12 + $0x18] sm:$0xff]
  %v8974 = vld [vmem:[#allocation12 + $0x24] sm:$0xff]
  %8979 = vrot.lane.b32.xlu0 %v8971, 3
  %v8980 = vpop.permute.xlu0 %8979
  %8981 = vrot.lane.b32.xlu0 %v8972, 3
  %v8982 = vpop.permute.xlu0 %8981
  %8983 = vrot.lane.b32.xlu0 %v8973, 3
  %v8984 = vpop.permute.xlu0 %8983
  %8985 = vrot.lane.b32.xlu0 %v8974, 3
  %v8986 = vpop.permute.xlu0 %8985
  %v8987 = vrot.slane %v8980, 4
  %v8988 = vrot.slane %v8982, 4
  %v8989 = vrot.slane %v8984, 4
  %v8990 = vrot.slane %v8986, 4
  %v8991 = vsel %vm8489, %v8980, %v8987
  %v8992 = vsel %vm8489, %v8982, %v8988
  %v8993 = vsel %vm8489, %v8984, %v8989
  %v8994 = vsel %vm8489, %v8986, %v8990
  %8999 = vst.msk [vmem:[#allocation2 + $0x120] sm:$0xf] %vm8399, %v8991
  %9000 = vst.msk [vmem:[#allocation2 + $0x144] sm:$0xf] %vm8399, %v8992
  %9001 = vst.msk [vmem:[#allocation2 + $0x168] sm:$0xf] %vm8399, %v8993
  %9002 = vst.msk [vmem:[#allocation2 + $0x18c] sm:$0xf] %vm8399, %v8994
  %v9003 = vld [vmem:[#allocation12] sm:$0xff]
  %v9004 = vld [vmem:[#allocation12 + $0xc] sm:$0xff]
  %v9005 = vld [vmem:[#allocation12 + $0x18] sm:$0xff]
  %v9006 = vld [vmem:[#allocation12 + $0x24] sm:$0xff]
  %9011 = vrot.lane.b32.xlu0 %v9003, 1
  %v9012 = vpop.permute.xlu0 %9011
  %9013 = vrot.lane.b32.xlu0 %v9004, 1
  %v9014 = vpop.permute.xlu0 %9013
  %9015 = vrot.lane.b32.xlu0 %v9005, 1
  %v9016 = vpop.permute.xlu0 %9015
  %9017 = vrot.lane.b32.xlu0 %v9006, 1
  %v9018 = vpop.permute.xlu0 %9017
  %v9019 = vrot.slane %v9012, 4
  %v9020 = vrot.slane %v9014, 4
  %v9021 = vrot.slane %v9016, 4
  %v9022 = vrot.slane %v9018, 4
  %v9023 = vsel %vm563, %v9012, %v9019
  %v9024 = vsel %vm563, %v9014, %v9020
  %v9025 = vsel %vm563, %v9016, %v9021
  %v9026 = vsel %vm563, %v9018, %v9022
  %9031 = vst.msk [vmem:[#allocation2 + $0x1b0] sm:$0xf] %vm8399, %v9023
  %9032 = vst.msk [vmem:[#allocation2 + $0x1d4] sm:$0xf] %vm8399, %v9024
  %9033 = vst.msk [vmem:[#allocation2 + $0x1f8] sm:$0xf] %vm8399, %v9025
  %9034 = vst.msk [vmem:[#allocation2 + $0x21c] sm:$0xf] %vm8399, %v9026
  %v9035 = vld [vmem:[#allocation12 + $0x4] sm:$0xf]
  %v9036 = vld [vmem:[#allocation12 + $0x10] sm:$0xf]
  %v9037 = vld [vmem:[#allocation12 + $0x1c] sm:$0xf]
  %v9038 = vld [vmem:[#allocation12 + $0x28] sm:$0xf]
  %9039 = vst.msk [vmem:[#allocation2 + $0x240] sm:$0xf] %vm8399, %v9035
  %9040 = vst.msk [vmem:[#allocation2 + $0x264] sm:$0xf] %vm8399, %v9036
  %9041 = vst.msk [vmem:[#allocation2 + $0x288] sm:$0xf] %vm8399, %v9037
  %9042 = vst.msk [vmem:[#allocation2 + $0x2ac] sm:$0xf] %vm8399, %v9038
  %v9043 = vld [vmem:[#allocation12 + $0x4] sm:$0xf]
  %v9044 = vld [vmem:[#allocation12 + $0x10] sm:$0xf]
  %v9045 = vld [vmem:[#allocation12 + $0x1c] sm:$0xf]
  %v9046 = vld [vmem:[#allocation12 + $0x28] sm:$0xf]
  %9051 = vrot.lane.b32.xlu0 %v9043, 127
  %v9052 = vpop.permute.xlu0 %9051
  %9053 = vrot.lane.b32.xlu0 %v9044, 127
  %v9054 = vpop.permute.xlu0 %9053
  %9055 = vrot.lane.b32.xlu0 %v9045, 127
  %v9056 = vpop.permute.xlu0 %9055
  %9057 = vrot.lane.b32.xlu0 %v9046, 127
  %v9058 = vpop.permute.xlu0 %9057
  %9063 = vst.msk [vmem:[#allocation2 + $0x2d0] sm:$0xf] %vm8399, %v9052
  %9064 = vst.msk [vmem:[#allocation2 + $0x2f4] sm:$0xf] %vm8399, %v9054
  %9065 = vst.msk [vmem:[#allocation2 + $0x318] sm:$0xf] %vm8399, %v9056
  %9066 = vst.msk [vmem:[#allocation2 + $0x33c] sm:$0xf] %vm8399, %v9058
  %v9067 = vld [vmem:[#allocation12 + $0x4] sm:$0xf]
  %v9068 = vld [vmem:[#allocation12 + $0x10] sm:$0xf]
  %v9069 = vld [vmem:[#allocation12 + $0x1c] sm:$0xf]
  %v9070 = vld [vmem:[#allocation12 + $0x28] sm:$0xf]
  %9075 = vrot.lane.b32.xlu0 %v9067, 125
  %v9076 = vpop.permute.xlu0 %9075
  %9077 = vrot.lane.b32.xlu0 %v9068, 125
  %v9078 = vpop.permute.xlu0 %9077
  %9079 = vrot.lane.b32.xlu0 %v9069, 125
  %v9080 = vpop.permute.xlu0 %9079
  %9081 = vrot.lane.b32.xlu0 %v9070, 125
  %v9082 = vpop.permute.xlu0 %9081
  %9087 = vst.msk [vmem:[#allocation2 + $0x360] sm:$0xf] %vm8399, %v9076
  %9088 = vst.msk [vmem:[#allocation2 + $0x384] sm:$0xf] %vm8399, %v9078
  %9089 = vst.msk [vmem:[#allocation2 + $0x3a8] sm:$0xf] %vm8399, %v9080
  %9090 = vst.msk [vmem:[#allocation2 + $0x3cc] sm:$0xf] %vm8399, %v9082
  %v9091 = vld [vmem:[#allocation12 + $0x4] sm:$0xf]
  %v9092 = vld [vmem:[#allocation12 + $0x10] sm:$0xf]
  %v9093 = vld [vmem:[#allocation12 + $0x1c] sm:$0xf]
  %v9094 = vld [vmem:[#allocation12 + $0x28] sm:$0xf]
  %9099 = vrot.lane.b32.xlu0 %v9091, 124
  %v9100 = vpop.permute.xlu0 %9099
  %9101 = vrot.lane.b32.xlu0 %v9092, 124
  %v9102 = vpop.permute.xlu0 %9101
  %9103 = vrot.lane.b32.xlu0 %v9093, 124
  %v9104 = vpop.permute.xlu0 %9103
  %9105 = vrot.lane.b32.xlu0 %v9094, 124
  %v9106 = vpop.permute.xlu0 %9105
  %9111 = vst.msk [vmem:[#allocation2 + $0x3f0] sm:$0xf] %vm8399, %v9100
  %9112 = vst.msk [vmem:[#allocation2 + $0x414] sm:$0xf] %vm8399, %v9102
  %9113 = vst.msk [vmem:[#allocation2 + $0x438] sm:$0xf] %vm8399, %v9104
  %9114 = vst.msk [vmem:[#allocation2 + $0x45c] sm:$0xf] %vm8399, %v9106
  %v9115 = vld [vmem:[#allocation12 + $0x4] sm:$0xf]
  %v9116 = vld [vmem:[#allocation12 + $0x10] sm:$0xf]
  %v9117 = vld [vmem:[#allocation12 + $0x1c] sm:$0xf]
  %v9118 = vld [vmem:[#allocation12 + $0x28] sm:$0xf]
  %9123 = vrot.lane.b32.xlu0 %v9115, 123
  %v9124 = vpop.permute.xlu0 %9123
  %9125 = vrot.lane.b32.xlu0 %v9116, 123
  %v9126 = vpop.permute.xlu0 %9125
  %9127 = vrot.lane.b32.xlu0 %v9117, 123
  %v9128 = vpop.permute.xlu0 %9127
  %9129 = vrot.lane.b32.xlu0 %v9118, 123
  %v9130 = vpop.permute.xlu0 %9129
  %9135 = vst.msk [vmem:[#allocation2 + $0x480] sm:$0xf] %vm8399, %v9124
  %9136 = vst.msk [vmem:[#allocation2 + $0x4a4] sm:$0xf] %vm8399, %v9126
  %9137 = vst.msk [vmem:[#allocation2 + $0x4c8] sm:$0xf] %vm8399, %v9128
  %9138 = vst.msk [vmem:[#allocation2 + $0x4ec] sm:$0xf] %vm8399, %v9130
  %v9139 = vld [vmem:[%s1 + $0x168] sm:$0xff]
  %v9140 = vld [vmem:[%s1 + $0x170] sm:$0xf]
  %v9141 = vld [vmem:[%s1 + $0x174] sm:$0xff]
  %v9142 = vld [vmem:[%s1 + $0x17c] sm:$0xf]
  %v9143 = vld [vmem:[%s1 + $0x180] sm:$0xff]
  %v9144 = vld [vmem:[%s1 + $0x188] sm:$0xf]
  %v9145 = vld [vmem:[%s1 + $0x18c] sm:$0xff]
  %v9146 = vld [vmem:[%s1 + $0x194] sm:$0xf]
  %v9147 = vld [vmem:[#allocation2] sm:$0xf]
  %v9148 = vld [vmem:[#allocation2 + $0x24] sm:$0xf]
  %v9149 = vld [vmem:[#allocation2 + $0x48] sm:$0xf]
  %v9150 = vld [vmem:[#allocation2 + $0x6c] sm:$0xf]
  %v9151 = vld [vmem:[#allocation2 + $0x90] sm:$0xf]
  %v9152 = vld [vmem:[#allocation2 + $0xb4] sm:$0xf]
  %v9153 = vld [vmem:[#allocation2 + $0xd8] sm:$0xf]
  %v9154 = vld [vmem:[#allocation2 + $0xfc] sm:$0xf]
  %v9155 = vld [vmem:[#allocation2 + $0x120] sm:$0xf]
  %v9156 = vld [vmem:[#allocation2 + $0x144] sm:$0xf]
  %v9157 = vld [vmem:[#allocation2 + $0x168] sm:$0xf]
  %v9158 = vld [vmem:[#allocation2 + $0x18c] sm:$0xf]
  %v9159 = vld [vmem:[#allocation2 + $0x1b0] sm:$0xf]
  %v9160 = vld [vmem:[#allocation2 + $0x1d4] sm:$0xf]
  %v9161 = vld [vmem:[#allocation2 + $0x1f8] sm:$0xf]
  %v9162 = vld [vmem:[#allocation2 + $0x21c] sm:$0xf]
  %v9163 = vld [vmem:[#allocation2 + $0x240] sm:$0xf]
  %v9164 = vld [vmem:[#allocation2 + $0x264] sm:$0xf]
  %v9165 = vld [vmem:[#allocation2 + $0x288] sm:$0xf]
  %v9166 = vld [vmem:[#allocation2 + $0x2ac] sm:$0xf]
  %v9167 = vld [vmem:[#allocation2 + $0x2d0] sm:$0xf]
  %v9168 = vld [vmem:[#allocation2 + $0x2f4] sm:$0xf]
  %v9169 = vld [vmem:[#allocation2 + $0x318] sm:$0xf]
  %v9170 = vld [vmem:[#allocation2 + $0x33c] sm:$0xf]
  %v9171 = vld [vmem:[#allocation2 + $0x360] sm:$0xf]
  %v9172 = vld [vmem:[#allocation2 + $0x384] sm:$0xf]
  %v9173 = vld [vmem:[#allocation2 + $0x3a8] sm:$0xf]
  %v9174 = vld [vmem:[#allocation2 + $0x3cc] sm:$0xf]
  %v9175 = vld [vmem:[#allocation2 + $0x3f0] sm:$0xf]
  %v9176 = vld [vmem:[#allocation2 + $0x414] sm:$0xf]
  %v9177 = vld [vmem:[#allocation2 + $0x438] sm:$0xf]
  %v9178 = vld [vmem:[#allocation2 + $0x45c] sm:$0xf]
  %v9179 = vld [vmem:[#allocation2 + $0x480] sm:$0xf]
  %v9180 = vld [vmem:[#allocation2 + $0x4a4] sm:$0xf]
  %v9181 = vld [vmem:[#allocation2 + $0x4c8] sm:$0xf]
  %v9182 = vld [vmem:[#allocation2 + $0x4ec] sm:$0xf]
  %v9183 = vld [vmem:[#allocation2 + $0x510] sm:$0x1]
  %v9192 = vunpack.c.l.b16 %v9139
  %v9193 = vunpack.c.h.b16 %v9139
  %v9194 = vunpack.c.l.b16 %v9140
  %v9195 = vunpack.c.l.b16 %v9141
  %v9196 = vunpack.c.h.b16 %v9141
  %v9197 = vunpack.c.l.b16 %v9142
  %v9198 = vunpack.c.l.b16 %v9143
  %v9199 = vunpack.c.h.b16 %v9143
  %v9200 = vunpack.c.l.b16 %v9144
  %v9201 = vunpack.c.l.b16 %v9145
  %v9202 = vunpack.c.h.b16 %v9145
  %v9203 = vunpack.c.l.b16 %v9146
  %v9204 = vpack.c.b16 %v9195, %v9192
  %v9205 = vpack.c.b16 %v9196, %v9193
  %v9206 = vpack.c.b16 %v9197, %v9194
  %v9207 = vpack.c.b16 %v9201, %v9198
  %v9208 = vpack.c.b16 %v9202, %v9199
  %v9209 = vpack.c.b16 %v9203, %v9200
  %v9251 = vunpack.c.l.b16 %v9147
  %v9252 = vunpack.c.l.b16 %v9148
  %v9253 = vunpack.c.l.b16 %v9149
  %v9254 = vunpack.c.l.b16 %v9150
  %v9255 = vunpack.c.l.b16 %v9151
  %v9256 = vunpack.c.l.b16 %v9152
  %v9257 = vunpack.c.l.b16 %v9153
  %v9258 = vunpack.c.l.b16 %v9154
  %v9259 = vunpack.c.l.b16 %v9155
  %v9260 = vunpack.c.l.b16 %v9156
  %v9261 = vunpack.c.l.b16 %v9157
  %v9262 = vunpack.c.l.b16 %v9158
  %v9263 = vunpack.c.l.b16 %v9159
  %v9264 = vunpack.c.l.b16 %v9160
  %v9265 = vunpack.c.l.b16 %v9161
  %v9266 = vunpack.c.l.b16 %v9162
  %v9267 = vunpack.c.l.b16 %v9163
  %v9268 = vunpack.c.l.b16 %v9164
  %v9269 = vunpack.c.l.b16 %v9165
  %v9270 = vunpack.c.l.b16 %v9166
  %v9271 = vunpack.c.l.b16 %v9167
  %v9272 = vunpack.c.l.b16 %v9168
  %v9273 = vunpack.c.l.b16 %v9169
  %v9274 = vunpack.c.l.b16 %v9170
  %v9275 = vunpack.c.l.b16 %v9171
  %v9276 = vunpack.c.l.b16 %v9172
  %v9277 = vunpack.c.l.b16 %v9173
  %v9278 = vunpack.c.l.b16 %v9174
  %v9279 = vunpack.c.l.b16 %v9175
  %v9280 = vunpack.c.l.b16 %v9176
  %v9281 = vunpack.c.l.b16 %v9177
  %v9282 = vunpack.c.l.b16 %v9178
  %v9283 = vunpack.c.l.b16 %v9179
  %v9284 = vunpack.c.l.b16 %v9180
  %v9285 = vunpack.c.l.b16 %v9181
  %v9286 = vunpack.c.l.b16 %v9182
  %v9287 = vunpack.c.l.b16 %v9183
  %v9288 = vpack.c.b16 %v9252, %v9251
  %v9289 = vpack.c.b16 %v9254, %v9253
  %v9290 = vpack.c.b16 %v9256, %v9255
  %v9291 = vpack.c.b16 %v9258, %v9257
  %v9292 = vpack.c.b16 %v9260, %v9259
  %v9293 = vpack.c.b16 %v9262, %v9261
  %v9294 = vpack.c.b16 %v9264, %v9263
  %v9295 = vpack.c.b16 %v9266, %v9265
  %v9296 = vpack.c.b16 %v9268, %v9267
  %v9297 = vpack.c.b16 %v9270, %v9269
  %v9298 = vpack.c.b16 %v9272, %v9271
  %v9299 = vpack.c.b16 %v9274, %v9273
  %v9300 = vpack.c.b16 %v9276, %v9275
  %v9301 = vpack.c.b16 %v9278, %v9277
  %v9302 = vpack.c.b16 %v9280, %v9279
  %v9303 = vpack.c.b16 %v9282, %v9281
  %v9304 = vpack.c.b16 %v9284, %v9283
  %v9305 = vpack.c.b16 %v9286, %v9285
  %v9306 = vpack.c.b16 %v9287, %v9287
  %v9326 = vsel %vm7710, %v9206, 0
  %v9329 = vsel %vm7710, %v9209, 0
  %v9332 = vand.u32 %v9306, %v1433
  %9334 = vmatpush.bf16.msra.mxu0 %v9295
  %9335 = vmatpush.bf16.msra.mxu0 %v9294
  %9336 = vmatpush.bf16.msra.mxu0 %v9293
  %9337 = vmatpush.bf16.msra.mxu0 %v9292
  %9338 = vmatpush.bf16.msra.mxu0 %v9291
  %9339 = vmatpush.bf16.msra.mxu0 %v9290
  %9340 = vmatpush.bf16.msra.mxu0 %v9289
  %9341 = vmatpush.bf16.msra.mxu0 %v9288
  %9342 = vmatmul.bf16.gmra.mxu0 %v9204
  %v9343 = vpop.f32.mrf.mxu0
  %v9344 = vadd.f32 0.0, %v9343
  %v9345 = vpop.f32.mrf.mxu0
  %v9346 = vadd.f32 0.0, %v9345
  %9347 = vmatmul.bf16.gmra.mxu0 %v9207
  %v9348 = vpop.f32.mrf.mxu0
  %v9349 = vadd.f32 0.0, %v9348
  %v9350 = vpop.f32.mrf.mxu0
  %v9351 = vadd.f32 0.0, %v9350
  %9352 = vdwg.mxu0
  %9353 = vmatpush.bf16.msra.mxu0 %v9303
  %9354 = vmatpush.bf16.msra.mxu0 %v9302
  %9355 = vmatpush.bf16.msra.mxu0 %v9301
  %9356 = vmatpush.bf16.msra.mxu0 %v9300
  %9357 = vmatpush.bf16.msra.mxu0 %v9299
  %9358 = vmatpush.bf16.msra.mxu0 %v9298
  %9359 = vmatpush.bf16.msra.mxu0 %v9297
  %9360 = vmatpush.bf16.msra.mxu0 %v9296
  %9361 = vmatmul.bf16.gmra.mxu0 %v9205
  %v9362 = vpop.f32.mrf.mxu0
  %v9363 = vadd.f32 %v9344, %v9362
  %v9364 = vpop.f32.mrf.mxu0
  %v9365 = vadd.f32 %v9346, %v9364
  %9366 = vmatmul.bf16.gmra.mxu0 %v9208
  %v9367 = vpop.f32.mrf.mxu0
  %v9368 = vadd.f32 %v9349, %v9367
  %v9369 = vpop.f32.mrf.mxu0
  %v9370 = vadd.f32 %v9351, %v9369
  %9371 = vdwg.mxu0
  %9372 = vmatpush.bf16.msra.mxu0 0
  %9373 = vmatpush.bf16.msra.mxu0 0
  %9374 = vmatpush.bf16.msra.mxu0 0
  %9375 = vmatpush.bf16.msra.mxu0 0
  %9376 = vmatpush.bf16.msra.mxu0 0
  %9377 = vmatpush.bf16.msra.mxu0 %v9332
  %9378 = vmatpush.bf16.msra.mxu0 %v9305
  %9379 = vmatpush.bf16.msra.mxu0 %v9304
  %9380 = vmatmul.bf16.gmra.mxu0 %v9326
  %v9381 = vpop.f32.mrf.mxu0
  %v9382 = vadd.f32 %v9363, %v9381
  %v9383 = vpop.f32.mrf.mxu0
  %v9384 = vadd.f32 %v9365, %v9383
  %9385 = vmatmul.bf16.gmra.mxu0 %v9329
  %v9386 = vpop.f32.mrf.mxu0
  %v9387 = vadd.f32 %v9368, %v9386
  %v9388 = vpop.f32.mrf.mxu0
  %v9389 = vadd.f32 %v9370, %v9388
  %9390 = vdwg.mxu0
  %v9391 = vld [vmem:[%s2 + $0x4] ss:$0 sm:$0xff]
  %v9392 = vmax.f32 %v9382, 0.0
  %v9393 = vmax.f32 %v9384, 0.0
  %v9394 = vmax.f32 %v9387, 0.0
  %v9395 = vmax.f32 %v9389, 0.0
  %v9396 = vmul.f32 %v9392, %v9391
  %v9397 = vmul.f32 %v9393, %v9391
  %v9398 = vmul.f32 %v9394, %v9391
  %v9399 = vmul.f32 %v9395, %v9391
  %v9400 = vpack.c.bf16 %v9396, %v9396
  %v9401 = vpack.c.bf16 %v9397, %v9397
  %v9402 = vpack.c.bf16 %v9398, %v9398
  %v9403 = vpack.c.bf16 %v9399, %v9399
  %9404 = vst.msk [vmem:[#allocation11 + $0x4] sm:$0xf] %vm8399, %v9400
  %9405 = vst.msk [vmem:[#allocation11 + $0x10] sm:$0xf] %vm8399, %v9401
  %9406 = vst.msk [vmem:[#allocation11 + $0x1c] sm:$0xf] %vm8399, %v9402
  %9407 = vst.msk [vmem:[#allocation11 + $0x28] sm:$0xf] %vm8399, %v9403
  %v9408 = vld [vmem:[#allocation11] sm:$0xff]
  %v9409 = vld [vmem:[#allocation11 + $0xc] sm:$0xff]
  %v9410 = vld [vmem:[#allocation11 + $0x18] sm:$0xff]
  %v9411 = vld [vmem:[#allocation11 + $0x24] sm:$0xff]
  %9416 = vrot.lane.b32.xlu0 %v9408, 5
  %v9417 = vpop.permute.xlu0 %9416
  %9418 = vrot.lane.b32.xlu0 %v9409, 5
  %v9419 = vpop.permute.xlu0 %9418
  %9420 = vrot.lane.b32.xlu0 %v9410, 5
  %v9421 = vpop.permute.xlu0 %9420
  %9422 = vrot.lane.b32.xlu0 %v9411, 5
  %v9423 = vpop.permute.xlu0 %9422
  %v9424 = vrot.slane %v9417, 4
  %v9425 = vrot.slane %v9419, 4
  %v9426 = vrot.slane %v9421, 4
  %v9427 = vrot.slane %v9423, 4
  %v9428 = vsel %vm7055, %v9417, %v9424
  %v9429 = vsel %vm7055, %v9419, %v9425
  %v9430 = vsel %vm7055, %v9421, %v9426
  %v9431 = vsel %vm7055, %v9423, %v9427
  %9436 = vst.msk [vmem:[#allocation2] sm:$0xf] %vm8399, %v9428
  %9437 = vst.msk [vmem:[#allocation2 + $0x24] sm:$0xf] %vm8399, %v9429
  %9438 = vst.msk [vmem:[#allocation2 + $0x48] sm:$0xf] %vm8399, %v9430
  %9439 = vst.msk [vmem:[#allocation2 + $0x6c] sm:$0xf] %vm8399, %v9431
  %v9440 = vld [vmem:[#allocation11] sm:$0xff]
  %v9441 = vld [vmem:[#allocation11 + $0xc] sm:$0xff]
  %v9442 = vld [vmem:[#allocation11 + $0x18] sm:$0xff]
  %v9443 = vld [vmem:[#allocation11 + $0x24] sm:$0xff]
  %9448 = vrot.lane.b32.xlu0 %v9440, 4
  %v9449 = vpop.permute.xlu0 %9448
  %9450 = vrot.lane.b32.xlu0 %v9441, 4
  %v9451 = vpop.permute.xlu0 %9450
  %9452 = vrot.lane.b32.xlu0 %v9442, 4
  %v9453 = vpop.permute.xlu0 %9452
  %9454 = vrot.lane.b32.xlu0 %v9443, 4
  %v9455 = vpop.permute.xlu0 %9454
  %v9456 = vrot.slane %v9449, 4
  %v9457 = vrot.slane %v9451, 4
  %v9458 = vrot.slane %v9453, 4
  %v9459 = vrot.slane %v9455, 4
  %v9460 = vsel %vm8456, %v9449, %v9456
  %v9461 = vsel %vm8456, %v9451, %v9457
  %v9462 = vsel %vm8456, %v9453, %v9458
  %v9463 = vsel %vm8456, %v9455, %v9459
  %9468 = vst.msk [vmem:[#allocation2 + $0x90] sm:$0xf] %vm8399, %v9460
  %9469 = vst.msk [vmem:[#allocation2 + $0xb4] sm:$0xf] %vm8399, %v9461
  %9470 = vst.msk [vmem:[#allocation2 + $0xd8] sm:$0xf] %vm8399, %v9462
  %9471 = vst.msk [vmem:[#allocation2 + $0xfc] sm:$0xf] %vm8399, %v9463
  %v9472 = vld [vmem:[#allocation11] sm:$0xff]
  %v9473 = vld [vmem:[#allocation11 + $0xc] sm:$0xff]
  %v9474 = vld [vmem:[#allocation11 + $0x18] sm:$0xff]
  %v9475 = vld [vmem:[#allocation11 + $0x24] sm:$0xff]
  %9480 = vrot.lane.b32.xlu0 %v9472, 3
  %v9481 = vpop.permute.xlu0 %9480
  %9482 = vrot.lane.b32.xlu0 %v9473, 3
  %v9483 = vpop.permute.xlu0 %9482
  %9484 = vrot.lane.b32.xlu0 %v9474, 3
  %v9485 = vpop.permute.xlu0 %9484
  %9486 = vrot.lane.b32.xlu0 %v9475, 3
  %v9487 = vpop.permute.xlu0 %9486
  %v9488 = vrot.slane %v9481, 4
  %v9489 = vrot.slane %v9483, 4
  %v9490 = vrot.slane %v9485, 4
  %v9491 = vrot.slane %v9487, 4
  %v9492 = vsel %vm8489, %v9481, %v9488
  %v9493 = vsel %vm8489, %v9483, %v9489
  %v9494 = vsel %vm8489, %v9485, %v9490
  %v9495 = vsel %vm8489, %v9487, %v9491
  %9500 = vst.msk [vmem:[#allocation2 + $0x120] sm:$0xf] %vm8399, %v9492
  %9501 = vst.msk [vmem:[#allocation2 + $0x144] sm:$0xf] %vm8399, %v9493
  %9502 = vst.msk [vmem:[#allocation2 + $0x168] sm:$0xf] %vm8399, %v9494
  %9503 = vst.msk [vmem:[#allocation2 + $0x18c] sm:$0xf] %vm8399, %v9495
  %v9504 = vld [vmem:[#allocation11] sm:$0xff]
  %v9505 = vld [vmem:[#allocation11 + $0xc] sm:$0xff]
  %v9506 = vld [vmem:[#allocation11 + $0x18] sm:$0xff]
  %v9507 = vld [vmem:[#allocation11 + $0x24] sm:$0xff]
  %9512 = vrot.lane.b32.xlu0 %v9504, 1
  %v9513 = vpop.permute.xlu0 %9512
  %9514 = vrot.lane.b32.xlu0 %v9505, 1
  %v9515 = vpop.permute.xlu0 %9514
  %9516 = vrot.lane.b32.xlu0 %v9506, 1
  %v9517 = vpop.permute.xlu0 %9516
  %9518 = vrot.lane.b32.xlu0 %v9507, 1
  %v9519 = vpop.permute.xlu0 %9518
  %v9520 = vrot.slane %v9513, 4
  %v9521 = vrot.slane %v9515, 4
  %v9522 = vrot.slane %v9517, 4
  %v9523 = vrot.slane %v9519, 4
  %v9524 = vsel %vm563, %v9513, %v9520
  %v9525 = vsel %vm563, %v9515, %v9521
  %v9526 = vsel %vm563, %v9517, %v9522
  %v9527 = vsel %vm563, %v9519, %v9523
  %9532 = vst.msk [vmem:[#allocation2 + $0x1b0] sm:$0xf] %vm8399, %v9524
  %9533 = vst.msk [vmem:[#allocation2 + $0x1d4] sm:$0xf] %vm8399, %v9525
  %9534 = vst.msk [vmem:[#allocation2 + $0x1f8] sm:$0xf] %vm8399, %v9526
  %9535 = vst.msk [vmem:[#allocation2 + $0x21c] sm:$0xf] %vm8399, %v9527
  %v9536 = vld [vmem:[#allocation11 + $0x4] sm:$0xf]
  %v9537 = vld [vmem:[#allocation11 + $0x10] sm:$0xf]
  %v9538 = vld [vmem:[#allocation11 + $0x1c] sm:$0xf]
  %v9539 = vld [vmem:[#allocation11 + $0x28] sm:$0xf]
  %9540 = vst.msk [vmem:[#allocation2 + $0x240] sm:$0xf] %vm8399, %v9536
  %9541 = vst.msk [vmem:[#allocation2 + $0x264] sm:$0xf] %vm8399, %v9537
  %9542 = vst.msk [vmem:[#allocation2 + $0x288] sm:$0xf] %vm8399, %v9538
  %9543 = vst.msk [vmem:[#allocation2 + $0x2ac] sm:$0xf] %vm8399, %v9539
  %v9544 = vld [vmem:[#allocation11 + $0x4] sm:$0xf]
  %v9545 = vld [vmem:[#allocation11 + $0x10] sm:$0xf]
  %v9546 = vld [vmem:[#allocation11 + $0x1c] sm:$0xf]
  %v9547 = vld [vmem:[#allocation11 + $0x28] sm:$0xf]
  %9552 = vrot.lane.b32.xlu0 %v9544, 127
  %v9553 = vpop.permute.xlu0 %9552
  %9554 = vrot.lane.b32.xlu0 %v9545, 127
  %v9555 = vpop.permute.xlu0 %9554
  %9556 = vrot.lane.b32.xlu0 %v9546, 127
  %v9557 = vpop.permute.xlu0 %9556
  %9558 = vrot.lane.b32.xlu0 %v9547, 127
  %v9559 = vpop.permute.xlu0 %9558
  %9564 = vst.msk [vmem:[#allocation2 + $0x2d0] sm:$0xf] %vm8399, %v9553
  %9565 = vst.msk [vmem:[#allocation2 + $0x2f4] sm:$0xf] %vm8399, %v9555
  %9566 = vst.msk [vmem:[#allocation2 + $0x318] sm:$0xf] %vm8399, %v9557
  %9567 = vst.msk [vmem:[#allocation2 + $0x33c] sm:$0xf] %vm8399, %v9559
  %v9568 = vld [vmem:[#allocation11 + $0x4] sm:$0xf]
  %v9569 = vld [vmem:[#allocation11 + $0x10] sm:$0xf]
  %v9570 = vld [vmem:[#allocation11 + $0x1c] sm:$0xf]
  %v9571 = vld [vmem:[#allocation11 + $0x28] sm:$0xf]
  %9576 = vrot.lane.b32.xlu0 %v9568, 125
  %v9577 = vpop.permute.xlu0 %9576
  %9578 = vrot.lane.b32.xlu0 %v9569, 125
  %v9579 = vpop.permute.xlu0 %9578
  %9580 = vrot.lane.b32.xlu0 %v9570, 125
  %v9581 = vpop.permute.xlu0 %9580
  %9582 = vrot.lane.b32.xlu0 %v9571, 125
  %v9583 = vpop.permute.xlu0 %9582
  %9588 = vst.msk [vmem:[#allocation2 + $0x360] sm:$0xf] %vm8399, %v9577
  %9589 = vst.msk [vmem:[#allocation2 + $0x384] sm:$0xf] %vm8399, %v9579
  %9590 = vst.msk [vmem:[#allocation2 + $0x3a8] sm:$0xf] %vm8399, %v9581
  %9591 = vst.msk [vmem:[#allocation2 + $0x3cc] sm:$0xf] %vm8399, %v9583
  %v9592 = vld [vmem:[#allocation11 + $0x4] sm:$0xf]
  %v9593 = vld [vmem:[#allocation11 + $0x10] sm:$0xf]
  %v9594 = vld [vmem:[#allocation11 + $0x1c] sm:$0xf]
  %v9595 = vld [vmem:[#allocation11 + $0x28] sm:$0xf]
  %9600 = vrot.lane.b32.xlu0 %v9592, 124
  %v9601 = vpop.permute.xlu0 %9600
  %9602 = vrot.lane.b32.xlu0 %v9593, 124
  %v9603 = vpop.permute.xlu0 %9602
  %9604 = vrot.lane.b32.xlu0 %v9594, 124
  %v9605 = vpop.permute.xlu0 %9604
  %9606 = vrot.lane.b32.xlu0 %v9595, 124
  %v9607 = vpop.permute.xlu0 %9606
  %9612 = vst.msk [vmem:[#allocation2 + $0x3f0] sm:$0xf] %vm8399, %v9601
  %9613 = vst.msk [vmem:[#allocation2 + $0x414] sm:$0xf] %vm8399, %v9603
  %9614 = vst.msk [vmem:[#allocation2 + $0x438] sm:$0xf] %vm8399, %v9605
  %9615 = vst.msk [vmem:[#allocation2 + $0x45c] sm:$0xf] %vm8399, %v9607
  %v9616 = vld [vmem:[#allocation11 + $0x4] sm:$0xf]
  %v9617 = vld [vmem:[#allocation11 + $0x10] sm:$0xf]
  %v9618 = vld [vmem:[#allocation11 + $0x1c] sm:$0xf]
  %v9619 = vld [vmem:[#allocation11 + $0x28] sm:$0xf]
  %9624 = vrot.lane.b32.xlu0 %v9616, 123
  %v9625 = vpop.permute.xlu0 %9624
  %9626 = vrot.lane.b32.xlu0 %v9617, 123
  %v9627 = vpop.permute.xlu0 %9626
  %9628 = vrot.lane.b32.xlu0 %v9618, 123
  %v9629 = vpop.permute.xlu0 %9628
  %9630 = vrot.lane.b32.xlu0 %v9619, 123
  %v9631 = vpop.permute.xlu0 %9630
  %9636 = vst.msk [vmem:[#allocation2 + $0x480] sm:$0xf] %vm8399, %v9625
  %9637 = vst.msk [vmem:[#allocation2 + $0x4a4] sm:$0xf] %vm8399, %v9627
  %9638 = vst.msk [vmem:[#allocation2 + $0x4c8] sm:$0xf] %vm8399, %v9629
  %9639 = vst.msk [vmem:[#allocation2 + $0x4ec] sm:$0xf] %vm8399, %v9631
  %v9640 = vld [vmem:[%s1 + $0x198] sm:$0xff]
  %v9641 = vld [vmem:[%s1 + $0x1a0] sm:$0xf]
  %v9642 = vld [vmem:[%s1 + $0x1a4] sm:$0xff]
  %v9643 = vld [vmem:[%s1 + $0x1ac] sm:$0xf]
  %v9644 = vld [vmem:[%s1 + $0x1b0] sm:$0xff]
  %v9645 = vld [vmem:[%s1 + $0x1b8] sm:$0xf]
  %v9646 = vld [vmem:[%s1 + $0x1bc] sm:$0xff]
  %v9647 = vld [vmem:[%s1 + $0x1c4] sm:$0xf]
  %v9648 = vld [vmem:[#allocation2] sm:$0xf]
  %v9649 = vld [vmem:[#allocation2 + $0x24] sm:$0xf]
  %v9650 = vld [vmem:[#allocation2 + $0x48] sm:$0xf]
  %v9651 = vld [vmem:[#allocation2 + $0x6c] sm:$0xf]
  %v9652 = vld [vmem:[#allocation2 + $0x90] sm:$0xf]
  %v9653 = vld [vmem:[#allocation2 + $0xb4] sm:$0xf]
  %v9654 = vld [vmem:[#allocation2 + $0xd8] sm:$0xf]
  %v9655 = vld [vmem:[#allocation2 + $0xfc] sm:$0xf]
  %v9656 = vld [vmem:[#allocation2 + $0x120] sm:$0xf]
  %v9657 = vld [vmem:[#allocation2 + $0x144] sm:$0xf]
  %v9658 = vld [vmem:[#allocation2 + $0x168] sm:$0xf]
  %v9659 = vld [vmem:[#allocation2 + $0x18c] sm:$0xf]
  %v9660 = vld [vmem:[#allocation2 + $0x1b0] sm:$0xf]
  %v9661 = vld [vmem:[#allocation2 + $0x1d4] sm:$0xf]
  %v9662 = vld [vmem:[#allocation2 + $0x1f8] sm:$0xf]
  %v9663 = vld [vmem:[#allocation2 + $0x21c] sm:$0xf]
  %v9664 = vld [vmem:[#allocation2 + $0x240] sm:$0xf]
  %v9665 = vld [vmem:[#allocation2 + $0x264] sm:$0xf]
  %v9666 = vld [vmem:[#allocation2 + $0x288] sm:$0xf]
  %v9667 = vld [vmem:[#allocation2 + $0x2ac] sm:$0xf]
  %v9668 = vld [vmem:[#allocation2 + $0x2d0] sm:$0xf]
  %v9669 = vld [vmem:[#allocation2 + $0x2f4] sm:$0xf]
  %v9670 = vld [vmem:[#allocation2 + $0x318] sm:$0xf]
  %v9671 = vld [vmem:[#allocation2 + $0x33c] sm:$0xf]
  %v9672 = vld [vmem:[#allocation2 + $0x360] sm:$0xf]
  %v9673 = vld [vmem:[#allocation2 + $0x384] sm:$0xf]
  %v9674 = vld [vmem:[#allocation2 + $0x3a8] sm:$0xf]
  %v9675 = vld [vmem:[#allocation2 + $0x3cc] sm:$0xf]
  %v9676 = vld [vmem:[#allocation2 + $0x3f0] sm:$0xf]
  %v9677 = vld [vmem:[#allocation2 + $0x414] sm:$0xf]
  %v9678 = vld [vmem:[#allocation2 + $0x438] sm:$0xf]
  %v9679 = vld [vmem:[#allocation2 + $0x45c] sm:$0xf]
  %v9680 = vld [vmem:[#allocation2 + $0x480] sm:$0xf]
  %v9681 = vld [vmem:[#allocation2 + $0x4a4] sm:$0xf]
  %v9682 = vld [vmem:[#allocation2 + $0x4c8] sm:$0xf]
  %v9683 = vld [vmem:[#allocation2 + $0x4ec] sm:$0xf]
  %v9684 = vld [vmem:[#allocation2 + $0x510] sm:$0x1]
  %v9693 = vunpack.c.l.b16 %v9640
  %v9694 = vunpack.c.h.b16 %v9640
  %v9695 = vunpack.c.l.b16 %v9641
  %v9696 = vunpack.c.l.b16 %v9642
  %v9697 = vunpack.c.h.b16 %v9642
  %v9698 = vunpack.c.l.b16 %v9643
  %v9699 = vunpack.c.l.b16 %v9644
  %v9700 = vunpack.c.h.b16 %v9644
  %v9701 = vunpack.c.l.b16 %v9645
  %v9702 = vunpack.c.l.b16 %v9646
  %v9703 = vunpack.c.h.b16 %v9646
  %v9704 = vunpack.c.l.b16 %v9647
  %v9705 = vpack.c.b16 %v9696, %v9693
  %v9706 = vpack.c.b16 %v9697, %v9694
  %v9707 = vpack.c.b16 %v9698, %v9695
  %v9708 = vpack.c.b16 %v9702, %v9699
  %v9709 = vpack.c.b16 %v9703, %v9700
  %v9710 = vpack.c.b16 %v9704, %v9701
  %v9752 = vunpack.c.l.b16 %v9648
  %v9753 = vunpack.c.l.b16 %v9649
  %v9754 = vunpack.c.l.b16 %v9650
  %v9755 = vunpack.c.l.b16 %v9651
  %v9756 = vunpack.c.l.b16 %v9652
  %v9757 = vunpack.c.l.b16 %v9653
  %v9758 = vunpack.c.l.b16 %v9654
  %v9759 = vunpack.c.l.b16 %v9655
  %v9760 = vunpack.c.l.b16 %v9656
  %v9761 = vunpack.c.l.b16 %v9657
  %v9762 = vunpack.c.l.b16 %v9658
  %v9763 = vunpack.c.l.b16 %v9659
  %v9764 = vunpack.c.l.b16 %v9660
  %v9765 = vunpack.c.l.b16 %v9661
  %v9766 = vunpack.c.l.b16 %v9662
  %v9767 = vunpack.c.l.b16 %v9663
  %v9768 = vunpack.c.l.b16 %v9664
  %v9769 = vunpack.c.l.b16 %v9665
  %v9770 = vunpack.c.l.b16 %v9666
  %v9771 = vunpack.c.l.b16 %v9667
  %v9772 = vunpack.c.l.b16 %v9668
  %v9773 = vunpack.c.l.b16 %v9669
  %v9774 = vunpack.c.l.b16 %v9670
  %v9775 = vunpack.c.l.b16 %v9671
  %v9776 = vunpack.c.l.b16 %v9672
  %v9777 = vunpack.c.l.b16 %v9673
  %v9778 = vunpack.c.l.b16 %v9674
  %v9779 = vunpack.c.l.b16 %v9675
  %v9780 = vunpack.c.l.b16 %v9676
  %v9781 = vunpack.c.l.b16 %v9677
  %v9782 = vunpack.c.l.b16 %v9678
  %v9783 = vunpack.c.l.b16 %v9679
  %v9784 = vunpack.c.l.b16 %v9680
  %v9785 = vunpack.c.l.b16 %v9681
  %v9786 = vunpack.c.l.b16 %v9682
  %v9787 = vunpack.c.l.b16 %v9683
  %v9788 = vunpack.c.l.b16 %v9684
  %v9789 = vpack.c.b16 %v9753, %v9752
  %v9790 = vpack.c.b16 %v9755, %v9754
  %v9791 = vpack.c.b16 %v9757, %v9756
  %v9792 = vpack.c.b16 %v9759, %v9758
  %v9793 = vpack.c.b16 %v9761, %v9760
  %v9794 = vpack.c.b16 %v9763, %v9762
  %v9795 = vpack.c.b16 %v9765, %v9764
  %v9796 = vpack.c.b16 %v9767, %v9766
  %v9797 = vpack.c.b16 %v9769, %v9768
  %v9798 = vpack.c.b16 %v9771, %v9770
  %v9799 = vpack.c.b16 %v9773, %v9772
  %v9800 = vpack.c.b16 %v9775, %v9774
  %v9801 = vpack.c.b16 %v9777, %v9776
  %v9802 = vpack.c.b16 %v9779, %v9778
  %v9803 = vpack.c.b16 %v9781, %v9780
  %v9804 = vpack.c.b16 %v9783, %v9782
  %v9805 = vpack.c.b16 %v9785, %v9784
  %v9806 = vpack.c.b16 %v9787, %v9786
  %v9807 = vpack.c.b16 %v9788, %v9788
  %v9827 = vsel %vm7710, %v9707, 0
  %v9830 = vsel %vm7710, %v9710, 0
  %v9833 = vand.u32 %v9807, %v1433
  %9835 = vmatpush.bf16.msra.mxu0 %v9796
  %9836 = vmatpush.bf16.msra.mxu0 %v9795
  %9837 = vmatpush.bf16.msra.mxu0 %v9794
  %9838 = vmatpush.bf16.msra.mxu0 %v9793
  %9839 = vmatpush.bf16.msra.mxu0 %v9792
  %9840 = vmatpush.bf16.msra.mxu0 %v9791
  %9841 = vmatpush.bf16.msra.mxu0 %v9790
  %9842 = vmatpush.bf16.msra.mxu0 %v9789
  %9843 = vmatmul.bf16.gmra.mxu0 %v9705
  %v9844 = vpop.f32.mrf.mxu0
  %v9845 = vadd.f32 0.0, %v9844
  %v9846 = vpop.f32.mrf.mxu0
  %v9847 = vadd.f32 0.0, %v9846
  %9848 = vmatmul.bf16.gmra.mxu0 %v9708
  %v9849 = vpop.f32.mrf.mxu0
  %v9850 = vadd.f32 0.0, %v9849
  %v9851 = vpop.f32.mrf.mxu0
  %v9852 = vadd.f32 0.0, %v9851
  %9853 = vdwg.mxu0
  %9854 = vmatpush.bf16.msra.mxu0 %v9804
  %9855 = vmatpush.bf16.msra.mxu0 %v9803
  %9856 = vmatpush.bf16.msra.mxu0 %v9802
  %9857 = vmatpush.bf16.msra.mxu0 %v9801
  %9858 = vmatpush.bf16.msra.mxu0 %v9800
  %9859 = vmatpush.bf16.msra.mxu0 %v9799
  %9860 = vmatpush.bf16.msra.mxu0 %v9798
  %9861 = vmatpush.bf16.msra.mxu0 %v9797
  %9862 = vmatmul.bf16.gmra.mxu0 %v9706
  %v9863 = vpop.f32.mrf.mxu0
  %v9864 = vadd.f32 %v9845, %v9863
  %v9865 = vpop.f32.mrf.mxu0
  %v9866 = vadd.f32 %v9847, %v9865
  %9867 = vmatmul.bf16.gmra.mxu0 %v9709
  %v9868 = vpop.f32.mrf.mxu0
  %v9869 = vadd.f32 %v9850, %v9868
  %v9870 = vpop.f32.mrf.mxu0
  %v9871 = vadd.f32 %v9852, %v9870
  %9872 = vdwg.mxu0
  %9873 = vmatpush.bf16.msra.mxu0 0
  %9874 = vmatpush.bf16.msra.mxu0 0
  %9875 = vmatpush.bf16.msra.mxu0 0
  %9876 = vmatpush.bf16.msra.mxu0 0
  %9877 = vmatpush.bf16.msra.mxu0 0
  %9878 = vmatpush.bf16.msra.mxu0 %v9833
  %9879 = vmatpush.bf16.msra.mxu0 %v9806
  %9880 = vmatpush.bf16.msra.mxu0 %v9805
  %9881 = vmatmul.bf16.gmra.mxu0 %v9827
  %v9882 = vpop.f32.mrf.mxu0
  %v9883 = vadd.f32 %v9864, %v9882
  %v9884 = vpop.f32.mrf.mxu0
  %v9885 = vadd.f32 %v9866, %v9884
  %9886 = vmatmul.bf16.gmra.mxu0 %v9830
  %v9887 = vpop.f32.mrf.mxu0
  %v9888 = vadd.f32 %v9869, %v9887
  %v9889 = vpop.f32.mrf.mxu0
  %v9890 = vadd.f32 %v9871, %v9889
  %9891 = vdwg.mxu0
  %v9892 = vld [vmem:[%s2 + $0x4] ss:$0 sm:$0xff]
  %v9893 = vmax.f32 %v9883, 0.0
  %v9894 = vmax.f32 %v9885, 0.0
  %v9895 = vmax.f32 %v9888, 0.0
  %v9896 = vmax.f32 %v9890, 0.0
  %v9897 = vmul.f32 %v9893, %v9892
  %v9898 = vmul.f32 %v9894, %v9892
  %v9899 = vmul.f32 %v9895, %v9892
  %v9900 = vmul.f32 %v9896, %v9892
  %v9901 = vpack.c.bf16 %v9897, %v9897
  %v9902 = vpack.c.bf16 %v9898, %v9898
  %v9903 = vpack.c.bf16 %v9899, %v9899
  %v9904 = vpack.c.bf16 %v9900, %v9900
  %9905 = vst.msk [vmem:[#allocation12 + $0x4] sm:$0xf] %vm8399, %v9901
  %9906 = vst.msk [vmem:[#allocation12 + $0x10] sm:$0xf] %vm8399, %v9902
  %9907 = vst.msk [vmem:[#allocation12 + $0x1c] sm:$0xf] %vm8399, %v9903
  %9908 = vst.msk [vmem:[#allocation12 + $0x28] sm:$0xf] %vm8399, %v9904
  %v9909 = vld [vmem:[#allocation12 + $0x4] sm:$0xf]
  %v9910 = vld [vmem:[#allocation12 + $0x10] sm:$0xf]
  %v9911 = vld [vmem:[#allocation12 + $0x1c] sm:$0xf]
  %v9912 = vld [vmem:[#allocation12 + $0x28] sm:$0xf]
  %v9913 = vld [vmem:[%s1 + $0xa80] sm:$0xf]
  %v9918 = vunpack.c.l.b16 %v9909
  %v9919 = vunpack.c.l.b16 %v9910
  %v9920 = vunpack.c.l.b16 %v9911
  %v9921 = vunpack.c.l.b16 %v9912
  %v9922 = vpack.c.b16 %v9919, %v9918
  %v9923 = vpack.c.b16 %v9921, %v9920
  %vm9924 = vcmask 64512
  %v9926 = vsel %vm9924, %v9922, 0
  %v9929 = vsel %vm9924, %v9923, 0
  %v9932 = vsel %vm8372, %v9913, 0
  %9934 = vmatpush.bf16.msra.mxu0 0
  %9935 = vmatpush.bf16.msra.mxu0 0
  %9936 = vmatpush.bf16.msra.mxu0 0
  %9937 = vmatpush.bf16.msra.mxu0 0
  %9938 = vmatpush.bf16.msra.mxu0 0
  %9939 = vmatpush.bf16.msra.mxu0 0
  %9940 = vmatpush.bf16.msra.mxu0 0
  %9941 = vmatpush.bf16.msra.mxu0 %v9932
  %9942 = vmatmul.bf16.gmra.mxu0 %v9926
  %v9943 = vpop.f32.mrf.mxu0
  %v9944 = vadd.f32 0.0, %v9943
  %v9945 = vpop.f32.mrf.mxu0
  %v9946 = vadd.f32 0.0, %v9945
  %9947 = vmatmul.bf16.gmra.mxu0 %v9929
  %v9948 = vpop.f32.mrf.mxu0
  %v9949 = vadd.f32 0.0, %v9948
  %v9950 = vpop.f32.mrf.mxu0
  %v9951 = vadd.f32 0.0, %v9950
  %9952 = vdwg.mxu0
  %v9953 = vpack.c.bf16 %v9946, %v9944
  %v9954 = vpack.c.bf16 %v9951, %v9949
  %v9955 = vld [vmem:[%s2] sm:$0x80]
  %v9956 = vld [vmem:[%s2 + $0x48] sm:$0x7]
  %v9957 = vld [vmem:[%s1 + $0xa98] sm:$0xf]
  %v9958 = vld [vmem:[%s1 + $0xab0] sm:$0xf]
  %v9959 = vld [vmem:[%s1 + $0xabc] sm:$0xf]
  %v9960 = vpack.c.bf16 %v9956, %v9955
  %v9962 = vshrl.u32 %v9960, 16
  %v9964 = vrot.slane %v9962, 3
  %v9965 = vshll.u32 %v9960, 16
  %v9967 = vrot.slane %v9965, 4
  %v9968 = vor.u32 %v9964, %v9967
  %v9970 = vsel %vm9924, %v9968, 0
  %v9973 = vsel %vm8372, %v9957, 0
  %9975 = vmatpush.bf16.msra.mxu0 0
  %9976 = vmatpush.bf16.msra.mxu0 0
  %9977 = vmatpush.bf16.msra.mxu0 0
  %9978 = vmatpush.bf16.msra.mxu0 0
  %9979 = vmatpush.bf16.msra.mxu0 0
  %9980 = vmatpush.bf16.msra.mxu0 0
  %9981 = vmatpush.bf16.msra.mxu0 0
  %9982 = vmatpush.bf16.msra.mxu0 %v9973
  %9983 = vmatmul.bf16.gmra.mxu0 %v9970
  %v9984 = vpop.f32.mrf.mxu0
  %v9985 = vadd.f32 0.0, %v9984
  %v9986 = vpop.f32.mrf.mxu0
  %9987 = vdwg.mxu0
  %v9990 = vunpack.c.l.b16 %v9958
  %v9991 = vunpack.c.l.b16 %v9959
  %v9992 = vpack.c.b16 %v9991, %v9990
  %v9994 = vsel %vm6127, %v9992, 0
  %9996 = vmatpush.bf16.msra.mxu0 0
  %9997 = vmatpush.bf16.msra.mxu0 0
  %9998 = vmatpush.bf16.msra.mxu0 0
  %9999 = vmatpush.bf16.msra.mxu0 0
  %10000 = vmatpush.bf16.msra.mxu0 0
  %10001 = vmatpush.bf16.msra.mxu0 0
  %10002 = vmatpush.bf16.msra.mxu0 %v9954
  %10003 = vmatpush.bf16.msra.mxu0 %v9953
  %10004 = vmatmul.bf16.gmra.mxu0 %v9994
  %v10005 = vpop.f32.mrf.mxu0
  %v10006 = vadd.f32 0.0, %v10005
  %v10007 = vpop.f32.mrf.mxu0
  %v10008 = vadd.f32 0.0, %v10007
  %10009 = vdwg.mxu0
  %v10010 = vpack.c.bf16 %v9985, %v9985
  %v10011 = vpack.c.bf16 %v10008, %v10006
  %vm10012 = vcmask 130048
  %v10014 = vsel %vm10012, %v10010, 0
  %10016 = vmatpush.bf16.msra.mxu0 0
  %10017 = vmatpush.bf16.msra.mxu0 0
  %10018 = vmatpush.bf16.msra.mxu0 0
  %10019 = vmatpush.bf16.msra.mxu0 0
  %10020 = vmatpush.bf16.msra.mxu0 0
  %10021 = vmatpush.bf16.msra.mxu0 0
  %10022 = vmatpush.bf16.msra.mxu0 0
  %10023 = vmatpush.bf16.msra.mxu0 %v10011
  %10024 = vmatmul.bf16.gmra.mxu0 %v10014
  %v10025 = vpop.f32.mrf.mxu0
  %v10026 = vadd.f32 0.0, %v10025
  %v10027 = vpop.f32.mrf.mxu0
  %10028 = vdwg.mxu0
  %v10029 = vmul.f32 %v9985, %v9985
  %vm10030 = vcmask 125952
  %v10031 = vsel %vm10030, %v10029, 0.0
  %10032 = vadd.xlane.f32.xlu0 %v10031
  %v10033 = vpop.xlane.xlu0 %10032
  %v10034 = vrsqrt.pop %v10033
  %v10035 = vmul.f32 %v10034, %v10033
  %v10036 = vmul.f32 %v10035, %v10034
  %v10037 = vmul.f32 0.5, %v10036
  %v10038 = vsub.f32 1.5, %v10037
  %v10039 = vmul.f32 %v10034, %v10038
  %v10040 = vmul.f32 %v10033, %v10039
  %vm10041 = vcmp.eq.f32.partialorder %v10033, inf
  %v10042 = vsel %vm10041, %v10033, %v10040
  %vm10043 = vcmp.eq.f32.partialorder %v10033, 0.0
  %v10044 = vand.u32 %v10033, 2147483648
  %v10045 = vsel %vm10043, %v10044, %v10042
  %v10046 = vmul.f32 %v10006, %v10006
  %v10047 = vmul.f32 %v10008, %v10008
  %vm10048 = vcmask 31744
  %v10049 = vsel %vm10048, %v10046, 0.0
  %v10050 = vsel %vm10048, %v10047, 0.0
  %v10051 = vadd.f32 %v10049, %v10050
  %v10052 = vrot.slane %v10051, 4
  %v10053 = vadd.f32 %v10051, %v10052
  %v10054 = vrot.slane %v10053, 2
  %v10055 = vadd.f32 %v10053, %v10054
  %v10056 = vrot.slane %v10055, 1
  %v10057 = vadd.f32 %v10055, %v10056
  %v10058 = vrsqrt.pop %v10057
  %v10059 = vmul.f32 %v10058, %v10057
  %v10060 = vmul.f32 %v10059, %v10058
  %v10061 = vmul.f32 0.5, %v10060
  %v10062 = vsub.f32 1.5, %v10061
  %v10063 = vmul.f32 %v10058, %v10062
  %v10064 = vmul.f32 %v10057, %v10063
  %vm10065 = vcmp.eq.f32.partialorder %v10057, inf
  %v10066 = vsel %vm10065, %v10057, %v10064
  %vm10067 = vcmp.eq.f32.partialorder %v10057, 0.0
  %v10068 = vand.u32 %v10057, 2147483648
  %v10069 = vsel %vm10067, %v10068, %v10066
  %v10070 = vmul.f32 %v10045, %v10069
  %v10071 = vmax.f32 %v10070, 0.0001
  %v10072 = vrcp.pop %v10071
  %v10073 = vmul.f32 %v10071, %v10072
  %v10074 = vsub.f32 1.0, %v10073
  %v10075 = vmul.f32 %v10072, %v10074
  %v10076 = vadd.f32 %v10072, %v10075
  %vm10077 = vweird.f32 %v10071
  %vm10078 = vweird.f32 %v10072
  %vm10079 = vmor %vm10077, %vm10078
  %v10080 = vsel %vm10079, %v10072, %v10076
  %v10081 = vand.u32 2147483647, %v10071
  %vm10082 = vcmp.eq.f32.partialorder %v10081, 8.507059e+37
  %v10083 = vand.u32 %v10071, 2147483648
  %v10084 = vor.u32 1.1754944e-38, %v10083
  %v10085 = vsel %vm10082, %v10084, %v10080
  %v10086 = vmul.f32 %v10026, %v10085
  %vm10087 = vcmask 27648
  %v10088 = vsel %vm10087, %v10086, -inf
  %10089 = vmax.xlane.f32.xlu0 %v10088
  %v10090 = vpop.xlane.xlu0 %10089
  %v10091 = vsub.f32 %v10086, %v10090
  %v10092 = vmul.f32 %v10091, 1.442695
  %v10093 = vpow.pop %v10092
  %v10094 = vsel %vm10087, %v10093, 0.0
  %10095 = vadd.xlane.f32.xlu0 %v10094
  %v10096 = vpop.xlane.xlu0 %10095
  %v10097 = vrcp.pop %v10096
  %v10098 = vmul.f32 %v10096, %v10097
  %v10099 = vsub.f32 1.0, %v10098
  %v10100 = vmul.f32 %v10097, %v10099
  %v10101 = vadd.f32 %v10097, %v10100
  %vm10102 = vweird.f32 %v10096
  %vm10103 = vweird.f32 %v10097
  %vm10104 = vmor %vm10102, %vm10103
  %v10105 = vsel %vm10104, %v10097, %v10101
  %v10106 = vand.u32 2147483647, %v10096
  %vm10107 = vcmp.eq.f32.partialorder %v10106, 8.507059e+37
  %v10108 = vand.u32 %v10096, 2147483648
  %v10109 = vor.u32 1.1754944e-38, %v10108
  %v10110 = vsel %vm10107, %v10109, %v10105
  %v10111 = vmul.f32 %v10093, %v10110
  %v10112 = vpack.c.bf16 %v10111, %v10111
  %v10114 = vsel %vm10048, %v10112, 0
  %v10117 = vsel %vm10048, %v9953, 0
  %v10120 = vsel %vm10048, %v9954, 0
  %10122 = vmatpush.bf16.xpose.msra.mxu0 0
  %10123 = vmatpush.bf16.xpose.msra.mxu0 0
  %10124 = vmatpush.bf16.xpose.msra.mxu0 0
  %10125 = vmatpush.bf16.xpose.msra.mxu0 0
  %10126 = vmatpush.bf16.xpose.msra.mxu0 0
  %10127 = vmatpush.bf16.xpose.msra.mxu0 0
  %10128 = vmatpush.bf16.xpose.msra.mxu0 %v10120
  %10129 = vmatpush.bf16.xpose.msra.mxu0 %v10117
  %10130 = vmatmul.bf16.gmra.mxu0 %v10114
  %v10131 = vpop.f32.mrf.mxu0
  %v10132 = vadd.f32 0.0, %v10131
  %v10133 = vpop.f32.mrf.mxu0
  %10134 = vdwg.mxu0
  %v10135 = vld [vmem:[%s1 + $0xac8] sm:$0xf]
  %v10136 = vld [vmem:[%s1 + $0xad4] sm:$0xf]
  %v10137 = vld [vmem:[%s1 + $0xae0] sm:$0xf]
  %v10138 = vld [vmem:[%s1 + $0xaec] sm:$0xf]
  %v10139 = vld [vmem:[%s1 + $0xaf8] sm:$0xf]
  %v10140 = vld [vmem:[%s1 + $0xb04] sm:$0xf]
  %v10141 = vld [vmem:[%s1 + $0xb10] sm:$0xf]
  %v10142 = vld [vmem:[%s1 + $0xb1c] sm:$0xf]
  %v10143 = vld [vmem:[%s2 + $0x5] ss:$0 sm:$0xff]
  %v10144 = vld [vmem:[%s2 + $0x6] ss:$0 sm:$0xff]
  %v10145 = vpack.c.bf16 %v10132, %v10132
  %v10150 = vunpack.c.l.b16 %v10135
  %v10151 = vunpack.c.l.b16 %v10136
  %v10152 = vunpack.c.l.b16 %v10137
  %v10153 = vunpack.c.l.b16 %v10138
  %v10154 = vpack.c.b16 %v10151, %v10150
  %v10155 = vpack.c.b16 %v10153, %v10152
  %v10159 = vsel %vm6127, %v10145, 0
  %10161 = vmatpush.bf16.msra.mxu0 0
  %10162 = vmatpush.bf16.msra.mxu0 0
  %10163 = vmatpush.bf16.msra.mxu0 0
  %10164 = vmatpush.bf16.msra.mxu0 0
  %10165 = vmatpush.bf16.msra.mxu0 0
  %10166 = vmatpush.bf16.msra.mxu0 0
  %10167 = vmatpush.bf16.msra.mxu0 %v10155
  %10168 = vmatpush.bf16.msra.mxu0 %v10154
  %10169 = vmatmul.bf16.gmra.mxu0 %v10159
  %v10170 = vpop.f32.mrf.mxu0
  %v10171 = vadd.f32 %v10143, %v10170
  %v10172 = vpop.f32.mrf.mxu0
  %10173 = vdwg.mxu0
  %v10174 = vmax.f32 %v10171, 0.0
  %v10175 = vpack.c.bf16 %v10174, %v10174
  %v10180 = vunpack.c.l.b16 %v10139
  %v10181 = vunpack.c.l.b16 %v10140
  %v10182 = vunpack.c.l.b16 %v10141
  %v10183 = vunpack.c.l.b16 %v10142
  %v10184 = vpack.c.b16 %v10181, %v10180
  %v10185 = vpack.c.b16 %v10183, %v10182
  %v10189 = vsel %vm6127, %v10175, 0
  %10191 = vmatpush.bf16.msra.mxu0 0
  %10192 = vmatpush.bf16.msra.mxu0 0
  %10193 = vmatpush.bf16.msra.mxu0 0
  %10194 = vmatpush.bf16.msra.mxu0 0
  %10195 = vmatpush.bf16.msra.mxu0 0
  %10196 = vmatpush.bf16.msra.mxu0 0
  %10197 = vmatpush.bf16.msra.mxu0 %v10185
  %10198 = vmatpush.bf16.msra.mxu0 %v10184
  %10199 = vmatmul.bf16.gmra.mxu0 %v10189
  %v10200 = vpop.f32.mrf.mxu0
  %v10201 = vadd.f32 %v10144, %v10200
  %v10202 = vpop.f32.mrf.mxu0
  %10203 = vdwg.mxu0
  %v10204 = vsel %vm8399, %v10201, -inf
  %10205 = vmax.xlane.f32.xlu0 %v10204
  %v10206 = vpop.xlane.xlu0 %10205
  %v10207 = vsub.f32 %v10201, %v10206
  %v10208 = vmul.f32 %v10207, 1.442695
  %v10209 = vpow.pop %v10208
  %v10210 = vsel %vm8399, %v10209, 0.0
  %10211 = vadd.xlane.f32.xlu0 %v10210
  %v10212 = vpop.xlane.xlu0 %10211
  %v10213 = vrcp.pop %v10212
  %v10214 = vmul.f32 %v10212, %v10213
  %v10215 = vsub.f32 1.0, %v10214
  %v10216 = vmul.f32 %v10213, %v10215
  %v10217 = vadd.f32 %v10213, %v10216
  %vm10218 = vweird.f32 %v10212
  %vm10219 = vweird.f32 %v10213
  %vm10220 = vmor %vm10218, %vm10219
  %v10221 = vsel %vm10220, %v10213, %v10217
  %v10222 = vand.u32 2147483647, %v10212
  %vm10223 = vcmp.eq.f32.partialorder %v10222, 8.507059e+37
  %v10224 = vand.u32 %v10212, 2147483648
  %v10225 = vor.u32 1.1754944e-38, %v10224
  %v10226 = vsel %vm10223, %v10225, %v10221
  %v10227 = vmul.f32 %v10209, %v10226
  %v10228 = vlog2.pop %v10212
  %v10229 = vmul.f32 %v10228, 0.6931472
  %v10230 = vadd.f32 %v10229, %v10206
  %v10233 = vrot.slane %v9955, 7
  %v10234 = vrot.slane %v9956, 7
  %v10235 = vsel %vm1431, %v10233, %v10234
  %v10237 = vmul.f32 %v10201, %v10235
  %v10238 = vsel %vm8399, %v10237, 0.0
  %10239 = vadd.xlane.f32.xlu0 %v10238
  %v10240 = vpop.xlane.xlu0 %10239
  %v10241 = vsub.f32 %v10230, %v10240
  %vm10242 = vcmask 3072
  %v10243 = vsel %vm10242, %v10241, 0.0
  %10244 = vadd.xlane.f32.xlu0 %v10243
  %v10245 = vpop.xlane.xlu0 %10244
  %v10246 = vrot.slane %v10245, 4
  %v10247 = vadd.f32 %v10245, %v10246
  %v10248 = vrot.slane %v10247, 2
  %v10249 = vadd.f32 %v10247, %v10248
  %v10250 = vrot.slane %v10249, 1
  %v10251 = vadd.f32 %v10249, %v10250
  %s10252 = vtos %v10251
  %v10253 = vstv %s10252
  %v10254 = vrcp.pop 4.0
  %v10255 = vmul.f32 4.0, %v10254
  %v10256 = vsub.f32 1.0, %v10255
  %v10257 = vmul.f32 %v10254, %v10256
  %v10258 = vadd.f32 %v10254, %v10257
  %vm10259 = vweird.f32 %v10254
  %v10260 = vsel %vm10259, %v10254, %v10258
  %v10261 = vmul.f32 %v10253, %v10260
  %10262 = vst [vmem:[%s3] sm:$0xff] 0.0
  %10263 = vst.msk [vmem:[%s3] sm:$0xf] %vm8399, %v10227
  %10265 = vrot.lane.b32.xlu0 %v10111, 8
  %v10266 = vpop.permute.xlu0 %10265
  %vm10268 = vcmask 93248
  %10269 = vst.msk [vmem:[%s3] sm:$0xf] %vm10268, %v10266
  %vm10270 = vcmask 1041400
  %10271 = vst.msk [vmem:[%s3 + $0x7] sm:$0x1] %vm10270, %v10261
  // Predicated region
  $region14: #{attentive_det_forward.1} parent=0 // pred_check
    _
  $region15: #{attentive_det_forward.1} parent=0 // pred_check_branch
    %10273 = sbr.rel (0) target = $region17
  $region16: #{attentive_det_forward.1} parent=0 // pred_region
    _
  $region17: #{attentive_det_forward.1} parent=0 // pred_fallthru
    _
  // Predicated region
  $region18: #{attentive_det_forward.1} parent=0 // pred_check
    _
  $region19: #{attentive_det_forward.1} parent=0 // pred_check_branch
    %10275 = sbr.rel (0) target = $region21
  $region20: #{attentive_det_forward.1} parent=0 // pred_region
    _
  $region21: #{attentive_det_forward.1} parent=0 // pred_fallthru
    _

</llo_original>
